<compile_context>
chip_gen: v7x
topology: tpu7x:2x2x1
jax: 0.10.0
libtpu: 0.0.40
codegen_flags: <defaults>
</compile_context>

<pallas_src>
import jax
import jax.numpy as jnp
from jax.experimental import pallas as pl
from jax.experimental.pallas import tpu as pltpu


# ---------------------------------------------------------------------------
# In-kernel compute helpers (values in f32; MXU operands cast to `cdt`)
# ---------------------------------------------------------------------------

def _gelu(x):
    # TODO(synk): PyTorch nn.GELU default is exact erf-GELU; Mosaic has no
    # reliable erf lowering here, so the tanh approximation is used.
    return jax.nn.gelu(x, approximate=True)


def _layernorm(x, g, b, eps=1e-5):
    mu = jnp.mean(x, axis=-1, keepdims=True)
    xc = x - mu
    var = jnp.mean(xc * xc, axis=-1, keepdims=True)
    return xc * jax.lax.rsqrt(var + eps) * g + b


def _mha(x, wq_ref, wk_ref, wv_ref, qkvb_ref, projw_ref, bi, num_heads,
         batch_mask, cdt):
    """Multi-head self-attention with host-side per-head weight splits.

    No lane-axis slicing of a fused QKV tensor: each head's q/k/v comes from
    its own (d, dh) weight block and the output projection is accumulated per
    head (concat-free).  `batch_mask` (or None) keeps attention block-diagonal
    across folded batch elements.
    """
    dh = wq_ref.shape[-1]
    scale = float(dh) ** -0.5
    xc = x.astype(cdt)
    out = None
    for h in range(num_heads):
        b3 = qkvb_ref[bi, h]                                        # (3, dh) f32
        q = jnp.dot(xc, wq_ref[bi, h], preferred_element_type=jnp.float32) + b3[0:1]
        k = jnp.dot(xc, wk_ref[bi, h], preferred_element_type=jnp.float32) + b3[1:2]
        v = jnp.dot(xc, wv_ref[bi, h], preferred_element_type=jnp.float32) + b3[2:3]
        s = jax.lax.dot_general(q.astype(cdt), k.astype(cdt),
                                (((1,), (1,)), ((), ())),
                                preferred_element_type=jnp.float32) * scale
        if batch_mask is not None:
            s = jnp.where(batch_mask, s, jnp.float32(-1e30))
        s = s - jnp.max(s, axis=-1, keepdims=True)
        e = jnp.exp(s)
        p = e / jnp.sum(e, axis=-1, keepdims=True)                  # exact softmax
        oh = jnp.dot(p.astype(cdt), v.astype(cdt),
                     preferred_element_type=jnp.float32)
        contrib = jnp.dot(oh.astype(cdt), projw_ref[bi, h],
                          preferred_element_type=jnp.float32)
        out = contrib if out is None else out + contrib
    return out


def _encoder_block(x, P, bi, num_heads, batch_mask, cdt):
    ln = P["enc_ln"][bi]                                            # (4, E) f32
    be = P["enc_b_e"][bi]                                           # (2, E) f32
    h = _layernorm(x, ln[0:1], ln[1:2])
    a = _mha(h, P["enc_wq"], P["enc_wk"], P["enc_wv"], P["enc_qkv_b"],
             P["enc_proj_w"], bi, num_heads, batch_mask, cdt)
    x = x + a + be[0:1]
    h = _layernorm(x, ln[2:3], ln[3:4])
    h = _gelu(jnp.dot(h.astype(cdt), P["enc_mlp_w1"][bi],
                      preferred_element_type=jnp.float32) + P["enc_mlp_b1"][bi])
    h = jnp.dot(h.astype(cdt), P["enc_mlp_w2"][bi],
                preferred_element_type=jnp.float32) + be[1:2]
    return x + h


def _guided_block(x, guide_c, P, bi, num_heads, batch_mask, cdt):
    # TODO(synk): GuidedBlock source is not in the reference file; assumed to
    # be a ViT block whose MLP input is [x | flatten_mask], implemented
    # concat-free as a split-weight matmul.
    ln = P["dec_ln"][bi]                                            # (4, Dd)
    bd = P["dec_b_d"][bi]                                           # (2, Dd)
    h = _layernorm(x, ln[0:1], ln[1:2])
    a = _mha(h, P["dec_wq"], P["dec_wk"], P["dec_wv"], P["dec_qkv_b"],
             P["dec_proj_w"], bi, num_heads, batch_mask, cdt)
    x = x + a + bd[0:1]
    h = _layernorm(x, ln[2:3], ln[3:4])
    h = (jnp.dot(h.astype(cdt), P["dec_mlp_w1_x"][bi],
                 preferred_element_type=jnp.float32)
         + jnp.dot(guide_c, P["dec_mlp_w1_g"][bi],
                   preferred_element_type=jnp.float32)
         + P["dec_mlp_b1"][bi])
    h = _gelu(h)
    h = jnp.dot(h.astype(cdt), P["dec_mlp_w2"][bi],
                preferred_element_type=jnp.float32) + bd[1:2]
    return x + h


# ---------------------------------------------------------------------------
# Fused forward kernel builder
# ---------------------------------------------------------------------------

def _build_forward_kernel(treedef, n_params, has_given, training, Bg,
                          n_info, n_query, depth, num_heads,
                          decoder_depth, total_decoder_depth,
                          decoder_num_heads, cdt):
    n_act = 5 if has_given else 4
    rows_e = Bg * n_info
    rows_q = Bg * n_query
    rows_d = rows_e + rows_q

    def kernel(*args):
        act_refs = args[:n_act]
        param_refs = args[n_act:n_act + n_params]
        out_ref = args[n_act + n_params]

        if has_given:
            patches_ref, pos_ref, given_ref, query_ref, mask_ref = act_refs
        else:
            patches_ref, pos_ref, query_ref, mask_ref = act_refs
            given_ref = None

        # Re-assemble the nested parameter dict of refs (loads happen at use).
        P = jax.tree_util.tree_unflatten(treedef, list(param_refs))

        # ---- block-diagonal attention masks for folded batches -----------
        if Bg > 1:
            def batch_ids(idx):
                info_id = jnp.zeros_like(idx)
                qry_id = jnp.zeros_like(idx)
                for j in range(1, Bg):
                    info_id = info_id + (idx >= j * n_info).astype(jnp.int32)
                    qry_id = qry_id + (idx >= rows_e + j * n_query).astype(jnp.int32)
                return jnp.where(idx < rows_e, info_id, qry_id)

            ri = jax.lax.broadcasted_iota(jnp.int32, (rows_e, rows_e), 0)
            ci = jax.lax.broadcasted_iota(jnp.int32, (rows_e, rows_e), 1)
            mask_e = batch_ids(ri) == batch_ids(ci)
            rid = jax.lax.broadcasted_iota(jnp.int32, (rows_d, rows_d), 0)
            cid = jax.lax.broadcasted_iota(jnp.int32, (rows_d, rows_d), 1)
            mask_d = batch_ids(rid) == batch_ids(cid)
        else:
            mask_e = None
            mask_d = None

        patches = patches_ref[...].astype(jnp.float32)              # (rows_e, F)
        patches_c = patches.astype(cdt)

        # ---- forward_encoder ---------------------------------------------
        # PatchEmbed3D: Conv3d(kernel==stride) == matmul over flattened cubes.
        vE = P["vecs_E"][...]        # rows: pe_b, pe_ln_g, pe_ln_b, me_b2, norm_g, norm_b
        x = jnp.dot(patches_c, P["pe_w"][...],
                    preferred_element_type=jnp.float32) + vE[0:1]
        x = _layernorm(x, vE[1:2], vE[2:3])
        # mlp_embed on [x | given_vector] via split weights (concat-free)
        h = jnp.dot(x.astype(cdt), P["me_w1_x"][...],
                    preferred_element_type=jnp.float32)
        if given_ref is not None:
            h = h + jnp.dot(given_ref[...].astype(cdt), P["me_w1_g"][...],
                            preferred_element_type=jnp.float32)
        h = _gelu(h + P["me_b1"][...])
        x = jnp.dot(h.astype(cdt), P["me_w2"][...],
                    preferred_element_type=jnp.float32) + vE[3:4]
        x = x + pos_ref[...].astype(jnp.float32)
        for bi in range(depth):
            x = _encoder_block(x, P, bi, num_heads, mask_e, cdt)
        x = _layernorm(x, vE[4:5], vE[5:6])

        # ---- forward_mid: decoder_embed([vector_stack | flatten_info]) ----
        info_vec = (jnp.dot(x.astype(cdt), P["de_w_x"][...],
                            preferred_element_type=jnp.float32)
                    + jnp.dot(patches_c, P["de_w_f"][...],
                              preferred_element_type=jnp.float32)
                    + P["de_b"][...])                               # (rows_e, Dd)

        # ---- forward_decoder -----------------------------------------------
        vp = jnp.concatenate(
            [info_vec, query_ref[...].astype(jnp.float32)], axis=0)  # (rows_d, Dd)
        guide_c = mask_ref[...].astype(cdt)                           # (rows_d, F)
        for bi in range(decoder_depth):
            vp = _guided_block(vp, guide_c, P, bi, decoder_num_heads, mask_d, cdt)
        vp_info = vp[0:rows_e, :]
        for bi in range(decoder_depth, total_decoder_depth):
            vp = _guided_block(vp, guide_c, P, bi, decoder_num_heads, mask_d, cdt)
        vp_query = vp[rows_e:, :]

        if training:
            pred_in = jnp.concatenate([vp_info, vp_query], axis=0)   # (rows_d, Dd)
            pred_guide = guide_c
        else:
            pred_in = vp_query
            pred_guide = guide_c[rows_e:, :]

        out = (jnp.dot(pred_in.astype(cdt), P["pred_w_x"][...],
                       preferred_element_type=jnp.float32)
               + jnp.dot(pred_guide, P["pred_w_m"][...],
                         preferred_element_type=jnp.float32)
               + P["pred_b"][...])
        out_ref[...] = out.astype(out_ref.dtype)                     # single store

    return kernel


# ---------------------------------------------------------------------------
# Glue: patch extraction (Conv3d patch ordering: channels-major, then x, y, z)
# ---------------------------------------------------------------------------

def extract_patches(batch_tensor, cube_size):
    """[B, C, X, Y, Z*T] -> [B, num_cubes, C*cx*cy*cz]."""
    # TODO(synk): assumes flatten_batch uses the same per-cube flattening order
    # as the Conv3d patch embedding.
    B, C, X, Y, Zt = batch_tensor.shape
    cx, cy, cz = cube_size
    gx, gy, gz = X // cx, Y // cy, Zt // cz
    x = batch_tensor.reshape(B, C, gx, cx, gy, cy, gz, cz)
    x = x.transpose(0, 2, 4, 6, 1, 3, 5, 7)      # [B, gx, gy, gz, C, cx, cy, cz]
    return x.reshape(B, gx * gy * gz, C * cx * cy * cz)


def _default_grid_parallel():
    """2-way parallel grid on chips with two TensorCores (v7x); 1 otherwise."""
    try:
        kind = jax.devices()[0].device_kind.lower()
    except Exception:
        return 1
    return 2 if "v7" in kind else 1


# ---------------------------------------------------------------------------
# Model
# ---------------------------------------------------------------------------

class MAEForBloodVesselPallas:
    def __init__(self, cube_size=(4, 4, 4), in_chan=1, embed_dim=48, given_dim=4,
                 depth=2, num_heads=2, decoder_embed_dim=64, decoder_depth=2,
                 decoder_num_heads=2, mlp_ratio=4.0, extra_decoder_depth=1,
                 param_dtype=jnp.bfloat16, grid_parallel=None, key=None):
        assert embed_dim % int(6 * num_heads) == 0
        assert decoder_embed_dim % decoder_num_heads == 0
        self.cube_size = cube_size
        self.in_chan = in_chan
        self.embed_dim = embed_dim
        self.given_dim = given_dim
        self.depth = depth
        self.num_heads = num_heads
        self.decoder_embed_dim = decoder_embed_dim
        self.decoder_depth = decoder_depth
        self.decoder_num_heads = decoder_num_heads
        self.mlp_ratio = mlp_ratio
        self.extra_decoder_depth = extra_decoder_depth
        self.param_dtype = param_dtype
        self.grid_parallel = grid_parallel
        self.cube_flatten_dim = int(cube_size[0] * cube_size[1] * cube_size[2] * in_chan)
        self.training = True
        self.params = self._init_params(key if key is not None else jax.random.PRNGKey(0))
        self._leaves, self._treedef = jax.tree_util.tree_flatten(self.params)
        self._fwd_cache = {}

    # ---- parameters (stacked per layer / per head; bf16 matmul weights) ----
    def _init_params(self, key):
        E, Gd, F = self.embed_dim, self.given_dim, self.cube_flatten_dim
        Dd = self.decoder_embed_dim
        He, Hd = int(E * self.mlp_ratio), int(Dd * self.mlp_ratio)
        De, Dc = self.depth, self.decoder_depth + self.extra_decoder_depth
        Hh, Hdh = self.num_heads, self.decoder_num_heads
        dhe, dhd = E // Hh, Dd // Hdh
        wdt = self.param_dtype
        keys = iter(jax.random.split(key, 64))

        def w(*shape):
            return (jax.random.normal(next(keys), shape, jnp.float32) * 0.02).astype(wdt)

        def zeros(*shape):
            return jnp.zeros(shape, jnp.float32)

        def ln_table(n, d):
            # rows per block: ln1_g, ln1_b, ln2_g, ln2_b
            base = jnp.array([1.0, 0.0, 1.0, 0.0], jnp.float32)[None, :, None]
            return jnp.tile(base, (n, 1, d))

        p = {}
        # PatchEmbed3D: Conv3d(kernel=stride=cube_size) == matmul over patches.
        p["pe_w"] = w(F, E)
        # vecs_E rows: 0 pe_b, 1 pe_ln_g, 2 pe_ln_b, 3 me_b2, 4 norm_g, 5 norm_b
        p["vecs_E"] = jnp.zeros((6, E), jnp.float32).at[1].set(1.0).at[4].set(1.0)
        # mlp_embed: fc1 split into x-rows / given-rows (concat-free)
        p["me_w1_x"], p["me_w1_g"] = w(E, He), w(max(Gd, 1), He)
        p["me_b1"], p["me_w2"] = zeros(1, He), w(He, E)
        # Encoder blocks, stacked over depth; QKV/proj pre-split per head.
        # (Weight import: fused timm Wqkv[(q|k|v), :] rows map to enc_w{q,k,v}[d,h] = W[h*dh:(h+1)*dh, :].T.)
        p["enc_ln"] = ln_table(De, E)
        p["enc_wq"] = w(De, Hh, E, dhe)
        p["enc_wk"] = w(De, Hh, E, dhe)
        p["enc_wv"] = w(De, Hh, E, dhe)
        p["enc_qkv_b"] = zeros(De, Hh, 3, dhe)        # rows: q_b, k_b, v_b
        p["enc_proj_w"] = w(De, Hh, dhe, E)
        p["enc_b_e"] = zeros(De, 2, E)                # rows: proj_b, mlp_b2
        p["enc_mlp_w1"] = w(De, E, He)
        p["enc_mlp_b1"] = zeros(De, 1, He)
        p["enc_mlp_w2"] = w(De, He, E)
        # decoder_embed: weight split into embed-rows / flatten-rows
        p["de_w_x"], p["de_w_f"], p["de_b"] = w(E, Dd), w(F, Dd), zeros(1, Dd)
        # Decoder (GuidedBlock) stack
        p["dec_ln"] = ln_table(Dc, Dd)
        p["dec_wq"] = w(Dc, Hdh, Dd, dhd)
        p["dec_wk"] = w(Dc, Hdh, Dd, dhd)
        p["dec_wv"] = w(Dc, Hdh, Dd, dhd)
        p["dec_qkv_b"] = zeros(Dc, Hdh, 3, dhd)
        p["dec_proj_w"] = w(Dc, Hdh, dhd, Dd)
        p["dec_b_d"] = zeros(Dc, 2, Dd)               # rows: proj_b, mlp_b2
        p["dec_mlp_w1_x"] = w(Dc, Dd, Hd)
        p["dec_mlp_w1_g"] = w(Dc, F, Hd)
        p["dec_mlp_b1"] = zeros(Dc, 1, Hd)
        p["dec_mlp_w2"] = w(Dc, Hd, Dd)
        # decoder_pred: weight split into decoding-rows / mask-rows
        p["pred_w_x"], p["pred_w_m"], p["pred_b"] = w(Dd, F), w(F, F), zeros(1, F)
        return p

    # ---- grid selection ----------------------------------------------------
    def _pick_grid(self, B):
        g = self.grid_parallel
        if g is None:
            g = _default_grid_parallel()
        g = max(1, int(g))
        if B % g != 0:
            g = 1
        return g

    # ---- advisory cost hint for XLA ----------------------------------------
    def _cost_estimate(self, Bg, n_info, n_query, training, G):
        E, F, Dd = self.embed_dim, self.cube_flatten_dim, self.decoder_embed_dim
        He, Hd = int(E * self.mlp_ratio), int(Dd * self.mlp_ratio)
        Hh, Hdh = self.num_heads, self.decoder_num_heads
        dhe, dhd = E // Hh, Dd // Hdh
        re_, rq = Bg * n_info, Bg * n_query
        rd = re_ + rq
        n_dec = self.decoder_depth + self.extra_decoder_depth
        fl = 2 * re_ * F * E
        fl += 2 * re_ * (E * He + max(self.given_dim, 0) * He + He * E)
        attn_e = Hh * (2 * re_ * E * dhe * 3 + 2 * re_ * re_ * dhe * 2 + 2 * re_ * dhe * E)
        fl += self.depth * (attn_e + 2 * re_ * (E * He + He * E))
        fl += 2 * re_ * (E * Dd + F * Dd)
        attn_d = Hdh * (2 * rd * Dd * dhd * 3 + 2 * rd * rd * dhd * 2 + 2 * rd * dhd * Dd)
        fl += n_dec * (attn_d + 2 * rd * (Dd * Hd + F * Hd + Hd * Dd))
        rout = rd if training else rq
        fl += 2 * rout * (Dd * F + F * F)
        tr = re_ * He + self.depth * (re_ * He + Hh * re_ * re_) \
            + n_dec * (rd * Hd + Hdh * rd * rd)
        pbytes = sum(int(l.size) * l.dtype.itemsize for l in self._leaves)
        abytes = 4 * (re_ * F + re_ * E + re_ * max(self.given_dim, 0)
                      + rq * Dd + rd * F + rout * F)
        return pl.CostEstimate(flops=int(G * fl), transcendentals=int(G * tr),
                               bytes_accessed=int(pbytes + G * abytes))

    # ---- build / cache the fused pallas_call -------------------------------
    def _get_forward(self, B, n_info, n_query, has_given, training):
        G = self._pick_grid(B)
        Bg = B // G
        cache_key = (B, n_info, n_query, has_given, training, G)
        if cache_key in self._fwd_cache:
            return self._fwd_cache[cache_key]

        E, Gd, F = self.embed_dim, self.given_dim, self.cube_flatten_dim
        Dd = self.decoder_embed_dim
        rows_e, rows_q = Bg * n_info, Bg * n_query
        rows_d = rows_e + rows_q
        rows_out = rows_d if training else rows_q
        n_params = len(self._leaves)

        kernel = _build_forward_kernel(
            self._treedef, n_params, has_given, training, Bg, n_info, n_query,
            self.depth, self.num_heads, self.decoder_depth,
            self.decoder_depth + self.extra_decoder_depth,
            self.decoder_num_heads, self.param_dtype)

        def act_spec(rows, width):
            return pl.BlockSpec((None, rows, width), lambda g: (g, 0, 0))

        act_specs = [act_spec(rows_e, F), act_spec(rows_e, E)]
        if has_given:
            act_specs.append(act_spec(rows_e, Gd))
        act_specs += [act_spec(rows_q, Dd), act_spec(rows_d, F)]

        def const_spec(shape):
            nd = len(shape)
            if nd == 2:
                return pl.BlockSpec(shape, lambda g: (0, 0))
            if nd == 3:
                return pl.BlockSpec(shape, lambda g: (0, 0, 0))
            return pl.BlockSpec(shape, lambda g: (0, 0, 0, 0))

        # Weights: full-array blocks, constant index map -> fetched once, reused.
        param_specs = [const_spec(leaf.shape) for leaf in self._leaves]

        fwd = pl.pallas_call(
            kernel,
            out_shape=jax.ShapeDtypeStruct((G, rows_out, F), jnp.float32),
            grid=(G,),
            in_specs=act_specs + param_specs,
            out_specs=pl.BlockSpec((None, rows_out, F), lambda g: (g, 0, 0)),
            compiler_params=pltpu.CompilerParams(
                dimension_semantics=("parallel",),
                vmem_limit_bytes=32 * 1024 * 1024),
            cost_estimate=self._cost_estimate(Bg, n_info, n_query, training, G),
        )
        self._fwd_cache[cache_key] = (fwd, G, Bg)
        return self._fwd_cache[cache_key]

    # ---- forward -----------------------------------------------------------
    def __call__(self, batch_tensor, pos_embed_tensor, given_vector, query_vector,
                 flatten_mask_info, flatten_mask_query):
        patches = extract_patches(batch_tensor, self.cube_size)     # [B, n_info, F]
        B, n_info, F = patches.shape
        n_query = query_vector.shape[1]
        has_given = given_vector is not None
        fwd, G, Bg = self._get_forward(B, n_info, n_query, has_given, self.training)

        def group(a):
            # [B, n, W] -> [G, Bg*n, W] (batch folded into rows per grid step)
            return a.reshape(G, Bg * a.shape[1], a.shape[2])

        acts = [group(patches), group(pos_embed_tensor)]
        if has_given:
            acts.append(group(given_vector))
        acts.append(group(query_vector))
        acts.append(jnp.concatenate([group(flatten_mask_info),
                                     group(flatten_mask_query)], axis=1))

        out = fwd(*acts, *self._leaves)                              # [G, rows_out, F]

        if self.training:
            info = out[:, :Bg * n_info, :].reshape(B, n_info, F)
            qry = out[:, Bg * n_info:, :].reshape(B, n_query, F)
            return jnp.concatenate([info, qry], axis=1)
        return out.reshape(B, n_query, F)


# ---------------------------------------------------------------------------
# Example run
# ---------------------------------------------------------------------------

if __name__ == "__main__":
    key = jax.random.PRNGKey(0)
    k_model, k_data = jax.random.split(key)

    cube_size = (4, 4, 4)
    in_chan = 1
    embed_dim = 48          # % (6 * num_heads) == 0
    given_dim = 4
    depth = 2
    num_heads = 2
    decoder_embed_dim = 64  # % decoder_num_heads == 0
    decoder_depth = 2
    decoder_num_heads = 2
    extra_decoder_depth = 1
    mlp_ratio = 4.0

    B = 2
    n_info = 6              # num_information_cubes
    n_query = 4             # num_query_cubes
    flat = in_chan * cube_size[0] * cube_size[1] * cube_size[2]   # 64

    model = MAEForBloodVesselPallas(
        cube_size=cube_size, in_chan=in_chan, embed_dim=embed_dim,
        given_dim=given_dim, depth=depth, num_heads=num_heads,
        decoder_embed_dim=decoder_embed_dim, decoder_depth=decoder_depth,
        decoder_num_heads=decoder_num_heads, mlp_ratio=mlp_ratio,
        extra_decoder_depth=extra_decoder_depth, key=k_model)

    ks = jax.random.split(k_data, 6)
    batch_tensor = jax.random.normal(
        ks[0], (B, in_chan, cube_size[0], cube_size[1], cube_size[2] * n_info),
        jnp.float32)
    pos_embed_tensor = jax.random.normal(ks[1], (B, n_info, embed_dim), jnp.float32) * 0.02
    given_vector = jax.random.normal(ks[2], (B, n_info, given_dim), jnp.float32)
    query_vector = jax.random.normal(ks[3], (B, n_query, decoder_embed_dim), jnp.float32) * 0.02
    flatten_mask_info = jax.random.normal(ks[4], (B, n_info, flat), jnp.float32)
    flatten_mask_query = jax.random.normal(ks[5], (B, n_query, flat), jnp.float32)

    out = model(batch_tensor, pos_embed_tensor, given_vector, query_vector,
                flatten_mask_info, flatten_mask_query)
    out = jax.block_until_ready(out)

    # training=True => [B, n_info + n_query, cube_flatten_dim]
    assert out.shape == (B, n_info + n_query, flat), out.shape
    assert bool(jnp.all(jnp.isfinite(out)))
    print("KERNEL_OK")
</pallas_src>

<mosaic_0001>
module attributes {stable_mosaic.version = 11 : i64} {
  func.func @kernel(%arg0: i32, %arg1: memref<1x12x64xf32, #tpu.memory_space<vmem>>, %arg2: memref<1x12x48xf32, #tpu.memory_space<vmem>>, %arg3: memref<1x12x4xf32, #tpu.memory_space<vmem>>, %arg4: memref<1x8x64xf32, #tpu.memory_space<vmem>>, %arg5: memref<1x20x64xf32, #tpu.memory_space<vmem>>, %arg6: memref<1x64xf32, #tpu.memory_space<vmem>>, %arg7: memref<64x64xbf16, #tpu.memory_space<vmem>>, %arg8: memref<48x64xbf16, #tpu.memory_space<vmem>>, %arg9: memref<3x2x64xf32, #tpu.memory_space<vmem>>, %arg10: memref<3x4x64xf32, #tpu.memory_space<vmem>>, %arg11: memref<3x1x256xf32, #tpu.memory_space<vmem>>, %arg12: memref<3x64x256xbf16, #tpu.memory_space<vmem>>, %arg13: memref<3x64x256xbf16, #tpu.memory_space<vmem>>, %arg14: memref<3x256x64xbf16, #tpu.memory_space<vmem>>, %arg15: memref<3x2x32x64xbf16, #tpu.memory_space<vmem>>, %arg16: memref<3x2x3x32xf32, #tpu.memory_space<vmem>>, %arg17: memref<3x2x64x32xbf16, #tpu.memory_space<vmem>>, %arg18: memref<3x2x64x32xbf16, #tpu.memory_space<vmem>>, %arg19: memref<3x2x64x32xbf16, #tpu.memory_space<vmem>>, %arg20: memref<2x2x48xf32, #tpu.memory_space<vmem>>, %arg21: memref<2x4x48xf32, #tpu.memory_space<vmem>>, %arg22: memref<2x1x192xf32, #tpu.memory_space<vmem>>, %arg23: memref<2x48x192xbf16, #tpu.memory_space<vmem>>, %arg24: memref<2x192x48xbf16, #tpu.memory_space<vmem>>, %arg25: memref<2x2x24x48xbf16, #tpu.memory_space<vmem>>, %arg26: memref<2x2x3x24xf32, #tpu.memory_space<vmem>>, %arg27: memref<2x2x48x24xbf16, #tpu.memory_space<vmem>>, %arg28: memref<2x2x48x24xbf16, #tpu.memory_space<vmem>>, %arg29: memref<2x2x48x24xbf16, #tpu.memory_space<vmem>>, %arg30: memref<1x192xf32, #tpu.memory_space<vmem>>, %arg31: memref<4x192xbf16, #tpu.memory_space<vmem>>, %arg32: memref<48x192xbf16, #tpu.memory_space<vmem>>, %arg33: memref<192x48xbf16, #tpu.memory_space<vmem>>, %arg34: memref<64x48xbf16, #tpu.memory_space<vmem>>, %arg35: memref<1x64xf32, #tpu.memory_space<vmem>>, %arg36: memref<64x64xbf16, #tpu.memory_space<vmem>>, %arg37: memref<64x64xbf16, #tpu.memory_space<vmem>>, %arg38: memref<6x48xf32, #tpu.memory_space<vmem>>, %arg39: memref<1x20x64xf32, #tpu.memory_space<vmem>>) attributes {dimension_semantics = [#tpu.dimension_semantics<parallel>], iteration_bounds = array<i64: 1>, scalar_prefetch = 0 : i64, scratch_operands = 0 : i64, tpu.core_type = #tpu.core_type<tc>, window_params = [{transform_indices = @transform_0, window_bounds = array<i64: 1, 12, 64>}, {transform_indices = @transform_1, window_bounds = array<i64: 1, 12, 48>}, {transform_indices = @transform_2, window_bounds = array<i64: 1, 12, 4>}, {transform_indices = @transform_3, window_bounds = array<i64: 1, 8, 64>}, {transform_indices = @transform_4, window_bounds = array<i64: 1, 20, 64>}, {pipeline_mode = #tpu.pipeline_mode<synchronous>, transform_indices = @transform_5, window_bounds = array<i64: 1, 64>}, {pipeline_mode = #tpu.pipeline_mode<synchronous>, transform_indices = @transform_6, window_bounds = array<i64: 64, 64>}, {pipeline_mode = #tpu.pipeline_mode<synchronous>, transform_indices = @transform_7, window_bounds = array<i64: 48, 64>}, {pipeline_mode = #tpu.pipeline_mode<synchronous>, transform_indices = @transform_8, window_bounds = array<i64: 3, 2, 64>}, {pipeline_mode = #tpu.pipeline_mode<synchronous>, transform_indices = @transform_9, window_bounds = array<i64: 3, 4, 64>}, {pipeline_mode = #tpu.pipeline_mode<synchronous>, transform_indices = @transform_10, window_bounds = array<i64: 3, 1, 256>}, {pipeline_mode = #tpu.pipeline_mode<synchronous>, transform_indices = @transform_11, window_bounds = array<i64: 3, 64, 256>}, {pipeline_mode = #tpu.pipeline_mode<synchronous>, transform_indices = @transform_12, window_bounds = array<i64: 3, 64, 256>}, {pipeline_mode = #tpu.pipeline_mode<synchronous>, transform_indices = @transform_13, window_bounds = array<i64: 3, 256, 64>}, {pipeline_mode = #tpu.pipeline_mode<synchronous>, transform_indices = @transform_14, window_bounds = array<i64: 3, 2, 32, 64>}, {pipeline_mode = #tpu.pipeline_mode<synchronous>, transform_indices = @transform_15, window_bounds = array<i64: 3, 2, 3, 32>}, {pipeline_mode = #tpu.pipeline_mode<synchronous>, transform_indices = @transform_16, window_bounds = array<i64: 3, 2, 64, 32>}, {pipeline_mode = #tpu.pipeline_mode<synchronous>, transform_indices = @transform_17, window_bounds = array<i64: 3, 2, 64, 32>}, {pipeline_mode = #tpu.pipeline_mode<synchronous>, transform_indices = @transform_18, window_bounds = array<i64: 3, 2, 64, 32>}, {pipeline_mode = #tpu.pipeline_mode<synchronous>, transform_indices = @transform_19, window_bounds = array<i64: 2, 2, 48>}, {pipeline_mode = #tpu.pipeline_mode<synchronous>, transform_indices = @transform_20, window_bounds = array<i64: 2, 4, 48>}, {pipeline_mode = #tpu.pipeline_mode<synchronous>, transform_indices = @transform_21, window_bounds = array<i64: 2, 1, 192>}, {pipeline_mode = #tpu.pipeline_mode<synchronous>, transform_indices = @transform_22, window_bounds = array<i64: 2, 48, 192>}, {pipeline_mode = #tpu.pipeline_mode<synchronous>, transform_indices = @transform_23, window_bounds = array<i64: 2, 192, 48>}, {pipeline_mode = #tpu.pipeline_mode<synchronous>, transform_indices = @transform_24, window_bounds = array<i64: 2, 2, 24, 48>}, {pipeline_mode = #tpu.pipeline_mode<synchronous>, transform_indices = @transform_25, window_bounds = array<i64: 2, 2, 3, 24>}, {pipeline_mode = #tpu.pipeline_mode<synchronous>, transform_indices = @transform_26, window_bounds = array<i64: 2, 2, 48, 24>}, {pipeline_mode = #tpu.pipeline_mode<synchronous>, transform_indices = @transform_27, window_bounds = array<i64: 2, 2, 48, 24>}, {pipeline_mode = #tpu.pipeline_mode<synchronous>, transform_indices = @transform_28, window_bounds = array<i64: 2, 2, 48, 24>}, {pipeline_mode = #tpu.pipeline_mode<synchronous>, transform_indices = @transform_29, window_bounds = array<i64: 1, 192>}, {pipeline_mode = #tpu.pipeline_mode<synchronous>, transform_indices = @transform_30, window_bounds = array<i64: 4, 192>}, {pipeline_mode = #tpu.pipeline_mode<synchronous>, transform_indices = @transform_31, window_bounds = array<i64: 48, 192>}, {pipeline_mode = #tpu.pipeline_mode<synchronous>, transform_indices = @transform_32, window_bounds = array<i64: 192, 48>}, {pipeline_mode = #tpu.pipeline_mode<synchronous>, transform_indices = @transform_33, window_bounds = array<i64: 64, 48>}, {pipeline_mode = #tpu.pipeline_mode<synchronous>, transform_indices = @transform_34, window_bounds = array<i64: 1, 64>}, {pipeline_mode = #tpu.pipeline_mode<synchronous>, transform_indices = @transform_35, window_bounds = array<i64: 64, 64>}, {pipeline_mode = #tpu.pipeline_mode<synchronous>, transform_indices = @transform_36, window_bounds = array<i64: 64, 64>}, {pipeline_mode = #tpu.pipeline_mode<synchronous>, transform_indices = @transform_37, window_bounds = array<i64: 6, 48>}, {transform_indices = @transform_38, window_bounds = array<i64: 1, 20, 64>}]} {
    %0 = tpu.iota {dimensions = array<i32: 0>} : vector<12x12xi32>
    %1 = tpu.iota {dimensions = array<i32: 1>} : vector<12x12xi32>
    %c0_i32 = arith.constant 0 : i32
    %2 = vector.broadcast %c0_i32 : i32 to vector<12x12xi32>
    %c0_i32_0 = arith.constant 0 : i32
    %3 = vector.broadcast %c0_i32_0 : i32 to vector<12x12xi32>
    %c6_i32 = arith.constant 6 : i32
    %4 = vector.broadcast %c6_i32 : i32 to vector<12x12xi32>
    %5 = arith.cmpi sge, %0, %4 : vector<12x12xi32>
    %6 = arith.extui %5 : vector<12x12xi1> to vector<12x12xi32>
    %7 = arith.addi %2, %6 : vector<12x12xi32>
    %c16_i32 = arith.constant 16 : i32
    %8 = vector.broadcast %c16_i32 : i32 to vector<12x12xi32>
    %9 = arith.cmpi sge, %0, %8 : vector<12x12xi32>
    %10 = arith.extui %9 : vector<12x12xi1> to vector<12x12xi32>
    %11 = arith.addi %3, %10 : vector<12x12xi32>
    %c12_i32 = arith.constant 12 : i32
    %12 = vector.broadcast %c12_i32 : i32 to vector<12x12xi32>
    %13 = arith.cmpi slt, %0, %12 : vector<12x12xi32>
    %14 = arith.select %13, %7, %11 : vector<12x12xi1>, vector<12x12xi32>
    %c0_i32_1 = arith.constant 0 : i32
    %15 = vector.broadcast %c0_i32_1 : i32 to vector<12x12xi32>
    %c0_i32_2 = arith.constant 0 : i32
    %16 = vector.broadcast %c0_i32_2 : i32 to vector<12x12xi32>
    %c6_i32_3 = arith.constant 6 : i32
    %17 = vector.broadcast %c6_i32_3 : i32 to vector<12x12xi32>
    %18 = arith.cmpi sge, %1, %17 : vector<12x12xi32>
    %19 = arith.extui %18 : vector<12x12xi1> to vector<12x12xi32>
    %20 = arith.addi %15, %19 : vector<12x12xi32>
    %c16_i32_4 = arith.constant 16 : i32
    %21 = vector.broadcast %c16_i32_4 : i32 to vector<12x12xi32>
    %22 = arith.cmpi sge, %1, %21 : vector<12x12xi32>
    %23 = arith.extui %22 : vector<12x12xi1> to vector<12x12xi32>
    %24 = arith.addi %16, %23 : vector<12x12xi32>
    %c12_i32_5 = arith.constant 12 : i32
    %25 = vector.broadcast %c12_i32_5 : i32 to vector<12x12xi32>
    %26 = arith.cmpi slt, %1, %25 : vector<12x12xi32>
    %27 = arith.select %26, %20, %24 : vector<12x12xi1>, vector<12x12xi32>
    %28 = arith.cmpi eq, %14, %27 : vector<12x12xi32>
    %29 = tpu.iota {dimensions = array<i32: 0>} : vector<20x20xi32>
    %30 = tpu.iota {dimensions = array<i32: 1>} : vector<20x20xi32>
    %c0_i32_6 = arith.constant 0 : i32
    %31 = vector.broadcast %c0_i32_6 : i32 to vector<20x20xi32>
    %c0_i32_7 = arith.constant 0 : i32
    %32 = vector.broadcast %c0_i32_7 : i32 to vector<20x20xi32>
    %c6_i32_8 = arith.constant 6 : i32
    %33 = vector.broadcast %c6_i32_8 : i32 to vector<20x20xi32>
    %34 = arith.cmpi sge, %29, %33 : vector<20x20xi32>
    %35 = arith.extui %34 : vector<20x20xi1> to vector<20x20xi32>
    %36 = arith.addi %31, %35 : vector<20x20xi32>
    %c16_i32_9 = arith.constant 16 : i32
    %37 = vector.broadcast %c16_i32_9 : i32 to vector<20x20xi32>
    %38 = arith.cmpi sge, %29, %37 : vector<20x20xi32>
    %39 = arith.extui %38 : vector<20x20xi1> to vector<20x20xi32>
    %40 = arith.addi %32, %39 : vector<20x20xi32>
    %c12_i32_10 = arith.constant 12 : i32
    %41 = vector.broadcast %c12_i32_10 : i32 to vector<20x20xi32>
    %42 = arith.cmpi slt, %29, %41 : vector<20x20xi32>
    %43 = arith.select %42, %36, %40 : vector<20x20xi1>, vector<20x20xi32>
    %c0_i32_11 = arith.constant 0 : i32
    %44 = vector.broadcast %c0_i32_11 : i32 to vector<20x20xi32>
    %c0_i32_12 = arith.constant 0 : i32
    %45 = vector.broadcast %c0_i32_12 : i32 to vector<20x20xi32>
    %c6_i32_13 = arith.constant 6 : i32
    %46 = vector.broadcast %c6_i32_13 : i32 to vector<20x20xi32>
    %47 = arith.cmpi sge, %30, %46 : vector<20x20xi32>
    %48 = arith.extui %47 : vector<20x20xi1> to vector<20x20xi32>
    %49 = arith.addi %44, %48 : vector<20x20xi32>
    %c16_i32_14 = arith.constant 16 : i32
    %50 = vector.broadcast %c16_i32_14 : i32 to vector<20x20xi32>
    %51 = arith.cmpi sge, %30, %50 : vector<20x20xi32>
    %52 = arith.extui %51 : vector<20x20xi1> to vector<20x20xi32>
    %53 = arith.addi %45, %52 : vector<20x20xi32>
    %c12_i32_15 = arith.constant 12 : i32
    %54 = vector.broadcast %c12_i32_15 : i32 to vector<20x20xi32>
    %55 = arith.cmpi slt, %30, %54 : vector<20x20xi32>
    %56 = arith.select %55, %49, %53 : vector<20x20xi1>, vector<20x20xi32>
    %57 = arith.cmpi eq, %43, %56 : vector<20x20xi32>
    %c0 = arith.constant 0 : index
    %c0_16 = arith.constant 0 : index
    %c0_17 = arith.constant 0 : index
    %58 = vector.load %arg1[%c0, %c0_16, %c0_17] : memref<1x12x64xf32, #tpu.memory_space<vmem>>, vector<1x12x64xf32>
    %59 = vector.shape_cast %58 : vector<1x12x64xf32> to vector<12x64xf32>
    %60 = arith.truncf %59 : vector<12x64xf32> to vector<12x64xbf16>
    %c0_18 = arith.constant 0 : index
    %c0_19 = arith.constant 0 : index
    %61 = vector.load %arg38[%c0_18, %c0_19] : memref<6x48xf32, #tpu.memory_space<vmem>>, vector<6x48xf32>
    %c0_20 = arith.constant 0 : index
    %c0_21 = arith.constant 0 : index
    %62 = vector.load %arg34[%c0_20, %c0_21] : memref<64x48xbf16, #tpu.memory_space<vmem>>, vector<64x48xbf16>
    %cst = arith.constant dense<0.000000e+00> : vector<12x48xf32>
    %63 = tpu.matmul %60, %62, %cst {dimension_numbers = #tpu.dot_dimension_numbers<[1], [0], [0], [1], [0, 0, 1, 1], [], []>} : vector<12x64xbf16>, vector<64x48xbf16>, vector<12x48xf32> -> vector<12x48xf32>
    %64 = vector.extract_strided_slice %61 {offsets = [0, 0], sizes = [1, 48], strides = [1, 1]} : vector<6x48xf32> to vector<1x48xf32>
    %65 = vector.broadcast %64 : vector<1x48xf32> to vector<12x48xf32>
    %66 = arith.addf %63, %65 : vector<12x48xf32>
    %67 = vector.extract_strided_slice %61 {offsets = [1, 0], sizes = [1, 48], strides = [1, 1]} : vector<6x48xf32> to vector<1x48xf32>
    %68 = vector.extract_strided_slice %61 {offsets = [2, 0], sizes = [1, 48], strides = [1, 1]} : vector<6x48xf32> to vector<1x48xf32>
    %cst_22 = arith.constant dense<0.000000e+00> : vector<12xf32>
    %69 = vector.multi_reduction <add>, %66, %cst_22 [1] : vector<12x48xf32> to vector<12xf32>
    %70 = vector.shape_cast %69 : vector<12xf32> to vector<12x1xf32>
    %cst_23 = arith.constant 4.800000e+01 : f32
    %71 = vector.broadcast %cst_23 : f32 to vector<12x1xf32>
    %72 = arith.divf %70, %71 : vector<12x1xf32>
    %73 = vector.broadcast %72 : vector<12x1xf32> to vector<12x48xf32>
    %74 = arith.subf %66, %73 : vector<12x48xf32>
    %75 = arith.mulf %74, %74 : vector<12x48xf32>
    %cst_24 = arith.constant dense<0.000000e+00> : vector<12xf32>
    %76 = vector.multi_reduction <add>, %75, %cst_24 [1] : vector<12x48xf32> to vector<12xf32>
    %77 = vector.shape_cast %76 : vector<12xf32> to vector<12x1xf32>
    %cst_25 = arith.constant 4.800000e+01 : f32
    %78 = vector.broadcast %cst_25 : f32 to vector<12x1xf32>
    %79 = arith.divf %77, %78 : vector<12x1xf32>
    %cst_26 = arith.constant 9.99999974E-6 : f32
    %80 = vector.broadcast %cst_26 : f32 to vector<12x1xf32>
    %81 = arith.addf %79, %80 : vector<12x1xf32>
    %82 = math.rsqrt %81 : vector<12x1xf32>
    %83 = vector.broadcast %82 : vector<12x1xf32> to vector<12x48xf32>
    %84 = arith.mulf %74, %83 : vector<12x48xf32>
    %85 = vector.broadcast %67 : vector<1x48xf32> to vector<12x48xf32>
    %86 = arith.mulf %84, %85 : vector<12x48xf32>
    %87 = vector.broadcast %68 : vector<1x48xf32> to vector<12x48xf32>
    %88 = arith.addf %86, %87 : vector<12x48xf32>
    %89 = arith.truncf %88 : vector<12x48xf32> to vector<12x48xbf16>
    %c0_27 = arith.constant 0 : index
    %c0_28 = arith.constant 0 : index
    %90 = vector.load %arg32[%c0_27, %c0_28] : memref<48x192xbf16, #tpu.memory_space<vmem>>, vector<48x192xbf16>
    %cst_29 = arith.constant dense<0.000000e+00> : vector<12x192xf32>
    %91 = tpu.matmul %89, %90, %cst_29 {dimension_numbers = #tpu.dot_dimension_numbers<[1], [0], [0], [1], [0, 0, 1, 1], [], []>} : vector<12x48xbf16>, vector<48x192xbf16>, vector<12x192xf32> -> vector<12x192xf32>
    %c0_30 = arith.constant 0 : index
    %c0_31 = arith.constant 0 : index
    %c0_32 = arith.constant 0 : index
    %92 = vector.load %arg3[%c0_30, %c0_31, %c0_32] : memref<1x12x4xf32, #tpu.memory_space<vmem>>, vector<1x12x4xf32>
    %93 = vector.shape_cast %92 : vector<1x12x4xf32> to vector<12x4xf32>
    %94 = arith.truncf %93 : vector<12x4xf32> to vector<12x4xbf16>
    %c0_33 = arith.constant 0 : index
    %c0_34 = arith.constant 0 : index
    %95 = vector.load %arg31[%c0_33, %c0_34] : memref<4x192xbf16, #tpu.memory_space<vmem>>, vector<4x192xbf16>
    %cst_35 = arith.constant dense<0.000000e+00> : vector<12x192xf32>
    %96 = tpu.matmul %94, %95, %cst_35 {dimension_numbers = #tpu.dot_dimension_numbers<[1], [0], [0], [1], [0, 0, 1, 1], [], []>} : vector<12x4xbf16>, vector<4x192xbf16>, vector<12x192xf32> -> vector<12x192xf32>
    %97 = arith.addf %91, %96 : vector<12x192xf32>
    %c0_36 = arith.constant 0 : index
    %c0_37 = arith.constant 0 : index
    %98 = vector.load %arg30[%c0_36, %c0_37] : memref<1x192xf32, #tpu.memory_space<vmem>>, vector<1x192xf32>
    %99 = vector.broadcast %98 : vector<1x192xf32> to vector<12x192xf32>
    %100 = arith.addf %97, %99 : vector<12x192xf32>
    %101 = arith.mulf %100, %100 : vector<12x192xf32>
    %102 = arith.mulf %100, %101 : vector<12x192xf32>
    %cst_38 = arith.constant 4.471500e-02 : f32
    %103 = vector.broadcast %cst_38 : f32 to vector<12x192xf32>
    %104 = arith.mulf %103, %102 : vector<12x192xf32>
    %105 = arith.addf %100, %104 : vector<12x192xf32>
    %cst_39 = arith.constant 0.797884583 : f32
    %106 = vector.broadcast %cst_39 : f32 to vector<12x192xf32>
    %107 = arith.mulf %106, %105 : vector<12x192xf32>
    %108 = math.tanh %107 : vector<12x192xf32>
    %cst_40 = arith.constant 1.000000e+00 : f32
    %109 = vector.broadcast %cst_40 : f32 to vector<12x192xf32>
    %110 = arith.addf %109, %108 : vector<12x192xf32>
    %cst_41 = arith.constant 5.000000e-01 : f32
    %111 = vector.broadcast %cst_41 : f32 to vector<12x192xf32>
    %112 = arith.mulf %111, %110 : vector<12x192xf32>
    %113 = arith.mulf %100, %112 : vector<12x192xf32>
    %114 = arith.truncf %113 : vector<12x192xf32> to vector<12x192xbf16>
    %c0_42 = arith.constant 0 : index
    %c0_43 = arith.constant 0 : index
    %115 = vector.load %arg33[%c0_42, %c0_43] : memref<192x48xbf16, #tpu.memory_space<vmem>>, vector<192x48xbf16>
    %cst_44 = arith.constant dense<0.000000e+00> : vector<12x48xf32>
    %116 = tpu.matmul %114, %115, %cst_44 {dimension_numbers = #tpu.dot_dimension_numbers<[1], [0], [0], [1], [0, 0, 1, 1], [], []>} : vector<12x192xbf16>, vector<192x48xbf16>, vector<12x48xf32> -> vector<12x48xf32>
    %117 = vector.extract_strided_slice %61 {offsets = [3, 0], sizes = [1, 48], strides = [1, 1]} : vector<6x48xf32> to vector<1x48xf32>
    %118 = vector.broadcast %117 : vector<1x48xf32> to vector<12x48xf32>
    %119 = arith.addf %116, %118 : vector<12x48xf32>
    %c0_45 = arith.constant 0 : index
    %c0_46 = arith.constant 0 : index
    %c0_47 = arith.constant 0 : index
    %120 = vector.load %arg2[%c0_45, %c0_46, %c0_47] : memref<1x12x48xf32, #tpu.memory_space<vmem>>, vector<1x12x48xf32>
    %121 = vector.shape_cast %120 : vector<1x12x48xf32> to vector<12x48xf32>
    %122 = arith.addf %119, %121 : vector<12x48xf32>
    %c0_48 = arith.constant 0 : index
    %c0_49 = arith.constant 0 : index
    %c0_50 = arith.constant 0 : index
    %123 = vector.load %arg21[%c0_48, %c0_49, %c0_50] : memref<2x4x48xf32, #tpu.memory_space<vmem>>, vector<1x4x48xf32>
    %124 = vector.shape_cast %123 : vector<1x4x48xf32> to vector<4x48xf32>
    %c0_51 = arith.constant 0 : index
    %c0_52 = arith.constant 0 : index
    %c0_53 = arith.constant 0 : index
    %125 = vector.load %arg20[%c0_51, %c0_52, %c0_53] : memref<2x2x48xf32, #tpu.memory_space<vmem>>, vector<1x2x48xf32>
    %126 = vector.shape_cast %125 : vector<1x2x48xf32> to vector<2x48xf32>
    %127 = vector.extract_strided_slice %124 {offsets = [0, 0], sizes = [1, 48], strides = [1, 1]} : vector<4x48xf32> to vector<1x48xf32>
    %128 = vector.extract_strided_slice %124 {offsets = [1, 0], sizes = [1, 48], strides = [1, 1]} : vector<4x48xf32> to vector<1x48xf32>
    %cst_54 = arith.constant dense<0.000000e+00> : vector<12xf32>
    %129 = vector.multi_reduction <add>, %122, %cst_54 [1] : vector<12x48xf32> to vector<12xf32>
    %130 = vector.shape_cast %129 : vector<12xf32> to vector<12x1xf32>
    %cst_55 = arith.constant 4.800000e+01 : f32
    %131 = vector.broadcast %cst_55 : f32 to vector<12x1xf32>
    %132 = arith.divf %130, %131 : vector<12x1xf32>
    %133 = vector.broadcast %132 : vector<12x1xf32> to vector<12x48xf32>
    %134 = arith.subf %122, %133 : vector<12x48xf32>
    %135 = arith.mulf %134, %134 : vector<12x48xf32>
    %cst_56 = arith.constant dense<0.000000e+00> : vector<12xf32>
    %136 = vector.multi_reduction <add>, %135, %cst_56 [1] : vector<12x48xf32> to vector<12xf32>
    %137 = vector.shape_cast %136 : vector<12xf32> to vector<12x1xf32>
    %cst_57 = arith.constant 4.800000e+01 : f32
    %138 = vector.broadcast %cst_57 : f32 to vector<12x1xf32>
    %139 = arith.divf %137, %138 : vector<12x1xf32>
    %cst_58 = arith.constant 9.99999974E-6 : f32
    %140 = vector.broadcast %cst_58 : f32 to vector<12x1xf32>
    %141 = arith.addf %139, %140 : vector<12x1xf32>
    %142 = math.rsqrt %141 : vector<12x1xf32>
    %143 = vector.broadcast %142 : vector<12x1xf32> to vector<12x48xf32>
    %144 = arith.mulf %134, %143 : vector<12x48xf32>
    %145 = vector.broadcast %127 : vector<1x48xf32> to vector<12x48xf32>
    %146 = arith.mulf %144, %145 : vector<12x48xf32>
    %147 = vector.broadcast %128 : vector<1x48xf32> to vector<12x48xf32>
    %148 = arith.addf %146, %147 : vector<12x48xf32>
    %149 = arith.truncf %148 : vector<12x48xf32> to vector<12x48xbf16>
    %c0_59 = arith.constant 0 : index
    %c0_60 = arith.constant 0 : index
    %c0_61 = arith.constant 0 : index
    %c0_62 = arith.constant 0 : index
    %150 = vector.load %arg26[%c0_59, %c0_60, %c0_61, %c0_62] : memref<2x2x3x24xf32, #tpu.memory_space<vmem>>, vector<1x1x3x24xf32>
    %151 = vector.shape_cast %150 : vector<1x1x3x24xf32> to vector<3x24xf32>
    %c0_63 = arith.constant 0 : index
    %c0_64 = arith.constant 0 : index
    %c0_65 = arith.constant 0 : index
    %c0_66 = arith.constant 0 : index
    %152 = vector.load %arg28[%c0_63, %c0_64, %c0_65, %c0_66] : memref<2x2x48x24xbf16, #tpu.memory_space<vmem>>, vector<1x1x48x24xbf16>
    %153 = vector.shape_cast %152 : vector<1x1x48x24xbf16> to vector<48x24xbf16>
    %cst_67 = arith.constant dense<0.000000e+00> : vector<12x24xf32>
    %154 = tpu.matmul %149, %153, %cst_67 {dimension_numbers = #tpu.dot_dimension_numbers<[1], [0], [0], [1], [0, 0, 1, 1], [], []>} : vector<12x48xbf16>, vector<48x24xbf16>, vector<12x24xf32> -> vector<12x24xf32>
    %155 = vector.extract_strided_slice %151 {offsets = [0, 0], sizes = [1, 24], strides = [1, 1]} : vector<3x24xf32> to vector<1x24xf32>
    %156 = vector.broadcast %155 : vector<1x24xf32> to vector<12x24xf32>
    %157 = arith.addf %154, %156 : vector<12x24xf32>
    %c0_68 = arith.constant 0 : index
    %c0_69 = arith.constant 0 : index
    %c0_70 = arith.constant 0 : index
    %c0_71 = arith.constant 0 : index
    %158 = vector.load %arg27[%c0_68, %c0_69, %c0_70, %c0_71] : memref<2x2x48x24xbf16, #tpu.memory_space<vmem>>, vector<1x1x48x24xbf16>
    %159 = vector.shape_cast %158 : vector<1x1x48x24xbf16> to vector<48x24xbf16>
    %cst_72 = arith.constant dense<0.000000e+00> : vector<12x24xf32>
    %160 = tpu.matmul %149, %159, %cst_72 {dimension_numbers = #tpu.dot_dimension_numbers<[1], [0], [0], [1], [0, 0, 1, 1], [], []>} : vector<12x48xbf16>, vector<48x24xbf16>, vector<12x24xf32> -> vector<12x24xf32>
    %161 = vector.extract_strided_slice %151 {offsets = [1, 0], sizes = [1, 24], strides = [1, 1]} : vector<3x24xf32> to vector<1x24xf32>
    %162 = vector.broadcast %161 : vector<1x24xf32> to vector<12x24xf32>
    %163 = arith.addf %160, %162 : vector<12x24xf32>
    %c0_73 = arith.constant 0 : index
    %c0_74 = arith.constant 0 : index
    %c0_75 = arith.constant 0 : index
    %c0_76 = arith.constant 0 : index
    %164 = vector.load %arg29[%c0_73, %c0_74, %c0_75, %c0_76] : memref<2x2x48x24xbf16, #tpu.memory_space<vmem>>, vector<1x1x48x24xbf16>
    %165 = vector.shape_cast %164 : vector<1x1x48x24xbf16> to vector<48x24xbf16>
    %cst_77 = arith.constant dense<0.000000e+00> : vector<12x24xf32>
    %166 = tpu.matmul %149, %165, %cst_77 {dimension_numbers = #tpu.dot_dimension_numbers<[1], [0], [0], [1], [0, 0, 1, 1], [], []>} : vector<12x48xbf16>, vector<48x24xbf16>, vector<12x24xf32> -> vector<12x24xf32>
    %167 = vector.extract_strided_slice %151 {offsets = [2, 0], sizes = [1, 24], strides = [1, 1]} : vector<3x24xf32> to vector<1x24xf32>
    %168 = vector.broadcast %167 : vector<1x24xf32> to vector<12x24xf32>
    %169 = arith.addf %166, %168 : vector<12x24xf32>
    %170 = arith.truncf %157 : vector<12x24xf32> to vector<12x24xbf16>
    %171 = arith.truncf %163 : vector<12x24xf32> to vector<12x24xbf16>
    %cst_78 = arith.constant dense<0.000000e+00> : vector<12x12xf32>
    %172 = tpu.matmul %170, %171, %cst_78 {dimension_numbers = #tpu.dot_dimension_numbers<[1], [1], [0], [0], [0, 0, 1, 0], [], []>} : vector<12x24xbf16>, vector<12x24xbf16>, vector<12x12xf32> -> vector<12x12xf32>
    %cst_79 = arith.constant 0.204124153 : f32
    %173 = vector.broadcast %cst_79 : f32 to vector<12x12xf32>
    %174 = arith.mulf %172, %173 : vector<12x12xf32>
    %cst_80 = arith.constant -1.000000e+30 : f32
    %175 = vector.broadcast %cst_80 : f32 to vector<12x12xf32>
    %176 = arith.select %28, %174, %175 : vector<12x12xi1>, vector<12x12xf32>
    %cst_81 = arith.constant dense<0xFF800000> : vector<12xf32>
    %177 = vector.multi_reduction <maximumf>, %176, %cst_81 [1] : vector<12x12xf32> to vector<12xf32>
    %178 = vector.shape_cast %177 : vector<12xf32> to vector<12x1xf32>
    %179 = vector.broadcast %178 : vector<12x1xf32> to vector<12x12xf32>
    %180 = arith.subf %176, %179 : vector<12x12xf32>
    %181 = math.exp %180 : vector<12x12xf32>
    %cst_82 = arith.constant dense<0.000000e+00> : vector<12xf32>
    %182 = vector.multi_reduction <add>, %181, %cst_82 [1] : vector<12x12xf32> to vector<12xf32>
    %183 = vector.shape_cast %182 : vector<12xf32> to vector<12x1xf32>
    %184 = vector.broadcast %183 : vector<12x1xf32> to vector<12x12xf32>
    %185 = arith.divf %181, %184 : vector<12x12xf32>
    %186 = arith.truncf %185 : vector<12x12xf32> to vector<12x12xbf16>
    %187 = arith.truncf %169 : vector<12x24xf32> to vector<12x24xbf16>
    %cst_83 = arith.constant dense<0.000000e+00> : vector<12x24xf32>
    %188 = tpu.matmul %186, %187, %cst_83 {dimension_numbers = #tpu.dot_dimension_numbers<[1], [0], [0], [1], [0, 0, 1, 1], [], []>} : vector<12x12xbf16>, vector<12x24xbf16>, vector<12x24xf32> -> vector<12x24xf32>
    %189 = arith.truncf %188 : vector<12x24xf32> to vector<12x24xbf16>
    %c0_84 = arith.constant 0 : index
    %c0_85 = arith.constant 0 : index
    %c0_86 = arith.constant 0 : index
    %c0_87 = arith.constant 0 : index
    %190 = vector.load %arg25[%c0_84, %c0_85, %c0_86, %c0_87] : memref<2x2x24x48xbf16, #tpu.memory_space<vmem>>, vector<1x1x24x48xbf16>
    %191 = vector.shape_cast %190 : vector<1x1x24x48xbf16> to vector<24x48xbf16>
    %cst_88 = arith.constant dense<0.000000e+00> : vector<12x48xf32>
    %192 = tpu.matmul %189, %191, %cst_88 {dimension_numbers = #tpu.dot_dimension_numbers<[1], [0], [0], [1], [0, 0, 1, 1], [], []>} : vector<12x24xbf16>, vector<24x48xbf16>, vector<12x48xf32> -> vector<12x48xf32>
    %c0_89 = arith.constant 0 : index
    %c1 = arith.constant 1 : index
    %c0_90 = arith.constant 0 : index
    %c0_91 = arith.constant 0 : index
    %193 = vector.load %arg26[%c0_89, %c1, %c0_90, %c0_91] : memref<2x2x3x24xf32, #tpu.memory_space<vmem>>, vector<1x1x3x24xf32>
    %194 = vector.shape_cast %193 : vector<1x1x3x24xf32> to vector<3x24xf32>
    %c0_92 = arith.constant 0 : index
    %c1_93 = arith.constant 1 : index
    %c0_94 = arith.constant 0 : index
    %c0_95 = arith.constant 0 : index
    %195 = vector.load %arg28[%c0_92, %c1_93, %c0_94, %c0_95] : memref<2x2x48x24xbf16, #tpu.memory_space<vmem>>, vector<1x1x48x24xbf16>
    %196 = vector.shape_cast %195 : vector<1x1x48x24xbf16> to vector<48x24xbf16>
    %cst_96 = arith.constant dense<0.000000e+00> : vector<12x24xf32>
    %197 = tpu.matmul %149, %196, %cst_96 {dimension_numbers = #tpu.dot_dimension_numbers<[1], [0], [0], [1], [0, 0, 1, 1], [], []>} : vector<12x48xbf16>, vector<48x24xbf16>, vector<12x24xf32> -> vector<12x24xf32>
    %198 = vector.extract_strided_slice %194 {offsets = [0, 0], sizes = [1, 24], strides = [1, 1]} : vector<3x24xf32> to vector<1x24xf32>
    %199 = vector.broadcast %198 : vector<1x24xf32> to vector<12x24xf32>
    %200 = arith.addf %197, %199 : vector<12x24xf32>
    %c0_97 = arith.constant 0 : index
    %c1_98 = arith.constant 1 : index
    %c0_99 = arith.constant 0 : index
    %c0_100 = arith.constant 0 : index
    %201 = vector.load %arg27[%c0_97, %c1_98, %c0_99, %c0_100] : memref<2x2x48x24xbf16, #tpu.memory_space<vmem>>, vector<1x1x48x24xbf16>
    %202 = vector.shape_cast %201 : vector<1x1x48x24xbf16> to vector<48x24xbf16>
    %cst_101 = arith.constant dense<0.000000e+00> : vector<12x24xf32>
    %203 = tpu.matmul %149, %202, %cst_101 {dimension_numbers = #tpu.dot_dimension_numbers<[1], [0], [0], [1], [0, 0, 1, 1], [], []>} : vector<12x48xbf16>, vector<48x24xbf16>, vector<12x24xf32> -> vector<12x24xf32>
    %204 = vector.extract_strided_slice %194 {offsets = [1, 0], sizes = [1, 24], strides = [1, 1]} : vector<3x24xf32> to vector<1x24xf32>
    %205 = vector.broadcast %204 : vector<1x24xf32> to vector<12x24xf32>
    %206 = arith.addf %203, %205 : vector<12x24xf32>
    %c0_102 = arith.constant 0 : index
    %c1_103 = arith.constant 1 : index
    %c0_104 = arith.constant 0 : index
    %c0_105 = arith.constant 0 : index
    %207 = vector.load %arg29[%c0_102, %c1_103, %c0_104, %c0_105] : memref<2x2x48x24xbf16, #tpu.memory_space<vmem>>, vector<1x1x48x24xbf16>
    %208 = vector.shape_cast %207 : vector<1x1x48x24xbf16> to vector<48x24xbf16>
    %cst_106 = arith.constant dense<0.000000e+00> : vector<12x24xf32>
    %209 = tpu.matmul %149, %208, %cst_106 {dimension_numbers = #tpu.dot_dimension_numbers<[1], [0], [0], [1], [0, 0, 1, 1], [], []>} : vector<12x48xbf16>, vector<48x24xbf16>, vector<12x24xf32> -> vector<12x24xf32>
    %210 = vector.extract_strided_slice %194 {offsets = [2, 0], sizes = [1, 24], strides = [1, 1]} : vector<3x24xf32> to vector<1x24xf32>
    %211 = vector.broadcast %210 : vector<1x24xf32> to vector<12x24xf32>
    %212 = arith.addf %209, %211 : vector<12x24xf32>
    %213 = arith.truncf %200 : vector<12x24xf32> to vector<12x24xbf16>
    %214 = arith.truncf %206 : vector<12x24xf32> to vector<12x24xbf16>
    %cst_107 = arith.constant dense<0.000000e+00> : vector<12x12xf32>
    %215 = tpu.matmul %213, %214, %cst_107 {dimension_numbers = #tpu.dot_dimension_numbers<[1], [1], [0], [0], [0, 0, 1, 0], [], []>} : vector<12x24xbf16>, vector<12x24xbf16>, vector<12x12xf32> -> vector<12x12xf32>
    %cst_108 = arith.constant 0.204124153 : f32
    %216 = vector.broadcast %cst_108 : f32 to vector<12x12xf32>
    %217 = arith.mulf %215, %216 : vector<12x12xf32>
    %cst_109 = arith.constant -1.000000e+30 : f32
    %218 = vector.broadcast %cst_109 : f32 to vector<12x12xf32>
    %219 = arith.select %28, %217, %218 : vector<12x12xi1>, vector<12x12xf32>
    %cst_110 = arith.constant dense<0xFF800000> : vector<12xf32>
    %220 = vector.multi_reduction <maximumf>, %219, %cst_110 [1] : vector<12x12xf32> to vector<12xf32>
    %221 = vector.shape_cast %220 : vector<12xf32> to vector<12x1xf32>
    %222 = vector.broadcast %221 : vector<12x1xf32> to vector<12x12xf32>
    %223 = arith.subf %219, %222 : vector<12x12xf32>
    %224 = math.exp %223 : vector<12x12xf32>
    %cst_111 = arith.constant dense<0.000000e+00> : vector<12xf32>
    %225 = vector.multi_reduction <add>, %224, %cst_111 [1] : vector<12x12xf32> to vector<12xf32>
    %226 = vector.shape_cast %225 : vector<12xf32> to vector<12x1xf32>
    %227 = vector.broadcast %226 : vector<12x1xf32> to vector<12x12xf32>
    %228 = arith.divf %224, %227 : vector<12x12xf32>
    %229 = arith.truncf %228 : vector<12x12xf32> to vector<12x12xbf16>
    %230 = arith.truncf %212 : vector<12x24xf32> to vector<12x24xbf16>
    %cst_112 = arith.constant dense<0.000000e+00> : vector<12x24xf32>
    %231 = tpu.matmul %229, %230, %cst_112 {dimension_numbers = #tpu.dot_dimension_numbers<[1], [0], [0], [1], [0, 0, 1, 1], [], []>} : vector<12x12xbf16>, vector<12x24xbf16>, vector<12x24xf32> -> vector<12x24xf32>
    %232 = arith.truncf %231 : vector<12x24xf32> to vector<12x24xbf16>
    %c0_113 = arith.constant 0 : index
    %c1_114 = arith.constant 1 : index
    %c0_115 = arith.constant 0 : index
    %c0_116 = arith.constant 0 : index
    %233 = vector.load %arg25[%c0_113, %c1_114, %c0_115, %c0_116] : memref<2x2x24x48xbf16, #tpu.memory_space<vmem>>, vector<1x1x24x48xbf16>
    %234 = vector.shape_cast %233 : vector<1x1x24x48xbf16> to vector<24x48xbf16>
    %cst_117 = arith.constant dense<0.000000e+00> : vector<12x48xf32>
    %235 = tpu.matmul %232, %234, %cst_117 {dimension_numbers = #tpu.dot_dimension_numbers<[1], [0], [0], [1], [0, 0, 1, 1], [], []>} : vector<12x24xbf16>, vector<24x48xbf16>, vector<12x48xf32> -> vector<12x48xf32>
    %236 = arith.addf %192, %235 : vector<12x48xf32>
    %237 = arith.addf %122, %236 : vector<12x48xf32>
    %238 = vector.extract_strided_slice %126 {offsets = [0, 0], sizes = [1, 48], strides = [1, 1]} : vector<2x48xf32> to vector<1x48xf32>
    %239 = vector.broadcast %238 : vector<1x48xf32> to vector<12x48xf32>
    %240 = arith.addf %237, %239 : vector<12x48xf32>
    %241 = vector.extract_strided_slice %124 {offsets = [2, 0], sizes = [1, 48], strides = [1, 1]} : vector<4x48xf32> to vector<1x48xf32>
    %242 = vector.extract_strided_slice %124 {offsets = [3, 0], sizes = [1, 48], strides = [1, 1]} : vector<4x48xf32> to vector<1x48xf32>
    %cst_118 = arith.constant dense<0.000000e+00> : vector<12xf32>
    %243 = vector.multi_reduction <add>, %240, %cst_118 [1] : vector<12x48xf32> to vector<12xf32>
    %244 = vector.shape_cast %243 : vector<12xf32> to vector<12x1xf32>
    %cst_119 = arith.constant 4.800000e+01 : f32
    %245 = vector.broadcast %cst_119 : f32 to vector<12x1xf32>
    %246 = arith.divf %244, %245 : vector<12x1xf32>
    %247 = vector.broadcast %246 : vector<12x1xf32> to vector<12x48xf32>
    %248 = arith.subf %240, %247 : vector<12x48xf32>
    %249 = arith.mulf %248, %248 : vector<12x48xf32>
    %cst_120 = arith.constant dense<0.000000e+00> : vector<12xf32>
    %250 = vector.multi_reduction <add>, %249, %cst_120 [1] : vector<12x48xf32> to vector<12xf32>
    %251 = vector.shape_cast %250 : vector<12xf32> to vector<12x1xf32>
    %cst_121 = arith.constant 4.800000e+01 : f32
    %252 = vector.broadcast %cst_121 : f32 to vector<12x1xf32>
    %253 = arith.divf %251, %252 : vector<12x1xf32>
    %cst_122 = arith.constant 9.99999974E-6 : f32
    %254 = vector.broadcast %cst_122 : f32 to vector<12x1xf32>
    %255 = arith.addf %253, %254 : vector<12x1xf32>
    %256 = math.rsqrt %255 : vector<12x1xf32>
    %257 = vector.broadcast %256 : vector<12x1xf32> to vector<12x48xf32>
    %258 = arith.mulf %248, %257 : vector<12x48xf32>
    %259 = vector.broadcast %241 : vector<1x48xf32> to vector<12x48xf32>
    %260 = arith.mulf %258, %259 : vector<12x48xf32>
    %261 = vector.broadcast %242 : vector<1x48xf32> to vector<12x48xf32>
    %262 = arith.addf %260, %261 : vector<12x48xf32>
    %263 = arith.truncf %262 : vector<12x48xf32> to vector<12x48xbf16>
    %c0_123 = arith.constant 0 : index
    %c0_124 = arith.constant 0 : index
    %c0_125 = arith.constant 0 : index
    %264 = vector.load %arg23[%c0_123, %c0_124, %c0_125] : memref<2x48x192xbf16, #tpu.memory_space<vmem>>, vector<1x48x192xbf16>
    %265 = vector.shape_cast %264 : vector<1x48x192xbf16> to vector<48x192xbf16>
    %cst_126 = arith.constant dense<0.000000e+00> : vector<12x192xf32>
    %266 = tpu.matmul %263, %265, %cst_126 {dimension_numbers = #tpu.dot_dimension_numbers<[1], [0], [0], [1], [0, 0, 1, 1], [], []>} : vector<12x48xbf16>, vector<48x192xbf16>, vector<12x192xf32> -> vector<12x192xf32>
    %c0_127 = arith.constant 0 : index
    %c0_128 = arith.constant 0 : index
    %c0_129 = arith.constant 0 : index
    %267 = vector.load %arg22[%c0_127, %c0_128, %c0_129] : memref<2x1x192xf32, #tpu.memory_space<vmem>>, vector<1x1x192xf32>
    %268 = vector.shape_cast %267 : vector<1x1x192xf32> to vector<1x192xf32>
    %269 = vector.broadcast %268 : vector<1x192xf32> to vector<12x192xf32>
    %270 = arith.addf %266, %269 : vector<12x192xf32>
    %271 = arith.mulf %270, %270 : vector<12x192xf32>
    %272 = arith.mulf %270, %271 : vector<12x192xf32>
    %cst_130 = arith.constant 4.471500e-02 : f32
    %273 = vector.broadcast %cst_130 : f32 to vector<12x192xf32>
    %274 = arith.mulf %273, %272 : vector<12x192xf32>
    %275 = arith.addf %270, %274 : vector<12x192xf32>
    %cst_131 = arith.constant 0.797884583 : f32
    %276 = vector.broadcast %cst_131 : f32 to vector<12x192xf32>
    %277 = arith.mulf %276, %275 : vector<12x192xf32>
    %278 = math.tanh %277 : vector<12x192xf32>
    %cst_132 = arith.constant 1.000000e+00 : f32
    %279 = vector.broadcast %cst_132 : f32 to vector<12x192xf32>
    %280 = arith.addf %279, %278 : vector<12x192xf32>
    %cst_133 = arith.constant 5.000000e-01 : f32
    %281 = vector.broadcast %cst_133 : f32 to vector<12x192xf32>
    %282 = arith.mulf %281, %280 : vector<12x192xf32>
    %283 = arith.mulf %270, %282 : vector<12x192xf32>
    %284 = arith.truncf %283 : vector<12x192xf32> to vector<12x192xbf16>
    %c0_134 = arith.constant 0 : index
    %c0_135 = arith.constant 0 : index
    %c0_136 = arith.constant 0 : index
    %285 = vector.load %arg24[%c0_134, %c0_135, %c0_136] : memref<2x192x48xbf16, #tpu.memory_space<vmem>>, vector<1x192x48xbf16>
    %286 = vector.shape_cast %285 : vector<1x192x48xbf16> to vector<192x48xbf16>
    %cst_137 = arith.constant dense<0.000000e+00> : vector<12x48xf32>
    %287 = tpu.matmul %284, %286, %cst_137 {dimension_numbers = #tpu.dot_dimension_numbers<[1], [0], [0], [1], [0, 0, 1, 1], [], []>} : vector<12x192xbf16>, vector<192x48xbf16>, vector<12x48xf32> -> vector<12x48xf32>
    %288 = vector.extract_strided_slice %126 {offsets = [1, 0], sizes = [1, 48], strides = [1, 1]} : vector<2x48xf32> to vector<1x48xf32>
    %289 = vector.broadcast %288 : vector<1x48xf32> to vector<12x48xf32>
    %290 = arith.addf %287, %289 : vector<12x48xf32>
    %291 = arith.addf %240, %290 : vector<12x48xf32>
    %c1_138 = arith.constant 1 : index
    %c0_139 = arith.constant 0 : index
    %c0_140 = arith.constant 0 : index
    %292 = vector.load %arg21[%c1_138, %c0_139, %c0_140] : memref<2x4x48xf32, #tpu.memory_space<vmem>>, vector<1x4x48xf32>
    %293 = vector.shape_cast %292 : vector<1x4x48xf32> to vector<4x48xf32>
    %c1_141 = arith.constant 1 : index
    %c0_142 = arith.constant 0 : index
    %c0_143 = arith.constant 0 : index
    %294 = vector.load %arg20[%c1_141, %c0_142, %c0_143] : memref<2x2x48xf32, #tpu.memory_space<vmem>>, vector<1x2x48xf32>
    %295 = vector.shape_cast %294 : vector<1x2x48xf32> to vector<2x48xf32>
    %296 = vector.extract_strided_slice %293 {offsets = [0, 0], sizes = [1, 48], strides = [1, 1]} : vector<4x48xf32> to vector<1x48xf32>
    %297 = vector.extract_strided_slice %293 {offsets = [1, 0], sizes = [1, 48], strides = [1, 1]} : vector<4x48xf32> to vector<1x48xf32>
    %cst_144 = arith.constant dense<0.000000e+00> : vector<12xf32>
    %298 = vector.multi_reduction <add>, %291, %cst_144 [1] : vector<12x48xf32> to vector<12xf32>
    %299 = vector.shape_cast %298 : vector<12xf32> to vector<12x1xf32>
    %cst_145 = arith.constant 4.800000e+01 : f32
    %300 = vector.broadcast %cst_145 : f32 to vector<12x1xf32>
    %301 = arith.divf %299, %300 : vector<12x1xf32>
    %302 = vector.broadcast %301 : vector<12x1xf32> to vector<12x48xf32>
    %303 = arith.subf %291, %302 : vector<12x48xf32>
    %304 = arith.mulf %303, %303 : vector<12x48xf32>
    %cst_146 = arith.constant dense<0.000000e+00> : vector<12xf32>
    %305 = vector.multi_reduction <add>, %304, %cst_146 [1] : vector<12x48xf32> to vector<12xf32>
    %306 = vector.shape_cast %305 : vector<12xf32> to vector<12x1xf32>
    %cst_147 = arith.constant 4.800000e+01 : f32
    %307 = vector.broadcast %cst_147 : f32 to vector<12x1xf32>
    %308 = arith.divf %306, %307 : vector<12x1xf32>
    %cst_148 = arith.constant 9.99999974E-6 : f32
    %309 = vector.broadcast %cst_148 : f32 to vector<12x1xf32>
    %310 = arith.addf %308, %309 : vector<12x1xf32>
    %311 = math.rsqrt %310 : vector<12x1xf32>
    %312 = vector.broadcast %311 : vector<12x1xf32> to vector<12x48xf32>
    %313 = arith.mulf %303, %312 : vector<12x48xf32>
    %314 = vector.broadcast %296 : vector<1x48xf32> to vector<12x48xf32>
    %315 = arith.mulf %313, %314 : vector<12x48xf32>
    %316 = vector.broadcast %297 : vector<1x48xf32> to vector<12x48xf32>
    %317 = arith.addf %315, %316 : vector<12x48xf32>
    %318 = arith.truncf %317 : vector<12x48xf32> to vector<12x48xbf16>
    %c1_149 = arith.constant 1 : index
    %c0_150 = arith.constant 0 : index
    %c0_151 = arith.constant 0 : index
    %c0_152 = arith.constant 0 : index
    %319 = vector.load %arg26[%c1_149, %c0_150, %c0_151, %c0_152] : memref<2x2x3x24xf32, #tpu.memory_space<vmem>>, vector<1x1x3x24xf32>
    %320 = vector.shape_cast %319 : vector<1x1x3x24xf32> to vector<3x24xf32>
    %c1_153 = arith.constant 1 : index
    %c0_154 = arith.constant 0 : index
    %c0_155 = arith.constant 0 : index
    %c0_156 = arith.constant 0 : index
    %321 = vector.load %arg28[%c1_153, %c0_154, %c0_155, %c0_156] : memref<2x2x48x24xbf16, #tpu.memory_space<vmem>>, vector<1x1x48x24xbf16>
    %322 = vector.shape_cast %321 : vector<1x1x48x24xbf16> to vector<48x24xbf16>
    %cst_157 = arith.constant dense<0.000000e+00> : vector<12x24xf32>
    %323 = tpu.matmul %318, %322, %cst_157 {dimension_numbers = #tpu.dot_dimension_numbers<[1], [0], [0], [1], [0, 0, 1, 1], [], []>} : vector<12x48xbf16>, vector<48x24xbf16>, vector<12x24xf32> -> vector<12x24xf32>
    %324 = vector.extract_strided_slice %320 {offsets = [0, 0], sizes = [1, 24], strides = [1, 1]} : vector<3x24xf32> to vector<1x24xf32>
    %325 = vector.broadcast %324 : vector<1x24xf32> to vector<12x24xf32>
    %326 = arith.addf %323, %325 : vector<12x24xf32>
    %c1_158 = arith.constant 1 : index
    %c0_159 = arith.constant 0 : index
    %c0_160 = arith.constant 0 : index
    %c0_161 = arith.constant 0 : index
    %327 = vector.load %arg27[%c1_158, %c0_159, %c0_160, %c0_161] : memref<2x2x48x24xbf16, #tpu.memory_space<vmem>>, vector<1x1x48x24xbf16>
    %328 = vector.shape_cast %327 : vector<1x1x48x24xbf16> to vector<48x24xbf16>
    %cst_162 = arith.constant dense<0.000000e+00> : vector<12x24xf32>
    %329 = tpu.matmul %318, %328, %cst_162 {dimension_numbers = #tpu.dot_dimension_numbers<[1], [0], [0], [1], [0, 0, 1, 1], [], []>} : vector<12x48xbf16>, vector<48x24xbf16>, vector<12x24xf32> -> vector<12x24xf32>
    %330 = vector.extract_strided_slice %320 {offsets = [1, 0], sizes = [1, 24], strides = [1, 1]} : vector<3x24xf32> to vector<1x24xf32>
    %331 = vector.broadcast %330 : vector<1x24xf32> to vector<12x24xf32>
    %332 = arith.addf %329, %331 : vector<12x24xf32>
    %c1_163 = arith.constant 1 : index
    %c0_164 = arith.constant 0 : index
    %c0_165 = arith.constant 0 : index
    %c0_166 = arith.constant 0 : index
    %333 = vector.load %arg29[%c1_163, %c0_164, %c0_165, %c0_166] : memref<2x2x48x24xbf16, #tpu.memory_space<vmem>>, vector<1x1x48x24xbf16>
    %334 = vector.shape_cast %333 : vector<1x1x48x24xbf16> to vector<48x24xbf16>
    %cst_167 = arith.constant dense<0.000000e+00> : vector<12x24xf32>
    %335 = tpu.matmul %318, %334, %cst_167 {dimension_numbers = #tpu.dot_dimension_numbers<[1], [0], [0], [1], [0, 0, 1, 1], [], []>} : vector<12x48xbf16>, vector<48x24xbf16>, vector<12x24xf32> -> vector<12x24xf32>
    %336 = vector.extract_strided_slice %320 {offsets = [2, 0], sizes = [1, 24], strides = [1, 1]} : vector<3x24xf32> to vector<1x24xf32>
    %337 = vector.broadcast %336 : vector<1x24xf32> to vector<12x24xf32>
    %338 = arith.addf %335, %337 : vector<12x24xf32>
    %339 = arith.truncf %326 : vector<12x24xf32> to vector<12x24xbf16>
    %340 = arith.truncf %332 : vector<12x24xf32> to vector<12x24xbf16>
    %cst_168 = arith.constant dense<0.000000e+00> : vector<12x12xf32>
    %341 = tpu.matmul %339, %340, %cst_168 {dimension_numbers = #tpu.dot_dimension_numbers<[1], [1], [0], [0], [0, 0, 1, 0], [], []>} : vector<12x24xbf16>, vector<12x24xbf16>, vector<12x12xf32> -> vector<12x12xf32>
    %cst_169 = arith.constant 0.204124153 : f32
    %342 = vector.broadcast %cst_169 : f32 to vector<12x12xf32>
    %343 = arith.mulf %341, %342 : vector<12x12xf32>
    %cst_170 = arith.constant -1.000000e+30 : f32
    %344 = vector.broadcast %cst_170 : f32 to vector<12x12xf32>
    %345 = arith.select %28, %343, %344 : vector<12x12xi1>, vector<12x12xf32>
    %cst_171 = arith.constant dense<0xFF800000> : vector<12xf32>
    %346 = vector.multi_reduction <maximumf>, %345, %cst_171 [1] : vector<12x12xf32> to vector<12xf32>
    %347 = vector.shape_cast %346 : vector<12xf32> to vector<12x1xf32>
    %348 = vector.broadcast %347 : vector<12x1xf32> to vector<12x12xf32>
    %349 = arith.subf %345, %348 : vector<12x12xf32>
    %350 = math.exp %349 : vector<12x12xf32>
    %cst_172 = arith.constant dense<0.000000e+00> : vector<12xf32>
    %351 = vector.multi_reduction <add>, %350, %cst_172 [1] : vector<12x12xf32> to vector<12xf32>
    %352 = vector.shape_cast %351 : vector<12xf32> to vector<12x1xf32>
    %353 = vector.broadcast %352 : vector<12x1xf32> to vector<12x12xf32>
    %354 = arith.divf %350, %353 : vector<12x12xf32>
    %355 = arith.truncf %354 : vector<12x12xf32> to vector<12x12xbf16>
    %356 = arith.truncf %338 : vector<12x24xf32> to vector<12x24xbf16>
    %cst_173 = arith.constant dense<0.000000e+00> : vector<12x24xf32>
    %357 = tpu.matmul %355, %356, %cst_173 {dimension_numbers = #tpu.dot_dimension_numbers<[1], [0], [0], [1], [0, 0, 1, 1], [], []>} : vector<12x12xbf16>, vector<12x24xbf16>, vector<12x24xf32> -> vector<12x24xf32>
    %358 = arith.truncf %357 : vector<12x24xf32> to vector<12x24xbf16>
    %c1_174 = arith.constant 1 : index
    %c0_175 = arith.constant 0 : index
    %c0_176 = arith.constant 0 : index
    %c0_177 = arith.constant 0 : index
    %359 = vector.load %arg25[%c1_174, %c0_175, %c0_176, %c0_177] : memref<2x2x24x48xbf16, #tpu.memory_space<vmem>>, vector<1x1x24x48xbf16>
    %360 = vector.shape_cast %359 : vector<1x1x24x48xbf16> to vector<24x48xbf16>
    %cst_178 = arith.constant dense<0.000000e+00> : vector<12x48xf32>
    %361 = tpu.matmul %358, %360, %cst_178 {dimension_numbers = #tpu.dot_dimension_numbers<[1], [0], [0], [1], [0, 0, 1, 1], [], []>} : vector<12x24xbf16>, vector<24x48xbf16>, vector<12x48xf32> -> vector<12x48xf32>
    %c1_179 = arith.constant 1 : index
    %c1_180 = arith.constant 1 : index
    %c0_181 = arith.constant 0 : index
    %c0_182 = arith.constant 0 : index
    %362 = vector.load %arg26[%c1_179, %c1_180, %c0_181, %c0_182] : memref<2x2x3x24xf32, #tpu.memory_space<vmem>>, vector<1x1x3x24xf32>
    %363 = vector.shape_cast %362 : vector<1x1x3x24xf32> to vector<3x24xf32>
    %c1_183 = arith.constant 1 : index
    %c1_184 = arith.constant 1 : index
    %c0_185 = arith.constant 0 : index
    %c0_186 = arith.constant 0 : index
    %364 = vector.load %arg28[%c1_183, %c1_184, %c0_185, %c0_186] : memref<2x2x48x24xbf16, #tpu.memory_space<vmem>>, vector<1x1x48x24xbf16>
    %365 = vector.shape_cast %364 : vector<1x1x48x24xbf16> to vector<48x24xbf16>
    %cst_187 = arith.constant dense<0.000000e+00> : vector<12x24xf32>
    %366 = tpu.matmul %318, %365, %cst_187 {dimension_numbers = #tpu.dot_dimension_numbers<[1], [0], [0], [1], [0, 0, 1, 1], [], []>} : vector<12x48xbf16>, vector<48x24xbf16>, vector<12x24xf32> -> vector<12x24xf32>
    %367 = vector.extract_strided_slice %363 {offsets = [0, 0], sizes = [1, 24], strides = [1, 1]} : vector<3x24xf32> to vector<1x24xf32>
    %368 = vector.broadcast %367 : vector<1x24xf32> to vector<12x24xf32>
    %369 = arith.addf %366, %368 : vector<12x24xf32>
    %c1_188 = arith.constant 1 : index
    %c1_189 = arith.constant 1 : index
    %c0_190 = arith.constant 0 : index
    %c0_191 = arith.constant 0 : index
    %370 = vector.load %arg27[%c1_188, %c1_189, %c0_190, %c0_191] : memref<2x2x48x24xbf16, #tpu.memory_space<vmem>>, vector<1x1x48x24xbf16>
    %371 = vector.shape_cast %370 : vector<1x1x48x24xbf16> to vector<48x24xbf16>
    %cst_192 = arith.constant dense<0.000000e+00> : vector<12x24xf32>
    %372 = tpu.matmul %318, %371, %cst_192 {dimension_numbers = #tpu.dot_dimension_numbers<[1], [0], [0], [1], [0, 0, 1, 1], [], []>} : vector<12x48xbf16>, vector<48x24xbf16>, vector<12x24xf32> -> vector<12x24xf32>
    %373 = vector.extract_strided_slice %363 {offsets = [1, 0], sizes = [1, 24], strides = [1, 1]} : vector<3x24xf32> to vector<1x24xf32>
    %374 = vector.broadcast %373 : vector<1x24xf32> to vector<12x24xf32>
    %375 = arith.addf %372, %374 : vector<12x24xf32>
    %c1_193 = arith.constant 1 : index
    %c1_194 = arith.constant 1 : index
    %c0_195 = arith.constant 0 : index
    %c0_196 = arith.constant 0 : index
    %376 = vector.load %arg29[%c1_193, %c1_194, %c0_195, %c0_196] : memref<2x2x48x24xbf16, #tpu.memory_space<vmem>>, vector<1x1x48x24xbf16>
    %377 = vector.shape_cast %376 : vector<1x1x48x24xbf16> to vector<48x24xbf16>
    %cst_197 = arith.constant dense<0.000000e+00> : vector<12x24xf32>
    %378 = tpu.matmul %318, %377, %cst_197 {dimension_numbers = #tpu.dot_dimension_numbers<[1], [0], [0], [1], [0, 0, 1, 1], [], []>} : vector<12x48xbf16>, vector<48x24xbf16>, vector<12x24xf32> -> vector<12x24xf32>
    %379 = vector.extract_strided_slice %363 {offsets = [2, 0], sizes = [1, 24], strides = [1, 1]} : vector<3x24xf32> to vector<1x24xf32>
    %380 = vector.broadcast %379 : vector<1x24xf32> to vector<12x24xf32>
    %381 = arith.addf %378, %380 : vector<12x24xf32>
    %382 = arith.truncf %369 : vector<12x24xf32> to vector<12x24xbf16>
    %383 = arith.truncf %375 : vector<12x24xf32> to vector<12x24xbf16>
    %cst_198 = arith.constant dense<0.000000e+00> : vector<12x12xf32>
    %384 = tpu.matmul %382, %383, %cst_198 {dimension_numbers = #tpu.dot_dimension_numbers<[1], [1], [0], [0], [0, 0, 1, 0], [], []>} : vector<12x24xbf16>, vector<12x24xbf16>, vector<12x12xf32> -> vector<12x12xf32>
    %cst_199 = arith.constant 0.204124153 : f32
    %385 = vector.broadcast %cst_199 : f32 to vector<12x12xf32>
    %386 = arith.mulf %384, %385 : vector<12x12xf32>
    %cst_200 = arith.constant -1.000000e+30 : f32
    %387 = vector.broadcast %cst_200 : f32 to vector<12x12xf32>
    %388 = arith.select %28, %386, %387 : vector<12x12xi1>, vector<12x12xf32>
    %cst_201 = arith.constant dense<0xFF800000> : vector<12xf32>
    %389 = vector.multi_reduction <maximumf>, %388, %cst_201 [1] : vector<12x12xf32> to vector<12xf32>
    %390 = vector.shape_cast %389 : vector<12xf32> to vector<12x1xf32>
    %391 = vector.broadcast %390 : vector<12x1xf32> to vector<12x12xf32>
    %392 = arith.subf %388, %391 : vector<12x12xf32>
    %393 = math.exp %392 : vector<12x12xf32>
    %cst_202 = arith.constant dense<0.000000e+00> : vector<12xf32>
    %394 = vector.multi_reduction <add>, %393, %cst_202 [1] : vector<12x12xf32> to vector<12xf32>
    %395 = vector.shape_cast %394 : vector<12xf32> to vector<12x1xf32>
    %396 = vector.broadcast %395 : vector<12x1xf32> to vector<12x12xf32>
    %397 = arith.divf %393, %396 : vector<12x12xf32>
    %398 = arith.truncf %397 : vector<12x12xf32> to vector<12x12xbf16>
    %399 = arith.truncf %381 : vector<12x24xf32> to vector<12x24xbf16>
    %cst_203 = arith.constant dense<0.000000e+00> : vector<12x24xf32>
    %400 = tpu.matmul %398, %399, %cst_203 {dimension_numbers = #tpu.dot_dimension_numbers<[1], [0], [0], [1], [0, 0, 1, 1], [], []>} : vector<12x12xbf16>, vector<12x24xbf16>, vector<12x24xf32> -> vector<12x24xf32>
    %401 = arith.truncf %400 : vector<12x24xf32> to vector<12x24xbf16>
    %c1_204 = arith.constant 1 : index
    %c1_205 = arith.constant 1 : index
    %c0_206 = arith.constant 0 : index
    %c0_207 = arith.constant 0 : index
    %402 = vector.load %arg25[%c1_204, %c1_205, %c0_206, %c0_207] : memref<2x2x24x48xbf16, #tpu.memory_space<vmem>>, vector<1x1x24x48xbf16>
    %403 = vector.shape_cast %402 : vector<1x1x24x48xbf16> to vector<24x48xbf16>
    %cst_208 = arith.constant dense<0.000000e+00> : vector<12x48xf32>
    %404 = tpu.matmul %401, %403, %cst_208 {dimension_numbers = #tpu.dot_dimension_numbers<[1], [0], [0], [1], [0, 0, 1, 1], [], []>} : vector<12x24xbf16>, vector<24x48xbf16>, vector<12x48xf32> -> vector<12x48xf32>
    %405 = arith.addf %361, %404 : vector<12x48xf32>
    %406 = arith.addf %291, %405 : vector<12x48xf32>
    %407 = vector.extract_strided_slice %295 {offsets = [0, 0], sizes = [1, 48], strides = [1, 1]} : vector<2x48xf32> to vector<1x48xf32>
    %408 = vector.broadcast %407 : vector<1x48xf32> to vector<12x48xf32>
    %409 = arith.addf %406, %408 : vector<12x48xf32>
    %410 = vector.extract_strided_slice %293 {offsets = [2, 0], sizes = [1, 48], strides = [1, 1]} : vector<4x48xf32> to vector<1x48xf32>
    %411 = vector.extract_strided_slice %293 {offsets = [3, 0], sizes = [1, 48], strides = [1, 1]} : vector<4x48xf32> to vector<1x48xf32>
    %cst_209 = arith.constant dense<0.000000e+00> : vector<12xf32>
    %412 = vector.multi_reduction <add>, %409, %cst_209 [1] : vector<12x48xf32> to vector<12xf32>
    %413 = vector.shape_cast %412 : vector<12xf32> to vector<12x1xf32>
    %cst_210 = arith.constant 4.800000e+01 : f32
    %414 = vector.broadcast %cst_210 : f32 to vector<12x1xf32>
    %415 = arith.divf %413, %414 : vector<12x1xf32>
    %416 = vector.broadcast %415 : vector<12x1xf32> to vector<12x48xf32>
    %417 = arith.subf %409, %416 : vector<12x48xf32>
    %418 = arith.mulf %417, %417 : vector<12x48xf32>
    %cst_211 = arith.constant dense<0.000000e+00> : vector<12xf32>
    %419 = vector.multi_reduction <add>, %418, %cst_211 [1] : vector<12x48xf32> to vector<12xf32>
    %420 = vector.shape_cast %419 : vector<12xf32> to vector<12x1xf32>
    %cst_212 = arith.constant 4.800000e+01 : f32
    %421 = vector.broadcast %cst_212 : f32 to vector<12x1xf32>
    %422 = arith.divf %420, %421 : vector<12x1xf32>
    %cst_213 = arith.constant 9.99999974E-6 : f32
    %423 = vector.broadcast %cst_213 : f32 to vector<12x1xf32>
    %424 = arith.addf %422, %423 : vector<12x1xf32>
    %425 = math.rsqrt %424 : vector<12x1xf32>
    %426 = vector.broadcast %425 : vector<12x1xf32> to vector<12x48xf32>
    %427 = arith.mulf %417, %426 : vector<12x48xf32>
    %428 = vector.broadcast %410 : vector<1x48xf32> to vector<12x48xf32>
    %429 = arith.mulf %427, %428 : vector<12x48xf32>
    %430 = vector.broadcast %411 : vector<1x48xf32> to vector<12x48xf32>
    %431 = arith.addf %429, %430 : vector<12x48xf32>
    %432 = arith.truncf %431 : vector<12x48xf32> to vector<12x48xbf16>
    %c1_214 = arith.constant 1 : index
    %c0_215 = arith.constant 0 : index
    %c0_216 = arith.constant 0 : index
    %433 = vector.load %arg23[%c1_214, %c0_215, %c0_216] : memref<2x48x192xbf16, #tpu.memory_space<vmem>>, vector<1x48x192xbf16>
    %434 = vector.shape_cast %433 : vector<1x48x192xbf16> to vector<48x192xbf16>
    %cst_217 = arith.constant dense<0.000000e+00> : vector<12x192xf32>
    %435 = tpu.matmul %432, %434, %cst_217 {dimension_numbers = #tpu.dot_dimension_numbers<[1], [0], [0], [1], [0, 0, 1, 1], [], []>} : vector<12x48xbf16>, vector<48x192xbf16>, vector<12x192xf32> -> vector<12x192xf32>
    %c1_218 = arith.constant 1 : index
    %c0_219 = arith.constant 0 : index
    %c0_220 = arith.constant 0 : index
    %436 = vector.load %arg22[%c1_218, %c0_219, %c0_220] : memref<2x1x192xf32, #tpu.memory_space<vmem>>, vector<1x1x192xf32>
    %437 = vector.shape_cast %436 : vector<1x1x192xf32> to vector<1x192xf32>
    %438 = vector.broadcast %437 : vector<1x192xf32> to vector<12x192xf32>
    %439 = arith.addf %435, %438 : vector<12x192xf32>
    %440 = arith.mulf %439, %439 : vector<12x192xf32>
    %441 = arith.mulf %439, %440 : vector<12x192xf32>
    %cst_221 = arith.constant 4.471500e-02 : f32
    %442 = vector.broadcast %cst_221 : f32 to vector<12x192xf32>
    %443 = arith.mulf %442, %441 : vector<12x192xf32>
    %444 = arith.addf %439, %443 : vector<12x192xf32>
    %cst_222 = arith.constant 0.797884583 : f32
    %445 = vector.broadcast %cst_222 : f32 to vector<12x192xf32>
    %446 = arith.mulf %445, %444 : vector<12x192xf32>
    %447 = math.tanh %446 : vector<12x192xf32>
    %cst_223 = arith.constant 1.000000e+00 : f32
    %448 = vector.broadcast %cst_223 : f32 to vector<12x192xf32>
    %449 = arith.addf %448, %447 : vector<12x192xf32>
    %cst_224 = arith.constant 5.000000e-01 : f32
    %450 = vector.broadcast %cst_224 : f32 to vector<12x192xf32>
    %451 = arith.mulf %450, %449 : vector<12x192xf32>
    %452 = arith.mulf %439, %451 : vector<12x192xf32>
    %453 = arith.truncf %452 : vector<12x192xf32> to vector<12x192xbf16>
    %c1_225 = arith.constant 1 : index
    %c0_226 = arith.constant 0 : index
    %c0_227 = arith.constant 0 : index
    %454 = vector.load %arg24[%c1_225, %c0_226, %c0_227] : memref<2x192x48xbf16, #tpu.memory_space<vmem>>, vector<1x192x48xbf16>
    %455 = vector.shape_cast %454 : vector<1x192x48xbf16> to vector<192x48xbf16>
    %cst_228 = arith.constant dense<0.000000e+00> : vector<12x48xf32>
    %456 = tpu.matmul %453, %455, %cst_228 {dimension_numbers = #tpu.dot_dimension_numbers<[1], [0], [0], [1], [0, 0, 1, 1], [], []>} : vector<12x192xbf16>, vector<192x48xbf16>, vector<12x48xf32> -> vector<12x48xf32>
    %457 = vector.extract_strided_slice %295 {offsets = [1, 0], sizes = [1, 48], strides = [1, 1]} : vector<2x48xf32> to vector<1x48xf32>
    %458 = vector.broadcast %457 : vector<1x48xf32> to vector<12x48xf32>
    %459 = arith.addf %456, %458 : vector<12x48xf32>
    %460 = arith.addf %409, %459 : vector<12x48xf32>
    %461 = vector.extract_strided_slice %61 {offsets = [4, 0], sizes = [1, 48], strides = [1, 1]} : vector<6x48xf32> to vector<1x48xf32>
    %462 = vector.extract_strided_slice %61 {offsets = [5, 0], sizes = [1, 48], strides = [1, 1]} : vector<6x48xf32> to vector<1x48xf32>
    %cst_229 = arith.constant dense<0.000000e+00> : vector<12xf32>
    %463 = vector.multi_reduction <add>, %460, %cst_229 [1] : vector<12x48xf32> to vector<12xf32>
    %464 = vector.shape_cast %463 : vector<12xf32> to vector<12x1xf32>
    %cst_230 = arith.constant 4.800000e+01 : f32
    %465 = vector.broadcast %cst_230 : f32 to vector<12x1xf32>
    %466 = arith.divf %464, %465 : vector<12x1xf32>
    %467 = vector.broadcast %466 : vector<12x1xf32> to vector<12x48xf32>
    %468 = arith.subf %460, %467 : vector<12x48xf32>
    %469 = arith.mulf %468, %468 : vector<12x48xf32>
    %cst_231 = arith.constant dense<0.000000e+00> : vector<12xf32>
    %470 = vector.multi_reduction <add>, %469, %cst_231 [1] : vector<12x48xf32> to vector<12xf32>
    %471 = vector.shape_cast %470 : vector<12xf32> to vector<12x1xf32>
    %cst_232 = arith.constant 4.800000e+01 : f32
    %472 = vector.broadcast %cst_232 : f32 to vector<12x1xf32>
    %473 = arith.divf %471, %472 : vector<12x1xf32>
    %cst_233 = arith.constant 9.99999974E-6 : f32
    %474 = vector.broadcast %cst_233 : f32 to vector<12x1xf32>
    %475 = arith.addf %473, %474 : vector<12x1xf32>
    %476 = math.rsqrt %475 : vector<12x1xf32>
    %477 = vector.broadcast %476 : vector<12x1xf32> to vector<12x48xf32>
    %478 = arith.mulf %468, %477 : vector<12x48xf32>
    %479 = vector.broadcast %461 : vector<1x48xf32> to vector<12x48xf32>
    %480 = arith.mulf %478, %479 : vector<12x48xf32>
    %481 = vector.broadcast %462 : vector<1x48xf32> to vector<12x48xf32>
    %482 = arith.addf %480, %481 : vector<12x48xf32>
    %483 = arith.truncf %482 : vector<12x48xf32> to vector<12x48xbf16>
    %c0_234 = arith.constant 0 : index
    %c0_235 = arith.constant 0 : index
    %484 = vector.load %arg8[%c0_234, %c0_235] : memref<48x64xbf16, #tpu.memory_space<vmem>>, vector<48x64xbf16>
    %cst_236 = arith.constant dense<0.000000e+00> : vector<12x64xf32>
    %485 = tpu.matmul %483, %484, %cst_236 {dimension_numbers = #tpu.dot_dimension_numbers<[1], [0], [0], [1], [0, 0, 1, 1], [], []>} : vector<12x48xbf16>, vector<48x64xbf16>, vector<12x64xf32> -> vector<12x64xf32>
    %c0_237 = arith.constant 0 : index
    %c0_238 = arith.constant 0 : index
    %486 = vector.load %arg7[%c0_237, %c0_238] : memref<64x64xbf16, #tpu.memory_space<vmem>>, vector<64x64xbf16>
    %cst_239 = arith.constant dense<0.000000e+00> : vector<12x64xf32>
    %487 = tpu.matmul %60, %486, %cst_239 {dimension_numbers = #tpu.dot_dimension_numbers<[1], [0], [0], [1], [0, 0, 1, 1], [], []>} : vector<12x64xbf16>, vector<64x64xbf16>, vector<12x64xf32> -> vector<12x64xf32>
    %488 = arith.addf %485, %487 : vector<12x64xf32>
    %c0_240 = arith.constant 0 : index
    %c0_241 = arith.constant 0 : index
    %489 = vector.load %arg6[%c0_240, %c0_241] : memref<1x64xf32, #tpu.memory_space<vmem>>, vector<1x64xf32>
    %490 = vector.broadcast %489 : vector<1x64xf32> to vector<12x64xf32>
    %491 = arith.addf %488, %490 : vector<12x64xf32>
    %c0_242 = arith.constant 0 : index
    %c0_243 = arith.constant 0 : index
    %c0_244 = arith.constant 0 : index
    %492 = vector.load %arg4[%c0_242, %c0_243, %c0_244] : memref<1x8x64xf32, #tpu.memory_space<vmem>>, vector<1x8x64xf32>
    %493 = vector.shape_cast %492 : vector<1x8x64xf32> to vector<8x64xf32>
    %494 = tpu.concatenate %491, %493 in 0 : vector<12x64xf32>, vector<8x64xf32> -> vector<20x64xf32>
    %c0_245 = arith.constant 0 : index
    %c0_246 = arith.constant 0 : index
    %c0_247 = arith.constant 0 : index
    %495 = vector.load %arg5[%c0_245, %c0_246, %c0_247] : memref<1x20x64xf32, #tpu.memory_space<vmem>>, vector<1x20x64xf32>
    %496 = vector.shape_cast %495 : vector<1x20x64xf32> to vector<20x64xf32>
    %497 = arith.truncf %496 : vector<20x64xf32> to vector<20x64xbf16>
    %c0_248 = arith.constant 0 : index
    %c0_249 = arith.constant 0 : index
    %c0_250 = arith.constant 0 : index
    %498 = vector.load %arg10[%c0_248, %c0_249, %c0_250] : memref<3x4x64xf32, #tpu.memory_space<vmem>>, vector<1x4x64xf32>
    %499 = vector.shape_cast %498 : vector<1x4x64xf32> to vector<4x64xf32>
    %c0_251 = arith.constant 0 : index
    %c0_252 = arith.constant 0 : index
    %c0_253 = arith.constant 0 : index
    %500 = vector.load %arg9[%c0_251, %c0_252, %c0_253] : memref<3x2x64xf32, #tpu.memory_space<vmem>>, vector<1x2x64xf32>
    %501 = vector.shape_cast %500 : vector<1x2x64xf32> to vector<2x64xf32>
    %502 = vector.extract_strided_slice %499 {offsets = [0, 0], sizes = [1, 64], strides = [1, 1]} : vector<4x64xf32> to vector<1x64xf32>
    %503 = vector.extract_strided_slice %499 {offsets = [1, 0], sizes = [1, 64], strides = [1, 1]} : vector<4x64xf32> to vector<1x64xf32>
    %cst_254 = arith.constant dense<0.000000e+00> : vector<20xf32>
    %504 = vector.multi_reduction <add>, %494, %cst_254 [1] : vector<20x64xf32> to vector<20xf32>
    %505 = vector.shape_cast %504 : vector<20xf32> to vector<20x1xf32>
    %cst_255 = arith.constant 6.400000e+01 : f32
    %506 = vector.broadcast %cst_255 : f32 to vector<20x1xf32>
    %507 = arith.divf %505, %506 : vector<20x1xf32>
    %508 = vector.broadcast %507 : vector<20x1xf32> to vector<20x64xf32>
    %509 = arith.subf %494, %508 : vector<20x64xf32>
    %510 = arith.mulf %509, %509 : vector<20x64xf32>
    %cst_256 = arith.constant dense<0.000000e+00> : vector<20xf32>
    %511 = vector.multi_reduction <add>, %510, %cst_256 [1] : vector<20x64xf32> to vector<20xf32>
    %512 = vector.shape_cast %511 : vector<20xf32> to vector<20x1xf32>
    %cst_257 = arith.constant 6.400000e+01 : f32
    %513 = vector.broadcast %cst_257 : f32 to vector<20x1xf32>
    %514 = arith.divf %512, %513 : vector<20x1xf32>
    %cst_258 = arith.constant 9.99999974E-6 : f32
    %515 = vector.broadcast %cst_258 : f32 to vector<20x1xf32>
    %516 = arith.addf %514, %515 : vector<20x1xf32>
    %517 = math.rsqrt %516 : vector<20x1xf32>
    %518 = vector.broadcast %517 : vector<20x1xf32> to vector<20x64xf32>
    %519 = arith.mulf %509, %518 : vector<20x64xf32>
    %520 = vector.broadcast %502 : vector<1x64xf32> to vector<20x64xf32>
    %521 = arith.mulf %519, %520 : vector<20x64xf32>
    %522 = vector.broadcast %503 : vector<1x64xf32> to vector<20x64xf32>
    %523 = arith.addf %521, %522 : vector<20x64xf32>
    %524 = arith.truncf %523 : vector<20x64xf32> to vector<20x64xbf16>
    %c0_259 = arith.constant 0 : index
    %c0_260 = arith.constant 0 : index
    %c0_261 = arith.constant 0 : index
    %c0_262 = arith.constant 0 : index
    %525 = vector.load %arg16[%c0_259, %c0_260, %c0_261, %c0_262] : memref<3x2x3x32xf32, #tpu.memory_space<vmem>>, vector<1x1x3x32xf32>
    %526 = vector.shape_cast %525 : vector<1x1x3x32xf32> to vector<3x32xf32>
    %c0_263 = arith.constant 0 : index
    %c0_264 = arith.constant 0 : index
    %c0_265 = arith.constant 0 : index
    %c0_266 = arith.constant 0 : index
    %527 = vector.load %arg18[%c0_263, %c0_264, %c0_265, %c0_266] : memref<3x2x64x32xbf16, #tpu.memory_space<vmem>>, vector<1x1x64x32xbf16>
    %528 = vector.shape_cast %527 : vector<1x1x64x32xbf16> to vector<64x32xbf16>
    %cst_267 = arith.constant dense<0.000000e+00> : vector<20x32xf32>
    %529 = tpu.matmul %524, %528, %cst_267 {dimension_numbers = #tpu.dot_dimension_numbers<[1], [0], [0], [1], [0, 0, 1, 1], [], []>} : vector<20x64xbf16>, vector<64x32xbf16>, vector<20x32xf32> -> vector<20x32xf32>
    %530 = vector.extract_strided_slice %526 {offsets = [0, 0], sizes = [1, 32], strides = [1, 1]} : vector<3x32xf32> to vector<1x32xf32>
    %531 = vector.broadcast %530 : vector<1x32xf32> to vector<20x32xf32>
    %532 = arith.addf %529, %531 : vector<20x32xf32>
    %c0_268 = arith.constant 0 : index
    %c0_269 = arith.constant 0 : index
    %c0_270 = arith.constant 0 : index
    %c0_271 = arith.constant 0 : index
    %533 = vector.load %arg17[%c0_268, %c0_269, %c0_270, %c0_271] : memref<3x2x64x32xbf16, #tpu.memory_space<vmem>>, vector<1x1x64x32xbf16>
    %534 = vector.shape_cast %533 : vector<1x1x64x32xbf16> to vector<64x32xbf16>
    %cst_272 = arith.constant dense<0.000000e+00> : vector<20x32xf32>
    %535 = tpu.matmul %524, %534, %cst_272 {dimension_numbers = #tpu.dot_dimension_numbers<[1], [0], [0], [1], [0, 0, 1, 1], [], []>} : vector<20x64xbf16>, vector<64x32xbf16>, vector<20x32xf32> -> vector<20x32xf32>
    %536 = vector.extract_strided_slice %526 {offsets = [1, 0], sizes = [1, 32], strides = [1, 1]} : vector<3x32xf32> to vector<1x32xf32>
    %537 = vector.broadcast %536 : vector<1x32xf32> to vector<20x32xf32>
    %538 = arith.addf %535, %537 : vector<20x32xf32>
    %c0_273 = arith.constant 0 : index
    %c0_274 = arith.constant 0 : index
    %c0_275 = arith.constant 0 : index
    %c0_276 = arith.constant 0 : index
    %539 = vector.load %arg19[%c0_273, %c0_274, %c0_275, %c0_276] : memref<3x2x64x32xbf16, #tpu.memory_space<vmem>>, vector<1x1x64x32xbf16>
    %540 = vector.shape_cast %539 : vector<1x1x64x32xbf16> to vector<64x32xbf16>
    %cst_277 = arith.constant dense<0.000000e+00> : vector<20x32xf32>
    %541 = tpu.matmul %524, %540, %cst_277 {dimension_numbers = #tpu.dot_dimension_numbers<[1], [0], [0], [1], [0, 0, 1, 1], [], []>} : vector<20x64xbf16>, vector<64x32xbf16>, vector<20x32xf32> -> vector<20x32xf32>
    %542 = vector.extract_strided_slice %526 {offsets = [2, 0], sizes = [1, 32], strides = [1, 1]} : vector<3x32xf32> to vector<1x32xf32>
    %543 = vector.broadcast %542 : vector<1x32xf32> to vector<20x32xf32>
    %544 = arith.addf %541, %543 : vector<20x32xf32>
    %545 = arith.truncf %532 : vector<20x32xf32> to vector<20x32xbf16>
    %546 = arith.truncf %538 : vector<20x32xf32> to vector<20x32xbf16>
    %cst_278 = arith.constant dense<0.000000e+00> : vector<20x20xf32>
    %547 = tpu.matmul %545, %546, %cst_278 {dimension_numbers = #tpu.dot_dimension_numbers<[1], [1], [0], [0], [0, 0, 1, 0], [], []>} : vector<20x32xbf16>, vector<20x32xbf16>, vector<20x20xf32> -> vector<20x20xf32>
    %cst_279 = arith.constant 0.176776692 : f32
    %548 = vector.broadcast %cst_279 : f32 to vector<20x20xf32>
    %549 = arith.mulf %547, %548 : vector<20x20xf32>
    %cst_280 = arith.constant -1.000000e+30 : f32
    %550 = vector.broadcast %cst_280 : f32 to vector<20x20xf32>
    %551 = arith.select %57, %549, %550 : vector<20x20xi1>, vector<20x20xf32>
    %cst_281 = arith.constant dense<0xFF800000> : vector<20xf32>
    %552 = vector.multi_reduction <maximumf>, %551, %cst_281 [1] : vector<20x20xf32> to vector<20xf32>
    %553 = vector.shape_cast %552 : vector<20xf32> to vector<20x1xf32>
    %554 = vector.broadcast %553 : vector<20x1xf32> to vector<20x20xf32>
    %555 = arith.subf %551, %554 : vector<20x20xf32>
    %556 = math.exp %555 : vector<20x20xf32>
    %cst_282 = arith.constant dense<0.000000e+00> : vector<20xf32>
    %557 = vector.multi_reduction <add>, %556, %cst_282 [1] : vector<20x20xf32> to vector<20xf32>
    %558 = vector.shape_cast %557 : vector<20xf32> to vector<20x1xf32>
    %559 = vector.broadcast %558 : vector<20x1xf32> to vector<20x20xf32>
    %560 = arith.divf %556, %559 : vector<20x20xf32>
    %561 = arith.truncf %560 : vector<20x20xf32> to vector<20x20xbf16>
    %562 = arith.truncf %544 : vector<20x32xf32> to vector<20x32xbf16>
    %cst_283 = arith.constant dense<0.000000e+00> : vector<20x32xf32>
    %563 = tpu.matmul %561, %562, %cst_283 {dimension_numbers = #tpu.dot_dimension_numbers<[1], [0], [0], [1], [0, 0, 1, 1], [], []>} : vector<20x20xbf16>, vector<20x32xbf16>, vector<20x32xf32> -> vector<20x32xf32>
    %564 = arith.truncf %563 : vector<20x32xf32> to vector<20x32xbf16>
    %c0_284 = arith.constant 0 : index
    %c0_285 = arith.constant 0 : index
    %c0_286 = arith.constant 0 : index
    %c0_287 = arith.constant 0 : index
    %565 = vector.load %arg15[%c0_284, %c0_285, %c0_286, %c0_287] : memref<3x2x32x64xbf16, #tpu.memory_space<vmem>>, vector<1x1x32x64xbf16>
    %566 = vector.shape_cast %565 : vector<1x1x32x64xbf16> to vector<32x64xbf16>
    %cst_288 = arith.constant dense<0.000000e+00> : vector<20x64xf32>
    %567 = tpu.matmul %564, %566, %cst_288 {dimension_numbers = #tpu.dot_dimension_numbers<[1], [0], [0], [1], [0, 0, 1, 1], [], []>} : vector<20x32xbf16>, vector<32x64xbf16>, vector<20x64xf32> -> vector<20x64xf32>
    %c0_289 = arith.constant 0 : index
    %c1_290 = arith.constant 1 : index
    %c0_291 = arith.constant 0 : index
    %c0_292 = arith.constant 0 : index
    %568 = vector.load %arg16[%c0_289, %c1_290, %c0_291, %c0_292] : memref<3x2x3x32xf32, #tpu.memory_space<vmem>>, vector<1x1x3x32xf32>
    %569 = vector.shape_cast %568 : vector<1x1x3x32xf32> to vector<3x32xf32>
    %c0_293 = arith.constant 0 : index
    %c1_294 = arith.constant 1 : index
    %c0_295 = arith.constant 0 : index
    %c0_296 = arith.constant 0 : index
    %570 = vector.load %arg18[%c0_293, %c1_294, %c0_295, %c0_296] : memref<3x2x64x32xbf16, #tpu.memory_space<vmem>>, vector<1x1x64x32xbf16>
    %571 = vector.shape_cast %570 : vector<1x1x64x32xbf16> to vector<64x32xbf16>
    %cst_297 = arith.constant dense<0.000000e+00> : vector<20x32xf32>
    %572 = tpu.matmul %524, %571, %cst_297 {dimension_numbers = #tpu.dot_dimension_numbers<[1], [0], [0], [1], [0, 0, 1, 1], [], []>} : vector<20x64xbf16>, vector<64x32xbf16>, vector<20x32xf32> -> vector<20x32xf32>
    %573 = vector.extract_strided_slice %569 {offsets = [0, 0], sizes = [1, 32], strides = [1, 1]} : vector<3x32xf32> to vector<1x32xf32>
    %574 = vector.broadcast %573 : vector<1x32xf32> to vector<20x32xf32>
    %575 = arith.addf %572, %574 : vector<20x32xf32>
    %c0_298 = arith.constant 0 : index
    %c1_299 = arith.constant 1 : index
    %c0_300 = arith.constant 0 : index
    %c0_301 = arith.constant 0 : index
    %576 = vector.load %arg17[%c0_298, %c1_299, %c0_300, %c0_301] : memref<3x2x64x32xbf16, #tpu.memory_space<vmem>>, vector<1x1x64x32xbf16>
    %577 = vector.shape_cast %576 : vector<1x1x64x32xbf16> to vector<64x32xbf16>
    %cst_302 = arith.constant dense<0.000000e+00> : vector<20x32xf32>
    %578 = tpu.matmul %524, %577, %cst_302 {dimension_numbers = #tpu.dot_dimension_numbers<[1], [0], [0], [1], [0, 0, 1, 1], [], []>} : vector<20x64xbf16>, vector<64x32xbf16>, vector<20x32xf32> -> vector<20x32xf32>
    %579 = vector.extract_strided_slice %569 {offsets = [1, 0], sizes = [1, 32], strides = [1, 1]} : vector<3x32xf32> to vector<1x32xf32>
    %580 = vector.broadcast %579 : vector<1x32xf32> to vector<20x32xf32>
    %581 = arith.addf %578, %580 : vector<20x32xf32>
    %c0_303 = arith.constant 0 : index
    %c1_304 = arith.constant 1 : index
    %c0_305 = arith.constant 0 : index
    %c0_306 = arith.constant 0 : index
    %582 = vector.load %arg19[%c0_303, %c1_304, %c0_305, %c0_306] : memref<3x2x64x32xbf16, #tpu.memory_space<vmem>>, vector<1x1x64x32xbf16>
    %583 = vector.shape_cast %582 : vector<1x1x64x32xbf16> to vector<64x32xbf16>
    %cst_307 = arith.constant dense<0.000000e+00> : vector<20x32xf32>
    %584 = tpu.matmul %524, %583, %cst_307 {dimension_numbers = #tpu.dot_dimension_numbers<[1], [0], [0], [1], [0, 0, 1, 1], [], []>} : vector<20x64xbf16>, vector<64x32xbf16>, vector<20x32xf32> -> vector<20x32xf32>
    %585 = vector.extract_strided_slice %569 {offsets = [2, 0], sizes = [1, 32], strides = [1, 1]} : vector<3x32xf32> to vector<1x32xf32>
    %586 = vector.broadcast %585 : vector<1x32xf32> to vector<20x32xf32>
    %587 = arith.addf %584, %586 : vector<20x32xf32>
    %588 = arith.truncf %575 : vector<20x32xf32> to vector<20x32xbf16>
    %589 = arith.truncf %581 : vector<20x32xf32> to vector<20x32xbf16>
    %cst_308 = arith.constant dense<0.000000e+00> : vector<20x20xf32>
    %590 = tpu.matmul %588, %589, %cst_308 {dimension_numbers = #tpu.dot_dimension_numbers<[1], [1], [0], [0], [0, 0, 1, 0], [], []>} : vector<20x32xbf16>, vector<20x32xbf16>, vector<20x20xf32> -> vector<20x20xf32>
    %cst_309 = arith.constant 0.176776692 : f32
    %591 = vector.broadcast %cst_309 : f32 to vector<20x20xf32>
    %592 = arith.mulf %590, %591 : vector<20x20xf32>
    %cst_310 = arith.constant -1.000000e+30 : f32
    %593 = vector.broadcast %cst_310 : f32 to vector<20x20xf32>
    %594 = arith.select %57, %592, %593 : vector<20x20xi1>, vector<20x20xf32>
    %cst_311 = arith.constant dense<0xFF800000> : vector<20xf32>
    %595 = vector.multi_reduction <maximumf>, %594, %cst_311 [1] : vector<20x20xf32> to vector<20xf32>
    %596 = vector.shape_cast %595 : vector<20xf32> to vector<20x1xf32>
    %597 = vector.broadcast %596 : vector<20x1xf32> to vector<20x20xf32>
    %598 = arith.subf %594, %597 : vector<20x20xf32>
    %599 = math.exp %598 : vector<20x20xf32>
    %cst_312 = arith.constant dense<0.000000e+00> : vector<20xf32>
    %600 = vector.multi_reduction <add>, %599, %cst_312 [1] : vector<20x20xf32> to vector<20xf32>
    %601 = vector.shape_cast %600 : vector<20xf32> to vector<20x1xf32>
    %602 = vector.broadcast %601 : vector<20x1xf32> to vector<20x20xf32>
    %603 = arith.divf %599, %602 : vector<20x20xf32>
    %604 = arith.truncf %603 : vector<20x20xf32> to vector<20x20xbf16>
    %605 = arith.truncf %587 : vector<20x32xf32> to vector<20x32xbf16>
    %cst_313 = arith.constant dense<0.000000e+00> : vector<20x32xf32>
    %606 = tpu.matmul %604, %605, %cst_313 {dimension_numbers = #tpu.dot_dimension_numbers<[1], [0], [0], [1], [0, 0, 1, 1], [], []>} : vector<20x20xbf16>, vector<20x32xbf16>, vector<20x32xf32> -> vector<20x32xf32>
    %607 = arith.truncf %606 : vector<20x32xf32> to vector<20x32xbf16>
    %c0_314 = arith.constant 0 : index
    %c1_315 = arith.constant 1 : index
    %c0_316 = arith.constant 0 : index
    %c0_317 = arith.constant 0 : index
    %608 = vector.load %arg15[%c0_314, %c1_315, %c0_316, %c0_317] : memref<3x2x32x64xbf16, #tpu.memory_space<vmem>>, vector<1x1x32x64xbf16>
    %609 = vector.shape_cast %608 : vector<1x1x32x64xbf16> to vector<32x64xbf16>
    %cst_318 = arith.constant dense<0.000000e+00> : vector<20x64xf32>
    %610 = tpu.matmul %607, %609, %cst_318 {dimension_numbers = #tpu.dot_dimension_numbers<[1], [0], [0], [1], [0, 0, 1, 1], [], []>} : vector<20x32xbf16>, vector<32x64xbf16>, vector<20x64xf32> -> vector<20x64xf32>
    %611 = arith.addf %567, %610 : vector<20x64xf32>
    %612 = arith.addf %494, %611 : vector<20x64xf32>
    %613 = vector.extract_strided_slice %501 {offsets = [0, 0], sizes = [1, 64], strides = [1, 1]} : vector<2x64xf32> to vector<1x64xf32>
    %614 = vector.broadcast %613 : vector<1x64xf32> to vector<20x64xf32>
    %615 = arith.addf %612, %614 : vector<20x64xf32>
    %616 = vector.extract_strided_slice %499 {offsets = [2, 0], sizes = [1, 64], strides = [1, 1]} : vector<4x64xf32> to vector<1x64xf32>
    %617 = vector.extract_strided_slice %499 {offsets = [3, 0], sizes = [1, 64], strides = [1, 1]} : vector<4x64xf32> to vector<1x64xf32>
    %cst_319 = arith.constant dense<0.000000e+00> : vector<20xf32>
    %618 = vector.multi_reduction <add>, %615, %cst_319 [1] : vector<20x64xf32> to vector<20xf32>
    %619 = vector.shape_cast %618 : vector<20xf32> to vector<20x1xf32>
    %cst_320 = arith.constant 6.400000e+01 : f32
    %620 = vector.broadcast %cst_320 : f32 to vector<20x1xf32>
    %621 = arith.divf %619, %620 : vector<20x1xf32>
    %622 = vector.broadcast %621 : vector<20x1xf32> to vector<20x64xf32>
    %623 = arith.subf %615, %622 : vector<20x64xf32>
    %624 = arith.mulf %623, %623 : vector<20x64xf32>
    %cst_321 = arith.constant dense<0.000000e+00> : vector<20xf32>
    %625 = vector.multi_reduction <add>, %624, %cst_321 [1] : vector<20x64xf32> to vector<20xf32>
    %626 = vector.shape_cast %625 : vector<20xf32> to vector<20x1xf32>
    %cst_322 = arith.constant 6.400000e+01 : f32
    %627 = vector.broadcast %cst_322 : f32 to vector<20x1xf32>
    %628 = arith.divf %626, %627 : vector<20x1xf32>
    %cst_323 = arith.constant 9.99999974E-6 : f32
    %629 = vector.broadcast %cst_323 : f32 to vector<20x1xf32>
    %630 = arith.addf %628, %629 : vector<20x1xf32>
    %631 = math.rsqrt %630 : vector<20x1xf32>
    %632 = vector.broadcast %631 : vector<20x1xf32> to vector<20x64xf32>
    %633 = arith.mulf %623, %632 : vector<20x64xf32>
    %634 = vector.broadcast %616 : vector<1x64xf32> to vector<20x64xf32>
    %635 = arith.mulf %633, %634 : vector<20x64xf32>
    %636 = vector.broadcast %617 : vector<1x64xf32> to vector<20x64xf32>
    %637 = arith.addf %635, %636 : vector<20x64xf32>
    %638 = arith.truncf %637 : vector<20x64xf32> to vector<20x64xbf16>
    %c0_324 = arith.constant 0 : index
    %c0_325 = arith.constant 0 : index
    %c0_326 = arith.constant 0 : index
    %639 = vector.load %arg13[%c0_324, %c0_325, %c0_326] : memref<3x64x256xbf16, #tpu.memory_space<vmem>>, vector<1x64x256xbf16>
    %640 = vector.shape_cast %639 : vector<1x64x256xbf16> to vector<64x256xbf16>
    %cst_327 = arith.constant dense<0.000000e+00> : vector<20x256xf32>
    %641 = tpu.matmul %638, %640, %cst_327 {dimension_numbers = #tpu.dot_dimension_numbers<[1], [0], [0], [1], [0, 0, 1, 1], [], []>} : vector<20x64xbf16>, vector<64x256xbf16>, vector<20x256xf32> -> vector<20x256xf32>
    %c0_328 = arith.constant 0 : index
    %c0_329 = arith.constant 0 : index
    %c0_330 = arith.constant 0 : index
    %642 = vector.load %arg12[%c0_328, %c0_329, %c0_330] : memref<3x64x256xbf16, #tpu.memory_space<vmem>>, vector<1x64x256xbf16>
    %643 = vector.shape_cast %642 : vector<1x64x256xbf16> to vector<64x256xbf16>
    %cst_331 = arith.constant dense<0.000000e+00> : vector<20x256xf32>
    %644 = tpu.matmul %497, %643, %cst_331 {dimension_numbers = #tpu.dot_dimension_numbers<[1], [0], [0], [1], [0, 0, 1, 1], [], []>} : vector<20x64xbf16>, vector<64x256xbf16>, vector<20x256xf32> -> vector<20x256xf32>
    %645 = arith.addf %641, %644 : vector<20x256xf32>
    %c0_332 = arith.constant 0 : index
    %c0_333 = arith.constant 0 : index
    %c0_334 = arith.constant 0 : index
    %646 = vector.load %arg11[%c0_332, %c0_333, %c0_334] : memref<3x1x256xf32, #tpu.memory_space<vmem>>, vector<1x1x256xf32>
    %647 = vector.shape_cast %646 : vector<1x1x256xf32> to vector<1x256xf32>
    %648 = vector.broadcast %647 : vector<1x256xf32> to vector<20x256xf32>
    %649 = arith.addf %645, %648 : vector<20x256xf32>
    %650 = arith.mulf %649, %649 : vector<20x256xf32>
    %651 = arith.mulf %649, %650 : vector<20x256xf32>
    %cst_335 = arith.constant 4.471500e-02 : f32
    %652 = vector.broadcast %cst_335 : f32 to vector<20x256xf32>
    %653 = arith.mulf %652, %651 : vector<20x256xf32>
    %654 = arith.addf %649, %653 : vector<20x256xf32>
    %cst_336 = arith.constant 0.797884583 : f32
    %655 = vector.broadcast %cst_336 : f32 to vector<20x256xf32>
    %656 = arith.mulf %655, %654 : vector<20x256xf32>
    %657 = math.tanh %656 : vector<20x256xf32>
    %cst_337 = arith.constant 1.000000e+00 : f32
    %658 = vector.broadcast %cst_337 : f32 to vector<20x256xf32>
    %659 = arith.addf %658, %657 : vector<20x256xf32>
    %cst_338 = arith.constant 5.000000e-01 : f32
    %660 = vector.broadcast %cst_338 : f32 to vector<20x256xf32>
    %661 = arith.mulf %660, %659 : vector<20x256xf32>
    %662 = arith.mulf %649, %661 : vector<20x256xf32>
    %663 = arith.truncf %662 : vector<20x256xf32> to vector<20x256xbf16>
    %c0_339 = arith.constant 0 : index
    %c0_340 = arith.constant 0 : index
    %c0_341 = arith.constant 0 : index
    %664 = vector.load %arg14[%c0_339, %c0_340, %c0_341] : memref<3x256x64xbf16, #tpu.memory_space<vmem>>, vector<1x256x64xbf16>
    %665 = vector.shape_cast %664 : vector<1x256x64xbf16> to vector<256x64xbf16>
    %cst_342 = arith.constant dense<0.000000e+00> : vector<20x64xf32>
    %666 = tpu.matmul %663, %665, %cst_342 {dimension_numbers = #tpu.dot_dimension_numbers<[1], [0], [0], [1], [0, 0, 1, 1], [], []>} : vector<20x256xbf16>, vector<256x64xbf16>, vector<20x64xf32> -> vector<20x64xf32>
    %667 = vector.extract_strided_slice %501 {offsets = [1, 0], sizes = [1, 64], strides = [1, 1]} : vector<2x64xf32> to vector<1x64xf32>
    %668 = vector.broadcast %667 : vector<1x64xf32> to vector<20x64xf32>
    %669 = arith.addf %666, %668 : vector<20x64xf32>
    %670 = arith.addf %615, %669 : vector<20x64xf32>
    %c1_343 = arith.constant 1 : index
    %c0_344 = arith.constant 0 : index
    %c0_345 = arith.constant 0 : index
    %671 = vector.load %arg10[%c1_343, %c0_344, %c0_345] : memref<3x4x64xf32, #tpu.memory_space<vmem>>, vector<1x4x64xf32>
    %672 = vector.shape_cast %671 : vector<1x4x64xf32> to vector<4x64xf32>
    %c1_346 = arith.constant 1 : index
    %c0_347 = arith.constant 0 : index
    %c0_348 = arith.constant 0 : index
    %673 = vector.load %arg9[%c1_346, %c0_347, %c0_348] : memref<3x2x64xf32, #tpu.memory_space<vmem>>, vector<1x2x64xf32>
    %674 = vector.shape_cast %673 : vector<1x2x64xf32> to vector<2x64xf32>
    %675 = vector.extract_strided_slice %672 {offsets = [0, 0], sizes = [1, 64], strides = [1, 1]} : vector<4x64xf32> to vector<1x64xf32>
    %676 = vector.extract_strided_slice %672 {offsets = [1, 0], sizes = [1, 64], strides = [1, 1]} : vector<4x64xf32> to vector<1x64xf32>
    %cst_349 = arith.constant dense<0.000000e+00> : vector<20xf32>
    %677 = vector.multi_reduction <add>, %670, %cst_349 [1] : vector<20x64xf32> to vector<20xf32>
    %678 = vector.shape_cast %677 : vector<20xf32> to vector<20x1xf32>
    %cst_350 = arith.constant 6.400000e+01 : f32
    %679 = vector.broadcast %cst_350 : f32 to vector<20x1xf32>
    %680 = arith.divf %678, %679 : vector<20x1xf32>
    %681 = vector.broadcast %680 : vector<20x1xf32> to vector<20x64xf32>
    %682 = arith.subf %670, %681 : vector<20x64xf32>
    %683 = arith.mulf %682, %682 : vector<20x64xf32>
    %cst_351 = arith.constant dense<0.000000e+00> : vector<20xf32>
    %684 = vector.multi_reduction <add>, %683, %cst_351 [1] : vector<20x64xf32> to vector<20xf32>
    %685 = vector.shape_cast %684 : vector<20xf32> to vector<20x1xf32>
    %cst_352 = arith.constant 6.400000e+01 : f32
    %686 = vector.broadcast %cst_352 : f32 to vector<20x1xf32>
    %687 = arith.divf %685, %686 : vector<20x1xf32>
    %cst_353 = arith.constant 9.99999974E-6 : f32
    %688 = vector.broadcast %cst_353 : f32 to vector<20x1xf32>
    %689 = arith.addf %687, %688 : vector<20x1xf32>
    %690 = math.rsqrt %689 : vector<20x1xf32>
    %691 = vector.broadcast %690 : vector<20x1xf32> to vector<20x64xf32>
    %692 = arith.mulf %682, %691 : vector<20x64xf32>
    %693 = vector.broadcast %675 : vector<1x64xf32> to vector<20x64xf32>
    %694 = arith.mulf %692, %693 : vector<20x64xf32>
    %695 = vector.broadcast %676 : vector<1x64xf32> to vector<20x64xf32>
    %696 = arith.addf %694, %695 : vector<20x64xf32>
    %697 = arith.truncf %696 : vector<20x64xf32> to vector<20x64xbf16>
    %c1_354 = arith.constant 1 : index
    %c0_355 = arith.constant 0 : index
    %c0_356 = arith.constant 0 : index
    %c0_357 = arith.constant 0 : index
    %698 = vector.load %arg16[%c1_354, %c0_355, %c0_356, %c0_357] : memref<3x2x3x32xf32, #tpu.memory_space<vmem>>, vector<1x1x3x32xf32>
    %699 = vector.shape_cast %698 : vector<1x1x3x32xf32> to vector<3x32xf32>
    %c1_358 = arith.constant 1 : index
    %c0_359 = arith.constant 0 : index
    %c0_360 = arith.constant 0 : index
    %c0_361 = arith.constant 0 : index
    %700 = vector.load %arg18[%c1_358, %c0_359, %c0_360, %c0_361] : memref<3x2x64x32xbf16, #tpu.memory_space<vmem>>, vector<1x1x64x32xbf16>
    %701 = vector.shape_cast %700 : vector<1x1x64x32xbf16> to vector<64x32xbf16>
    %cst_362 = arith.constant dense<0.000000e+00> : vector<20x32xf32>
    %702 = tpu.matmul %697, %701, %cst_362 {dimension_numbers = #tpu.dot_dimension_numbers<[1], [0], [0], [1], [0, 0, 1, 1], [], []>} : vector<20x64xbf16>, vector<64x32xbf16>, vector<20x32xf32> -> vector<20x32xf32>
    %703 = vector.extract_strided_slice %699 {offsets = [0, 0], sizes = [1, 32], strides = [1, 1]} : vector<3x32xf32> to vector<1x32xf32>
    %704 = vector.broadcast %703 : vector<1x32xf32> to vector<20x32xf32>
    %705 = arith.addf %702, %704 : vector<20x32xf32>
    %c1_363 = arith.constant 1 : index
    %c0_364 = arith.constant 0 : index
    %c0_365 = arith.constant 0 : index
    %c0_366 = arith.constant 0 : index
    %706 = vector.load %arg17[%c1_363, %c0_364, %c0_365, %c0_366] : memref<3x2x64x32xbf16, #tpu.memory_space<vmem>>, vector<1x1x64x32xbf16>
    %707 = vector.shape_cast %706 : vector<1x1x64x32xbf16> to vector<64x32xbf16>
    %cst_367 = arith.constant dense<0.000000e+00> : vector<20x32xf32>
    %708 = tpu.matmul %697, %707, %cst_367 {dimension_numbers = #tpu.dot_dimension_numbers<[1], [0], [0], [1], [0, 0, 1, 1], [], []>} : vector<20x64xbf16>, vector<64x32xbf16>, vector<20x32xf32> -> vector<20x32xf32>
    %709 = vector.extract_strided_slice %699 {offsets = [1, 0], sizes = [1, 32], strides = [1, 1]} : vector<3x32xf32> to vector<1x32xf32>
    %710 = vector.broadcast %709 : vector<1x32xf32> to vector<20x32xf32>
    %711 = arith.addf %708, %710 : vector<20x32xf32>
    %c1_368 = arith.constant 1 : index
    %c0_369 = arith.constant 0 : index
    %c0_370 = arith.constant 0 : index
    %c0_371 = arith.constant 0 : index
    %712 = vector.load %arg19[%c1_368, %c0_369, %c0_370, %c0_371] : memref<3x2x64x32xbf16, #tpu.memory_space<vmem>>, vector<1x1x64x32xbf16>
    %713 = vector.shape_cast %712 : vector<1x1x64x32xbf16> to vector<64x32xbf16>
    %cst_372 = arith.constant dense<0.000000e+00> : vector<20x32xf32>
    %714 = tpu.matmul %697, %713, %cst_372 {dimension_numbers = #tpu.dot_dimension_numbers<[1], [0], [0], [1], [0, 0, 1, 1], [], []>} : vector<20x64xbf16>, vector<64x32xbf16>, vector<20x32xf32> -> vector<20x32xf32>
    %715 = vector.extract_strided_slice %699 {offsets = [2, 0], sizes = [1, 32], strides = [1, 1]} : vector<3x32xf32> to vector<1x32xf32>
    %716 = vector.broadcast %715 : vector<1x32xf32> to vector<20x32xf32>
    %717 = arith.addf %714, %716 : vector<20x32xf32>
    %718 = arith.truncf %705 : vector<20x32xf32> to vector<20x32xbf16>
    %719 = arith.truncf %711 : vector<20x32xf32> to vector<20x32xbf16>
    %cst_373 = arith.constant dense<0.000000e+00> : vector<20x20xf32>
    %720 = tpu.matmul %718, %719, %cst_373 {dimension_numbers = #tpu.dot_dimension_numbers<[1], [1], [0], [0], [0, 0, 1, 0], [], []>} : vector<20x32xbf16>, vector<20x32xbf16>, vector<20x20xf32> -> vector<20x20xf32>
    %cst_374 = arith.constant 0.176776692 : f32
    %721 = vector.broadcast %cst_374 : f32 to vector<20x20xf32>
    %722 = arith.mulf %720, %721 : vector<20x20xf32>
    %cst_375 = arith.constant -1.000000e+30 : f32
    %723 = vector.broadcast %cst_375 : f32 to vector<20x20xf32>
    %724 = arith.select %57, %722, %723 : vector<20x20xi1>, vector<20x20xf32>
    %cst_376 = arith.constant dense<0xFF800000> : vector<20xf32>
    %725 = vector.multi_reduction <maximumf>, %724, %cst_376 [1] : vector<20x20xf32> to vector<20xf32>
    %726 = vector.shape_cast %725 : vector<20xf32> to vector<20x1xf32>
    %727 = vector.broadcast %726 : vector<20x1xf32> to vector<20x20xf32>
    %728 = arith.subf %724, %727 : vector<20x20xf32>
    %729 = math.exp %728 : vector<20x20xf32>
    %cst_377 = arith.constant dense<0.000000e+00> : vector<20xf32>
    %730 = vector.multi_reduction <add>, %729, %cst_377 [1] : vector<20x20xf32> to vector<20xf32>
    %731 = vector.shape_cast %730 : vector<20xf32> to vector<20x1xf32>
    %732 = vector.broadcast %731 : vector<20x1xf32> to vector<20x20xf32>
    %733 = arith.divf %729, %732 : vector<20x20xf32>
    %734 = arith.truncf %733 : vector<20x20xf32> to vector<20x20xbf16>
    %735 = arith.truncf %717 : vector<20x32xf32> to vector<20x32xbf16>
    %cst_378 = arith.constant dense<0.000000e+00> : vector<20x32xf32>
    %736 = tpu.matmul %734, %735, %cst_378 {dimension_numbers = #tpu.dot_dimension_numbers<[1], [0], [0], [1], [0, 0, 1, 1], [], []>} : vector<20x20xbf16>, vector<20x32xbf16>, vector<20x32xf32> -> vector<20x32xf32>
    %737 = arith.truncf %736 : vector<20x32xf32> to vector<20x32xbf16>
    %c1_379 = arith.constant 1 : index
    %c0_380 = arith.constant 0 : index
    %c0_381 = arith.constant 0 : index
    %c0_382 = arith.constant 0 : index
    %738 = vector.load %arg15[%c1_379, %c0_380, %c0_381, %c0_382] : memref<3x2x32x64xbf16, #tpu.memory_space<vmem>>, vector<1x1x32x64xbf16>
    %739 = vector.shape_cast %738 : vector<1x1x32x64xbf16> to vector<32x64xbf16>
    %cst_383 = arith.constant dense<0.000000e+00> : vector<20x64xf32>
    %740 = tpu.matmul %737, %739, %cst_383 {dimension_numbers = #tpu.dot_dimension_numbers<[1], [0], [0], [1], [0, 0, 1, 1], [], []>} : vector<20x32xbf16>, vector<32x64xbf16>, vector<20x64xf32> -> vector<20x64xf32>
    %c1_384 = arith.constant 1 : index
    %c1_385 = arith.constant 1 : index
    %c0_386 = arith.constant 0 : index
    %c0_387 = arith.constant 0 : index
    %741 = vector.load %arg16[%c1_384, %c1_385, %c0_386, %c0_387] : memref<3x2x3x32xf32, #tpu.memory_space<vmem>>, vector<1x1x3x32xf32>
    %742 = vector.shape_cast %741 : vector<1x1x3x32xf32> to vector<3x32xf32>
    %c1_388 = arith.constant 1 : index
    %c1_389 = arith.constant 1 : index
    %c0_390 = arith.constant 0 : index
    %c0_391 = arith.constant 0 : index
    %743 = vector.load %arg18[%c1_388, %c1_389, %c0_390, %c0_391] : memref<3x2x64x32xbf16, #tpu.memory_space<vmem>>, vector<1x1x64x32xbf16>
    %744 = vector.shape_cast %743 : vector<1x1x64x32xbf16> to vector<64x32xbf16>
    %cst_392 = arith.constant dense<0.000000e+00> : vector<20x32xf32>
    %745 = tpu.matmul %697, %744, %cst_392 {dimension_numbers = #tpu.dot_dimension_numbers<[1], [0], [0], [1], [0, 0, 1, 1], [], []>} : vector<20x64xbf16>, vector<64x32xbf16>, vector<20x32xf32> -> vector<20x32xf32>
    %746 = vector.extract_strided_slice %742 {offsets = [0, 0], sizes = [1, 32], strides = [1, 1]} : vector<3x32xf32> to vector<1x32xf32>
    %747 = vector.broadcast %746 : vector<1x32xf32> to vector<20x32xf32>
    %748 = arith.addf %745, %747 : vector<20x32xf32>
    %c1_393 = arith.constant 1 : index
    %c1_394 = arith.constant 1 : index
    %c0_395 = arith.constant 0 : index
    %c0_396 = arith.constant 0 : index
    %749 = vector.load %arg17[%c1_393, %c1_394, %c0_395, %c0_396] : memref<3x2x64x32xbf16, #tpu.memory_space<vmem>>, vector<1x1x64x32xbf16>
    %750 = vector.shape_cast %749 : vector<1x1x64x32xbf16> to vector<64x32xbf16>
    %cst_397 = arith.constant dense<0.000000e+00> : vector<20x32xf32>
    %751 = tpu.matmul %697, %750, %cst_397 {dimension_numbers = #tpu.dot_dimension_numbers<[1], [0], [0], [1], [0, 0, 1, 1], [], []>} : vector<20x64xbf16>, vector<64x32xbf16>, vector<20x32xf32> -> vector<20x32xf32>
    %752 = vector.extract_strided_slice %742 {offsets = [1, 0], sizes = [1, 32], strides = [1, 1]} : vector<3x32xf32> to vector<1x32xf32>
    %753 = vector.broadcast %752 : vector<1x32xf32> to vector<20x32xf32>
    %754 = arith.addf %751, %753 : vector<20x32xf32>
    %c1_398 = arith.constant 1 : index
    %c1_399 = arith.constant 1 : index
    %c0_400 = arith.constant 0 : index
    %c0_401 = arith.constant 0 : index
    %755 = vector.load %arg19[%c1_398, %c1_399, %c0_400, %c0_401] : memref<3x2x64x32xbf16, #tpu.memory_space<vmem>>, vector<1x1x64x32xbf16>
    %756 = vector.shape_cast %755 : vector<1x1x64x32xbf16> to vector<64x32xbf16>
    %cst_402 = arith.constant dense<0.000000e+00> : vector<20x32xf32>
    %757 = tpu.matmul %697, %756, %cst_402 {dimension_numbers = #tpu.dot_dimension_numbers<[1], [0], [0], [1], [0, 0, 1, 1], [], []>} : vector<20x64xbf16>, vector<64x32xbf16>, vector<20x32xf32> -> vector<20x32xf32>
    %758 = vector.extract_strided_slice %742 {offsets = [2, 0], sizes = [1, 32], strides = [1, 1]} : vector<3x32xf32> to vector<1x32xf32>
    %759 = vector.broadcast %758 : vector<1x32xf32> to vector<20x32xf32>
    %760 = arith.addf %757, %759 : vector<20x32xf32>
    %761 = arith.truncf %748 : vector<20x32xf32> to vector<20x32xbf16>
    %762 = arith.truncf %754 : vector<20x32xf32> to vector<20x32xbf16>
    %cst_403 = arith.constant dense<0.000000e+00> : vector<20x20xf32>
    %763 = tpu.matmul %761, %762, %cst_403 {dimension_numbers = #tpu.dot_dimension_numbers<[1], [1], [0], [0], [0, 0, 1, 0], [], []>} : vector<20x32xbf16>, vector<20x32xbf16>, vector<20x20xf32> -> vector<20x20xf32>
    %cst_404 = arith.constant 0.176776692 : f32
    %764 = vector.broadcast %cst_404 : f32 to vector<20x20xf32>
    %765 = arith.mulf %763, %764 : vector<20x20xf32>
    %cst_405 = arith.constant -1.000000e+30 : f32
    %766 = vector.broadcast %cst_405 : f32 to vector<20x20xf32>
    %767 = arith.select %57, %765, %766 : vector<20x20xi1>, vector<20x20xf32>
    %cst_406 = arith.constant dense<0xFF800000> : vector<20xf32>
    %768 = vector.multi_reduction <maximumf>, %767, %cst_406 [1] : vector<20x20xf32> to vector<20xf32>
    %769 = vector.shape_cast %768 : vector<20xf32> to vector<20x1xf32>
    %770 = vector.broadcast %769 : vector<20x1xf32> to vector<20x20xf32>
    %771 = arith.subf %767, %770 : vector<20x20xf32>
    %772 = math.exp %771 : vector<20x20xf32>
    %cst_407 = arith.constant dense<0.000000e+00> : vector<20xf32>
    %773 = vector.multi_reduction <add>, %772, %cst_407 [1] : vector<20x20xf32> to vector<20xf32>
    %774 = vector.shape_cast %773 : vector<20xf32> to vector<20x1xf32>
    %775 = vector.broadcast %774 : vector<20x1xf32> to vector<20x20xf32>
    %776 = arith.divf %772, %775 : vector<20x20xf32>
    %777 = arith.truncf %776 : vector<20x20xf32> to vector<20x20xbf16>
    %778 = arith.truncf %760 : vector<20x32xf32> to vector<20x32xbf16>
    %cst_408 = arith.constant dense<0.000000e+00> : vector<20x32xf32>
    %779 = tpu.matmul %777, %778, %cst_408 {dimension_numbers = #tpu.dot_dimension_numbers<[1], [0], [0], [1], [0, 0, 1, 1], [], []>} : vector<20x20xbf16>, vector<20x32xbf16>, vector<20x32xf32> -> vector<20x32xf32>
    %780 = arith.truncf %779 : vector<20x32xf32> to vector<20x32xbf16>
    %c1_409 = arith.constant 1 : index
    %c1_410 = arith.constant 1 : index
    %c0_411 = arith.constant 0 : index
    %c0_412 = arith.constant 0 : index
    %781 = vector.load %arg15[%c1_409, %c1_410, %c0_411, %c0_412] : memref<3x2x32x64xbf16, #tpu.memory_space<vmem>>, vector<1x1x32x64xbf16>
    %782 = vector.shape_cast %781 : vector<1x1x32x64xbf16> to vector<32x64xbf16>
    %cst_413 = arith.constant dense<0.000000e+00> : vector<20x64xf32>
    %783 = tpu.matmul %780, %782, %cst_413 {dimension_numbers = #tpu.dot_dimension_numbers<[1], [0], [0], [1], [0, 0, 1, 1], [], []>} : vector<20x32xbf16>, vector<32x64xbf16>, vector<20x64xf32> -> vector<20x64xf32>
    %784 = arith.addf %740, %783 : vector<20x64xf32>
    %785 = arith.addf %670, %784 : vector<20x64xf32>
    %786 = vector.extract_strided_slice %674 {offsets = [0, 0], sizes = [1, 64], strides = [1, 1]} : vector<2x64xf32> to vector<1x64xf32>
    %787 = vector.broadcast %786 : vector<1x64xf32> to vector<20x64xf32>
    %788 = arith.addf %785, %787 : vector<20x64xf32>
    %789 = vector.extract_strided_slice %672 {offsets = [2, 0], sizes = [1, 64], strides = [1, 1]} : vector<4x64xf32> to vector<1x64xf32>
    %790 = vector.extract_strided_slice %672 {offsets = [3, 0], sizes = [1, 64], strides = [1, 1]} : vector<4x64xf32> to vector<1x64xf32>
    %cst_414 = arith.constant dense<0.000000e+00> : vector<20xf32>
    %791 = vector.multi_reduction <add>, %788, %cst_414 [1] : vector<20x64xf32> to vector<20xf32>
    %792 = vector.shape_cast %791 : vector<20xf32> to vector<20x1xf32>
    %cst_415 = arith.constant 6.400000e+01 : f32
    %793 = vector.broadcast %cst_415 : f32 to vector<20x1xf32>
    %794 = arith.divf %792, %793 : vector<20x1xf32>
    %795 = vector.broadcast %794 : vector<20x1xf32> to vector<20x64xf32>
    %796 = arith.subf %788, %795 : vector<20x64xf32>
    %797 = arith.mulf %796, %796 : vector<20x64xf32>
    %cst_416 = arith.constant dense<0.000000e+00> : vector<20xf32>
    %798 = vector.multi_reduction <add>, %797, %cst_416 [1] : vector<20x64xf32> to vector<20xf32>
    %799 = vector.shape_cast %798 : vector<20xf32> to vector<20x1xf32>
    %cst_417 = arith.constant 6.400000e+01 : f32
    %800 = vector.broadcast %cst_417 : f32 to vector<20x1xf32>
    %801 = arith.divf %799, %800 : vector<20x1xf32>
    %cst_418 = arith.constant 9.99999974E-6 : f32
    %802 = vector.broadcast %cst_418 : f32 to vector<20x1xf32>
    %803 = arith.addf %801, %802 : vector<20x1xf32>
    %804 = math.rsqrt %803 : vector<20x1xf32>
    %805 = vector.broadcast %804 : vector<20x1xf32> to vector<20x64xf32>
    %806 = arith.mulf %796, %805 : vector<20x64xf32>
    %807 = vector.broadcast %789 : vector<1x64xf32> to vector<20x64xf32>
    %808 = arith.mulf %806, %807 : vector<20x64xf32>
    %809 = vector.broadcast %790 : vector<1x64xf32> to vector<20x64xf32>
    %810 = arith.addf %808, %809 : vector<20x64xf32>
    %811 = arith.truncf %810 : vector<20x64xf32> to vector<20x64xbf16>
    %c1_419 = arith.constant 1 : index
    %c0_420 = arith.constant 0 : index
    %c0_421 = arith.constant 0 : index
    %812 = vector.load %arg13[%c1_419, %c0_420, %c0_421] : memref<3x64x256xbf16, #tpu.memory_space<vmem>>, vector<1x64x256xbf16>
    %813 = vector.shape_cast %812 : vector<1x64x256xbf16> to vector<64x256xbf16>
    %cst_422 = arith.constant dense<0.000000e+00> : vector<20x256xf32>
    %814 = tpu.matmul %811, %813, %cst_422 {dimension_numbers = #tpu.dot_dimension_numbers<[1], [0], [0], [1], [0, 0, 1, 1], [], []>} : vector<20x64xbf16>, vector<64x256xbf16>, vector<20x256xf32> -> vector<20x256xf32>
    %c1_423 = arith.constant 1 : index
    %c0_424 = arith.constant 0 : index
    %c0_425 = arith.constant 0 : index
    %815 = vector.load %arg12[%c1_423, %c0_424, %c0_425] : memref<3x64x256xbf16, #tpu.memory_space<vmem>>, vector<1x64x256xbf16>
    %816 = vector.shape_cast %815 : vector<1x64x256xbf16> to vector<64x256xbf16>
    %cst_426 = arith.constant dense<0.000000e+00> : vector<20x256xf32>
    %817 = tpu.matmul %497, %816, %cst_426 {dimension_numbers = #tpu.dot_dimension_numbers<[1], [0], [0], [1], [0, 0, 1, 1], [], []>} : vector<20x64xbf16>, vector<64x256xbf16>, vector<20x256xf32> -> vector<20x256xf32>
    %818 = arith.addf %814, %817 : vector<20x256xf32>
    %c1_427 = arith.constant 1 : index
    %c0_428 = arith.constant 0 : index
    %c0_429 = arith.constant 0 : index
    %819 = vector.load %arg11[%c1_427, %c0_428, %c0_429] : memref<3x1x256xf32, #tpu.memory_space<vmem>>, vector<1x1x256xf32>
    %820 = vector.shape_cast %819 : vector<1x1x256xf32> to vector<1x256xf32>
    %821 = vector.broadcast %820 : vector<1x256xf32> to vector<20x256xf32>
    %822 = arith.addf %818, %821 : vector<20x256xf32>
    %823 = arith.mulf %822, %822 : vector<20x256xf32>
    %824 = arith.mulf %822, %823 : vector<20x256xf32>
    %cst_430 = arith.constant 4.471500e-02 : f32
    %825 = vector.broadcast %cst_430 : f32 to vector<20x256xf32>
    %826 = arith.mulf %825, %824 : vector<20x256xf32>
    %827 = arith.addf %822, %826 : vector<20x256xf32>
    %cst_431 = arith.constant 0.797884583 : f32
    %828 = vector.broadcast %cst_431 : f32 to vector<20x256xf32>
    %829 = arith.mulf %828, %827 : vector<20x256xf32>
    %830 = math.tanh %829 : vector<20x256xf32>
    %cst_432 = arith.constant 1.000000e+00 : f32
    %831 = vector.broadcast %cst_432 : f32 to vector<20x256xf32>
    %832 = arith.addf %831, %830 : vector<20x256xf32>
    %cst_433 = arith.constant 5.000000e-01 : f32
    %833 = vector.broadcast %cst_433 : f32 to vector<20x256xf32>
    %834 = arith.mulf %833, %832 : vector<20x256xf32>
    %835 = arith.mulf %822, %834 : vector<20x256xf32>
    %836 = arith.truncf %835 : vector<20x256xf32> to vector<20x256xbf16>
    %c1_434 = arith.constant 1 : index
    %c0_435 = arith.constant 0 : index
    %c0_436 = arith.constant 0 : index
    %837 = vector.load %arg14[%c1_434, %c0_435, %c0_436] : memref<3x256x64xbf16, #tpu.memory_space<vmem>>, vector<1x256x64xbf16>
    %838 = vector.shape_cast %837 : vector<1x256x64xbf16> to vector<256x64xbf16>
    %cst_437 = arith.constant dense<0.000000e+00> : vector<20x64xf32>
    %839 = tpu.matmul %836, %838, %cst_437 {dimension_numbers = #tpu.dot_dimension_numbers<[1], [0], [0], [1], [0, 0, 1, 1], [], []>} : vector<20x256xbf16>, vector<256x64xbf16>, vector<20x64xf32> -> vector<20x64xf32>
    %840 = vector.extract_strided_slice %674 {offsets = [1, 0], sizes = [1, 64], strides = [1, 1]} : vector<2x64xf32> to vector<1x64xf32>
    %841 = vector.broadcast %840 : vector<1x64xf32> to vector<20x64xf32>
    %842 = arith.addf %839, %841 : vector<20x64xf32>
    %843 = arith.addf %788, %842 : vector<20x64xf32>
    %844 = vector.extract_strided_slice %843 {offsets = [0, 0], sizes = [12, 64], strides = [1, 1]} : vector<20x64xf32> to vector<12x64xf32>
    %c2 = arith.constant 2 : index
    %c0_438 = arith.constant 0 : index
    %c0_439 = arith.constant 0 : index
    %845 = vector.load %arg10[%c2, %c0_438, %c0_439] : memref<3x4x64xf32, #tpu.memory_space<vmem>>, vector<1x4x64xf32>
    %846 = vector.shape_cast %845 : vector<1x4x64xf32> to vector<4x64xf32>
    %c2_440 = arith.constant 2 : index
    %c0_441 = arith.constant 0 : index
    %c0_442 = arith.constant 0 : index
    %847 = vector.load %arg9[%c2_440, %c0_441, %c0_442] : memref<3x2x64xf32, #tpu.memory_space<vmem>>, vector<1x2x64xf32>
    %848 = vector.shape_cast %847 : vector<1x2x64xf32> to vector<2x64xf32>
    %849 = vector.extract_strided_slice %846 {offsets = [0, 0], sizes = [1, 64], strides = [1, 1]} : vector<4x64xf32> to vector<1x64xf32>
    %850 = vector.extract_strided_slice %846 {offsets = [1, 0], sizes = [1, 64], strides = [1, 1]} : vector<4x64xf32> to vector<1x64xf32>
    %cst_443 = arith.constant dense<0.000000e+00> : vector<20xf32>
    %851 = vector.multi_reduction <add>, %843, %cst_443 [1] : vector<20x64xf32> to vector<20xf32>
    %852 = vector.shape_cast %851 : vector<20xf32> to vector<20x1xf32>
    %cst_444 = arith.constant 6.400000e+01 : f32
    %853 = vector.broadcast %cst_444 : f32 to vector<20x1xf32>
    %854 = arith.divf %852, %853 : vector<20x1xf32>
    %855 = vector.broadcast %854 : vector<20x1xf32> to vector<20x64xf32>
    %856 = arith.subf %843, %855 : vector<20x64xf32>
    %857 = arith.mulf %856, %856 : vector<20x64xf32>
    %cst_445 = arith.constant dense<0.000000e+00> : vector<20xf32>
    %858 = vector.multi_reduction <add>, %857, %cst_445 [1] : vector<20x64xf32> to vector<20xf32>
    %859 = vector.shape_cast %858 : vector<20xf32> to vector<20x1xf32>
    %cst_446 = arith.constant 6.400000e+01 : f32
    %860 = vector.broadcast %cst_446 : f32 to vector<20x1xf32>
    %861 = arith.divf %859, %860 : vector<20x1xf32>
    %cst_447 = arith.constant 9.99999974E-6 : f32
    %862 = vector.broadcast %cst_447 : f32 to vector<20x1xf32>
    %863 = arith.addf %861, %862 : vector<20x1xf32>
    %864 = math.rsqrt %863 : vector<20x1xf32>
    %865 = vector.broadcast %864 : vector<20x1xf32> to vector<20x64xf32>
    %866 = arith.mulf %856, %865 : vector<20x64xf32>
    %867 = vector.broadcast %849 : vector<1x64xf32> to vector<20x64xf32>
    %868 = arith.mulf %866, %867 : vector<20x64xf32>
    %869 = vector.broadcast %850 : vector<1x64xf32> to vector<20x64xf32>
    %870 = arith.addf %868, %869 : vector<20x64xf32>
    %871 = arith.truncf %870 : vector<20x64xf32> to vector<20x64xbf16>
    %c2_448 = arith.constant 2 : index
    %c0_449 = arith.constant 0 : index
    %c0_450 = arith.constant 0 : index
    %c0_451 = arith.constant 0 : index
    %872 = vector.load %arg16[%c2_448, %c0_449, %c0_450, %c0_451] : memref<3x2x3x32xf32, #tpu.memory_space<vmem>>, vector<1x1x3x32xf32>
    %873 = vector.shape_cast %872 : vector<1x1x3x32xf32> to vector<3x32xf32>
    %c2_452 = arith.constant 2 : index
    %c0_453 = arith.constant 0 : index
    %c0_454 = arith.constant 0 : index
    %c0_455 = arith.constant 0 : index
    %874 = vector.load %arg18[%c2_452, %c0_453, %c0_454, %c0_455] : memref<3x2x64x32xbf16, #tpu.memory_space<vmem>>, vector<1x1x64x32xbf16>
    %875 = vector.shape_cast %874 : vector<1x1x64x32xbf16> to vector<64x32xbf16>
    %cst_456 = arith.constant dense<0.000000e+00> : vector<20x32xf32>
    %876 = tpu.matmul %871, %875, %cst_456 {dimension_numbers = #tpu.dot_dimension_numbers<[1], [0], [0], [1], [0, 0, 1, 1], [], []>} : vector<20x64xbf16>, vector<64x32xbf16>, vector<20x32xf32> -> vector<20x32xf32>
    %877 = vector.extract_strided_slice %873 {offsets = [0, 0], sizes = [1, 32], strides = [1, 1]} : vector<3x32xf32> to vector<1x32xf32>
    %878 = vector.broadcast %877 : vector<1x32xf32> to vector<20x32xf32>
    %879 = arith.addf %876, %878 : vector<20x32xf32>
    %c2_457 = arith.constant 2 : index
    %c0_458 = arith.constant 0 : index
    %c0_459 = arith.constant 0 : index
    %c0_460 = arith.constant 0 : index
    %880 = vector.load %arg17[%c2_457, %c0_458, %c0_459, %c0_460] : memref<3x2x64x32xbf16, #tpu.memory_space<vmem>>, vector<1x1x64x32xbf16>
    %881 = vector.shape_cast %880 : vector<1x1x64x32xbf16> to vector<64x32xbf16>
    %cst_461 = arith.constant dense<0.000000e+00> : vector<20x32xf32>
    %882 = tpu.matmul %871, %881, %cst_461 {dimension_numbers = #tpu.dot_dimension_numbers<[1], [0], [0], [1], [0, 0, 1, 1], [], []>} : vector<20x64xbf16>, vector<64x32xbf16>, vector<20x32xf32> -> vector<20x32xf32>
    %883 = vector.extract_strided_slice %873 {offsets = [1, 0], sizes = [1, 32], strides = [1, 1]} : vector<3x32xf32> to vector<1x32xf32>
    %884 = vector.broadcast %883 : vector<1x32xf32> to vector<20x32xf32>
    %885 = arith.addf %882, %884 : vector<20x32xf32>
    %c2_462 = arith.constant 2 : index
    %c0_463 = arith.constant 0 : index
    %c0_464 = arith.constant 0 : index
    %c0_465 = arith.constant 0 : index
    %886 = vector.load %arg19[%c2_462, %c0_463, %c0_464, %c0_465] : memref<3x2x64x32xbf16, #tpu.memory_space<vmem>>, vector<1x1x64x32xbf16>
    %887 = vector.shape_cast %886 : vector<1x1x64x32xbf16> to vector<64x32xbf16>
    %cst_466 = arith.constant dense<0.000000e+00> : vector<20x32xf32>
    %888 = tpu.matmul %871, %887, %cst_466 {dimension_numbers = #tpu.dot_dimension_numbers<[1], [0], [0], [1], [0, 0, 1, 1], [], []>} : vector<20x64xbf16>, vector<64x32xbf16>, vector<20x32xf32> -> vector<20x32xf32>
    %889 = vector.extract_strided_slice %873 {offsets = [2, 0], sizes = [1, 32], strides = [1, 1]} : vector<3x32xf32> to vector<1x32xf32>
    %890 = vector.broadcast %889 : vector<1x32xf32> to vector<20x32xf32>
    %891 = arith.addf %888, %890 : vector<20x32xf32>
    %892 = arith.truncf %879 : vector<20x32xf32> to vector<20x32xbf16>
    %893 = arith.truncf %885 : vector<20x32xf32> to vector<20x32xbf16>
    %cst_467 = arith.constant dense<0.000000e+00> : vector<20x20xf32>
    %894 = tpu.matmul %892, %893, %cst_467 {dimension_numbers = #tpu.dot_dimension_numbers<[1], [1], [0], [0], [0, 0, 1, 0], [], []>} : vector<20x32xbf16>, vector<20x32xbf16>, vector<20x20xf32> -> vector<20x20xf32>
    %cst_468 = arith.constant 0.176776692 : f32
    %895 = vector.broadcast %cst_468 : f32 to vector<20x20xf32>
    %896 = arith.mulf %894, %895 : vector<20x20xf32>
    %cst_469 = arith.constant -1.000000e+30 : f32
    %897 = vector.broadcast %cst_469 : f32 to vector<20x20xf32>
    %898 = arith.select %57, %896, %897 : vector<20x20xi1>, vector<20x20xf32>
    %cst_470 = arith.constant dense<0xFF800000> : vector<20xf32>
    %899 = vector.multi_reduction <maximumf>, %898, %cst_470 [1] : vector<20x20xf32> to vector<20xf32>
    %900 = vector.shape_cast %899 : vector<20xf32> to vector<20x1xf32>
    %901 = vector.broadcast %900 : vector<20x1xf32> to vector<20x20xf32>
    %902 = arith.subf %898, %901 : vector<20x20xf32>
    %903 = math.exp %902 : vector<20x20xf32>
    %cst_471 = arith.constant dense<0.000000e+00> : vector<20xf32>
    %904 = vector.multi_reduction <add>, %903, %cst_471 [1] : vector<20x20xf32> to vector<20xf32>
    %905 = vector.shape_cast %904 : vector<20xf32> to vector<20x1xf32>
    %906 = vector.broadcast %905 : vector<20x1xf32> to vector<20x20xf32>
    %907 = arith.divf %903, %906 : vector<20x20xf32>
    %908 = arith.truncf %907 : vector<20x20xf32> to vector<20x20xbf16>
    %909 = arith.truncf %891 : vector<20x32xf32> to vector<20x32xbf16>
    %cst_472 = arith.constant dense<0.000000e+00> : vector<20x32xf32>
    %910 = tpu.matmul %908, %909, %cst_472 {dimension_numbers = #tpu.dot_dimension_numbers<[1], [0], [0], [1], [0, 0, 1, 1], [], []>} : vector<20x20xbf16>, vector<20x32xbf16>, vector<20x32xf32> -> vector<20x32xf32>
    %911 = arith.truncf %910 : vector<20x32xf32> to vector<20x32xbf16>
    %c2_473 = arith.constant 2 : index
    %c0_474 = arith.constant 0 : index
    %c0_475 = arith.constant 0 : index
    %c0_476 = arith.constant 0 : index
    %912 = vector.load %arg15[%c2_473, %c0_474, %c0_475, %c0_476] : memref<3x2x32x64xbf16, #tpu.memory_space<vmem>>, vector<1x1x32x64xbf16>
    %913 = vector.shape_cast %912 : vector<1x1x32x64xbf16> to vector<32x64xbf16>
    %cst_477 = arith.constant dense<0.000000e+00> : vector<20x64xf32>
    %914 = tpu.matmul %911, %913, %cst_477 {dimension_numbers = #tpu.dot_dimension_numbers<[1], [0], [0], [1], [0, 0, 1, 1], [], []>} : vector<20x32xbf16>, vector<32x64xbf16>, vector<20x64xf32> -> vector<20x64xf32>
    %c2_478 = arith.constant 2 : index
    %c1_479 = arith.constant 1 : index
    %c0_480 = arith.constant 0 : index
    %c0_481 = arith.constant 0 : index
    %915 = vector.load %arg16[%c2_478, %c1_479, %c0_480, %c0_481] : memref<3x2x3x32xf32, #tpu.memory_space<vmem>>, vector<1x1x3x32xf32>
    %916 = vector.shape_cast %915 : vector<1x1x3x32xf32> to vector<3x32xf32>
    %c2_482 = arith.constant 2 : index
    %c1_483 = arith.constant 1 : index
    %c0_484 = arith.constant 0 : index
    %c0_485 = arith.constant 0 : index
    %917 = vector.load %arg18[%c2_482, %c1_483, %c0_484, %c0_485] : memref<3x2x64x32xbf16, #tpu.memory_space<vmem>>, vector<1x1x64x32xbf16>
    %918 = vector.shape_cast %917 : vector<1x1x64x32xbf16> to vector<64x32xbf16>
    %cst_486 = arith.constant dense<0.000000e+00> : vector<20x32xf32>
    %919 = tpu.matmul %871, %918, %cst_486 {dimension_numbers = #tpu.dot_dimension_numbers<[1], [0], [0], [1], [0, 0, 1, 1], [], []>} : vector<20x64xbf16>, vector<64x32xbf16>, vector<20x32xf32> -> vector<20x32xf32>
    %920 = vector.extract_strided_slice %916 {offsets = [0, 0], sizes = [1, 32], strides = [1, 1]} : vector<3x32xf32> to vector<1x32xf32>
    %921 = vector.broadcast %920 : vector<1x32xf32> to vector<20x32xf32>
    %922 = arith.addf %919, %921 : vector<20x32xf32>
    %c2_487 = arith.constant 2 : index
    %c1_488 = arith.constant 1 : index
    %c0_489 = arith.constant 0 : index
    %c0_490 = arith.constant 0 : index
    %923 = vector.load %arg17[%c2_487, %c1_488, %c0_489, %c0_490] : memref<3x2x64x32xbf16, #tpu.memory_space<vmem>>, vector<1x1x64x32xbf16>
    %924 = vector.shape_cast %923 : vector<1x1x64x32xbf16> to vector<64x32xbf16>
    %cst_491 = arith.constant dense<0.000000e+00> : vector<20x32xf32>
    %925 = tpu.matmul %871, %924, %cst_491 {dimension_numbers = #tpu.dot_dimension_numbers<[1], [0], [0], [1], [0, 0, 1, 1], [], []>} : vector<20x64xbf16>, vector<64x32xbf16>, vector<20x32xf32> -> vector<20x32xf32>
    %926 = vector.extract_strided_slice %916 {offsets = [1, 0], sizes = [1, 32], strides = [1, 1]} : vector<3x32xf32> to vector<1x32xf32>
    %927 = vector.broadcast %926 : vector<1x32xf32> to vector<20x32xf32>
    %928 = arith.addf %925, %927 : vector<20x32xf32>
    %c2_492 = arith.constant 2 : index
    %c1_493 = arith.constant 1 : index
    %c0_494 = arith.constant 0 : index
    %c0_495 = arith.constant 0 : index
    %929 = vector.load %arg19[%c2_492, %c1_493, %c0_494, %c0_495] : memref<3x2x64x32xbf16, #tpu.memory_space<vmem>>, vector<1x1x64x32xbf16>
    %930 = vector.shape_cast %929 : vector<1x1x64x32xbf16> to vector<64x32xbf16>
    %cst_496 = arith.constant dense<0.000000e+00> : vector<20x32xf32>
    %931 = tpu.matmul %871, %930, %cst_496 {dimension_numbers = #tpu.dot_dimension_numbers<[1], [0], [0], [1], [0, 0, 1, 1], [], []>} : vector<20x64xbf16>, vector<64x32xbf16>, vector<20x32xf32> -> vector<20x32xf32>
    %932 = vector.extract_strided_slice %916 {offsets = [2, 0], sizes = [1, 32], strides = [1, 1]} : vector<3x32xf32> to vector<1x32xf32>
    %933 = vector.broadcast %932 : vector<1x32xf32> to vector<20x32xf32>
    %934 = arith.addf %931, %933 : vector<20x32xf32>
    %935 = arith.truncf %922 : vector<20x32xf32> to vector<20x32xbf16>
    %936 = arith.truncf %928 : vector<20x32xf32> to vector<20x32xbf16>
    %cst_497 = arith.constant dense<0.000000e+00> : vector<20x20xf32>
    %937 = tpu.matmul %935, %936, %cst_497 {dimension_numbers = #tpu.dot_dimension_numbers<[1], [1], [0], [0], [0, 0, 1, 0], [], []>} : vector<20x32xbf16>, vector<20x32xbf16>, vector<20x20xf32> -> vector<20x20xf32>
    %cst_498 = arith.constant 0.176776692 : f32
    %938 = vector.broadcast %cst_498 : f32 to vector<20x20xf32>
    %939 = arith.mulf %937, %938 : vector<20x20xf32>
    %cst_499 = arith.constant -1.000000e+30 : f32
    %940 = vector.broadcast %cst_499 : f32 to vector<20x20xf32>
    %941 = arith.select %57, %939, %940 : vector<20x20xi1>, vector<20x20xf32>
    %cst_500 = arith.constant dense<0xFF800000> : vector<20xf32>
    %942 = vector.multi_reduction <maximumf>, %941, %cst_500 [1] : vector<20x20xf32> to vector<20xf32>
    %943 = vector.shape_cast %942 : vector<20xf32> to vector<20x1xf32>
    %944 = vector.broadcast %943 : vector<20x1xf32> to vector<20x20xf32>
    %945 = arith.subf %941, %944 : vector<20x20xf32>
    %946 = math.exp %945 : vector<20x20xf32>
    %cst_501 = arith.constant dense<0.000000e+00> : vector<20xf32>
    %947 = vector.multi_reduction <add>, %946, %cst_501 [1] : vector<20x20xf32> to vector<20xf32>
    %948 = vector.shape_cast %947 : vector<20xf32> to vector<20x1xf32>
    %949 = vector.broadcast %948 : vector<20x1xf32> to vector<20x20xf32>
    %950 = arith.divf %946, %949 : vector<20x20xf32>
    %951 = arith.truncf %950 : vector<20x20xf32> to vector<20x20xbf16>
    %952 = arith.truncf %934 : vector<20x32xf32> to vector<20x32xbf16>
    %cst_502 = arith.constant dense<0.000000e+00> : vector<20x32xf32>
    %953 = tpu.matmul %951, %952, %cst_502 {dimension_numbers = #tpu.dot_dimension_numbers<[1], [0], [0], [1], [0, 0, 1, 1], [], []>} : vector<20x20xbf16>, vector<20x32xbf16>, vector<20x32xf32> -> vector<20x32xf32>
    %954 = arith.truncf %953 : vector<20x32xf32> to vector<20x32xbf16>
    %c2_503 = arith.constant 2 : index
    %c1_504 = arith.constant 1 : index
    %c0_505 = arith.constant 0 : index
    %c0_506 = arith.constant 0 : index
    %955 = vector.load %arg15[%c2_503, %c1_504, %c0_505, %c0_506] : memref<3x2x32x64xbf16, #tpu.memory_space<vmem>>, vector<1x1x32x64xbf16>
    %956 = vector.shape_cast %955 : vector<1x1x32x64xbf16> to vector<32x64xbf16>
    %cst_507 = arith.constant dense<0.000000e+00> : vector<20x64xf32>
    %957 = tpu.matmul %954, %956, %cst_507 {dimension_numbers = #tpu.dot_dimension_numbers<[1], [0], [0], [1], [0, 0, 1, 1], [], []>} : vector<20x32xbf16>, vector<32x64xbf16>, vector<20x64xf32> -> vector<20x64xf32>
    %958 = arith.addf %914, %957 : vector<20x64xf32>
    %959 = arith.addf %843, %958 : vector<20x64xf32>
    %960 = vector.extract_strided_slice %848 {offsets = [0, 0], sizes = [1, 64], strides = [1, 1]} : vector<2x64xf32> to vector<1x64xf32>
    %961 = vector.broadcast %960 : vector<1x64xf32> to vector<20x64xf32>
    %962 = arith.addf %959, %961 : vector<20x64xf32>
    %963 = vector.extract_strided_slice %846 {offsets = [2, 0], sizes = [1, 64], strides = [1, 1]} : vector<4x64xf32> to vector<1x64xf32>
    %964 = vector.extract_strided_slice %846 {offsets = [3, 0], sizes = [1, 64], strides = [1, 1]} : vector<4x64xf32> to vector<1x64xf32>
    %cst_508 = arith.constant dense<0.000000e+00> : vector<20xf32>
    %965 = vector.multi_reduction <add>, %962, %cst_508 [1] : vector<20x64xf32> to vector<20xf32>
    %966 = vector.shape_cast %965 : vector<20xf32> to vector<20x1xf32>
    %cst_509 = arith.constant 6.400000e+01 : f32
    %967 = vector.broadcast %cst_509 : f32 to vector<20x1xf32>
    %968 = arith.divf %966, %967 : vector<20x1xf32>
    %969 = vector.broadcast %968 : vector<20x1xf32> to vector<20x64xf32>
    %970 = arith.subf %962, %969 : vector<20x64xf32>
    %971 = arith.mulf %970, %970 : vector<20x64xf32>
    %cst_510 = arith.constant dense<0.000000e+00> : vector<20xf32>
    %972 = vector.multi_reduction <add>, %971, %cst_510 [1] : vector<20x64xf32> to vector<20xf32>
    %973 = vector.shape_cast %972 : vector<20xf32> to vector<20x1xf32>
    %cst_511 = arith.constant 6.400000e+01 : f32
    %974 = vector.broadcast %cst_511 : f32 to vector<20x1xf32>
    %975 = arith.divf %973, %974 : vector<20x1xf32>
    %cst_512 = arith.constant 9.99999974E-6 : f32
    %976 = vector.broadcast %cst_512 : f32 to vector<20x1xf32>
    %977 = arith.addf %975, %976 : vector<20x1xf32>
    %978 = math.rsqrt %977 : vector<20x1xf32>
    %979 = vector.broadcast %978 : vector<20x1xf32> to vector<20x64xf32>
    %980 = arith.mulf %970, %979 : vector<20x64xf32>
    %981 = vector.broadcast %963 : vector<1x64xf32> to vector<20x64xf32>
    %982 = arith.mulf %980, %981 : vector<20x64xf32>
    %983 = vector.broadcast %964 : vector<1x64xf32> to vector<20x64xf32>
    %984 = arith.addf %982, %983 : vector<20x64xf32>
    %985 = arith.truncf %984 : vector<20x64xf32> to vector<20x64xbf16>
    %c2_513 = arith.constant 2 : index
    %c0_514 = arith.constant 0 : index
    %c0_515 = arith.constant 0 : index
    %986 = vector.load %arg13[%c2_513, %c0_514, %c0_515] : memref<3x64x256xbf16, #tpu.memory_space<vmem>>, vector<1x64x256xbf16>
    %987 = vector.shape_cast %986 : vector<1x64x256xbf16> to vector<64x256xbf16>
    %cst_516 = arith.constant dense<0.000000e+00> : vector<20x256xf32>
    %988 = tpu.matmul %985, %987, %cst_516 {dimension_numbers = #tpu.dot_dimension_numbers<[1], [0], [0], [1], [0, 0, 1, 1], [], []>} : vector<20x64xbf16>, vector<64x256xbf16>, vector<20x256xf32> -> vector<20x256xf32>
    %c2_517 = arith.constant 2 : index
    %c0_518 = arith.constant 0 : index
    %c0_519 = arith.constant 0 : index
    %989 = vector.load %arg12[%c2_517, %c0_518, %c0_519] : memref<3x64x256xbf16, #tpu.memory_space<vmem>>, vector<1x64x256xbf16>
    %990 = vector.shape_cast %989 : vector<1x64x256xbf16> to vector<64x256xbf16>
    %cst_520 = arith.constant dense<0.000000e+00> : vector<20x256xf32>
    %991 = tpu.matmul %497, %990, %cst_520 {dimension_numbers = #tpu.dot_dimension_numbers<[1], [0], [0], [1], [0, 0, 1, 1], [], []>} : vector<20x64xbf16>, vector<64x256xbf16>, vector<20x256xf32> -> vector<20x256xf32>
    %992 = arith.addf %988, %991 : vector<20x256xf32>
    %c2_521 = arith.constant 2 : index
    %c0_522 = arith.constant 0 : index
    %c0_523 = arith.constant 0 : index
    %993 = vector.load %arg11[%c2_521, %c0_522, %c0_523] : memref<3x1x256xf32, #tpu.memory_space<vmem>>, vector<1x1x256xf32>
    %994 = vector.shape_cast %993 : vector<1x1x256xf32> to vector<1x256xf32>
    %995 = vector.broadcast %994 : vector<1x256xf32> to vector<20x256xf32>
    %996 = arith.addf %992, %995 : vector<20x256xf32>
    %997 = arith.mulf %996, %996 : vector<20x256xf32>
    %998 = arith.mulf %996, %997 : vector<20x256xf32>
    %cst_524 = arith.constant 4.471500e-02 : f32
    %999 = vector.broadcast %cst_524 : f32 to vector<20x256xf32>
    %1000 = arith.mulf %999, %998 : vector<20x256xf32>
    %1001 = arith.addf %996, %1000 : vector<20x256xf32>
    %cst_525 = arith.constant 0.797884583 : f32
    %1002 = vector.broadcast %cst_525 : f32 to vector<20x256xf32>
    %1003 = arith.mulf %1002, %1001 : vector<20x256xf32>
    %1004 = math.tanh %1003 : vector<20x256xf32>
    %cst_526 = arith.constant 1.000000e+00 : f32
    %1005 = vector.broadcast %cst_526 : f32 to vector<20x256xf32>
    %1006 = arith.addf %1005, %1004 : vector<20x256xf32>
    %cst_527 = arith.constant 5.000000e-01 : f32
    %1007 = vector.broadcast %cst_527 : f32 to vector<20x256xf32>
    %1008 = arith.mulf %1007, %1006 : vector<20x256xf32>
    %1009 = arith.mulf %996, %1008 : vector<20x256xf32>
    %1010 = arith.truncf %1009 : vector<20x256xf32> to vector<20x256xbf16>
    %c2_528 = arith.constant 2 : index
    %c0_529 = arith.constant 0 : index
    %c0_530 = arith.constant 0 : index
    %1011 = vector.load %arg14[%c2_528, %c0_529, %c0_530] : memref<3x256x64xbf16, #tpu.memory_space<vmem>>, vector<1x256x64xbf16>
    %1012 = vector.shape_cast %1011 : vector<1x256x64xbf16> to vector<256x64xbf16>
    %cst_531 = arith.constant dense<0.000000e+00> : vector<20x64xf32>
    %1013 = tpu.matmul %1010, %1012, %cst_531 {dimension_numbers = #tpu.dot_dimension_numbers<[1], [0], [0], [1], [0, 0, 1, 1], [], []>} : vector<20x256xbf16>, vector<256x64xbf16>, vector<20x64xf32> -> vector<20x64xf32>
    %1014 = vector.extract_strided_slice %848 {offsets = [1, 0], sizes = [1, 64], strides = [1, 1]} : vector<2x64xf32> to vector<1x64xf32>
    %1015 = vector.broadcast %1014 : vector<1x64xf32> to vector<20x64xf32>
    %1016 = arith.addf %1013, %1015 : vector<20x64xf32>
    %1017 = arith.addf %962, %1016 : vector<20x64xf32>
    %1018 = vector.extract_strided_slice %1017 {offsets = [12, 0], sizes = [8, 64], strides = [1, 1]} : vector<20x64xf32> to vector<8x64xf32>
    %1019 = tpu.concatenate %844, %1018 in 0 : vector<12x64xf32>, vector<8x64xf32> -> vector<20x64xf32>
    %1020 = arith.truncf %1019 : vector<20x64xf32> to vector<20x64xbf16>
    %c0_532 = arith.constant 0 : index
    %c0_533 = arith.constant 0 : index
    %1021 = vector.load %arg37[%c0_532, %c0_533] : memref<64x64xbf16, #tpu.memory_space<vmem>>, vector<64x64xbf16>
    %cst_534 = arith.constant dense<0.000000e+00> : vector<20x64xf32>
    %1022 = tpu.matmul %1020, %1021, %cst_534 {dimension_numbers = #tpu.dot_dimension_numbers<[1], [0], [0], [1], [0, 0, 1, 1], [], []>} : vector<20x64xbf16>, vector<64x64xbf16>, vector<20x64xf32> -> vector<20x64xf32>
    %c0_535 = arith.constant 0 : index
    %c0_536 = arith.constant 0 : index
    %1023 = vector.load %arg36[%c0_535, %c0_536] : memref<64x64xbf16, #tpu.memory_space<vmem>>, vector<64x64xbf16>
    %cst_537 = arith.constant dense<0.000000e+00> : vector<20x64xf32>
    %1024 = tpu.matmul %497, %1023, %cst_537 {dimension_numbers = #tpu.dot_dimension_numbers<[1], [0], [0], [1], [0, 0, 1, 1], [], []>} : vector<20x64xbf16>, vector<64x64xbf16>, vector<20x64xf32> -> vector<20x64xf32>
    %1025 = arith.addf %1022, %1024 : vector<20x64xf32>
    %c0_538 = arith.constant 0 : index
    %c0_539 = arith.constant 0 : index
    %1026 = vector.load %arg35[%c0_538, %c0_539] : memref<1x64xf32, #tpu.memory_space<vmem>>, vector<1x64xf32>
    %1027 = vector.broadcast %1026 : vector<1x64xf32> to vector<20x64xf32>
    %1028 = arith.addf %1025, %1027 : vector<20x64xf32>
    %c0_540 = arith.constant 0 : index
    %c0_541 = arith.constant 0 : index
    %c0_542 = arith.constant 0 : index
    %1029 = vector.load %arg39[%c0_540, %c0_541, %c0_542] : memref<1x20x64xf32, #tpu.memory_space<vmem>>, vector<1x20x64xf32>
    %1030 = vector.shape_cast %1029 : vector<1x20x64xf32> to vector<20x64xf32>
    %1031 = vector.shape_cast %1028 : vector<20x64xf32> to vector<1x20x64xf32>
    tpu.vector_store %arg39[%c0_540, %c0_541, %c0_542], %1031 {strides = array<i32>} : memref<1x20x64xf32, #tpu.memory_space<vmem>>, vector<1x20x64xf32>,
    return
  }
  func.func @transform_0(%arg0: i32) -> (i32, i32, i32) {
    %c0_i32 = arith.constant 0 : i32
    %c0_i32_0 = arith.constant 0 : i32
    %c0_i32_1 = arith.constant 0 : i32
    return %arg0, %c0_i32, %c0_i32_0 : i32, i32, i32
  }
  func.func @transform_1(%arg0: i32) -> (i32, i32, i32) {
    %c0_i32 = arith.constant 0 : i32
    %c0_i32_0 = arith.constant 0 : i32
    %c0_i32_1 = arith.constant 0 : i32
    return %arg0, %c0_i32, %c0_i32_0 : i32, i32, i32
  }
  func.func @transform_2(%arg0: i32) -> (i32, i32, i32) {
    %c0_i32 = arith.constant 0 : i32
    %c0_i32_0 = arith.constant 0 : i32
    %c0_i32_1 = arith.constant 0 : i32
    return %arg0, %c0_i32, %c0_i32_0 : i32, i32, i32
  }
  func.func @transform_3(%arg0: i32) -> (i32, i32, i32) {
    %c0_i32 = arith.constant 0 : i32
    %c0_i32_0 = arith.constant 0 : i32
    %c0_i32_1 = arith.constant 0 : i32
    return %arg0, %c0_i32, %c0_i32_0 : i32, i32, i32
  }
  func.func @transform_4(%arg0: i32) -> (i32, i32, i32) {
    %c0_i32 = arith.constant 0 : i32
    %c0_i32_0 = arith.constant 0 : i32
    %c0_i32_1 = arith.constant 0 : i32
    return %arg0, %c0_i32, %c0_i32_0 : i32, i32, i32
  }
  func.func @transform_5(%arg0: i32) -> (i32, i32) {
    %c0_i32 = arith.constant 0 : i32
    %c0_i32_0 = arith.constant 0 : i32
    %c0_i32_1 = arith.constant 0 : i32
    return %c0_i32, %c0_i32_0 : i32, i32
  }
  func.func @transform_6(%arg0: i32) -> (i32, i32) {
    %c0_i32 = arith.constant 0 : i32
    %c0_i32_0 = arith.constant 0 : i32
    %c0_i32_1 = arith.constant 0 : i32
    return %c0_i32, %c0_i32_0 : i32, i32
  }
  func.func @transform_7(%arg0: i32) -> (i32, i32) {
    %c0_i32 = arith.constant 0 : i32
    %c0_i32_0 = arith.constant 0 : i32
    %c0_i32_1 = arith.constant 0 : i32
    return %c0_i32, %c0_i32_0 : i32, i32
  }
  func.func @transform_8(%arg0: i32) -> (i32, i32, i32) {
    %c0_i32 = arith.constant 0 : i32
    %c0_i32_0 = arith.constant 0 : i32
    %c0_i32_1 = arith.constant 0 : i32
    %c0_i32_2 = arith.constant 0 : i32
    return %c0_i32, %c0_i32_0, %c0_i32_1 : i32, i32, i32
  }
  func.func @transform_9(%arg0: i32) -> (i32, i32, i32) {
    %c0_i32 = arith.constant 0 : i32
    %c0_i32_0 = arith.constant 0 : i32
    %c0_i32_1 = arith.constant 0 : i32
    %c0_i32_2 = arith.constant 0 : i32
    return %c0_i32, %c0_i32_0, %c0_i32_1 : i32, i32, i32
  }
  func.func @transform_10(%arg0: i32) -> (i32, i32, i32) {
    %c0_i32 = arith.constant 0 : i32
    %c0_i32_0 = arith.constant 0 : i32
    %c0_i32_1 = arith.constant 0 : i32
    %c0_i32_2 = arith.constant 0 : i32
    return %c0_i32, %c0_i32_0, %c0_i32_1 : i32, i32, i32
  }
  func.func @transform_11(%arg0: i32) -> (i32, i32, i32) {
    %c0_i32 = arith.constant 0 : i32
    %c0_i32_0 = arith.constant 0 : i32
    %c0_i32_1 = arith.constant 0 : i32
    %c0_i32_2 = arith.constant 0 : i32
    return %c0_i32, %c0_i32_0, %c0_i32_1 : i32, i32, i32
  }
  func.func @transform_12(%arg0: i32) -> (i32, i32, i32) {
    %c0_i32 = arith.constant 0 : i32
    %c0_i32_0 = arith.constant 0 : i32
    %c0_i32_1 = arith.constant 0 : i32
    %c0_i32_2 = arith.constant 0 : i32
    return %c0_i32, %c0_i32_0, %c0_i32_1 : i32, i32, i32
  }
  func.func @transform_13(%arg0: i32) -> (i32, i32, i32) {
    %c0_i32 = arith.constant 0 : i32
    %c0_i32_0 = arith.constant 0 : i32
    %c0_i32_1 = arith.constant 0 : i32
    %c0_i32_2 = arith.constant 0 : i32
    return %c0_i32, %c0_i32_0, %c0_i32_1 : i32, i32, i32
  }
  func.func @transform_14(%arg0: i32) -> (i32, i32, i32, i32) {
    %c0_i32 = arith.constant 0 : i32
    %c0_i32_0 = arith.constant 0 : i32
    %c0_i32_1 = arith.constant 0 : i32
    %c0_i32_2 = arith.constant 0 : i32
    %c0_i32_3 = arith.constant 0 : i32
    return %c0_i32, %c0_i32_0, %c0_i32_1, %c0_i32_2 : i32, i32, i32, i32
  }
  func.func @transform_15(%arg0: i32) -> (i32, i32, i32, i32) {
    %c0_i32 = arith.constant 0 : i32
    %c0_i32_0 = arith.constant 0 : i32
    %c0_i32_1 = arith.constant 0 : i32
    %c0_i32_2 = arith.constant 0 : i32
    %c0_i32_3 = arith.constant 0 : i32
    return %c0_i32, %c0_i32_0, %c0_i32_1, %c0_i32_2 : i32, i32, i32, i32
  }
  func.func @transform_16(%arg0: i32) -> (i32, i32, i32, i32) {
    %c0_i32 = arith.constant 0 : i32
    %c0_i32_0 = arith.constant 0 : i32
    %c0_i32_1 = arith.constant 0 : i32
    %c0_i32_2 = arith.constant 0 : i32
    %c0_i32_3 = arith.constant 0 : i32
    return %c0_i32, %c0_i32_0, %c0_i32_1, %c0_i32_2 : i32, i32, i32, i32
  }
  func.func @transform_17(%arg0: i32) -> (i32, i32, i32, i32) {
    %c0_i32 = arith.constant 0 : i32
    %c0_i32_0 = arith.constant 0 : i32
    %c0_i32_1 = arith.constant 0 : i32
    %c0_i32_2 = arith.constant 0 : i32
    %c0_i32_3 = arith.constant 0 : i32
    return %c0_i32, %c0_i32_0, %c0_i32_1, %c0_i32_2 : i32, i32, i32, i32
  }
  func.func @transform_18(%arg0: i32) -> (i32, i32, i32, i32) {
    %c0_i32 = arith.constant 0 : i32
    %c0_i32_0 = arith.constant 0 : i32
    %c0_i32_1 = arith.constant 0 : i32
    %c0_i32_2 = arith.constant 0 : i32
    %c0_i32_3 = arith.constant 0 : i32
    return %c0_i32, %c0_i32_0, %c0_i32_1, %c0_i32_2 : i32, i32, i32, i32
  }
  func.func @transform_19(%arg0: i32) -> (i32, i32, i32) {
    %c0_i32 = arith.constant 0 : i32
    %c0_i32_0 = arith.constant 0 : i32
    %c0_i32_1 = arith.constant 0 : i32
    %c0_i32_2 = arith.constant 0 : i32
    return %c0_i32, %c0_i32_0, %c0_i32_1 : i32, i32, i32
  }
  func.func @transform_20(%arg0: i32) -> (i32, i32, i32) {
    %c0_i32 = arith.constant 0 : i32
    %c0_i32_0 = arith.constant 0 : i32
    %c0_i32_1 = arith.constant 0 : i32
    %c0_i32_2 = arith.constant 0 : i32
    return %c0_i32, %c0_i32_0, %c0_i32_1 : i32, i32, i32
  }
  func.func @transform_21(%arg0: i32) -> (i32, i32, i32) {
    %c0_i32 = arith.constant 0 : i32
    %c0_i32_0 = arith.constant 0 : i32
    %c0_i32_1 = arith.constant 0 : i32
    %c0_i32_2 = arith.constant 0 : i32
    return %c0_i32, %c0_i32_0, %c0_i32_1 : i32, i32, i32
  }
  func.func @transform_22(%arg0: i32) -> (i32, i32, i32) {
    %c0_i32 = arith.constant 0 : i32
    %c0_i32_0 = arith.constant 0 : i32
    %c0_i32_1 = arith.constant 0 : i32
    %c0_i32_2 = arith.constant 0 : i32
    return %c0_i32, %c0_i32_0, %c0_i32_1 : i32, i32, i32
  }
  func.func @transform_23(%arg0: i32) -> (i32, i32, i32) {
    %c0_i32 = arith.constant 0 : i32
    %c0_i32_0 = arith.constant 0 : i32
    %c0_i32_1 = arith.constant 0 : i32
    %c0_i32_2 = arith.constant 0 : i32
    return %c0_i32, %c0_i32_0, %c0_i32_1 : i32, i32, i32
  }
  func.func @transform_24(%arg0: i32) -> (i32, i32, i32, i32) {
    %c0_i32 = arith.constant 0 : i32
    %c0_i32_0 = arith.constant 0 : i32
    %c0_i32_1 = arith.constant 0 : i32
    %c0_i32_2 = arith.constant 0 : i32
    %c0_i32_3 = arith.constant 0 : i32
    return %c0_i32, %c0_i32_0, %c0_i32_1, %c0_i32_2 : i32, i32, i32, i32
  }
  func.func @transform_25(%arg0: i32) -> (i32, i32, i32, i32) {
    %c0_i32 = arith.constant 0 : i32
    %c0_i32_0 = arith.constant 0 : i32
    %c0_i32_1 = arith.constant 0 : i32
    %c0_i32_2 = arith.constant 0 : i32
    %c0_i32_3 = arith.constant 0 : i32
    return %c0_i32, %c0_i32_0, %c0_i32_1, %c0_i32_2 : i32, i32, i32, i32
  }
  func.func @transform_26(%arg0: i32) -> (i32, i32, i32, i32) {
    %c0_i32 = arith.constant 0 : i32
    %c0_i32_0 = arith.constant 0 : i32
    %c0_i32_1 = arith.constant 0 : i32
    %c0_i32_2 = arith.constant 0 : i32
    %c0_i32_3 = arith.constant 0 : i32
    return %c0_i32, %c0_i32_0, %c0_i32_1, %c0_i32_2 : i32, i32, i32, i32
  }
  func.func @transform_27(%arg0: i32) -> (i32, i32, i32, i32) {
    %c0_i32 = arith.constant 0 : i32
    %c0_i32_0 = arith.constant 0 : i32
    %c0_i32_1 = arith.constant 0 : i32
    %c0_i32_2 = arith.constant 0 : i32
    %c0_i32_3 = arith.constant 0 : i32
    return %c0_i32, %c0_i32_0, %c0_i32_1, %c0_i32_2 : i32, i32, i32, i32
  }
  func.func @transform_28(%arg0: i32) -> (i32, i32, i32, i32) {
    %c0_i32 = arith.constant 0 : i32
    %c0_i32_0 = arith.constant 0 : i32
    %c0_i32_1 = arith.constant 0 : i32
    %c0_i32_2 = arith.constant 0 : i32
    %c0_i32_3 = arith.constant 0 : i32
    return %c0_i32, %c0_i32_0, %c0_i32_1, %c0_i32_2 : i32, i32, i32, i32
  }
  func.func @transform_29(%arg0: i32) -> (i32, i32) {
    %c0_i32 = arith.constant 0 : i32
    %c0_i32_0 = arith.constant 0 : i32
    %c0_i32_1 = arith.constant 0 : i32
    return %c0_i32, %c0_i32_0 : i32, i32
  }
  func.func @transform_30(%arg0: i32) -> (i32, i32) {
    %c0_i32 = arith.constant 0 : i32
    %c0_i32_0 = arith.constant 0 : i32
    %c0_i32_1 = arith.constant 0 : i32
    return %c0_i32, %c0_i32_0 : i32, i32
  }
  func.func @transform_31(%arg0: i32) -> (i32, i32) {
    %c0_i32 = arith.constant 0 : i32
    %c0_i32_0 = arith.constant 0 : i32
    %c0_i32_1 = arith.constant 0 : i32
    return %c0_i32, %c0_i32_0 : i32, i32
  }
  func.func @transform_32(%arg0: i32) -> (i32, i32) {
    %c0_i32 = arith.constant 0 : i32
    %c0_i32_0 = arith.constant 0 : i32
    %c0_i32_1 = arith.constant 0 : i32
    return %c0_i32, %c0_i32_0 : i32, i32
  }
  func.func @transform_33(%arg0: i32) -> (i32, i32) {
    %c0_i32 = arith.constant 0 : i32
    %c0_i32_0 = arith.constant 0 : i32
    %c0_i32_1 = arith.constant 0 : i32
    return %c0_i32, %c0_i32_0 : i32, i32
  }
  func.func @transform_34(%arg0: i32) -> (i32, i32) {
    %c0_i32 = arith.constant 0 : i32
    %c0_i32_0 = arith.constant 0 : i32
    %c0_i32_1 = arith.constant 0 : i32
    return %c0_i32, %c0_i32_0 : i32, i32
  }
  func.func @transform_35(%arg0: i32) -> (i32, i32) {
    %c0_i32 = arith.constant 0 : i32
    %c0_i32_0 = arith.constant 0 : i32
    %c0_i32_1 = arith.constant 0 : i32
    return %c0_i32, %c0_i32_0 : i32, i32
  }
  func.func @transform_36(%arg0: i32) -> (i32, i32) {
    %c0_i32 = arith.constant 0 : i32
    %c0_i32_0 = arith.constant 0 : i32
    %c0_i32_1 = arith.constant 0 : i32
    return %c0_i32, %c0_i32_0 : i32, i32
  }
  func.func @transform_37(%arg0: i32) -> (i32, i32) {
    %c0_i32 = arith.constant 0 : i32
    %c0_i32_0 = arith.constant 0 : i32
    %c0_i32_1 = arith.constant 0 : i32
    return %c0_i32, %c0_i32_0 : i32, i32
  }
  func.func @transform_38(%arg0: i32) -> (i32, i32, i32) {
    %c0_i32 = arith.constant 0 : i32
    %c0_i32_0 = arith.constant 0 : i32
    %c0_i32_1 = arith.constant 0 : i32
    return %arg0, %c0_i32, %c0_i32_0 : i32, i32, i32
  }
}

</mosaic_0001>

<llo_original>
// kernel: tpu_custom_call.1
$region0: #{tpu_custom_call.1}
  #allocation0 [shape = 'u32[]', space=smem, size = 0x4, offset = 0x4, fixed_abs, tag = 'smem constant byte address 0x4 - core index']
  #allocation1 [shape = 'u32[144,128]{1,0:T(1,128)}', space=vmem, size = 0x12000, scoped, tag = 'internal scratch']
  %s0 = inlined_call_operand.smem [shape: u32[39], index: -1, kind: input, shape index: {}]
  %s1 = sld [smem:[%s0]]
  %s2 = scalar_lea.smem %s0, 1
  %s3 = sld [smem:[%s2]]
  %s4 = scalar_lea.smem %s0, 2
  %s5 = sld [smem:[%s4]]
  %s6 = scalar_lea.smem %s0, 3
  %s7 = sld [smem:[%s6]]
  %s8 = scalar_lea.smem %s0, 4
  %s9 = sld [smem:[%s8]]
  %s10 = scalar_lea.smem %s0, 5
  %s11 = sld [smem:[%s10]]
  %s12 = scalar_lea.smem %s0, 6
  %s13 = sld [smem:[%s12]]
  %s14 = scalar_lea.smem %s0, 7
  %s15 = sld [smem:[%s14]]
  %s16 = scalar_lea.smem %s0, 8
  %s17 = sld [smem:[%s16]]
  %s18 = scalar_lea.smem %s0, 9
  %s19 = sld [smem:[%s18]]
  %s20 = scalar_lea.smem %s0, 10
  %s21 = sld [smem:[%s20]]
  %s22 = scalar_lea.smem %s0, 11
  %s23 = sld [smem:[%s22]]
  %s24 = scalar_lea.smem %s0, 12
  %s25 = sld [smem:[%s24]]
  %s26 = scalar_lea.smem %s0, 13
  %s27 = sld [smem:[%s26]]
  %s28 = scalar_lea.smem %s0, 14
  %s29 = sld [smem:[%s28]]
  %s30 = scalar_lea.smem %s0, 15
  %s31 = sld [smem:[%s30]]
  %s32 = scalar_lea.smem %s0, 16
  %s33 = sld [smem:[%s32]]
  %s34 = scalar_lea.smem %s0, 17
  %s35 = sld [smem:[%s34]]
  %s36 = scalar_lea.smem %s0, 18
  %s37 = sld [smem:[%s36]]
  %s38 = scalar_lea.smem %s0, 19
  %s39 = sld [smem:[%s38]]
  %s40 = scalar_lea.smem %s0, 20
  %s41 = sld [smem:[%s40]]
  %s42 = scalar_lea.smem %s0, 21
  %s43 = sld [smem:[%s42]]
  %s44 = scalar_lea.smem %s0, 22
  %s45 = sld [smem:[%s44]]
  %s46 = scalar_lea.smem %s0, 23
  %s47 = sld [smem:[%s46]]
  %s48 = scalar_lea.smem %s0, 24
  %s49 = sld [smem:[%s48]]
  %s50 = scalar_lea.smem %s0, 25
  %s51 = sld [smem:[%s50]]
  %s52 = scalar_lea.smem %s0, 26
  %s53 = sld [smem:[%s52]]
  %s54 = scalar_lea.smem %s0, 27
  %s55 = sld [smem:[%s54]]
  %s56 = scalar_lea.smem %s0, 28
  %s57 = sld [smem:[%s56]]
  %s58 = scalar_lea.smem %s0, 29
  %s59 = sld [smem:[%s58]]
  %s60 = scalar_lea.smem %s0, 30
  %s61 = sld [smem:[%s60]]
  %s62 = scalar_lea.smem %s0, 31
  %s63 = sld [smem:[%s62]]
  %s64 = scalar_lea.smem %s0, 32
  %s65 = sld [smem:[%s64]]
  %s66 = scalar_lea.smem %s0, 33
  %s67 = sld [smem:[%s66]]
  %s68 = scalar_lea.smem %s0, 34
  %s69 = sld [smem:[%s68]]
  %s70 = scalar_lea.smem %s0, 35
  %s71 = sld [smem:[%s70]]
  %s72 = scalar_lea.smem %s0, 36
  %s73 = sld [smem:[%s72]]
  %s74 = scalar_lea.smem %s0, 37
  %s75 = sld [smem:[%s74]]
  %s76 = scalar_lea.smem %s0, 38
  %s77 = sld [smem:[%s76]]
  %s78 = sld [smem:[#allocation0]]
  $region162: #{tpu_custom_call.1} parent=0
    _
  %s80 = ssub.s32 1, %s78
  %s81 = scalar_select 0, %s80, %s78
  // Predicated region
  $region2: #{tpu_custom_call.1} parent=0 // pred_check
    _
  $region3: #{tpu_custom_call.1} parent=0 // pred_check_branch
    %83 = sbr.rel (0) target = $region5
  $region4: #{tpu_custom_call.1} parent=0 // pred_region
    _
  $region5: #{tpu_custom_call.1} parent=0 // pred_fallthru
    _
  // Predicated region
  $region6: #{tpu_custom_call.1} parent=0 // pred_check
    _
  $region7: #{tpu_custom_call.1} parent=0 // pred_check_branch
    %85 = sbr.rel (0) target = $region9
  $region8: #{tpu_custom_call.1} parent=0 // pred_region
    _
  $region9: #{tpu_custom_call.1} parent=0 // pred_fallthru
    _
  // Predicated region
  $region10: #{tpu_custom_call.1} parent=0 // pred_check
    _
  $region11: #{tpu_custom_call.1} parent=0 // pred_check_branch
    %87 = sbr.rel (0) target = $region13
  $region12: #{tpu_custom_call.1} parent=0 // pred_region
    _
  $region13: #{tpu_custom_call.1} parent=0 // pred_fallthru
    _
  // Predicated region
  $region14: #{tpu_custom_call.1} parent=0 // pred_check
    _
  $region15: #{tpu_custom_call.1} parent=0 // pred_check_branch
    %89 = sbr.rel (0) target = $region17
  $region16: #{tpu_custom_call.1} parent=0 // pred_region
    _
  $region17: #{tpu_custom_call.1} parent=0 // pred_fallthru
    _
  // Predicated region
  $region18: #{tpu_custom_call.1} parent=0 // pred_check
    _
  $region19: #{tpu_custom_call.1} parent=0 // pred_check_branch
    %91 = sbr.rel (0) target = $region21
  $region20: #{tpu_custom_call.1} parent=0 // pred_region
    _
  $region21: #{tpu_custom_call.1} parent=0 // pred_fallthru
    _
  // Predicated region
  $region22: #{tpu_custom_call.1} parent=0 // pred_check
    _
  $region23: #{tpu_custom_call.1} parent=0 // pred_check_branch
    %93 = sbr.rel (0) target = $region25
  $region24: #{tpu_custom_call.1} parent=0 // pred_region
    _
  $region25: #{tpu_custom_call.1} parent=0 // pred_fallthru
    _
  // Predicated region
  $region26: #{tpu_custom_call.1} parent=0 // pred_check
    _
  $region27: #{tpu_custom_call.1} parent=0 // pred_check_branch
    %95 = sbr.rel (0) target = $region29
  $region28: #{tpu_custom_call.1} parent=0 // pred_region
    _
  $region29: #{tpu_custom_call.1} parent=0 // pred_fallthru
    _
  // Predicated region
  $region30: #{tpu_custom_call.1} parent=0 // pred_check
    _
  $region31: #{tpu_custom_call.1} parent=0 // pred_check_branch
    %97 = sbr.rel (0) target = $region33
  $region32: #{tpu_custom_call.1} parent=0 // pred_region
    _
  $region33: #{tpu_custom_call.1} parent=0 // pred_fallthru
    _
  // Predicated region
  $region34: #{tpu_custom_call.1} parent=0 // pred_check
    _
  $region35: #{tpu_custom_call.1} parent=0 // pred_check_branch
    %99 = sbr.rel (0) target = $region37
  $region36: #{tpu_custom_call.1} parent=0 // pred_region
    _
  $region37: #{tpu_custom_call.1} parent=0 // pred_fallthru
    _
  // Predicated region
  $region38: #{tpu_custom_call.1} parent=0 // pred_check
    _
  $region39: #{tpu_custom_call.1} parent=0 // pred_check_branch
    %101 = sbr.rel (0) target = $region41
  $region40: #{tpu_custom_call.1} parent=0 // pred_region
    _
  $region41: #{tpu_custom_call.1} parent=0 // pred_fallthru
    _
  // Predicated region
  $region42: #{tpu_custom_call.1} parent=0 // pred_check
    _
  $region43: #{tpu_custom_call.1} parent=0 // pred_check_branch
    %103 = sbr.rel (0) target = $region45
  $region44: #{tpu_custom_call.1} parent=0 // pred_region
    _
  $region45: #{tpu_custom_call.1} parent=0 // pred_fallthru
    _
  // Predicated region
  $region46: #{tpu_custom_call.1} parent=0 // pred_check
    _
  $region47: #{tpu_custom_call.1} parent=0 // pred_check_branch
    %105 = sbr.rel (0) target = $region49
  $region48: #{tpu_custom_call.1} parent=0 // pred_region
    _
  $region49: #{tpu_custom_call.1} parent=0 // pred_fallthru
    _
  // Predicated region
  $region50: #{tpu_custom_call.1} parent=0 // pred_check
    _
  $region51: #{tpu_custom_call.1} parent=0 // pred_check_branch
    %107 = sbr.rel (0) target = $region53
  $region52: #{tpu_custom_call.1} parent=0 // pred_region
    _
  $region53: #{tpu_custom_call.1} parent=0 // pred_fallthru
    _
  // Predicated region
  $region54: #{tpu_custom_call.1} parent=0 // pred_check
    _
  $region55: #{tpu_custom_call.1} parent=0 // pred_check_branch
    %109 = sbr.rel (0) target = $region57
  $region56: #{tpu_custom_call.1} parent=0 // pred_region
    _
  $region57: #{tpu_custom_call.1} parent=0 // pred_fallthru
    _
  // Predicated region
  $region58: #{tpu_custom_call.1} parent=0 // pred_check
    _
  $region59: #{tpu_custom_call.1} parent=0 // pred_check_branch
    %111 = sbr.rel (0) target = $region61
  $region60: #{tpu_custom_call.1} parent=0 // pred_region
    _
  $region61: #{tpu_custom_call.1} parent=0 // pred_fallthru
    _
  // Predicated region
  $region62: #{tpu_custom_call.1} parent=0 // pred_check
    _
  $region63: #{tpu_custom_call.1} parent=0 // pred_check_branch
    %113 = sbr.rel (0) target = $region65
  $region64: #{tpu_custom_call.1} parent=0 // pred_region
    _
  $region65: #{tpu_custom_call.1} parent=0 // pred_fallthru
    _
  // Predicated region
  $region66: #{tpu_custom_call.1} parent=0 // pred_check
    _
  $region67: #{tpu_custom_call.1} parent=0 // pred_check_branch
    %115 = sbr.rel (0) target = $region69
  $region68: #{tpu_custom_call.1} parent=0 // pred_region
    _
  $region69: #{tpu_custom_call.1} parent=0 // pred_fallthru
    _
  // Predicated region
  $region70: #{tpu_custom_call.1} parent=0 // pred_check
    _
  $region71: #{tpu_custom_call.1} parent=0 // pred_check_branch
    %117 = sbr.rel (0) target = $region73
  $region72: #{tpu_custom_call.1} parent=0 // pred_region
    _
  $region73: #{tpu_custom_call.1} parent=0 // pred_fallthru
    _
  // Predicated region
  $region74: #{tpu_custom_call.1} parent=0 // pred_check
    _
  $region75: #{tpu_custom_call.1} parent=0 // pred_check_branch
    %119 = sbr.rel (0) target = $region77
  $region76: #{tpu_custom_call.1} parent=0 // pred_region
    _
  $region77: #{tpu_custom_call.1} parent=0 // pred_fallthru
    _
  // Predicated region
  $region78: #{tpu_custom_call.1} parent=0 // pred_check
    _
  $region79: #{tpu_custom_call.1} parent=0 // pred_check_branch
    %121 = sbr.rel (0) target = $region81
  $region80: #{tpu_custom_call.1} parent=0 // pred_region
    _
  $region81: #{tpu_custom_call.1} parent=0 // pred_fallthru
    _
  // Predicated region
  $region82: #{tpu_custom_call.1} parent=0 // pred_check
    _
  $region83: #{tpu_custom_call.1} parent=0 // pred_check_branch
    %123 = sbr.rel (0) target = $region85
  $region84: #{tpu_custom_call.1} parent=0 // pred_region
    _
  $region85: #{tpu_custom_call.1} parent=0 // pred_fallthru
    _
  // Predicated region
  $region86: #{tpu_custom_call.1} parent=0 // pred_check
    _
  $region87: #{tpu_custom_call.1} parent=0 // pred_check_branch
    %125 = sbr.rel (0) target = $region89
  $region88: #{tpu_custom_call.1} parent=0 // pred_region
    _
  $region89: #{tpu_custom_call.1} parent=0 // pred_fallthru
    _
  // Predicated region
  $region90: #{tpu_custom_call.1} parent=0 // pred_check
    _
  $region91: #{tpu_custom_call.1} parent=0 // pred_check_branch
    %127 = sbr.rel (0) target = $region93
  $region92: #{tpu_custom_call.1} parent=0 // pred_region
    _
  $region93: #{tpu_custom_call.1} parent=0 // pred_fallthru
    _
  // Predicated region
  $region94: #{tpu_custom_call.1} parent=0 // pred_check
    _
  $region95: #{tpu_custom_call.1} parent=0 // pred_check_branch
    %129 = sbr.rel (0) target = $region97
  $region96: #{tpu_custom_call.1} parent=0 // pred_region
    _
  $region97: #{tpu_custom_call.1} parent=0 // pred_fallthru
    _
  // Predicated region
  $region98: #{tpu_custom_call.1} parent=0 // pred_check
    _
  $region99: #{tpu_custom_call.1} parent=0 // pred_check_branch
    %131 = sbr.rel (0) target = $region101
  $region100: #{tpu_custom_call.1} parent=0 // pred_region
    _
  $region101: #{tpu_custom_call.1} parent=0 // pred_fallthru
    _
  // Predicated region
  $region102: #{tpu_custom_call.1} parent=0 // pred_check
    _
  $region103: #{tpu_custom_call.1} parent=0 // pred_check_branch
    %133 = sbr.rel (0) target = $region105
  $region104: #{tpu_custom_call.1} parent=0 // pred_region
    _
  $region105: #{tpu_custom_call.1} parent=0 // pred_fallthru
    _
  // Predicated region
  $region106: #{tpu_custom_call.1} parent=0 // pred_check
    _
  $region107: #{tpu_custom_call.1} parent=0 // pred_check_branch
    %135 = sbr.rel (0) target = $region109
  $region108: #{tpu_custom_call.1} parent=0 // pred_region
    _
  $region109: #{tpu_custom_call.1} parent=0 // pred_fallthru
    _
  // Predicated region
  $region110: #{tpu_custom_call.1} parent=0 // pred_check
    _
  $region111: #{tpu_custom_call.1} parent=0 // pred_check_branch
    %137 = sbr.rel (0) target = $region113
  $region112: #{tpu_custom_call.1} parent=0 // pred_region
    _
  $region113: #{tpu_custom_call.1} parent=0 // pred_fallthru
    _
  // Predicated region
  $region114: #{tpu_custom_call.1} parent=0 // pred_check
    _
  $region115: #{tpu_custom_call.1} parent=0 // pred_check_branch
    %139 = sbr.rel (0) target = $region117
  $region116: #{tpu_custom_call.1} parent=0 // pred_region
    _
  $region117: #{tpu_custom_call.1} parent=0 // pred_fallthru
    _
  // Predicated region
  $region118: #{tpu_custom_call.1} parent=0 // pred_check
    _
  $region119: #{tpu_custom_call.1} parent=0 // pred_check_branch
    %141 = sbr.rel (0) target = $region121
  $region120: #{tpu_custom_call.1} parent=0 // pred_region
    _
  $region121: #{tpu_custom_call.1} parent=0 // pred_fallthru
    _
  // Predicated region
  $region122: #{tpu_custom_call.1} parent=0 // pred_check
    _
  $region123: #{tpu_custom_call.1} parent=0 // pred_check_branch
    %143 = sbr.rel (0) target = $region125
  $region124: #{tpu_custom_call.1} parent=0 // pred_region
    _
  $region125: #{tpu_custom_call.1} parent=0 // pred_fallthru
    _
  // Predicated region
  $region126: #{tpu_custom_call.1} parent=0 // pred_check
    _
  $region127: #{tpu_custom_call.1} parent=0 // pred_check_branch
    %145 = sbr.rel (0) target = $region129
  $region128: #{tpu_custom_call.1} parent=0 // pred_region
    _
  $region129: #{tpu_custom_call.1} parent=0 // pred_fallthru
    _
  // Predicated region
  $region130: #{tpu_custom_call.1} parent=0 // pred_check
    _
  $region131: #{tpu_custom_call.1} parent=0 // pred_check_branch
    %147 = sbr.rel (0) target = $region133
  $region132: #{tpu_custom_call.1} parent=0 // pred_region
    _
  $region133: #{tpu_custom_call.1} parent=0 // pred_fallthru
    _
  // Predicated region
  $region134: #{tpu_custom_call.1} parent=0 // pred_check
    _
  $region135: #{tpu_custom_call.1} parent=0 // pred_check_branch
    %149 = sbr.rel (0) target = $region137
  $region136: #{tpu_custom_call.1} parent=0 // pred_region
    _
  $region137: #{tpu_custom_call.1} parent=0 // pred_fallthru
    _
  // Predicated region
  $region138: #{tpu_custom_call.1} parent=0 // pred_check
    _
  $region139: #{tpu_custom_call.1} parent=0 // pred_check_branch
    %151 = sbr.rel (0) target = $region141
  $region140: #{tpu_custom_call.1} parent=0 // pred_region
    _
  $region141: #{tpu_custom_call.1} parent=0 // pred_fallthru
    _
  // Predicated region
  $region142: #{tpu_custom_call.1} parent=0 // pred_check
    _
  $region143: #{tpu_custom_call.1} parent=0 // pred_check_branch
    %153 = sbr.rel (0) target = $region145
  $region144: #{tpu_custom_call.1} parent=0 // pred_region
    _
  $region145: #{tpu_custom_call.1} parent=0 // pred_fallthru
    _
  // Predicated region
  $region146: #{tpu_custom_call.1} parent=0 // pred_check
    _
  $region147: #{tpu_custom_call.1} parent=0 // pred_check_branch
    %155 = sbr.rel (0) target = $region149
  $region148: #{tpu_custom_call.1} parent=0 // pred_region
    _
  $region149: #{tpu_custom_call.1} parent=0 // pred_fallthru
    _
  // Predicated region
  $region150: #{tpu_custom_call.1} parent=0 // pred_check
    _
  $region151: #{tpu_custom_call.1} parent=0 // pred_check_branch
    %157 = sbr.rel (0) target = $region153
  $region152: #{tpu_custom_call.1} parent=0 // pred_region
    _
  $region153: #{tpu_custom_call.1} parent=0 // pred_fallthru
    _
  %v159 = vlaneseq
  %v160 = vshrl.u32 %v159, 7
  %v161 = vadd.s32 %v160, 8
  %v162 = vlaneseq
  %v163 = vand.u32 %v162, 127
  %vm164 = vcmp.ge.s32.totalorder %v160, 6
  %vm165 = vcmp.ge.s32.totalorder %v161, 6
  %v166 = vsel %vm164, 1, 0
  %v167 = vsel %vm165, 1, 0
  %vm168 = vcmp.ge.s32.totalorder %v160, 16
  %vm169 = vcmp.ge.s32.totalorder %v161, 16
  %v170 = vsel %vm168, 1, 0
  %v171 = vsel %vm169, 1, 0
  %vm172 = vcmp.lt.s32.totalorder %v160, 12
  %vm173 = vcmp.lt.s32.totalorder %v161, 12
  %v174 = vsel %vm172, %v166, %v170
  %v175 = vsel %vm173, %v167, %v171
  %vm176 = vcmp.ge.s32.totalorder %v163, 6
  %v177 = vsel %vm176, 1, 0
  %vm178 = vcmp.ge.s32.totalorder %v163, 16
  %v179 = vsel %vm178, 1, 0
  %vm180 = vcmp.lt.s32.totalorder %v163, 12
  %v181 = vsel %vm180, %v177, %v179
  %vm182 = vcmp.eq.s32.totalorder %v174, %v181
  %vm183 = vcmp.eq.s32.totalorder %v175, %v181
  %v184 = vadd.s32 %v160, 16
  %vm185 = vcmp.ge.s32.totalorder %v184, 6
  %v186 = vsel %vm185, 1, 0
  %vm187 = vcmp.ge.s32.totalorder %v184, 16
  %v188 = vsel %vm187, 1, 0
  %vm189 = vcmp.lt.s32.totalorder %v184, 12
  %v190 = vsel %vm189, %v186, %v188
  %vm191 = vcmp.eq.s32.totalorder %v190, %v181
  %v192 = vld [vmem:[%s1] sm:$0xff]
  %v193 = vld [vmem:[%s1 + $0x8] sm:$0xf]
  %v194 = vpack.c.bf16 %v193, %v192
  %v195 = vld [vmem:[%s75] sm:$0x3f]
  %v196 = vld [vmem:[%s67] sm:$0xf]
  %v197 = vld [vmem:[%s67 + $0x4] sm:$0xf]
  %v198 = vld [vmem:[%s67 + $0x8] sm:$0xf]
  %v199 = vld [vmem:[%s67 + $0xc] sm:$0xf]
  %v200 = vld [vmem:[%s67 + $0x10] sm:$0xf]
  %v201 = vld [vmem:[%s67 + $0x14] sm:$0xf]
  %v202 = vld [vmem:[%s67 + $0x18] sm:$0xf]
  %v203 = vld [vmem:[%s67 + $0x1c] sm:$0xf]
  %v204 = vlaneseq
  %v205 = vshrl.u32 %v204, 7
  %v206 = vsub.s32 0, %v205
  %v207 = vrot.slane %v195, %v206
  %v216 = vunpack.c.l.b16 %v196
  %v217 = vunpack.c.l.b16 %v197
  %v218 = vunpack.c.l.b16 %v198
  %v219 = vunpack.c.l.b16 %v199
  %v220 = vunpack.c.l.b16 %v200
  %v221 = vunpack.c.l.b16 %v201
  %v222 = vunpack.c.l.b16 %v202
  %v223 = vunpack.c.l.b16 %v203
  %v224 = vpack.c.b16 %v217, %v216
  %v225 = vpack.c.b16 %v219, %v218
  %v226 = vpack.c.b16 %v221, %v220
  %v227 = vpack.c.b16 %v223, %v222
  %vm232 = vcmask 523264
  %v234 = vsel %vm232, %v194, 0
  %236 = vmatprep.subr.bf16.mxu0 0
  %237 = vmatpush1.bf16.msra.mxu0 %v224
  %238 = vmatprep.subr.bf16.mxu0 0
  %239 = vmatpush1.bf16.msra.mxu0 %v225
  %240 = vmatprep.subr.bf16.mxu0 0
  %241 = vmatpush1.bf16.msra.mxu0 %v226
  %242 = vmatprep.subr.bf16.mxu0 0
  %243 = vmatpush1.bf16.msra.mxu0 %v227
  %244 = vmatprep.subr.bf16.mxu0 0
  %245 = vmatpush1.bf16.msra.mxu0 0
  %246 = vmatprep.subr.bf16.mxu0 0
  %247 = vmatpush1.bf16.msra.mxu0 0
  %248 = vmatprep.subr.bf16.mxu0 0
  %249 = vmatpush1.bf16.msra.mxu0 0
  %250 = vmatprep.subr.bf16.mxu0 0
  %251 = vmatpush1.bf16.msra.mxu0 0
  %252 = vmatprep.subr.bf16.mxu0 0
  %253 = vmatpush1.bf16.msra.mxu0 0
  %254 = vmatprep.subr.bf16.mxu0 0
  %255 = vmatpush1.bf16.msra.mxu0 0
  %256 = vmatprep.subr.bf16.mxu0 0
  %257 = vmatpush1.bf16.msra.mxu0 0
  %258 = vmatprep.subr.bf16.mxu0 0
  %259 = vmatpush1.bf16.msra.mxu0 0
  %260 = vmatprep.subr.bf16.mxu0 0
  %261 = vmatpush1.bf16.msra.mxu0 0
  %262 = vmatprep.subr.bf16.mxu0 0
  %263 = vmatpush1.bf16.msra.mxu0 0
  %264 = vmatprep.subr.bf16.mxu0 0
  %265 = vmatpush1.bf16.msra.mxu0 0
  %266 = vmatprep.subr.bf16.mxu0 0
  %267 = vmatpush1.bf16.msra.mxu0 0
  %268 = vmatprep.mubr.bf16.mxu0 0
  %269 = vmatmul.mubr.bf16.gmra.mrb[0].mxu0 %v234
  %v270 = vpop.f32.mrb[0].mxu0
  %v271 = vadd.f32 %v207, %v270
  %v272 = vpop.f32.mrb[0].mxu0
  %v273 = vpop.f32.mrb[0].mxu0
  %v274 = vadd.f32 %v207, %v273
  %v275 = vpop.f32.mrb[0].mxu0
  %276 = vdwg.mxu0
  %vm277 = vcmask 392192
  %v278 = vsel %vm277, %v271, 0.0
  %279 = vadd.xlane.f32.xlu0 %v278
  %v280 = vpop.xlane.xlu0 %279
  %vm281 = vcmask 388096
  %v282 = vsel %vm281, %v274, 0.0
  %283 = vadd.xlane.f32.xlu0 %v282
  %v284 = vpop.xlane.xlu0 %283
  %v285 = vrcp.pop 48.0
  %v286 = vmul.f32 %v280, %v285
  %v287 = vmul.f32 %v284, %v285
  %v288 = vsub.f32 %v271, %v286
  %v289 = vsub.f32 %v274, %v287
  %v290 = vmul.f32 %v288, %v288
  %v291 = vmul.f32 %v289, %v289
  %v292 = vsel %vm277, %v290, 0.0
  %293 = vadd.xlane.f32.xlu0 %v292
  %v294 = vpop.xlane.xlu0 %293
  %v295 = vsel %vm281, %v291, 0.0
  %296 = vadd.xlane.f32.xlu0 %v295
  %v297 = vpop.xlane.xlu0 %296
  %v298 = vmul.f32 %v294, %v285
  %v299 = vmul.f32 %v297, %v285
  %v300 = vadd.f32 %v298, 1e-05
  %v301 = vadd.f32 %v299, 1e-05
  %v302 = vrsqrt.pop %v300
  %v303 = vrsqrt.pop %v301
  %v304 = vmul.f32 %v288, %v302
  %v305 = vmul.f32 %v289, %v303
  %v306 = vlaneseq
  %v307 = vshrl.u32 %v306, 7
  %v308 = vsub.s32 1, %v307
  %v309 = vrot.slane %v195, %v308
  %v310 = vmul.f32 %v304, %v309
  %v311 = vmul.f32 %v305, %v309
  %v312 = vlaneseq
  %v313 = vshrl.u32 %v312, 7
  %v314 = vsub.s32 2, %v313
  %v315 = vrot.slane %v195, %v314
  %v316 = vadd.f32 %v310, %v315
  %v317 = vadd.f32 %v311, %v315
  %v318 = vpack.c.bf16 %v317, %v316
  %v319 = vld [vmem:[%s63] sm:$0xff]
  %v320 = vld [vmem:[%s63 + $0x8] sm:$0xff]
  %v321 = vld [vmem:[%s63 + $0x10] sm:$0xff]
  %v322 = vld [vmem:[%s63 + $0x18] sm:$0xff]
  %v323 = vld [vmem:[%s63 + $0x20] sm:$0xff]
  %v324 = vld [vmem:[%s63 + $0x28] sm:$0xff]
  %v325 = vld [vmem:[%s5] sm:$0xff]
  %v326 = vld [vmem:[%s5 + $0x8] sm:$0xf]
  %v327 = vpack.c.bf16 %v326, %v325
  %v328 = vld [vmem:[%s61] sm:$0xf]
  %v331 = vunpack.c.l.s4 1983009808
  %v332 = vunpack.c.0.s8 %v331
  %v333 = vlaneseq
  %v334 = vshrl.u32 %v333, 7
  %v335 = vsub.s32 %v332, %v334
  %v336 = vrot.slane %v328, %v335
  %v337 = vcombine.high %v336, %v336
  %vm338 = vcmask 31744
  %v340 = vsel %vm338, %v327, 0
  %vm342 = vcmask 1041408
  %v344 = vsel %vm342, %v336, 0
  %v347 = vsel %vm342, %v337, 0
  %349 = vmatprep.subr.bf16.mxu0 %v347
  %350 = vmatpush1.bf16.msra.mxu0 %v344
  %351 = vmatprep.subr.bf16.mxu0 0
  %352 = vmatpush1.bf16.msra.mxu0 0
  %353 = vmatprep.subr.bf16.mxu0 0
  %354 = vmatpush1.bf16.msra.mxu0 0
  %355 = vmatprep.subr.bf16.mxu0 0
  %356 = vmatpush1.bf16.msra.mxu0 0
  %357 = vmatprep.subr.bf16.mxu0 0
  %358 = vmatpush1.bf16.msra.mxu0 0
  %359 = vmatprep.subr.bf16.mxu0 0
  %360 = vmatpush1.bf16.msra.mxu0 0
  %361 = vmatprep.subr.bf16.mxu0 0
  %362 = vmatpush1.bf16.msra.mxu0 0
  %363 = vmatprep.subr.bf16.mxu0 0
  %364 = vmatpush1.bf16.msra.mxu0 0
  %365 = vmatprep.subr.bf16.mxu0 0
  %366 = vmatpush1.bf16.msra.mxu0 0
  %367 = vmatprep.subr.bf16.mxu0 0
  %368 = vmatpush1.bf16.msra.mxu0 0
  %369 = vmatprep.subr.bf16.mxu0 0
  %370 = vmatpush1.bf16.msra.mxu0 0
  %371 = vmatprep.subr.bf16.mxu0 0
  %372 = vmatpush1.bf16.msra.mxu0 0
  %373 = vmatprep.subr.bf16.mxu0 0
  %374 = vmatpush1.bf16.msra.mxu0 0
  %375 = vmatprep.subr.bf16.mxu0 0
  %376 = vmatpush1.bf16.msra.mxu0 0
  %377 = vmatprep.subr.bf16.mxu0 0
  %378 = vmatpush1.bf16.msra.mxu0 0
  %379 = vmatprep.subr.bf16.mxu0 0
  %380 = vmatpush1.bf16.msra.mxu0 0
  %381 = vmatprep.mubr.bf16.mxu0 0
  %382 = vmatmul.mubr.bf16.gmra.mrb[0].mxu0 %v340
  %v383 = vpop.f32.mrb[0].mxu0
  %v384 = vadd.f32 0.0, %v383
  %v385 = vpop.f32.mrb[0].mxu0
  %v386 = vadd.f32 0.0, %v385
  %v387 = vpop.f32.mrb[0].mxu0
  %v388 = vadd.f32 0.0, %v387
  %v389 = vpop.f32.mrb[0].mxu0
  %v390 = vadd.f32 0.0, %v389
  %391 = vdwg.mxu0
  %v398 = vunpack.c.l.b16 %v319
  %v399 = vunpack.c.h.b16 %v319
  %v400 = vunpack.c.l.b16 %v320
  %v401 = vunpack.c.h.b16 %v320
  %v402 = vunpack.c.l.b16 %v321
  %v403 = vunpack.c.h.b16 %v321
  %v404 = vunpack.c.l.b16 %v322
  %v405 = vunpack.c.h.b16 %v322
  %v406 = vunpack.c.l.b16 %v323
  %v407 = vunpack.c.h.b16 %v323
  %v408 = vunpack.c.l.b16 %v324
  %v409 = vunpack.c.h.b16 %v324
  %v410 = vpack.c.b16 %v400, %v398
  %v411 = vpack.c.b16 %v401, %v399
  %v412 = vpack.c.b16 %v404, %v402
  %v413 = vpack.c.b16 %v405, %v403
  %v414 = vpack.c.b16 %v408, %v406
  %v415 = vpack.c.b16 %v409, %v407
  %v423 = vsel %vm277, %v318, 0
  %425 = vmatprep.subr.bf16.mxu0 %v411
  %426 = vmatpush1.bf16.msra.mxu0 %v410
  %427 = vmatprep.subr.bf16.mxu0 %v413
  %428 = vmatpush1.bf16.msra.mxu0 %v412
  %429 = vmatprep.subr.bf16.mxu0 %v415
  %430 = vmatpush1.bf16.msra.mxu0 %v414
  %431 = vmatprep.subr.bf16.mxu0 0
  %432 = vmatpush1.bf16.msra.mxu0 0
  %433 = vmatprep.subr.bf16.mxu0 0
  %434 = vmatpush1.bf16.msra.mxu0 0
  %435 = vmatprep.subr.bf16.mxu0 0
  %436 = vmatpush1.bf16.msra.mxu0 0
  %437 = vmatprep.subr.bf16.mxu0 0
  %438 = vmatpush1.bf16.msra.mxu0 0
  %439 = vmatprep.subr.bf16.mxu0 0
  %440 = vmatpush1.bf16.msra.mxu0 0
  %441 = vmatprep.subr.bf16.mxu0 0
  %442 = vmatpush1.bf16.msra.mxu0 0
  %443 = vmatprep.subr.bf16.mxu0 0
  %444 = vmatpush1.bf16.msra.mxu0 0
  %445 = vmatprep.subr.bf16.mxu0 0
  %446 = vmatpush1.bf16.msra.mxu0 0
  %447 = vmatprep.subr.bf16.mxu0 0
  %448 = vmatpush1.bf16.msra.mxu0 0
  %449 = vmatprep.subr.bf16.mxu0 0
  %450 = vmatpush1.bf16.msra.mxu0 0
  %451 = vmatprep.subr.bf16.mxu0 0
  %452 = vmatpush1.bf16.msra.mxu0 0
  %453 = vmatprep.subr.bf16.mxu0 0
  %454 = vmatpush1.bf16.msra.mxu0 0
  %455 = vmatprep.subr.bf16.mxu0 0
  %456 = vmatpush1.bf16.msra.mxu0 0
  %457 = vmatprep.mubr.bf16.mxu0 0
  %458 = vmatmul.mubr.bf16.gmra.mrb[0].mxu0 %v423
  %v459 = vpop.f32.mrb[0].mxu0
  %v460 = vadd.f32 %v384, %v459
  %v461 = vpop.f32.mrb[0].mxu0
  %v462 = vadd.f32 %v386, %v461
  %v463 = vpop.f32.mrb[0].mxu0
  %v464 = vadd.f32 %v388, %v463
  %v465 = vpop.f32.mrb[0].mxu0
  %v466 = vadd.f32 %v390, %v465
  %467 = vdwg.mxu0
  %v468 = vld [vmem:[%s59] sm:$0x3]
  %v470 = vlaneseq
  %v471 = vshrl.u32 %v470, 7
  %v472 = vsub.s32 0, %v471
  %v473 = vrot.slane %v468, %v472
  %v474 = vlaneseq
  %v475 = vshrl.u32 %v474, 7
  %v476 = vsub.s32 1, %v475
  %v477 = vrot.slane %v468, %v476
  %v480 = vadd.f32 %v460, %v473
  %v481 = vadd.f32 %v462, %v477
  %v482 = vadd.f32 %v464, %v473
  %v483 = vadd.f32 %v466, %v477
  %v484 = vmul.f32 %v480, %v480
  %v485 = vmul.f32 %v481, %v481
  %v486 = vmul.f32 %v482, %v482
  %v487 = vmul.f32 %v483, %v483
  %v488 = vmul.f32 %v480, %v484
  %v489 = vmul.f32 %v481, %v485
  %v490 = vmul.f32 %v482, %v486
  %v491 = vmul.f32 %v483, %v487
  %v492 = vmul.f32 %v488, 0.044715
  %v493 = vmul.f32 %v489, 0.044715
  %v494 = vmul.f32 %v490, 0.044715
  %v495 = vmul.f32 %v491, 0.044715
  %v496 = vadd.f32 %v480, %v492
  %v497 = vadd.f32 %v481, %v493
  %v498 = vadd.f32 %v482, %v494
  %v499 = vadd.f32 %v483, %v495
  %v500 = vmul.f32 %v496, 0.7978846
  %v501 = vmul.f32 %v497, 0.7978846
  %v502 = vmul.f32 %v498, 0.7978846
  %v503 = vmul.f32 %v499, 0.7978846
  %v504 = vtanh.pop %v500
  %v505 = vtanh.pop %v501
  %v506 = vtanh.pop %v502
  %v507 = vtanh.pop %v503
  %v508 = vadd.f32 %v504, 1.0
  %v509 = vadd.f32 %v505, 1.0
  %v510 = vadd.f32 %v506, 1.0
  %v511 = vadd.f32 %v507, 1.0
  %v512 = vmul.f32 %v508, 0.5
  %v513 = vmul.f32 %v509, 0.5
  %v514 = vmul.f32 %v510, 0.5
  %v515 = vmul.f32 %v511, 0.5
  %v516 = vmul.f32 %v480, %v512
  %v517 = vmul.f32 %v481, %v513
  %v518 = vmul.f32 %v482, %v514
  %v519 = vmul.f32 %v483, %v515
  %v520 = vpack.c.bf16 %v518, %v516
  %v521 = vpack.c.bf16 %v519, %v517
  %v522 = vld [vmem:[%s65] sm:$0xf]
  %v523 = vld [vmem:[%s65 + $0x4] sm:$0xf]
  %v524 = vld [vmem:[%s65 + $0x8] sm:$0xf]
  %v525 = vld [vmem:[%s65 + $0xc] sm:$0xf]
  %v526 = vld [vmem:[%s65 + $0x10] sm:$0xf]
  %v527 = vld [vmem:[%s65 + $0x14] sm:$0xf]
  %v528 = vld [vmem:[%s65 + $0x18] sm:$0xf]
  %v529 = vld [vmem:[%s65 + $0x1c] sm:$0xf]
  %v530 = vld [vmem:[%s65 + $0x20] sm:$0xf]
  %v531 = vld [vmem:[%s65 + $0x24] sm:$0xf]
  %v532 = vld [vmem:[%s65 + $0x28] sm:$0xf]
  %v533 = vld [vmem:[%s65 + $0x2c] sm:$0xf]
  %v534 = vld [vmem:[%s65 + $0x30] sm:$0xf]
  %v535 = vld [vmem:[%s65 + $0x34] sm:$0xf]
  %v536 = vld [vmem:[%s65 + $0x38] sm:$0xf]
  %v537 = vld [vmem:[%s65 + $0x3c] sm:$0xf]
  %v538 = vld [vmem:[%s65 + $0x40] sm:$0xf]
  %v539 = vld [vmem:[%s65 + $0x44] sm:$0xf]
  %v540 = vld [vmem:[%s65 + $0x48] sm:$0xf]
  %v541 = vld [vmem:[%s65 + $0x4c] sm:$0xf]
  %v542 = vld [vmem:[%s65 + $0x50] sm:$0xf]
  %v543 = vld [vmem:[%s65 + $0x54] sm:$0xf]
  %v544 = vld [vmem:[%s65 + $0x58] sm:$0xf]
  %v545 = vld [vmem:[%s65 + $0x5c] sm:$0xf]
  %v546 = vlaneseq
  %v547 = vshrl.u32 %v546, 7
  %v548 = vsub.s32 3, %v547
  %v549 = vrot.slane %v195, %v548
  %v574 = vunpack.c.l.b16 %v522
  %v575 = vunpack.c.l.b16 %v523
  %v576 = vunpack.c.l.b16 %v524
  %v577 = vunpack.c.l.b16 %v525
  %v578 = vunpack.c.l.b16 %v526
  %v579 = vunpack.c.l.b16 %v527
  %v580 = vunpack.c.l.b16 %v528
  %v581 = vunpack.c.l.b16 %v529
  %v582 = vunpack.c.l.b16 %v530
  %v583 = vunpack.c.l.b16 %v531
  %v584 = vunpack.c.l.b16 %v532
  %v585 = vunpack.c.l.b16 %v533
  %v586 = vunpack.c.l.b16 %v534
  %v587 = vunpack.c.l.b16 %v535
  %v588 = vunpack.c.l.b16 %v536
  %v589 = vunpack.c.l.b16 %v537
  %v590 = vunpack.c.l.b16 %v538
  %v591 = vunpack.c.l.b16 %v539
  %v592 = vunpack.c.l.b16 %v540
  %v593 = vunpack.c.l.b16 %v541
  %v594 = vunpack.c.l.b16 %v542
  %v595 = vunpack.c.l.b16 %v543
  %v596 = vunpack.c.l.b16 %v544
  %v597 = vunpack.c.l.b16 %v545
  %v598 = vpack.c.b16 %v575, %v574
  %v599 = vpack.c.b16 %v577, %v576
  %v600 = vpack.c.b16 %v579, %v578
  %v601 = vpack.c.b16 %v581, %v580
  %v602 = vpack.c.b16 %v583, %v582
  %v603 = vpack.c.b16 %v585, %v584
  %v604 = vpack.c.b16 %v587, %v586
  %v605 = vpack.c.b16 %v589, %v588
  %v606 = vpack.c.b16 %v591, %v590
  %v607 = vpack.c.b16 %v593, %v592
  %v608 = vpack.c.b16 %v595, %v594
  %v609 = vpack.c.b16 %v597, %v596
  %v623 = vsel %vm232, %v521, 0
  %625 = vmatprep.subr.bf16.mxu0 0
  %626 = vmatpush1.bf16.msra.mxu0 %v598
  %627 = vmatprep.subr.bf16.mxu0 0
  %628 = vmatpush1.bf16.msra.mxu0 %v599
  %629 = vmatprep.subr.bf16.mxu0 0
  %630 = vmatpush1.bf16.msra.mxu0 %v600
  %631 = vmatprep.subr.bf16.mxu0 0
  %632 = vmatpush1.bf16.msra.mxu0 %v601
  %633 = vmatprep.subr.bf16.mxu0 0
  %634 = vmatpush1.bf16.msra.mxu0 %v602
  %635 = vmatprep.subr.bf16.mxu0 0
  %636 = vmatpush1.bf16.msra.mxu0 %v603
  %637 = vmatprep.subr.bf16.mxu0 0
  %638 = vmatpush1.bf16.msra.mxu0 %v604
  %639 = vmatprep.subr.bf16.mxu0 0
  %640 = vmatpush1.bf16.msra.mxu0 %v605
  %641 = vmatprep.subr.bf16.mxu0 0
  %642 = vmatpush1.bf16.msra.mxu0 %v606
  %643 = vmatprep.subr.bf16.mxu0 0
  %644 = vmatpush1.bf16.msra.mxu0 %v607
  %645 = vmatprep.subr.bf16.mxu0 0
  %646 = vmatpush1.bf16.msra.mxu0 %v608
  %647 = vmatprep.subr.bf16.mxu0 0
  %648 = vmatpush1.bf16.msra.mxu0 %v609
  %649 = vmatprep.subr.bf16.mxu0 0
  %650 = vmatpush1.bf16.msra.mxu0 0
  %651 = vmatprep.subr.bf16.mxu0 0
  %652 = vmatpush1.bf16.msra.mxu0 0
  %653 = vmatprep.subr.bf16.mxu0 0
  %654 = vmatpush1.bf16.msra.mxu0 0
  %655 = vmatprep.subr.bf16.mxu0 0
  %656 = vmatpush1.bf16.msra.mxu0 0
  %657 = vmatprep.mubr.bf16.mxu0 %v623
  %658 = vmatmul.mubr.bf16.gmra.mrb[0].mxu0 %v520
  %v659 = vpop.f32.mrb[0].mxu0
  %v660 = vadd.f32 %v549, %v659
  %v661 = vpop.f32.mrb[0].mxu0
  %v662 = vpop.f32.mrb[0].mxu0
  %v663 = vadd.f32 %v549, %v662
  %v664 = vpop.f32.mrb[0].mxu0
  %665 = vdwg.mxu0
  %v666 = vld [vmem:[%s3] sm:$0xff]
  %v667 = vld [vmem:[%s3 + $0x8] sm:$0xf]
  %v668 = vadd.f32 %v660, %v666
  %v669 = vadd.f32 %v663, %v667
  %v670 = vld [vmem:[%s41] sm:$0xf]
  %v671 = vld [vmem:[%s39] sm:$0x3]
  %v672 = vsel %vm277, %v668, 0.0
  %673 = vadd.xlane.f32.xlu0 %v672
  %v674 = vpop.xlane.xlu0 %673
  %v675 = vsel %vm281, %v669, 0.0
  %676 = vadd.xlane.f32.xlu0 %v675
  %v677 = vpop.xlane.xlu0 %676
  %v678 = vmul.f32 %v674, %v285
  %v679 = vmul.f32 %v677, %v285
  %v680 = vsub.f32 %v668, %v678
  %v681 = vsub.f32 %v669, %v679
  %v682 = vmul.f32 %v680, %v680
  %v683 = vmul.f32 %v681, %v681
  %v684 = vsel %vm277, %v682, 0.0
  %685 = vadd.xlane.f32.xlu0 %v684
  %v686 = vpop.xlane.xlu0 %685
  %v687 = vsel %vm281, %v683, 0.0
  %688 = vadd.xlane.f32.xlu0 %v687
  %v689 = vpop.xlane.xlu0 %688
  %v690 = vmul.f32 %v686, %v285
  %v691 = vmul.f32 %v689, %v285
  %v692 = vadd.f32 %v690, 1e-05
  %v693 = vadd.f32 %v691, 1e-05
  %v694 = vrsqrt.pop %v692
  %v695 = vrsqrt.pop %v693
  %v696 = vmul.f32 %v680, %v694
  %v697 = vmul.f32 %v681, %v695
  %v698 = vlaneseq
  %v699 = vshrl.u32 %v698, 7
  %v700 = vsub.s32 0, %v699
  %v701 = vrot.slane %v670, %v700
  %v702 = vmul.f32 %v696, %v701
  %v703 = vmul.f32 %v697, %v701
  %v704 = vlaneseq
  %v705 = vshrl.u32 %v704, 7
  %v706 = vsub.s32 1, %v705
  %v707 = vrot.slane %v670, %v706
  %v708 = vadd.f32 %v702, %v707
  %v709 = vadd.f32 %v703, %v707
  %v710 = vpack.c.bf16 %v709, %v708
  %v711 = vld [vmem:[%s51] sm:$0x7]
  %v712 = vld [vmem:[%s55] sm:$0xf]
  %v713 = vld [vmem:[%s55 + $0x4] sm:$0xf]
  %v714 = vld [vmem:[%s55 + $0x8] sm:$0xf]
  %v715 = vld [vmem:[%s55 + $0xc] sm:$0xf]
  %v716 = vld [vmem:[%s55 + $0x10] sm:$0xf]
  %v717 = vld [vmem:[%s55 + $0x14] sm:$0xf]
  %v718 = vlaneseq
  %v719 = vshrl.u32 %v718, 7
  %v720 = vsub.s32 0, %v719
  %v721 = vrot.slane %v711, %v720
  %v728 = vunpack.c.l.b16 %v712
  %v729 = vunpack.c.l.b16 %v713
  %v730 = vunpack.c.l.b16 %v714
  %v731 = vunpack.c.l.b16 %v715
  %v732 = vunpack.c.l.b16 %v716
  %v733 = vunpack.c.l.b16 %v717
  %v734 = vpack.c.b16 %v729, %v728
  %v735 = vpack.c.b16 %v731, %v730
  %v736 = vpack.c.b16 %v733, %v732
  %v741 = vsel %vm277, %v710, 0
  %743 = vmatprep.subr.bf16.mxu0 0
  %744 = vmatpush1.bf16.msra.mxu0 %v734
  %745 = vmatprep.subr.bf16.mxu0 0
  %746 = vmatpush1.bf16.msra.mxu0 %v735
  %747 = vmatprep.subr.bf16.mxu0 0
  %748 = vmatpush1.bf16.msra.mxu0 %v736
  %749 = vmatprep.subr.bf16.mxu0 0
  %750 = vmatpush1.bf16.msra.mxu0 0
  %751 = vmatprep.subr.bf16.mxu0 0
  %752 = vmatpush1.bf16.msra.mxu0 0
  %753 = vmatprep.subr.bf16.mxu0 0
  %754 = vmatpush1.bf16.msra.mxu0 0
  %755 = vmatprep.subr.bf16.mxu0 0
  %756 = vmatpush1.bf16.msra.mxu0 0
  %757 = vmatprep.subr.bf16.mxu0 0
  %758 = vmatpush1.bf16.msra.mxu0 0
  %759 = vmatprep.subr.bf16.mxu0 0
  %760 = vmatpush1.bf16.msra.mxu0 0
  %761 = vmatprep.subr.bf16.mxu0 0
  %762 = vmatpush1.bf16.msra.mxu0 0
  %763 = vmatprep.subr.bf16.mxu0 0
  %764 = vmatpush1.bf16.msra.mxu0 0
  %765 = vmatprep.subr.bf16.mxu0 0
  %766 = vmatpush1.bf16.msra.mxu0 0
  %767 = vmatprep.subr.bf16.mxu0 0
  %768 = vmatpush1.bf16.msra.mxu0 0
  %769 = vmatprep.subr.bf16.mxu0 0
  %770 = vmatpush1.bf16.msra.mxu0 0
  %771 = vmatprep.subr.bf16.mxu0 0
  %772 = vmatpush1.bf16.msra.mxu0 0
  %773 = vmatprep.subr.bf16.mxu0 0
  %774 = vmatpush1.bf16.msra.mxu0 0
  %775 = vmatprep.mubr.bf16.mxu0 0
  %776 = vmatmul.mubr.bf16.gmra.mrb[0].mxu0 %v741
  %v777 = vpop.f32.mrb[0].mxu0
  %v778 = vadd.f32 %v721, %v777
  %v779 = vpop.f32.mrb[0].mxu0
  %v780 = vpop.f32.mrb[0].mxu0
  %v781 = vadd.f32 %v721, %v780
  %v782 = vpop.f32.mrb[0].mxu0
  %783 = vdwg.mxu0
  %v784 = vld [vmem:[%s53] sm:$0xf]
  %v785 = vld [vmem:[%s53 + $0x4] sm:$0xf]
  %v786 = vld [vmem:[%s53 + $0x8] sm:$0xf]
  %v787 = vld [vmem:[%s53 + $0xc] sm:$0xf]
  %v788 = vld [vmem:[%s53 + $0x10] sm:$0xf]
  %v789 = vld [vmem:[%s53 + $0x14] sm:$0xf]
  %v790 = vlaneseq
  %v791 = vshrl.u32 %v790, 7
  %v792 = vsub.s32 1, %v791
  %v793 = vrot.slane %v711, %v792
  %v800 = vunpack.c.l.b16 %v784
  %v801 = vunpack.c.l.b16 %v785
  %v802 = vunpack.c.l.b16 %v786
  %v803 = vunpack.c.l.b16 %v787
  %v804 = vunpack.c.l.b16 %v788
  %v805 = vunpack.c.l.b16 %v789
  %v806 = vpack.c.b16 %v801, %v800
  %v807 = vpack.c.b16 %v803, %v802
  %v808 = vpack.c.b16 %v805, %v804
  %812 = vmatprep.subr.bf16.mxu0 0
  %813 = vmatpush1.bf16.msra.mxu0 %v806
  %814 = vmatprep.subr.bf16.mxu0 0
  %815 = vmatpush1.bf16.msra.mxu0 %v807
  %816 = vmatprep.subr.bf16.mxu0 0
  %817 = vmatpush1.bf16.msra.mxu0 %v808
  %818 = vmatprep.subr.bf16.mxu0 0
  %819 = vmatpush1.bf16.msra.mxu0 0
  %820 = vmatprep.subr.bf16.mxu0 0
  %821 = vmatpush1.bf16.msra.mxu0 0
  %822 = vmatprep.subr.bf16.mxu0 0
  %823 = vmatpush1.bf16.msra.mxu0 0
  %824 = vmatprep.subr.bf16.mxu0 0
  %825 = vmatpush1.bf16.msra.mxu0 0
  %826 = vmatprep.subr.bf16.mxu0 0
  %827 = vmatpush1.bf16.msra.mxu0 0
  %828 = vmatprep.subr.bf16.mxu0 0
  %829 = vmatpush1.bf16.msra.mxu0 0
  %830 = vmatprep.subr.bf16.mxu0 0
  %831 = vmatpush1.bf16.msra.mxu0 0
  %832 = vmatprep.subr.bf16.mxu0 0
  %833 = vmatpush1.bf16.msra.mxu0 0
  %834 = vmatprep.subr.bf16.mxu0 0
  %835 = vmatpush1.bf16.msra.mxu0 0
  %836 = vmatprep.subr.bf16.mxu0 0
  %837 = vmatpush1.bf16.msra.mxu0 0
  %838 = vmatprep.subr.bf16.mxu0 0
  %839 = vmatpush1.bf16.msra.mxu0 0
  %840 = vmatprep.subr.bf16.mxu0 0
  %841 = vmatpush1.bf16.msra.mxu0 0
  %842 = vmatprep.subr.bf16.mxu0 0
  %843 = vmatpush1.bf16.msra.mxu0 0
  %844 = vmatprep.mubr.bf16.mxu0 0
  %845 = vmatmul.mubr.bf16.gmra.mrb[0].mxu0 %v741
  %v846 = vpop.f32.mrb[0].mxu0
  %v847 = vadd.f32 %v793, %v846
  %v848 = vpop.f32.mrb[0].mxu0
  %v849 = vpop.f32.mrb[0].mxu0
  %v850 = vadd.f32 %v793, %v849
  %v851 = vpop.f32.mrb[0].mxu0
  %852 = vdwg.mxu0
  %v853 = vld [vmem:[%s57] sm:$0xf]
  %v854 = vld [vmem:[%s57 + $0x4] sm:$0xf]
  %v855 = vld [vmem:[%s57 + $0x8] sm:$0xf]
  %v856 = vld [vmem:[%s57 + $0xc] sm:$0xf]
  %v857 = vld [vmem:[%s57 + $0x10] sm:$0xf]
  %v858 = vld [vmem:[%s57 + $0x14] sm:$0xf]
  %v859 = vlaneseq
  %v860 = vshrl.u32 %v859, 7
  %v861 = vsub.s32 2, %v860
  %v862 = vrot.slane %v711, %v861
  %v869 = vunpack.c.l.b16 %v853
  %v870 = vunpack.c.l.b16 %v854
  %v871 = vunpack.c.l.b16 %v855
  %v872 = vunpack.c.l.b16 %v856
  %v873 = vunpack.c.l.b16 %v857
  %v874 = vunpack.c.l.b16 %v858
  %v875 = vpack.c.b16 %v870, %v869
  %v876 = vpack.c.b16 %v872, %v871
  %v877 = vpack.c.b16 %v874, %v873
  %881 = vmatprep.subr.bf16.mxu0 0
  %882 = vmatpush1.bf16.msra.mxu0 %v875
  %883 = vmatprep.subr.bf16.mxu0 0
  %884 = vmatpush1.bf16.msra.mxu0 %v876
  %885 = vmatprep.subr.bf16.mxu0 0
  %886 = vmatpush1.bf16.msra.mxu0 %v877
  %887 = vmatprep.subr.bf16.mxu0 0
  %888 = vmatpush1.bf16.msra.mxu0 0
  %889 = vmatprep.subr.bf16.mxu0 0
  %890 = vmatpush1.bf16.msra.mxu0 0
  %891 = vmatprep.subr.bf16.mxu0 0
  %892 = vmatpush1.bf16.msra.mxu0 0
  %893 = vmatprep.subr.bf16.mxu0 0
  %894 = vmatpush1.bf16.msra.mxu0 0
  %895 = vmatprep.subr.bf16.mxu0 0
  %896 = vmatpush1.bf16.msra.mxu0 0
  %897 = vmatprep.subr.bf16.mxu0 0
  %898 = vmatpush1.bf16.msra.mxu0 0
  %899 = vmatprep.subr.bf16.mxu0 0
  %900 = vmatpush1.bf16.msra.mxu0 0
  %901 = vmatprep.subr.bf16.mxu0 0
  %902 = vmatpush1.bf16.msra.mxu0 0
  %903 = vmatprep.subr.bf16.mxu0 0
  %904 = vmatpush1.bf16.msra.mxu0 0
  %905 = vmatprep.subr.bf16.mxu0 0
  %906 = vmatpush1.bf16.msra.mxu0 0
  %907 = vmatprep.subr.bf16.mxu0 0
  %908 = vmatpush1.bf16.msra.mxu0 0
  %909 = vmatprep.subr.bf16.mxu0 0
  %910 = vmatpush1.bf16.msra.mxu0 0
  %911 = vmatprep.subr.bf16.mxu0 0
  %912 = vmatpush1.bf16.msra.mxu0 0
  %913 = vmatprep.mubr.bf16.mxu0 0
  %914 = vmatmul.mubr.bf16.gmra.mrb[0].mxu0 %v741
  %v915 = vpop.f32.mrb[0].mxu0
  %v916 = vadd.f32 %v862, %v915
  %v917 = vpop.f32.mrb[0].mxu0
  %v918 = vpop.f32.mrb[0].mxu0
  %v919 = vadd.f32 %v862, %v918
  %v920 = vpop.f32.mrb[0].mxu0
  %921 = vdwg.mxu0
  %v922 = vpack.c.bf16 %v781, %v778
  %v923 = vpack.c.bf16 %v850, %v847
  %vm924 = vcmask 195584
  %v926 = vsel %vm924, %v922, 0
  %v929 = vsel %vm924, %v923, 0
  %931 = vmatprep.subr.bf16.mxu0 0
  %932 = vmatpush1.bf16.xpose.msra.mxu0 %v929
  %933 = vmatprep.subr.bf16.mxu0 0
  %934 = vmatpush1.bf16.xpose.msra.mxu0 0
  %935 = vmatprep.subr.bf16.mxu0 0
  %936 = vmatpush1.bf16.xpose.msra.mxu0 0
  %937 = vmatprep.subr.bf16.mxu0 0
  %938 = vmatpush1.bf16.xpose.msra.mxu0 0
  %939 = vmatprep.subr.bf16.mxu0 0
  %940 = vmatpush1.bf16.xpose.msra.mxu0 0
  %941 = vmatprep.subr.bf16.mxu0 0
  %942 = vmatpush1.bf16.xpose.msra.mxu0 0
  %943 = vmatprep.subr.bf16.mxu0 0
  %944 = vmatpush1.bf16.xpose.msra.mxu0 0
  %945 = vmatprep.subr.bf16.mxu0 0
  %946 = vmatpush1.bf16.xpose.msra.mxu0 0
  %947 = vmatprep.subr.bf16.mxu0 0
  %948 = vmatpush1.bf16.xpose.msra.mxu0 0
  %949 = vmatprep.subr.bf16.mxu0 0
  %950 = vmatpush1.bf16.xpose.msra.mxu0 0
  %951 = vmatprep.subr.bf16.mxu0 0
  %952 = vmatpush1.bf16.xpose.msra.mxu0 0
  %953 = vmatprep.subr.bf16.mxu0 0
  %954 = vmatpush1.bf16.xpose.msra.mxu0 0
  %955 = vmatprep.subr.bf16.mxu0 0
  %956 = vmatpush1.bf16.xpose.msra.mxu0 0
  %957 = vmatprep.subr.bf16.mxu0 0
  %958 = vmatpush1.bf16.xpose.msra.mxu0 0
  %959 = vmatprep.subr.bf16.mxu0 0
  %960 = vmatpush1.bf16.xpose.msra.mxu0 0
  %961 = vmatprep.subr.bf16.mxu0 0
  %962 = vmatpush1.bf16.xpose.msra.mxu0 0
  %963 = vmatprep.mubr.bf16.mxu0 0
  %964 = vmatmul.mubr.bf16.gmra.mrb[0].mxu0 %v926
  %v965 = vpop.f32.mrb[0].mxu0
  %v966 = vadd.f32 0.0, %v965
  %v967 = vpop.f32.mrb[0].mxu0
  %v968 = vpop.f32.mrb[0].mxu0
  %v969 = vadd.f32 0.0, %v968
  %v970 = vpop.f32.mrb[0].mxu0
  %971 = vdwg.mxu0
  %v972 = vmul.f32 %v966, 0.20412415
  %v973 = vmul.f32 %v969, 0.20412415
  %v974 = vsel %vm182, %v972, -1e+30
  %v975 = vsel %vm183, %v973, -1e+30
  %vm976 = vcmask 97280
  %v977 = vsel %vm976, %v974, -inf
  %978 = vmax.xlane.f32.xlu0 %v977
  %v979 = vpop.xlane.xlu0 %978
  %vm980 = vcmask 93184
  %v981 = vsel %vm980, %v975, -inf
  %982 = vmax.xlane.f32.xlu0 %v981
  %v983 = vpop.xlane.xlu0 %982
  %v984 = vsub.f32 %v974, %v979
  %v985 = vsub.f32 %v975, %v983
  %v986 = vmul.f32 %v984, 1.442695
  %v987 = vpow.pop %v986
  %v988 = vmul.f32 %v985, 1.442695
  %v989 = vpow.pop %v988
  %v990 = vsel %vm976, %v987, 0.0
  %991 = vadd.xlane.f32.xlu0 %v990
  %v992 = vpop.xlane.xlu0 %991
  %v993 = vsel %vm980, %v989, 0.0
  %994 = vadd.xlane.f32.xlu0 %v993
  %v995 = vpop.xlane.xlu0 %994
  %v996 = vrcp.pop %v992
  %v997 = vmul.f32 %v987, %v996
  %v998 = vrcp.pop %v995
  %v999 = vmul.f32 %v989, %v998
  %v1000 = vpack.c.bf16 %v999, %v997
  %v1001 = vpack.c.bf16 %v919, %v916
  %v1003 = vsel %vm976, %v1000, 0
  %vm1005 = vcmask 1045504
  %v1007 = vsel %vm1005, %v1001, 0
  %1009 = vmatprep.subr.bf16.mxu0 0
  %1010 = vmatpush1.bf16.msra.mxu0 %v1007
  %1011 = vmatprep.subr.bf16.mxu0 0
  %1012 = vmatpush1.bf16.msra.mxu0 0
  %1013 = vmatprep.subr.bf16.mxu0 0
  %1014 = vmatpush1.bf16.msra.mxu0 0
  %1015 = vmatprep.subr.bf16.mxu0 0
  %1016 = vmatpush1.bf16.msra.mxu0 0
  %1017 = vmatprep.subr.bf16.mxu0 0
  %1018 = vmatpush1.bf16.msra.mxu0 0
  %1019 = vmatprep.subr.bf16.mxu0 0
  %1020 = vmatpush1.bf16.msra.mxu0 0
  %1021 = vmatprep.subr.bf16.mxu0 0
  %1022 = vmatpush1.bf16.msra.mxu0 0
  %1023 = vmatprep.subr.bf16.mxu0 0
  %1024 = vmatpush1.bf16.msra.mxu0 0
  %1025 = vmatprep.subr.bf16.mxu0 0
  %1026 = vmatpush1.bf16.msra.mxu0 0
  %1027 = vmatprep.subr.bf16.mxu0 0
  %1028 = vmatpush1.bf16.msra.mxu0 0
  %1029 = vmatprep.subr.bf16.mxu0 0
  %1030 = vmatpush1.bf16.msra.mxu0 0
  %1031 = vmatprep.subr.bf16.mxu0 0
  %1032 = vmatpush1.bf16.msra.mxu0 0
  %1033 = vmatprep.subr.bf16.mxu0 0
  %1034 = vmatpush1.bf16.msra.mxu0 0
  %1035 = vmatprep.subr.bf16.mxu0 0
  %1036 = vmatpush1.bf16.msra.mxu0 0
  %1037 = vmatprep.subr.bf16.mxu0 0
  %1038 = vmatpush1.bf16.msra.mxu0 0
  %1039 = vmatprep.subr.bf16.mxu0 0
  %1040 = vmatpush1.bf16.msra.mxu0 0
  %1041 = vmatprep.mubr.bf16.mxu0 0
  %1042 = vmatmul.mubr.bf16.gmra.mrb[0].mxu0 %v1003
  %v1043 = vpop.f32.mrb[0].mxu0
  %v1044 = vadd.f32 0.0, %v1043
  %v1045 = vpop.f32.mrb[0].mxu0
  %v1046 = vpop.f32.mrb[0].mxu0
  %v1047 = vadd.f32 0.0, %v1046
  %v1048 = vpop.f32.mrb[0].mxu0
  %1049 = vdwg.mxu0
  %v1050 = vpack.c.bf16 %v1047, %v1044
  %v1051 = vld [vmem:[%s49] sm:$0xf]
  %v1052 = vld [vmem:[%s49 + $0x4] sm:$0xf]
  %v1053 = vld [vmem:[%s49 + $0x8] sm:$0xf]
  %s1054 = scalar_lea.vmem %s51, 4
  %v1055 = vld [vmem:[%s1054] sm:$0x7]
  %s1056 = scalar_lea.vmem %s55, 24
  %v1057 = vld [vmem:[%s1056] sm:$0xf]
  %v1058 = vld [vmem:[%s1056 + $0x4] sm:$0xf]
  %v1059 = vld [vmem:[%s1056 + $0x8] sm:$0xf]
  %v1060 = vld [vmem:[%s1056 + $0xc] sm:$0xf]
  %v1061 = vld [vmem:[%s1056 + $0x10] sm:$0xf]
  %v1062 = vld [vmem:[%s1056 + $0x14] sm:$0xf]
  %v1063 = vlaneseq
  %v1064 = vshrl.u32 %v1063, 7
  %v1065 = vsub.s32 0, %v1064
  %v1066 = vrot.slane %v1055, %v1065
  %v1073 = vunpack.c.l.b16 %v1057
  %v1074 = vunpack.c.l.b16 %v1058
  %v1075 = vunpack.c.l.b16 %v1059
  %v1076 = vunpack.c.l.b16 %v1060
  %v1077 = vunpack.c.l.b16 %v1061
  %v1078 = vunpack.c.l.b16 %v1062
  %v1079 = vpack.c.b16 %v1074, %v1073
  %v1080 = vpack.c.b16 %v1076, %v1075
  %v1081 = vpack.c.b16 %v1078, %v1077
  %1085 = vmatprep.subr.bf16.mxu0 0
  %1086 = vmatpush1.bf16.msra.mxu0 %v1079
  %1087 = vmatprep.subr.bf16.mxu0 0
  %1088 = vmatpush1.bf16.msra.mxu0 %v1080
  %1089 = vmatprep.subr.bf16.mxu0 0
  %1090 = vmatpush1.bf16.msra.mxu0 %v1081
  %1091 = vmatprep.subr.bf16.mxu0 0
  %1092 = vmatpush1.bf16.msra.mxu0 0
  %1093 = vmatprep.subr.bf16.mxu0 0
  %1094 = vmatpush1.bf16.msra.mxu0 0
  %1095 = vmatprep.subr.bf16.mxu0 0
  %1096 = vmatpush1.bf16.msra.mxu0 0
  %1097 = vmatprep.subr.bf16.mxu0 0
  %1098 = vmatpush1.bf16.msra.mxu0 0
  %1099 = vmatprep.subr.bf16.mxu0 0
  %1100 = vmatpush1.bf16.msra.mxu0 0
  %1101 = vmatprep.subr.bf16.mxu0 0
  %1102 = vmatpush1.bf16.msra.mxu0 0
  %1103 = vmatprep.subr.bf16.mxu0 0
  %1104 = vmatpush1.bf16.msra.mxu0 0
  %1105 = vmatprep.subr.bf16.mxu0 0
  %1106 = vmatpush1.bf16.msra.mxu0 0
  %1107 = vmatprep.subr.bf16.mxu0 0
  %1108 = vmatpush1.bf16.msra.mxu0 0
  %1109 = vmatprep.subr.bf16.mxu0 0
  %1110 = vmatpush1.bf16.msra.mxu0 0
  %1111 = vmatprep.subr.bf16.mxu0 0
  %1112 = vmatpush1.bf16.msra.mxu0 0
  %1113 = vmatprep.subr.bf16.mxu0 0
  %1114 = vmatpush1.bf16.msra.mxu0 0
  %1115 = vmatprep.subr.bf16.mxu0 0
  %1116 = vmatpush1.bf16.msra.mxu0 0
  %1117 = vmatprep.mubr.bf16.mxu0 0
  %1118 = vmatmul.mubr.bf16.gmra.mrb[0].mxu0 %v741
  %v1119 = vpop.f32.mrb[0].mxu0
  %v1120 = vadd.f32 %v1066, %v1119
  %v1121 = vpop.f32.mrb[0].mxu0
  %v1122 = vpop.f32.mrb[0].mxu0
  %v1123 = vadd.f32 %v1066, %v1122
  %v1124 = vpop.f32.mrb[0].mxu0
  %1125 = vdwg.mxu0
  %s1126 = scalar_lea.vmem %s53, 24
  %v1127 = vld [vmem:[%s1126] sm:$0xf]
  %v1128 = vld [vmem:[%s1126 + $0x4] sm:$0xf]
  %v1129 = vld [vmem:[%s1126 + $0x8] sm:$0xf]
  %v1130 = vld [vmem:[%s1126 + $0xc] sm:$0xf]
  %v1131 = vld [vmem:[%s1126 + $0x10] sm:$0xf]
  %v1132 = vld [vmem:[%s1126 + $0x14] sm:$0xf]
  %v1133 = vlaneseq
  %v1134 = vshrl.u32 %v1133, 7
  %v1135 = vsub.s32 1, %v1134
  %v1136 = vrot.slane %v1055, %v1135
  %v1143 = vunpack.c.l.b16 %v1127
  %v1144 = vunpack.c.l.b16 %v1128
  %v1145 = vunpack.c.l.b16 %v1129
  %v1146 = vunpack.c.l.b16 %v1130
  %v1147 = vunpack.c.l.b16 %v1131
  %v1148 = vunpack.c.l.b16 %v1132
  %v1149 = vpack.c.b16 %v1144, %v1143
  %v1150 = vpack.c.b16 %v1146, %v1145
  %v1151 = vpack.c.b16 %v1148, %v1147
  %1155 = vmatprep.subr.bf16.mxu0 0
  %1156 = vmatpush1.bf16.msra.mxu0 %v1149
  %1157 = vmatprep.subr.bf16.mxu0 0
  %1158 = vmatpush1.bf16.msra.mxu0 %v1150
  %1159 = vmatprep.subr.bf16.mxu0 0
  %1160 = vmatpush1.bf16.msra.mxu0 %v1151
  %1161 = vmatprep.subr.bf16.mxu0 0
  %1162 = vmatpush1.bf16.msra.mxu0 0
  %1163 = vmatprep.subr.bf16.mxu0 0
  %1164 = vmatpush1.bf16.msra.mxu0 0
  %1165 = vmatprep.subr.bf16.mxu0 0
  %1166 = vmatpush1.bf16.msra.mxu0 0
  %1167 = vmatprep.subr.bf16.mxu0 0
  %1168 = vmatpush1.bf16.msra.mxu0 0
  %1169 = vmatprep.subr.bf16.mxu0 0
  %1170 = vmatpush1.bf16.msra.mxu0 0
  %1171 = vmatprep.subr.bf16.mxu0 0
  %1172 = vmatpush1.bf16.msra.mxu0 0
  %1173 = vmatprep.subr.bf16.mxu0 0
  %1174 = vmatpush1.bf16.msra.mxu0 0
  %1175 = vmatprep.subr.bf16.mxu0 0
  %1176 = vmatpush1.bf16.msra.mxu0 0
  %1177 = vmatprep.subr.bf16.mxu0 0
  %1178 = vmatpush1.bf16.msra.mxu0 0
  %1179 = vmatprep.subr.bf16.mxu0 0
  %1180 = vmatpush1.bf16.msra.mxu0 0
  %1181 = vmatprep.subr.bf16.mxu0 0
  %1182 = vmatpush1.bf16.msra.mxu0 0
  %1183 = vmatprep.subr.bf16.mxu0 0
  %1184 = vmatpush1.bf16.msra.mxu0 0
  %1185 = vmatprep.subr.bf16.mxu0 0
  %1186 = vmatpush1.bf16.msra.mxu0 0
  %1187 = vmatprep.mubr.bf16.mxu0 0
  %1188 = vmatmul.mubr.bf16.gmra.mrb[0].mxu0 %v741
  %v1189 = vpop.f32.mrb[0].mxu0
  %v1190 = vadd.f32 %v1136, %v1189
  %v1191 = vpop.f32.mrb[0].mxu0
  %v1192 = vpop.f32.mrb[0].mxu0
  %v1193 = vadd.f32 %v1136, %v1192
  %v1194 = vpop.f32.mrb[0].mxu0
  %1195 = vdwg.mxu0
  %s1196 = scalar_lea.vmem %s57, 24
  %v1197 = vld [vmem:[%s1196] sm:$0xf]
  %v1198 = vld [vmem:[%s1196 + $0x4] sm:$0xf]
  %v1199 = vld [vmem:[%s1196 + $0x8] sm:$0xf]
  %v1200 = vld [vmem:[%s1196 + $0xc] sm:$0xf]
  %v1201 = vld [vmem:[%s1196 + $0x10] sm:$0xf]
  %v1202 = vld [vmem:[%s1196 + $0x14] sm:$0xf]
  %v1203 = vlaneseq
  %v1204 = vshrl.u32 %v1203, 7
  %v1205 = vsub.s32 2, %v1204
  %v1206 = vrot.slane %v1055, %v1205
  %v1213 = vunpack.c.l.b16 %v1197
  %v1214 = vunpack.c.l.b16 %v1198
  %v1215 = vunpack.c.l.b16 %v1199
  %v1216 = vunpack.c.l.b16 %v1200
  %v1217 = vunpack.c.l.b16 %v1201
  %v1218 = vunpack.c.l.b16 %v1202
  %v1219 = vpack.c.b16 %v1214, %v1213
  %v1220 = vpack.c.b16 %v1216, %v1215
  %v1221 = vpack.c.b16 %v1218, %v1217
  %1225 = vmatprep.subr.bf16.mxu0 0
  %1226 = vmatpush1.bf16.msra.mxu0 %v1219
  %1227 = vmatprep.subr.bf16.mxu0 0
  %1228 = vmatpush1.bf16.msra.mxu0 %v1220
  %1229 = vmatprep.subr.bf16.mxu0 0
  %1230 = vmatpush1.bf16.msra.mxu0 %v1221
  %1231 = vmatprep.subr.bf16.mxu0 0
  %1232 = vmatpush1.bf16.msra.mxu0 0
  %1233 = vmatprep.subr.bf16.mxu0 0
  %1234 = vmatpush1.bf16.msra.mxu0 0
  %1235 = vmatprep.subr.bf16.mxu0 0
  %1236 = vmatpush1.bf16.msra.mxu0 0
  %1237 = vmatprep.subr.bf16.mxu0 0
  %1238 = vmatpush1.bf16.msra.mxu0 0
  %1239 = vmatprep.subr.bf16.mxu0 0
  %1240 = vmatpush1.bf16.msra.mxu0 0
  %1241 = vmatprep.subr.bf16.mxu0 0
  %1242 = vmatpush1.bf16.msra.mxu0 0
  %1243 = vmatprep.subr.bf16.mxu0 0
  %1244 = vmatpush1.bf16.msra.mxu0 0
  %1245 = vmatprep.subr.bf16.mxu0 0
  %1246 = vmatpush1.bf16.msra.mxu0 0
  %1247 = vmatprep.subr.bf16.mxu0 0
  %1248 = vmatpush1.bf16.msra.mxu0 0
  %1249 = vmatprep.subr.bf16.mxu0 0
  %1250 = vmatpush1.bf16.msra.mxu0 0
  %1251 = vmatprep.subr.bf16.mxu0 0
  %1252 = vmatpush1.bf16.msra.mxu0 0
  %1253 = vmatprep.subr.bf16.mxu0 0
  %1254 = vmatpush1.bf16.msra.mxu0 0
  %1255 = vmatprep.subr.bf16.mxu0 0
  %1256 = vmatpush1.bf16.msra.mxu0 0
  %1257 = vmatprep.mubr.bf16.mxu0 0
  %1258 = vmatmul.mubr.bf16.gmra.mrb[0].mxu0 %v741
  %v1259 = vpop.f32.mrb[0].mxu0
  %v1260 = vadd.f32 %v1206, %v1259
  %v1261 = vpop.f32.mrb[0].mxu0
  %v1262 = vpop.f32.mrb[0].mxu0
  %v1263 = vadd.f32 %v1206, %v1262
  %v1264 = vpop.f32.mrb[0].mxu0
  %1265 = vdwg.mxu0
  %v1266 = vpack.c.bf16 %v1123, %v1120
  %v1267 = vpack.c.bf16 %v1193, %v1190
  %v1269 = vsel %vm924, %v1266, 0
  %v1272 = vsel %vm924, %v1267, 0
  %1274 = vmatprep.subr.bf16.mxu0 0
  %1275 = vmatpush1.bf16.xpose.msra.mxu0 %v1272
  %1276 = vmatprep.subr.bf16.mxu0 0
  %1277 = vmatpush1.bf16.xpose.msra.mxu0 0
  %1278 = vmatprep.subr.bf16.mxu0 0
  %1279 = vmatpush1.bf16.xpose.msra.mxu0 0
  %1280 = vmatprep.subr.bf16.mxu0 0
  %1281 = vmatpush1.bf16.xpose.msra.mxu0 0
  %1282 = vmatprep.subr.bf16.mxu0 0
  %1283 = vmatpush1.bf16.xpose.msra.mxu0 0
  %1284 = vmatprep.subr.bf16.mxu0 0
  %1285 = vmatpush1.bf16.xpose.msra.mxu0 0
  %1286 = vmatprep.subr.bf16.mxu0 0
  %1287 = vmatpush1.bf16.xpose.msra.mxu0 0
  %1288 = vmatprep.subr.bf16.mxu0 0
  %1289 = vmatpush1.bf16.xpose.msra.mxu0 0
  %1290 = vmatprep.subr.bf16.mxu0 0
  %1291 = vmatpush1.bf16.xpose.msra.mxu0 0
  %1292 = vmatprep.subr.bf16.mxu0 0
  %1293 = vmatpush1.bf16.xpose.msra.mxu0 0
  %1294 = vmatprep.subr.bf16.mxu0 0
  %1295 = vmatpush1.bf16.xpose.msra.mxu0 0
  %1296 = vmatprep.subr.bf16.mxu0 0
  %1297 = vmatpush1.bf16.xpose.msra.mxu0 0
  %1298 = vmatprep.subr.bf16.mxu0 0
  %1299 = vmatpush1.bf16.xpose.msra.mxu0 0
  %1300 = vmatprep.subr.bf16.mxu0 0
  %1301 = vmatpush1.bf16.xpose.msra.mxu0 0
  %1302 = vmatprep.subr.bf16.mxu0 0
  %1303 = vmatpush1.bf16.xpose.msra.mxu0 0
  %1304 = vmatprep.subr.bf16.mxu0 0
  %1305 = vmatpush1.bf16.xpose.msra.mxu0 0
  %1306 = vmatprep.mubr.bf16.mxu0 0
  %1307 = vmatmul.mubr.bf16.gmra.mrb[0].mxu0 %v1269
  %v1308 = vpop.f32.mrb[0].mxu0
  %v1309 = vadd.f32 0.0, %v1308
  %v1310 = vpop.f32.mrb[0].mxu0
  %v1311 = vpop.f32.mrb[0].mxu0
  %v1312 = vadd.f32 0.0, %v1311
  %v1313 = vpop.f32.mrb[0].mxu0
  %1314 = vdwg.mxu0
  %v1315 = vmul.f32 %v1309, 0.20412415
  %v1316 = vmul.f32 %v1312, 0.20412415
  %v1317 = vsel %vm182, %v1315, -1e+30
  %v1318 = vsel %vm183, %v1316, -1e+30
  %v1319 = vsel %vm976, %v1317, -inf
  %1320 = vmax.xlane.f32.xlu0 %v1319
  %v1321 = vpop.xlane.xlu0 %1320
  %v1322 = vsel %vm980, %v1318, -inf
  %1323 = vmax.xlane.f32.xlu0 %v1322
  %v1324 = vpop.xlane.xlu0 %1323
  %v1325 = vsub.f32 %v1317, %v1321
  %v1326 = vsub.f32 %v1318, %v1324
  %v1327 = vmul.f32 %v1325, 1.442695
  %v1328 = vpow.pop %v1327
  %v1329 = vmul.f32 %v1326, 1.442695
  %v1330 = vpow.pop %v1329
  %v1331 = vsel %vm976, %v1328, 0.0
  %1332 = vadd.xlane.f32.xlu0 %v1331
  %v1333 = vpop.xlane.xlu0 %1332
  %v1334 = vsel %vm980, %v1330, 0.0
  %1335 = vadd.xlane.f32.xlu0 %v1334
  %v1336 = vpop.xlane.xlu0 %1335
  %v1337 = vrcp.pop %v1333
  %v1338 = vmul.f32 %v1328, %v1337
  %v1339 = vrcp.pop %v1336
  %v1340 = vmul.f32 %v1330, %v1339
  %v1341 = vpack.c.bf16 %v1340, %v1338
  %v1342 = vpack.c.bf16 %v1263, %v1260
  %v1344 = vsel %vm976, %v1341, 0
  %v1347 = vsel %vm1005, %v1342, 0
  %1349 = vmatprep.subr.bf16.mxu0 0
  %1350 = vmatpush1.bf16.msra.mxu0 %v1347
  %1351 = vmatprep.subr.bf16.mxu0 0
  %1352 = vmatpush1.bf16.msra.mxu0 0
  %1353 = vmatprep.subr.bf16.mxu0 0
  %1354 = vmatpush1.bf16.msra.mxu0 0
  %1355 = vmatprep.subr.bf16.mxu0 0
  %1356 = vmatpush1.bf16.msra.mxu0 0
  %1357 = vmatprep.subr.bf16.mxu0 0
  %1358 = vmatpush1.bf16.msra.mxu0 0
  %1359 = vmatprep.subr.bf16.mxu0 0
  %1360 = vmatpush1.bf16.msra.mxu0 0
  %1361 = vmatprep.subr.bf16.mxu0 0
  %1362 = vmatpush1.bf16.msra.mxu0 0
  %1363 = vmatprep.subr.bf16.mxu0 0
  %1364 = vmatpush1.bf16.msra.mxu0 0
  %1365 = vmatprep.subr.bf16.mxu0 0
  %1366 = vmatpush1.bf16.msra.mxu0 0
  %1367 = vmatprep.subr.bf16.mxu0 0
  %1368 = vmatpush1.bf16.msra.mxu0 0
  %1369 = vmatprep.subr.bf16.mxu0 0
  %1370 = vmatpush1.bf16.msra.mxu0 0
  %1371 = vmatprep.subr.bf16.mxu0 0
  %1372 = vmatpush1.bf16.msra.mxu0 0
  %1373 = vmatprep.subr.bf16.mxu0 0
  %1374 = vmatpush1.bf16.msra.mxu0 0
  %1375 = vmatprep.subr.bf16.mxu0 0
  %1376 = vmatpush1.bf16.msra.mxu0 0
  %1377 = vmatprep.subr.bf16.mxu0 0
  %1378 = vmatpush1.bf16.msra.mxu0 0
  %1379 = vmatprep.subr.bf16.mxu0 0
  %1380 = vmatpush1.bf16.msra.mxu0 0
  %1381 = vmatprep.mubr.bf16.mxu0 0
  %1382 = vmatmul.mubr.bf16.gmra.mrb[0].mxu0 %v1344
  %v1383 = vpop.f32.mrb[0].mxu0
  %v1384 = vadd.f32 0.0, %v1383
  %v1385 = vpop.f32.mrb[0].mxu0
  %v1386 = vpop.f32.mrb[0].mxu0
  %v1387 = vadd.f32 0.0, %v1386
  %v1388 = vpop.f32.mrb[0].mxu0
  %1389 = vdwg.mxu0
  %v1390 = vpack.c.bf16 %v1387, %v1384
  %s1391 = scalar_lea.vmem %s49, 12
  %v1392 = vld [vmem:[%s1391] sm:$0xf]
  %v1393 = vld [vmem:[%s1391 + $0x4] sm:$0xf]
  %v1394 = vld [vmem:[%s1391 + $0x8] sm:$0xf]
  %v1398 = vunpack.c.l.b16 %v1392
  %v1399 = vunpack.c.l.b16 %v1393
  %v1400 = vunpack.c.l.b16 %v1394
  %v1401 = vpack.c.b16 %v1399, %v1398
  %v1402 = vpack.c.b16 %v1400, %v1400
  %v1405 = vsel %vm924, %v1390, 0
  %vm1407 = vcmask 1043456
  %v1409 = vsel %vm1407, %v1402, 0
  %1411 = vmatprep.subr.bf16.mxu0 0
  %1412 = vmatpush1.bf16.msra.mxu0 %v1401
  %1413 = vmatprep.subr.bf16.mxu0 0
  %1414 = vmatpush1.bf16.msra.mxu0 %v1409
  %1415 = vmatprep.subr.bf16.mxu0 0
  %1416 = vmatpush1.bf16.msra.mxu0 0
  %1417 = vmatprep.subr.bf16.mxu0 0
  %1418 = vmatpush1.bf16.msra.mxu0 0
  %1419 = vmatprep.subr.bf16.mxu0 0
  %1420 = vmatpush1.bf16.msra.mxu0 0
  %1421 = vmatprep.subr.bf16.mxu0 0
  %1422 = vmatpush1.bf16.msra.mxu0 0
  %1423 = vmatprep.subr.bf16.mxu0 0
  %1424 = vmatpush1.bf16.msra.mxu0 0
  %1425 = vmatprep.subr.bf16.mxu0 0
  %1426 = vmatpush1.bf16.msra.mxu0 0
  %1427 = vmatprep.subr.bf16.mxu0 0
  %1428 = vmatpush1.bf16.msra.mxu0 0
  %1429 = vmatprep.subr.bf16.mxu0 0
  %1430 = vmatpush1.bf16.msra.mxu0 0
  %1431 = vmatprep.subr.bf16.mxu0 0
  %1432 = vmatpush1.bf16.msra.mxu0 0
  %1433 = vmatprep.subr.bf16.mxu0 0
  %1434 = vmatpush1.bf16.msra.mxu0 0
  %1435 = vmatprep.subr.bf16.mxu0 0
  %1436 = vmatpush1.bf16.msra.mxu0 0
  %1437 = vmatprep.subr.bf16.mxu0 0
  %1438 = vmatpush1.bf16.msra.mxu0 0
  %1439 = vmatprep.subr.bf16.mxu0 0
  %1440 = vmatpush1.bf16.msra.mxu0 0
  %1441 = vmatprep.subr.bf16.mxu0 0
  %1442 = vmatpush1.bf16.msra.mxu0 0
  %1443 = vmatprep.mubr.bf16.mxu0 0
  %1444 = vmatmul.mubr.bf16.gmra.mrb[0].mxu0 %v1405
  %v1445 = vpop.f32.mrb[0].mxu0
  %v1446 = vadd.f32 0.0, %v1445
  %v1447 = vpop.f32.mrb[0].mxu0
  %v1448 = vpop.f32.mrb[0].mxu0
  %v1449 = vadd.f32 0.0, %v1448
  %v1450 = vpop.f32.mrb[0].mxu0
  %1451 = vdwg.mxu0
  %v1455 = vunpack.c.l.b16 %v1051
  %v1456 = vunpack.c.l.b16 %v1052
  %v1457 = vunpack.c.l.b16 %v1053
  %v1458 = vpack.c.b16 %v1456, %v1455
  %v1459 = vpack.c.b16 %v1457, %v1457
  %v1462 = vsel %vm924, %v1050, 0
  %v1465 = vsel %vm1407, %v1459, 0
  %1467 = vmatprep.subr.bf16.mxu0 0
  %1468 = vmatpush1.bf16.msra.mxu0 %v1458
  %1469 = vmatprep.subr.bf16.mxu0 0
  %1470 = vmatpush1.bf16.msra.mxu0 %v1465
  %1471 = vmatprep.subr.bf16.mxu0 0
  %1472 = vmatpush1.bf16.msra.mxu0 0
  %1473 = vmatprep.subr.bf16.mxu0 0
  %1474 = vmatpush1.bf16.msra.mxu0 0
  %1475 = vmatprep.subr.bf16.mxu0 0
  %1476 = vmatpush1.bf16.msra.mxu0 0
  %1477 = vmatprep.subr.bf16.mxu0 0
  %1478 = vmatpush1.bf16.msra.mxu0 0
  %1479 = vmatprep.subr.bf16.mxu0 0
  %1480 = vmatpush1.bf16.msra.mxu0 0
  %1481 = vmatprep.subr.bf16.mxu0 0
  %1482 = vmatpush1.bf16.msra.mxu0 0
  %1483 = vmatprep.subr.bf16.mxu0 0
  %1484 = vmatpush1.bf16.msra.mxu0 0
  %1485 = vmatprep.subr.bf16.mxu0 0
  %1486 = vmatpush1.bf16.msra.mxu0 0
  %1487 = vmatprep.subr.bf16.mxu0 0
  %1488 = vmatpush1.bf16.msra.mxu0 0
  %1489 = vmatprep.subr.bf16.mxu0 0
  %1490 = vmatpush1.bf16.msra.mxu0 0
  %1491 = vmatprep.subr.bf16.mxu0 0
  %1492 = vmatpush1.bf16.msra.mxu0 0
  %1493 = vmatprep.subr.bf16.mxu0 0
  %1494 = vmatpush1.bf16.msra.mxu0 0
  %1495 = vmatprep.subr.bf16.mxu0 0
  %1496 = vmatpush1.bf16.msra.mxu0 0
  %1497 = vmatprep.subr.bf16.mxu0 0
  %1498 = vmatpush1.bf16.msra.mxu0 0
  %1499 = vmatprep.mubr.bf16.mxu0 0
  %1500 = vmatmul.mubr.bf16.gmra.mrb[0].mxu0 %v1462
  %v1501 = vpop.f32.mrb[0].mxu0
  %v1502 = vadd.f32 %v1446, %v1501
  %v1503 = vpop.f32.mrb[0].mxu0
  %v1504 = vpop.f32.mrb[0].mxu0
  %v1505 = vadd.f32 %v1449, %v1504
  %v1506 = vpop.f32.mrb[0].mxu0
  %1507 = vdwg.mxu0
  %v1508 = vadd.f32 %v668, %v1502
  %v1509 = vadd.f32 %v669, %v1505
  %v1510 = vlaneseq
  %v1511 = vshrl.u32 %v1510, 7
  %v1512 = vsub.s32 0, %v1511
  %v1513 = vrot.slane %v671, %v1512
  %v1514 = vadd.f32 %v1508, %v1513
  %v1515 = vadd.f32 %v1509, %v1513
  %v1516 = vsel %vm277, %v1514, 0.0
  %1517 = vadd.xlane.f32.xlu0 %v1516
  %v1518 = vpop.xlane.xlu0 %1517
  %v1519 = vsel %vm281, %v1515, 0.0
  %1520 = vadd.xlane.f32.xlu0 %v1519
  %v1521 = vpop.xlane.xlu0 %1520
  %v1522 = vmul.f32 %v1518, %v285
  %v1523 = vmul.f32 %v1521, %v285
  %v1524 = vsub.f32 %v1514, %v1522
  %v1525 = vsub.f32 %v1515, %v1523
  %v1526 = vmul.f32 %v1524, %v1524
  %v1527 = vmul.f32 %v1525, %v1525
  %v1528 = vsel %vm277, %v1526, 0.0
  %1529 = vadd.xlane.f32.xlu0 %v1528
  %v1530 = vpop.xlane.xlu0 %1529
  %v1531 = vsel %vm281, %v1527, 0.0
  %1532 = vadd.xlane.f32.xlu0 %v1531
  %v1533 = vpop.xlane.xlu0 %1532
  %v1534 = vmul.f32 %v1530, %v285
  %v1535 = vmul.f32 %v1533, %v285
  %v1536 = vadd.f32 %v1534, 1e-05
  %v1537 = vadd.f32 %v1535, 1e-05
  %v1538 = vrsqrt.pop %v1536
  %v1539 = vrsqrt.pop %v1537
  %v1540 = vmul.f32 %v1524, %v1538
  %v1541 = vmul.f32 %v1525, %v1539
  %v1542 = vlaneseq
  %v1543 = vshrl.u32 %v1542, 7
  %v1544 = vsub.s32 2, %v1543
  %v1545 = vrot.slane %v670, %v1544
  %v1546 = vmul.f32 %v1540, %v1545
  %v1547 = vmul.f32 %v1541, %v1545
  %v1548 = vlaneseq
  %v1549 = vshrl.u32 %v1548, 7
  %v1550 = vsub.s32 3, %v1549
  %v1551 = vrot.slane %v670, %v1550
  %v1552 = vadd.f32 %v1546, %v1551
  %v1553 = vadd.f32 %v1547, %v1551
  %v1554 = vpack.c.bf16 %v1553, %v1552
  %v1555 = vld [vmem:[%s45] sm:$0xff]
  %v1556 = vld [vmem:[%s45 + $0x8] sm:$0xff]
  %v1557 = vld [vmem:[%s45 + $0x10] sm:$0xff]
  %v1558 = vld [vmem:[%s45 + $0x18] sm:$0xff]
  %v1559 = vld [vmem:[%s45 + $0x20] sm:$0xff]
  %v1560 = vld [vmem:[%s45 + $0x28] sm:$0xff]
  %v1561 = vld [vmem:[%s43] sm:$0x3]
  %v1563 = vlaneseq
  %v1564 = vshrl.u32 %v1563, 7
  %v1565 = vsub.s32 0, %v1564
  %v1566 = vrot.slane %v1561, %v1565
  %v1567 = vlaneseq
  %v1568 = vshrl.u32 %v1567, 7
  %v1569 = vsub.s32 1, %v1568
  %v1570 = vrot.slane %v1561, %v1569
  %v1579 = vunpack.c.l.b16 %v1555
  %v1580 = vunpack.c.h.b16 %v1555
  %v1581 = vunpack.c.l.b16 %v1556
  %v1582 = vunpack.c.h.b16 %v1556
  %v1583 = vunpack.c.l.b16 %v1557
  %v1584 = vunpack.c.h.b16 %v1557
  %v1585 = vunpack.c.l.b16 %v1558
  %v1586 = vunpack.c.h.b16 %v1558
  %v1587 = vunpack.c.l.b16 %v1559
  %v1588 = vunpack.c.h.b16 %v1559
  %v1589 = vunpack.c.l.b16 %v1560
  %v1590 = vunpack.c.h.b16 %v1560
  %v1591 = vpack.c.b16 %v1581, %v1579
  %v1592 = vpack.c.b16 %v1582, %v1580
  %v1593 = vpack.c.b16 %v1585, %v1583
  %v1594 = vpack.c.b16 %v1586, %v1584
  %v1595 = vpack.c.b16 %v1589, %v1587
  %v1596 = vpack.c.b16 %v1590, %v1588
  %v1604 = vsel %vm277, %v1554, 0
  %1606 = vmatprep.subr.bf16.mxu0 %v1592
  %1607 = vmatpush1.bf16.msra.mxu0 %v1591
  %1608 = vmatprep.subr.bf16.mxu0 %v1594
  %1609 = vmatpush1.bf16.msra.mxu0 %v1593
  %1610 = vmatprep.subr.bf16.mxu0 %v1596
  %1611 = vmatpush1.bf16.msra.mxu0 %v1595
  %1612 = vmatprep.subr.bf16.mxu0 0
  %1613 = vmatpush1.bf16.msra.mxu0 0
  %1614 = vmatprep.subr.bf16.mxu0 0
  %1615 = vmatpush1.bf16.msra.mxu0 0
  %1616 = vmatprep.subr.bf16.mxu0 0
  %1617 = vmatpush1.bf16.msra.mxu0 0
  %1618 = vmatprep.subr.bf16.mxu0 0
  %1619 = vmatpush1.bf16.msra.mxu0 0
  %1620 = vmatprep.subr.bf16.mxu0 0
  %1621 = vmatpush1.bf16.msra.mxu0 0
  %1622 = vmatprep.subr.bf16.mxu0 0
  %1623 = vmatpush1.bf16.msra.mxu0 0
  %1624 = vmatprep.subr.bf16.mxu0 0
  %1625 = vmatpush1.bf16.msra.mxu0 0
  %1626 = vmatprep.subr.bf16.mxu0 0
  %1627 = vmatpush1.bf16.msra.mxu0 0
  %1628 = vmatprep.subr.bf16.mxu0 0
  %1629 = vmatpush1.bf16.msra.mxu0 0
  %1630 = vmatprep.subr.bf16.mxu0 0
  %1631 = vmatpush1.bf16.msra.mxu0 0
  %1632 = vmatprep.subr.bf16.mxu0 0
  %1633 = vmatpush1.bf16.msra.mxu0 0
  %1634 = vmatprep.subr.bf16.mxu0 0
  %1635 = vmatpush1.bf16.msra.mxu0 0
  %1636 = vmatprep.subr.bf16.mxu0 0
  %1637 = vmatpush1.bf16.msra.mxu0 0
  %1638 = vmatprep.mubr.bf16.mxu0 0
  %1639 = vmatmul.mubr.bf16.gmra.mrb[0].mxu0 %v1604
  %v1640 = vpop.f32.mrb[0].mxu0
  %v1641 = vadd.f32 %v1566, %v1640
  %v1642 = vpop.f32.mrb[0].mxu0
  %v1643 = vadd.f32 %v1570, %v1642
  %v1644 = vpop.f32.mrb[0].mxu0
  %v1645 = vadd.f32 %v1566, %v1644
  %v1646 = vpop.f32.mrb[0].mxu0
  %v1647 = vadd.f32 %v1570, %v1646
  %1648 = vdwg.mxu0
  %v1649 = vmul.f32 %v1641, %v1641
  %v1650 = vmul.f32 %v1643, %v1643
  %v1651 = vmul.f32 %v1645, %v1645
  %v1652 = vmul.f32 %v1647, %v1647
  %v1653 = vmul.f32 %v1641, %v1649
  %v1654 = vmul.f32 %v1643, %v1650
  %v1655 = vmul.f32 %v1645, %v1651
  %v1656 = vmul.f32 %v1647, %v1652
  %v1657 = vmul.f32 %v1653, 0.044715
  %v1658 = vmul.f32 %v1654, 0.044715
  %v1659 = vmul.f32 %v1655, 0.044715
  %v1660 = vmul.f32 %v1656, 0.044715
  %v1661 = vadd.f32 %v1641, %v1657
  %v1662 = vadd.f32 %v1643, %v1658
  %v1663 = vadd.f32 %v1645, %v1659
  %v1664 = vadd.f32 %v1647, %v1660
  %v1665 = vmul.f32 %v1661, 0.7978846
  %v1666 = vmul.f32 %v1662, 0.7978846
  %v1667 = vmul.f32 %v1663, 0.7978846
  %v1668 = vmul.f32 %v1664, 0.7978846
  %v1669 = vtanh.pop %v1665
  %v1670 = vtanh.pop %v1666
  %v1671 = vtanh.pop %v1667
  %v1672 = vtanh.pop %v1668
  %v1673 = vadd.f32 %v1669, 1.0
  %v1674 = vadd.f32 %v1670, 1.0
  %v1675 = vadd.f32 %v1671, 1.0
  %v1676 = vadd.f32 %v1672, 1.0
  %v1677 = vmul.f32 %v1673, 0.5
  %v1678 = vmul.f32 %v1674, 0.5
  %v1679 = vmul.f32 %v1675, 0.5
  %v1680 = vmul.f32 %v1676, 0.5
  %v1681 = vmul.f32 %v1641, %v1677
  %v1682 = vmul.f32 %v1643, %v1678
  %v1683 = vmul.f32 %v1645, %v1679
  %v1684 = vmul.f32 %v1647, %v1680
  %v1685 = vpack.c.bf16 %v1683, %v1681
  %v1686 = vpack.c.bf16 %v1684, %v1682
  %v1687 = vld [vmem:[%s47] sm:$0xf]
  %v1688 = vld [vmem:[%s47 + $0x4] sm:$0xf]
  %v1689 = vld [vmem:[%s47 + $0x8] sm:$0xf]
  %v1690 = vld [vmem:[%s47 + $0xc] sm:$0xf]
  %v1691 = vld [vmem:[%s47 + $0x10] sm:$0xf]
  %v1692 = vld [vmem:[%s47 + $0x14] sm:$0xf]
  %v1693 = vld [vmem:[%s47 + $0x18] sm:$0xf]
  %v1694 = vld [vmem:[%s47 + $0x1c] sm:$0xf]
  %v1695 = vld [vmem:[%s47 + $0x20] sm:$0xf]
  %v1696 = vld [vmem:[%s47 + $0x24] sm:$0xf]
  %v1697 = vld [vmem:[%s47 + $0x28] sm:$0xf]
  %v1698 = vld [vmem:[%s47 + $0x2c] sm:$0xf]
  %v1699 = vld [vmem:[%s47 + $0x30] sm:$0xf]
  %v1700 = vld [vmem:[%s47 + $0x34] sm:$0xf]
  %v1701 = vld [vmem:[%s47 + $0x38] sm:$0xf]
  %v1702 = vld [vmem:[%s47 + $0x3c] sm:$0xf]
  %v1703 = vld [vmem:[%s47 + $0x40] sm:$0xf]
  %v1704 = vld [vmem:[%s47 + $0x44] sm:$0xf]
  %v1705 = vld [vmem:[%s47 + $0x48] sm:$0xf]
  %v1706 = vld [vmem:[%s47 + $0x4c] sm:$0xf]
  %v1707 = vld [vmem:[%s47 + $0x50] sm:$0xf]
  %v1708 = vld [vmem:[%s47 + $0x54] sm:$0xf]
  %v1709 = vld [vmem:[%s47 + $0x58] sm:$0xf]
  %v1710 = vld [vmem:[%s47 + $0x5c] sm:$0xf]
  %v1711 = vlaneseq
  %v1712 = vshrl.u32 %v1711, 7
  %v1713 = vsub.s32 1, %v1712
  %v1714 = vrot.slane %v671, %v1713
  %v1739 = vunpack.c.l.b16 %v1687
  %v1740 = vunpack.c.l.b16 %v1688
  %v1741 = vunpack.c.l.b16 %v1689
  %v1742 = vunpack.c.l.b16 %v1690
  %v1743 = vunpack.c.l.b16 %v1691
  %v1744 = vunpack.c.l.b16 %v1692
  %v1745 = vunpack.c.l.b16 %v1693
  %v1746 = vunpack.c.l.b16 %v1694
  %v1747 = vunpack.c.l.b16 %v1695
  %v1748 = vunpack.c.l.b16 %v1696
  %v1749 = vunpack.c.l.b16 %v1697
  %v1750 = vunpack.c.l.b16 %v1698
  %v1751 = vunpack.c.l.b16 %v1699
  %v1752 = vunpack.c.l.b16 %v1700
  %v1753 = vunpack.c.l.b16 %v1701
  %v1754 = vunpack.c.l.b16 %v1702
  %v1755 = vunpack.c.l.b16 %v1703
  %v1756 = vunpack.c.l.b16 %v1704
  %v1757 = vunpack.c.l.b16 %v1705
  %v1758 = vunpack.c.l.b16 %v1706
  %v1759 = vunpack.c.l.b16 %v1707
  %v1760 = vunpack.c.l.b16 %v1708
  %v1761 = vunpack.c.l.b16 %v1709
  %v1762 = vunpack.c.l.b16 %v1710
  %v1763 = vpack.c.b16 %v1740, %v1739
  %v1764 = vpack.c.b16 %v1742, %v1741
  %v1765 = vpack.c.b16 %v1744, %v1743
  %v1766 = vpack.c.b16 %v1746, %v1745
  %v1767 = vpack.c.b16 %v1748, %v1747
  %v1768 = vpack.c.b16 %v1750, %v1749
  %v1769 = vpack.c.b16 %v1752, %v1751
  %v1770 = vpack.c.b16 %v1754, %v1753
  %v1771 = vpack.c.b16 %v1756, %v1755
  %v1772 = vpack.c.b16 %v1758, %v1757
  %v1773 = vpack.c.b16 %v1760, %v1759
  %v1774 = vpack.c.b16 %v1762, %v1761
  %v1788 = vsel %vm232, %v1686, 0
  %1790 = vmatprep.subr.bf16.mxu0 0
  %1791 = vmatpush1.bf16.msra.mxu0 %v1763
  %1792 = vmatprep.subr.bf16.mxu0 0
  %1793 = vmatpush1.bf16.msra.mxu0 %v1764
  %1794 = vmatprep.subr.bf16.mxu0 0
  %1795 = vmatpush1.bf16.msra.mxu0 %v1765
  %1796 = vmatprep.subr.bf16.mxu0 0
  %1797 = vmatpush1.bf16.msra.mxu0 %v1766
  %1798 = vmatprep.subr.bf16.mxu0 0
  %1799 = vmatpush1.bf16.msra.mxu0 %v1767
  %1800 = vmatprep.subr.bf16.mxu0 0
  %1801 = vmatpush1.bf16.msra.mxu0 %v1768
  %1802 = vmatprep.subr.bf16.mxu0 0
  %1803 = vmatpush1.bf16.msra.mxu0 %v1769
  %1804 = vmatprep.subr.bf16.mxu0 0
  %1805 = vmatpush1.bf16.msra.mxu0 %v1770
  %1806 = vmatprep.subr.bf16.mxu0 0
  %1807 = vmatpush1.bf16.msra.mxu0 %v1771
  %1808 = vmatprep.subr.bf16.mxu0 0
  %1809 = vmatpush1.bf16.msra.mxu0 %v1772
  %1810 = vmatprep.subr.bf16.mxu0 0
  %1811 = vmatpush1.bf16.msra.mxu0 %v1773
  %1812 = vmatprep.subr.bf16.mxu0 0
  %1813 = vmatpush1.bf16.msra.mxu0 %v1774
  %1814 = vmatprep.subr.bf16.mxu0 0
  %1815 = vmatpush1.bf16.msra.mxu0 0
  %1816 = vmatprep.subr.bf16.mxu0 0
  %1817 = vmatpush1.bf16.msra.mxu0 0
  %1818 = vmatprep.subr.bf16.mxu0 0
  %1819 = vmatpush1.bf16.msra.mxu0 0
  %1820 = vmatprep.subr.bf16.mxu0 0
  %1821 = vmatpush1.bf16.msra.mxu0 0
  %1822 = vmatprep.mubr.bf16.mxu0 %v1788
  %1823 = vmatmul.mubr.bf16.gmra.mrb[0].mxu0 %v1685
  %v1824 = vpop.f32.mrb[0].mxu0
  %v1825 = vadd.f32 %v1714, %v1824
  %v1826 = vpop.f32.mrb[0].mxu0
  %v1827 = vpop.f32.mrb[0].mxu0
  %v1828 = vadd.f32 %v1714, %v1827
  %v1829 = vpop.f32.mrb[0].mxu0
  %1830 = vdwg.mxu0
  %v1831 = vadd.f32 %v1514, %v1825
  %v1832 = vadd.f32 %v1515, %v1828
  %s1833 = scalar_lea.vmem %s41, 4
  %v1834 = vld [vmem:[%s1833] sm:$0xf]
  %s1835 = scalar_lea.vmem %s39, 2
  %v1836 = vld [vmem:[%s1835] sm:$0x3]
  %v1837 = vsel %vm277, %v1831, 0.0
  %1838 = vadd.xlane.f32.xlu0 %v1837
  %v1839 = vpop.xlane.xlu0 %1838
  %v1840 = vsel %vm281, %v1832, 0.0
  %1841 = vadd.xlane.f32.xlu0 %v1840
  %v1842 = vpop.xlane.xlu0 %1841
  %v1843 = vmul.f32 %v1839, %v285
  %v1844 = vmul.f32 %v1842, %v285
  %v1845 = vsub.f32 %v1831, %v1843
  %v1846 = vsub.f32 %v1832, %v1844
  %v1847 = vmul.f32 %v1845, %v1845
  %v1848 = vmul.f32 %v1846, %v1846
  %v1849 = vsel %vm277, %v1847, 0.0
  %1850 = vadd.xlane.f32.xlu0 %v1849
  %v1851 = vpop.xlane.xlu0 %1850
  %v1852 = vsel %vm281, %v1848, 0.0
  %1853 = vadd.xlane.f32.xlu0 %v1852
  %v1854 = vpop.xlane.xlu0 %1853
  %v1855 = vmul.f32 %v1851, %v285
  %v1856 = vmul.f32 %v1854, %v285
  %v1857 = vadd.f32 %v1855, 1e-05
  %v1858 = vadd.f32 %v1856, 1e-05
  %v1859 = vrsqrt.pop %v1857
  %v1860 = vrsqrt.pop %v1858
  %v1861 = vmul.f32 %v1845, %v1859
  %v1862 = vmul.f32 %v1846, %v1860
  %v1863 = vlaneseq
  %v1864 = vshrl.u32 %v1863, 7
  %v1865 = vsub.s32 0, %v1864
  %v1866 = vrot.slane %v1834, %v1865
  %v1867 = vmul.f32 %v1861, %v1866
  %v1868 = vmul.f32 %v1862, %v1866
  %v1869 = vlaneseq
  %v1870 = vshrl.u32 %v1869, 7
  %v1871 = vsub.s32 1, %v1870
  %v1872 = vrot.slane %v1834, %v1871
  %v1873 = vadd.f32 %v1867, %v1872
  %v1874 = vadd.f32 %v1868, %v1872
  %v1875 = vpack.c.bf16 %v1874, %v1873
  %s1876 = scalar_lea.vmem %s51, 8
  %v1877 = vld [vmem:[%s1876] sm:$0x7]
  %s1878 = scalar_lea.vmem %s55, 48
  %v1879 = vld [vmem:[%s1878] sm:$0xf]
  %v1880 = vld [vmem:[%s1878 + $0x4] sm:$0xf]
  %v1881 = vld [vmem:[%s1878 + $0x8] sm:$0xf]
  %v1882 = vld [vmem:[%s1878 + $0xc] sm:$0xf]
  %v1883 = vld [vmem:[%s1878 + $0x10] sm:$0xf]
  %v1884 = vld [vmem:[%s1878 + $0x14] sm:$0xf]
  %v1885 = vlaneseq
  %v1886 = vshrl.u32 %v1885, 7
  %v1887 = vsub.s32 0, %v1886
  %v1888 = vrot.slane %v1877, %v1887
  %v1895 = vunpack.c.l.b16 %v1879
  %v1896 = vunpack.c.l.b16 %v1880
  %v1897 = vunpack.c.l.b16 %v1881
  %v1898 = vunpack.c.l.b16 %v1882
  %v1899 = vunpack.c.l.b16 %v1883
  %v1900 = vunpack.c.l.b16 %v1884
  %v1901 = vpack.c.b16 %v1896, %v1895
  %v1902 = vpack.c.b16 %v1898, %v1897
  %v1903 = vpack.c.b16 %v1900, %v1899
  %v1908 = vsel %vm277, %v1875, 0
  %1910 = vmatprep.subr.bf16.mxu0 0
  %1911 = vmatpush1.bf16.msra.mxu0 %v1901
  %1912 = vmatprep.subr.bf16.mxu0 0
  %1913 = vmatpush1.bf16.msra.mxu0 %v1902
  %1914 = vmatprep.subr.bf16.mxu0 0
  %1915 = vmatpush1.bf16.msra.mxu0 %v1903
  %1916 = vmatprep.subr.bf16.mxu0 0
  %1917 = vmatpush1.bf16.msra.mxu0 0
  %1918 = vmatprep.subr.bf16.mxu0 0
  %1919 = vmatpush1.bf16.msra.mxu0 0
  %1920 = vmatprep.subr.bf16.mxu0 0
  %1921 = vmatpush1.bf16.msra.mxu0 0
  %1922 = vmatprep.subr.bf16.mxu0 0
  %1923 = vmatpush1.bf16.msra.mxu0 0
  %1924 = vmatprep.subr.bf16.mxu0 0
  %1925 = vmatpush1.bf16.msra.mxu0 0
  %1926 = vmatprep.subr.bf16.mxu0 0
  %1927 = vmatpush1.bf16.msra.mxu0 0
  %1928 = vmatprep.subr.bf16.mxu0 0
  %1929 = vmatpush1.bf16.msra.mxu0 0
  %1930 = vmatprep.subr.bf16.mxu0 0
  %1931 = vmatpush1.bf16.msra.mxu0 0
  %1932 = vmatprep.subr.bf16.mxu0 0
  %1933 = vmatpush1.bf16.msra.mxu0 0
  %1934 = vmatprep.subr.bf16.mxu0 0
  %1935 = vmatpush1.bf16.msra.mxu0 0
  %1936 = vmatprep.subr.bf16.mxu0 0
  %1937 = vmatpush1.bf16.msra.mxu0 0
  %1938 = vmatprep.subr.bf16.mxu0 0
  %1939 = vmatpush1.bf16.msra.mxu0 0
  %1940 = vmatprep.subr.bf16.mxu0 0
  %1941 = vmatpush1.bf16.msra.mxu0 0
  %1942 = vmatprep.mubr.bf16.mxu0 0
  %1943 = vmatmul.mubr.bf16.gmra.mrb[0].mxu0 %v1908
  %v1944 = vpop.f32.mrb[0].mxu0
  %v1945 = vadd.f32 %v1888, %v1944
  %v1946 = vpop.f32.mrb[0].mxu0
  %v1947 = vpop.f32.mrb[0].mxu0
  %v1948 = vadd.f32 %v1888, %v1947
  %v1949 = vpop.f32.mrb[0].mxu0
  %1950 = vdwg.mxu0
  %s1951 = scalar_lea.vmem %s53, 48
  %v1952 = vld [vmem:[%s1951] sm:$0xf]
  %v1953 = vld [vmem:[%s1951 + $0x4] sm:$0xf]
  %v1954 = vld [vmem:[%s1951 + $0x8] sm:$0xf]
  %v1955 = vld [vmem:[%s1951 + $0xc] sm:$0xf]
  %v1956 = vld [vmem:[%s1951 + $0x10] sm:$0xf]
  %v1957 = vld [vmem:[%s1951 + $0x14] sm:$0xf]
  %v1958 = vlaneseq
  %v1959 = vshrl.u32 %v1958, 7
  %v1960 = vsub.s32 1, %v1959
  %v1961 = vrot.slane %v1877, %v1960
  %v1968 = vunpack.c.l.b16 %v1952
  %v1969 = vunpack.c.l.b16 %v1953
  %v1970 = vunpack.c.l.b16 %v1954
  %v1971 = vunpack.c.l.b16 %v1955
  %v1972 = vunpack.c.l.b16 %v1956
  %v1973 = vunpack.c.l.b16 %v1957
  %v1974 = vpack.c.b16 %v1969, %v1968
  %v1975 = vpack.c.b16 %v1971, %v1970
  %v1976 = vpack.c.b16 %v1973, %v1972
  %1980 = vmatprep.subr.bf16.mxu0 0
  %1981 = vmatpush1.bf16.msra.mxu0 %v1974
  %1982 = vmatprep.subr.bf16.mxu0 0
  %1983 = vmatpush1.bf16.msra.mxu0 %v1975
  %1984 = vmatprep.subr.bf16.mxu0 0
  %1985 = vmatpush1.bf16.msra.mxu0 %v1976
  %1986 = vmatprep.subr.bf16.mxu0 0
  %1987 = vmatpush1.bf16.msra.mxu0 0
  %1988 = vmatprep.subr.bf16.mxu0 0
  %1989 = vmatpush1.bf16.msra.mxu0 0
  %1990 = vmatprep.subr.bf16.mxu0 0
  %1991 = vmatpush1.bf16.msra.mxu0 0
  %1992 = vmatprep.subr.bf16.mxu0 0
  %1993 = vmatpush1.bf16.msra.mxu0 0
  %1994 = vmatprep.subr.bf16.mxu0 0
  %1995 = vmatpush1.bf16.msra.mxu0 0
  %1996 = vmatprep.subr.bf16.mxu0 0
  %1997 = vmatpush1.bf16.msra.mxu0 0
  %1998 = vmatprep.subr.bf16.mxu0 0
  %1999 = vmatpush1.bf16.msra.mxu0 0
  %2000 = vmatprep.subr.bf16.mxu0 0
  %2001 = vmatpush1.bf16.msra.mxu0 0
  %2002 = vmatprep.subr.bf16.mxu0 0
  %2003 = vmatpush1.bf16.msra.mxu0 0
  %2004 = vmatprep.subr.bf16.mxu0 0
  %2005 = vmatpush1.bf16.msra.mxu0 0
  %2006 = vmatprep.subr.bf16.mxu0 0
  %2007 = vmatpush1.bf16.msra.mxu0 0
  %2008 = vmatprep.subr.bf16.mxu0 0
  %2009 = vmatpush1.bf16.msra.mxu0 0
  %2010 = vmatprep.subr.bf16.mxu0 0
  %2011 = vmatpush1.bf16.msra.mxu0 0
  %2012 = vmatprep.mubr.bf16.mxu0 0
  %2013 = vmatmul.mubr.bf16.gmra.mrb[0].mxu0 %v1908
  %v2014 = vpop.f32.mrb[0].mxu0
  %v2015 = vadd.f32 %v1961, %v2014
  %v2016 = vpop.f32.mrb[0].mxu0
  %v2017 = vpop.f32.mrb[0].mxu0
  %v2018 = vadd.f32 %v1961, %v2017
  %v2019 = vpop.f32.mrb[0].mxu0
  %2020 = vdwg.mxu0
  %s2021 = scalar_lea.vmem %s57, 48
  %v2022 = vld [vmem:[%s2021] sm:$0xf]
  %v2023 = vld [vmem:[%s2021 + $0x4] sm:$0xf]
  %v2024 = vld [vmem:[%s2021 + $0x8] sm:$0xf]
  %v2025 = vld [vmem:[%s2021 + $0xc] sm:$0xf]
  %v2026 = vld [vmem:[%s2021 + $0x10] sm:$0xf]
  %v2027 = vld [vmem:[%s2021 + $0x14] sm:$0xf]
  %v2028 = vlaneseq
  %v2029 = vshrl.u32 %v2028, 7
  %v2030 = vsub.s32 2, %v2029
  %v2031 = vrot.slane %v1877, %v2030
  %v2038 = vunpack.c.l.b16 %v2022
  %v2039 = vunpack.c.l.b16 %v2023
  %v2040 = vunpack.c.l.b16 %v2024
  %v2041 = vunpack.c.l.b16 %v2025
  %v2042 = vunpack.c.l.b16 %v2026
  %v2043 = vunpack.c.l.b16 %v2027
  %v2044 = vpack.c.b16 %v2039, %v2038
  %v2045 = vpack.c.b16 %v2041, %v2040
  %v2046 = vpack.c.b16 %v2043, %v2042
  %2050 = vmatprep.subr.bf16.mxu0 0
  %2051 = vmatpush1.bf16.msra.mxu0 %v2044
  %2052 = vmatprep.subr.bf16.mxu0 0
  %2053 = vmatpush1.bf16.msra.mxu0 %v2045
  %2054 = vmatprep.subr.bf16.mxu0 0
  %2055 = vmatpush1.bf16.msra.mxu0 %v2046
  %2056 = vmatprep.subr.bf16.mxu0 0
  %2057 = vmatpush1.bf16.msra.mxu0 0
  %2058 = vmatprep.subr.bf16.mxu0 0
  %2059 = vmatpush1.bf16.msra.mxu0 0
  %2060 = vmatprep.subr.bf16.mxu0 0
  %2061 = vmatpush1.bf16.msra.mxu0 0
  %2062 = vmatprep.subr.bf16.mxu0 0
  %2063 = vmatpush1.bf16.msra.mxu0 0
  %2064 = vmatprep.subr.bf16.mxu0 0
  %2065 = vmatpush1.bf16.msra.mxu0 0
  %2066 = vmatprep.subr.bf16.mxu0 0
  %2067 = vmatpush1.bf16.msra.mxu0 0
  %2068 = vmatprep.subr.bf16.mxu0 0
  %2069 = vmatpush1.bf16.msra.mxu0 0
  %2070 = vmatprep.subr.bf16.mxu0 0
  %2071 = vmatpush1.bf16.msra.mxu0 0
  %2072 = vmatprep.subr.bf16.mxu0 0
  %2073 = vmatpush1.bf16.msra.mxu0 0
  %2074 = vmatprep.subr.bf16.mxu0 0
  %2075 = vmatpush1.bf16.msra.mxu0 0
  %2076 = vmatprep.subr.bf16.mxu0 0
  %2077 = vmatpush1.bf16.msra.mxu0 0
  %2078 = vmatprep.subr.bf16.mxu0 0
  %2079 = vmatpush1.bf16.msra.mxu0 0
  %2080 = vmatprep.subr.bf16.mxu0 0
  %2081 = vmatpush1.bf16.msra.mxu0 0
  %2082 = vmatprep.mubr.bf16.mxu0 0
  %2083 = vmatmul.mubr.bf16.gmra.mrb[0].mxu0 %v1908
  %v2084 = vpop.f32.mrb[0].mxu0
  %v2085 = vadd.f32 %v2031, %v2084
  %v2086 = vpop.f32.mrb[0].mxu0
  %v2087 = vpop.f32.mrb[0].mxu0
  %v2088 = vadd.f32 %v2031, %v2087
  %v2089 = vpop.f32.mrb[0].mxu0
  %2090 = vdwg.mxu0
  %v2091 = vpack.c.bf16 %v1948, %v1945
  %v2092 = vpack.c.bf16 %v2018, %v2015
  %v2094 = vsel %vm924, %v2091, 0
  %v2097 = vsel %vm924, %v2092, 0
  %2099 = vmatprep.subr.bf16.mxu0 0
  %2100 = vmatpush1.bf16.xpose.msra.mxu0 %v2097
  %2101 = vmatprep.subr.bf16.mxu0 0
  %2102 = vmatpush1.bf16.xpose.msra.mxu0 0
  %2103 = vmatprep.subr.bf16.mxu0 0
  %2104 = vmatpush1.bf16.xpose.msra.mxu0 0
  %2105 = vmatprep.subr.bf16.mxu0 0
  %2106 = vmatpush1.bf16.xpose.msra.mxu0 0
  %2107 = vmatprep.subr.bf16.mxu0 0
  %2108 = vmatpush1.bf16.xpose.msra.mxu0 0
  %2109 = vmatprep.subr.bf16.mxu0 0
  %2110 = vmatpush1.bf16.xpose.msra.mxu0 0
  %2111 = vmatprep.subr.bf16.mxu0 0
  %2112 = vmatpush1.bf16.xpose.msra.mxu0 0
  %2113 = vmatprep.subr.bf16.mxu0 0
  %2114 = vmatpush1.bf16.xpose.msra.mxu0 0
  %2115 = vmatprep.subr.bf16.mxu0 0
  %2116 = vmatpush1.bf16.xpose.msra.mxu0 0
  %2117 = vmatprep.subr.bf16.mxu0 0
  %2118 = vmatpush1.bf16.xpose.msra.mxu0 0
  %2119 = vmatprep.subr.bf16.mxu0 0
  %2120 = vmatpush1.bf16.xpose.msra.mxu0 0
  %2121 = vmatprep.subr.bf16.mxu0 0
  %2122 = vmatpush1.bf16.xpose.msra.mxu0 0
  %2123 = vmatprep.subr.bf16.mxu0 0
  %2124 = vmatpush1.bf16.xpose.msra.mxu0 0
  %2125 = vmatprep.subr.bf16.mxu0 0
  %2126 = vmatpush1.bf16.xpose.msra.mxu0 0
  %2127 = vmatprep.subr.bf16.mxu0 0
  %2128 = vmatpush1.bf16.xpose.msra.mxu0 0
  %2129 = vmatprep.subr.bf16.mxu0 0
  %2130 = vmatpush1.bf16.xpose.msra.mxu0 0
  %2131 = vmatprep.mubr.bf16.mxu0 0
  %2132 = vmatmul.mubr.bf16.gmra.mrb[0].mxu0 %v2094
  %v2133 = vpop.f32.mrb[0].mxu0
  %v2134 = vadd.f32 0.0, %v2133
  %v2135 = vpop.f32.mrb[0].mxu0
  %v2136 = vpop.f32.mrb[0].mxu0
  %v2137 = vadd.f32 0.0, %v2136
  %v2138 = vpop.f32.mrb[0].mxu0
  %2139 = vdwg.mxu0
  %v2140 = vmul.f32 %v2134, 0.20412415
  %v2141 = vmul.f32 %v2137, 0.20412415
  %v2142 = vsel %vm182, %v2140, -1e+30
  %v2143 = vsel %vm183, %v2141, -1e+30
  %v2144 = vsel %vm976, %v2142, -inf
  %2145 = vmax.xlane.f32.xlu0 %v2144
  %v2146 = vpop.xlane.xlu0 %2145
  %v2147 = vsel %vm980, %v2143, -inf
  %2148 = vmax.xlane.f32.xlu0 %v2147
  %v2149 = vpop.xlane.xlu0 %2148
  %v2150 = vsub.f32 %v2142, %v2146
  %v2151 = vsub.f32 %v2143, %v2149
  %v2152 = vmul.f32 %v2150, 1.442695
  %v2153 = vpow.pop %v2152
  %v2154 = vmul.f32 %v2151, 1.442695
  %v2155 = vpow.pop %v2154
  %v2156 = vsel %vm976, %v2153, 0.0
  %2157 = vadd.xlane.f32.xlu0 %v2156
  %v2158 = vpop.xlane.xlu0 %2157
  %v2159 = vsel %vm980, %v2155, 0.0
  %2160 = vadd.xlane.f32.xlu0 %v2159
  %v2161 = vpop.xlane.xlu0 %2160
  %v2162 = vrcp.pop %v2158
  %v2163 = vmul.f32 %v2153, %v2162
  %v2164 = vrcp.pop %v2161
  %v2165 = vmul.f32 %v2155, %v2164
  %v2166 = vpack.c.bf16 %v2165, %v2163
  %v2167 = vpack.c.bf16 %v2088, %v2085
  %v2169 = vsel %vm976, %v2166, 0
  %v2172 = vsel %vm1005, %v2167, 0
  %2174 = vmatprep.subr.bf16.mxu0 0
  %2175 = vmatpush1.bf16.msra.mxu0 %v2172
  %2176 = vmatprep.subr.bf16.mxu0 0
  %2177 = vmatpush1.bf16.msra.mxu0 0
  %2178 = vmatprep.subr.bf16.mxu0 0
  %2179 = vmatpush1.bf16.msra.mxu0 0
  %2180 = vmatprep.subr.bf16.mxu0 0
  %2181 = vmatpush1.bf16.msra.mxu0 0
  %2182 = vmatprep.subr.bf16.mxu0 0
  %2183 = vmatpush1.bf16.msra.mxu0 0
  %2184 = vmatprep.subr.bf16.mxu0 0
  %2185 = vmatpush1.bf16.msra.mxu0 0
  %2186 = vmatprep.subr.bf16.mxu0 0
  %2187 = vmatpush1.bf16.msra.mxu0 0
  %2188 = vmatprep.subr.bf16.mxu0 0
  %2189 = vmatpush1.bf16.msra.mxu0 0
  %2190 = vmatprep.subr.bf16.mxu0 0
  %2191 = vmatpush1.bf16.msra.mxu0 0
  %2192 = vmatprep.subr.bf16.mxu0 0
  %2193 = vmatpush1.bf16.msra.mxu0 0
  %2194 = vmatprep.subr.bf16.mxu0 0
  %2195 = vmatpush1.bf16.msra.mxu0 0
  %2196 = vmatprep.subr.bf16.mxu0 0
  %2197 = vmatpush1.bf16.msra.mxu0 0
  %2198 = vmatprep.subr.bf16.mxu0 0
  %2199 = vmatpush1.bf16.msra.mxu0 0
  %2200 = vmatprep.subr.bf16.mxu0 0
  %2201 = vmatpush1.bf16.msra.mxu0 0
  %2202 = vmatprep.subr.bf16.mxu0 0
  %2203 = vmatpush1.bf16.msra.mxu0 0
  %2204 = vmatprep.subr.bf16.mxu0 0
  %2205 = vmatpush1.bf16.msra.mxu0 0
  %2206 = vmatprep.mubr.bf16.mxu0 0
  %2207 = vmatmul.mubr.bf16.gmra.mrb[0].mxu0 %v2169
  %v2208 = vpop.f32.mrb[0].mxu0
  %v2209 = vadd.f32 0.0, %v2208
  %v2210 = vpop.f32.mrb[0].mxu0
  %v2211 = vpop.f32.mrb[0].mxu0
  %v2212 = vadd.f32 0.0, %v2211
  %v2213 = vpop.f32.mrb[0].mxu0
  %2214 = vdwg.mxu0
  %v2215 = vpack.c.bf16 %v2212, %v2209
  %s2216 = scalar_lea.vmem %s49, 24
  %v2217 = vld [vmem:[%s2216] sm:$0xf]
  %v2218 = vld [vmem:[%s2216 + $0x4] sm:$0xf]
  %v2219 = vld [vmem:[%s2216 + $0x8] sm:$0xf]
  %s2220 = scalar_lea.vmem %s51, 12
  %v2221 = vld [vmem:[%s2220] sm:$0x7]
  %s2222 = scalar_lea.vmem %s55, 72
  %v2223 = vld [vmem:[%s2222] sm:$0xf]
  %v2224 = vld [vmem:[%s2222 + $0x4] sm:$0xf]
  %v2225 = vld [vmem:[%s2222 + $0x8] sm:$0xf]
  %v2226 = vld [vmem:[%s2222 + $0xc] sm:$0xf]
  %v2227 = vld [vmem:[%s2222 + $0x10] sm:$0xf]
  %v2228 = vld [vmem:[%s2222 + $0x14] sm:$0xf]
  %v2229 = vlaneseq
  %v2230 = vshrl.u32 %v2229, 7
  %v2231 = vsub.s32 0, %v2230
  %v2232 = vrot.slane %v2221, %v2231
  %v2239 = vunpack.c.l.b16 %v2223
  %v2240 = vunpack.c.l.b16 %v2224
  %v2241 = vunpack.c.l.b16 %v2225
  %v2242 = vunpack.c.l.b16 %v2226
  %v2243 = vunpack.c.l.b16 %v2227
  %v2244 = vunpack.c.l.b16 %v2228
  %v2245 = vpack.c.b16 %v2240, %v2239
  %v2246 = vpack.c.b16 %v2242, %v2241
  %v2247 = vpack.c.b16 %v2244, %v2243
  %2251 = vmatprep.subr.bf16.mxu0 0
  %2252 = vmatpush1.bf16.msra.mxu0 %v2245
  %2253 = vmatprep.subr.bf16.mxu0 0
  %2254 = vmatpush1.bf16.msra.mxu0 %v2246
  %2255 = vmatprep.subr.bf16.mxu0 0
  %2256 = vmatpush1.bf16.msra.mxu0 %v2247
  %2257 = vmatprep.subr.bf16.mxu0 0
  %2258 = vmatpush1.bf16.msra.mxu0 0
  %2259 = vmatprep.subr.bf16.mxu0 0
  %2260 = vmatpush1.bf16.msra.mxu0 0
  %2261 = vmatprep.subr.bf16.mxu0 0
  %2262 = vmatpush1.bf16.msra.mxu0 0
  %2263 = vmatprep.subr.bf16.mxu0 0
  %2264 = vmatpush1.bf16.msra.mxu0 0
  %2265 = vmatprep.subr.bf16.mxu0 0
  %2266 = vmatpush1.bf16.msra.mxu0 0
  %2267 = vmatprep.subr.bf16.mxu0 0
  %2268 = vmatpush1.bf16.msra.mxu0 0
  %2269 = vmatprep.subr.bf16.mxu0 0
  %2270 = vmatpush1.bf16.msra.mxu0 0
  %2271 = vmatprep.subr.bf16.mxu0 0
  %2272 = vmatpush1.bf16.msra.mxu0 0
  %2273 = vmatprep.subr.bf16.mxu0 0
  %2274 = vmatpush1.bf16.msra.mxu0 0
  %2275 = vmatprep.subr.bf16.mxu0 0
  %2276 = vmatpush1.bf16.msra.mxu0 0
  %2277 = vmatprep.subr.bf16.mxu0 0
  %2278 = vmatpush1.bf16.msra.mxu0 0
  %2279 = vmatprep.subr.bf16.mxu0 0
  %2280 = vmatpush1.bf16.msra.mxu0 0
  %2281 = vmatprep.subr.bf16.mxu0 0
  %2282 = vmatpush1.bf16.msra.mxu0 0
  %2283 = vmatprep.mubr.bf16.mxu0 0
  %2284 = vmatmul.mubr.bf16.gmra.mrb[0].mxu0 %v1908
  %v2285 = vpop.f32.mrb[0].mxu0
  %v2286 = vadd.f32 %v2232, %v2285
  %v2287 = vpop.f32.mrb[0].mxu0
  %v2288 = vpop.f32.mrb[0].mxu0
  %v2289 = vadd.f32 %v2232, %v2288
  %v2290 = vpop.f32.mrb[0].mxu0
  %2291 = vdwg.mxu0
  %s2292 = scalar_lea.vmem %s53, 72
  %v2293 = vld [vmem:[%s2292] sm:$0xf]
  %v2294 = vld [vmem:[%s2292 + $0x4] sm:$0xf]
  %v2295 = vld [vmem:[%s2292 + $0x8] sm:$0xf]
  %v2296 = vld [vmem:[%s2292 + $0xc] sm:$0xf]
  %v2297 = vld [vmem:[%s2292 + $0x10] sm:$0xf]
  %v2298 = vld [vmem:[%s2292 + $0x14] sm:$0xf]
  %v2299 = vlaneseq
  %v2300 = vshrl.u32 %v2299, 7
  %v2301 = vsub.s32 1, %v2300
  %v2302 = vrot.slane %v2221, %v2301
  %v2309 = vunpack.c.l.b16 %v2293
  %v2310 = vunpack.c.l.b16 %v2294
  %v2311 = vunpack.c.l.b16 %v2295
  %v2312 = vunpack.c.l.b16 %v2296
  %v2313 = vunpack.c.l.b16 %v2297
  %v2314 = vunpack.c.l.b16 %v2298
  %v2315 = vpack.c.b16 %v2310, %v2309
  %v2316 = vpack.c.b16 %v2312, %v2311
  %v2317 = vpack.c.b16 %v2314, %v2313
  %2321 = vmatprep.subr.bf16.mxu0 0
  %2322 = vmatpush1.bf16.msra.mxu0 %v2315
  %2323 = vmatprep.subr.bf16.mxu0 0
  %2324 = vmatpush1.bf16.msra.mxu0 %v2316
  %2325 = vmatprep.subr.bf16.mxu0 0
  %2326 = vmatpush1.bf16.msra.mxu0 %v2317
  %2327 = vmatprep.subr.bf16.mxu0 0
  %2328 = vmatpush1.bf16.msra.mxu0 0
  %2329 = vmatprep.subr.bf16.mxu0 0
  %2330 = vmatpush1.bf16.msra.mxu0 0
  %2331 = vmatprep.subr.bf16.mxu0 0
  %2332 = vmatpush1.bf16.msra.mxu0 0
  %2333 = vmatprep.subr.bf16.mxu0 0
  %2334 = vmatpush1.bf16.msra.mxu0 0
  %2335 = vmatprep.subr.bf16.mxu0 0
  %2336 = vmatpush1.bf16.msra.mxu0 0
  %2337 = vmatprep.subr.bf16.mxu0 0
  %2338 = vmatpush1.bf16.msra.mxu0 0
  %2339 = vmatprep.subr.bf16.mxu0 0
  %2340 = vmatpush1.bf16.msra.mxu0 0
  %2341 = vmatprep.subr.bf16.mxu0 0
  %2342 = vmatpush1.bf16.msra.mxu0 0
  %2343 = vmatprep.subr.bf16.mxu0 0
  %2344 = vmatpush1.bf16.msra.mxu0 0
  %2345 = vmatprep.subr.bf16.mxu0 0
  %2346 = vmatpush1.bf16.msra.mxu0 0
  %2347 = vmatprep.subr.bf16.mxu0 0
  %2348 = vmatpush1.bf16.msra.mxu0 0
  %2349 = vmatprep.subr.bf16.mxu0 0
  %2350 = vmatpush1.bf16.msra.mxu0 0
  %2351 = vmatprep.subr.bf16.mxu0 0
  %2352 = vmatpush1.bf16.msra.mxu0 0
  %2353 = vmatprep.mubr.bf16.mxu0 0
  %2354 = vmatmul.mubr.bf16.gmra.mrb[0].mxu0 %v1908
  %v2355 = vpop.f32.mrb[0].mxu0
  %v2356 = vadd.f32 %v2302, %v2355
  %v2357 = vpop.f32.mrb[0].mxu0
  %v2358 = vpop.f32.mrb[0].mxu0
  %v2359 = vadd.f32 %v2302, %v2358
  %v2360 = vpop.f32.mrb[0].mxu0
  %2361 = vdwg.mxu0
  %s2362 = scalar_lea.vmem %s57, 72
  %v2363 = vld [vmem:[%s2362] sm:$0xf]
  %v2364 = vld [vmem:[%s2362 + $0x4] sm:$0xf]
  %v2365 = vld [vmem:[%s2362 + $0x8] sm:$0xf]
  %v2366 = vld [vmem:[%s2362 + $0xc] sm:$0xf]
  %v2367 = vld [vmem:[%s2362 + $0x10] sm:$0xf]
  %v2368 = vld [vmem:[%s2362 + $0x14] sm:$0xf]
  %v2369 = vlaneseq
  %v2370 = vshrl.u32 %v2369, 7
  %v2371 = vsub.s32 2, %v2370
  %v2372 = vrot.slane %v2221, %v2371
  %v2379 = vunpack.c.l.b16 %v2363
  %v2380 = vunpack.c.l.b16 %v2364
  %v2381 = vunpack.c.l.b16 %v2365
  %v2382 = vunpack.c.l.b16 %v2366
  %v2383 = vunpack.c.l.b16 %v2367
  %v2384 = vunpack.c.l.b16 %v2368
  %v2385 = vpack.c.b16 %v2380, %v2379
  %v2386 = vpack.c.b16 %v2382, %v2381
  %v2387 = vpack.c.b16 %v2384, %v2383
  %2391 = vmatprep.subr.bf16.mxu0 0
  %2392 = vmatpush1.bf16.msra.mxu0 %v2385
  %2393 = vmatprep.subr.bf16.mxu0 0
  %2394 = vmatpush1.bf16.msra.mxu0 %v2386
  %2395 = vmatprep.subr.bf16.mxu0 0
  %2396 = vmatpush1.bf16.msra.mxu0 %v2387
  %2397 = vmatprep.subr.bf16.mxu0 0
  %2398 = vmatpush1.bf16.msra.mxu0 0
  %2399 = vmatprep.subr.bf16.mxu0 0
  %2400 = vmatpush1.bf16.msra.mxu0 0
  %2401 = vmatprep.subr.bf16.mxu0 0
  %2402 = vmatpush1.bf16.msra.mxu0 0
  %2403 = vmatprep.subr.bf16.mxu0 0
  %2404 = vmatpush1.bf16.msra.mxu0 0
  %2405 = vmatprep.subr.bf16.mxu0 0
  %2406 = vmatpush1.bf16.msra.mxu0 0
  %2407 = vmatprep.subr.bf16.mxu0 0
  %2408 = vmatpush1.bf16.msra.mxu0 0
  %2409 = vmatprep.subr.bf16.mxu0 0
  %2410 = vmatpush1.bf16.msra.mxu0 0
  %2411 = vmatprep.subr.bf16.mxu0 0
  %2412 = vmatpush1.bf16.msra.mxu0 0
  %2413 = vmatprep.subr.bf16.mxu0 0
  %2414 = vmatpush1.bf16.msra.mxu0 0
  %2415 = vmatprep.subr.bf16.mxu0 0
  %2416 = vmatpush1.bf16.msra.mxu0 0
  %2417 = vmatprep.subr.bf16.mxu0 0
  %2418 = vmatpush1.bf16.msra.mxu0 0
  %2419 = vmatprep.subr.bf16.mxu0 0
  %2420 = vmatpush1.bf16.msra.mxu0 0
  %2421 = vmatprep.subr.bf16.mxu0 0
  %2422 = vmatpush1.bf16.msra.mxu0 0
  %2423 = vmatprep.mubr.bf16.mxu0 0
  %2424 = vmatmul.mubr.bf16.gmra.mrb[0].mxu0 %v1908
  %v2425 = vpop.f32.mrb[0].mxu0
  %v2426 = vadd.f32 %v2372, %v2425
  %v2427 = vpop.f32.mrb[0].mxu0
  %v2428 = vpop.f32.mrb[0].mxu0
  %v2429 = vadd.f32 %v2372, %v2428
  %v2430 = vpop.f32.mrb[0].mxu0
  %2431 = vdwg.mxu0
  %v2432 = vpack.c.bf16 %v2289, %v2286
  %v2433 = vpack.c.bf16 %v2359, %v2356
  %v2435 = vsel %vm924, %v2432, 0
  %v2438 = vsel %vm924, %v2433, 0
  %2440 = vmatprep.subr.bf16.mxu0 0
  %2441 = vmatpush1.bf16.xpose.msra.mxu0 %v2438
  %2442 = vmatprep.subr.bf16.mxu0 0
  %2443 = vmatpush1.bf16.xpose.msra.mxu0 0
  %2444 = vmatprep.subr.bf16.mxu0 0
  %2445 = vmatpush1.bf16.xpose.msra.mxu0 0
  %2446 = vmatprep.subr.bf16.mxu0 0
  %2447 = vmatpush1.bf16.xpose.msra.mxu0 0
  %2448 = vmatprep.subr.bf16.mxu0 0
  %2449 = vmatpush1.bf16.xpose.msra.mxu0 0
  %2450 = vmatprep.subr.bf16.mxu0 0
  %2451 = vmatpush1.bf16.xpose.msra.mxu0 0
  %2452 = vmatprep.subr.bf16.mxu0 0
  %2453 = vmatpush1.bf16.xpose.msra.mxu0 0
  %2454 = vmatprep.subr.bf16.mxu0 0
  %2455 = vmatpush1.bf16.xpose.msra.mxu0 0
  %2456 = vmatprep.subr.bf16.mxu0 0
  %2457 = vmatpush1.bf16.xpose.msra.mxu0 0
  %2458 = vmatprep.subr.bf16.mxu0 0
  %2459 = vmatpush1.bf16.xpose.msra.mxu0 0
  %2460 = vmatprep.subr.bf16.mxu0 0
  %2461 = vmatpush1.bf16.xpose.msra.mxu0 0
  %2462 = vmatprep.subr.bf16.mxu0 0
  %2463 = vmatpush1.bf16.xpose.msra.mxu0 0
  %2464 = vmatprep.subr.bf16.mxu0 0
  %2465 = vmatpush1.bf16.xpose.msra.mxu0 0
  %2466 = vmatprep.subr.bf16.mxu0 0
  %2467 = vmatpush1.bf16.xpose.msra.mxu0 0
  %2468 = vmatprep.subr.bf16.mxu0 0
  %2469 = vmatpush1.bf16.xpose.msra.mxu0 0
  %2470 = vmatprep.subr.bf16.mxu0 0
  %2471 = vmatpush1.bf16.xpose.msra.mxu0 0
  %2472 = vmatprep.mubr.bf16.mxu0 0
  %2473 = vmatmul.mubr.bf16.gmra.mrb[0].mxu0 %v2435
  %v2474 = vpop.f32.mrb[0].mxu0
  %v2475 = vadd.f32 0.0, %v2474
  %v2476 = vpop.f32.mrb[0].mxu0
  %v2477 = vpop.f32.mrb[0].mxu0
  %v2478 = vadd.f32 0.0, %v2477
  %v2479 = vpop.f32.mrb[0].mxu0
  %2480 = vdwg.mxu0
  %v2481 = vmul.f32 %v2475, 0.20412415
  %v2482 = vmul.f32 %v2478, 0.20412415
  %v2483 = vsel %vm182, %v2481, -1e+30
  %v2484 = vsel %vm183, %v2482, -1e+30
  %v2485 = vsel %vm976, %v2483, -inf
  %2486 = vmax.xlane.f32.xlu0 %v2485
  %v2487 = vpop.xlane.xlu0 %2486
  %v2488 = vsel %vm980, %v2484, -inf
  %2489 = vmax.xlane.f32.xlu0 %v2488
  %v2490 = vpop.xlane.xlu0 %2489
  %v2491 = vsub.f32 %v2483, %v2487
  %v2492 = vsub.f32 %v2484, %v2490
  %v2493 = vmul.f32 %v2491, 1.442695
  %v2494 = vpow.pop %v2493
  %v2495 = vmul.f32 %v2492, 1.442695
  %v2496 = vpow.pop %v2495
  %v2497 = vsel %vm976, %v2494, 0.0
  %2498 = vadd.xlane.f32.xlu0 %v2497
  %v2499 = vpop.xlane.xlu0 %2498
  %v2500 = vsel %vm980, %v2496, 0.0
  %2501 = vadd.xlane.f32.xlu0 %v2500
  %v2502 = vpop.xlane.xlu0 %2501
  %v2503 = vrcp.pop %v2499
  %v2504 = vmul.f32 %v2494, %v2503
  %v2505 = vrcp.pop %v2502
  %v2506 = vmul.f32 %v2496, %v2505
  %v2507 = vpack.c.bf16 %v2506, %v2504
  %v2508 = vpack.c.bf16 %v2429, %v2426
  %v2510 = vsel %vm976, %v2507, 0
  %v2513 = vsel %vm1005, %v2508, 0
  %2515 = vmatprep.subr.bf16.mxu0 0
  %2516 = vmatpush1.bf16.msra.mxu0 %v2513
  %2517 = vmatprep.subr.bf16.mxu0 0
  %2518 = vmatpush1.bf16.msra.mxu0 0
  %2519 = vmatprep.subr.bf16.mxu0 0
  %2520 = vmatpush1.bf16.msra.mxu0 0
  %2521 = vmatprep.subr.bf16.mxu0 0
  %2522 = vmatpush1.bf16.msra.mxu0 0
  %2523 = vmatprep.subr.bf16.mxu0 0
  %2524 = vmatpush1.bf16.msra.mxu0 0
  %2525 = vmatprep.subr.bf16.mxu0 0
  %2526 = vmatpush1.bf16.msra.mxu0 0
  %2527 = vmatprep.subr.bf16.mxu0 0
  %2528 = vmatpush1.bf16.msra.mxu0 0
  %2529 = vmatprep.subr.bf16.mxu0 0
  %2530 = vmatpush1.bf16.msra.mxu0 0
  %2531 = vmatprep.subr.bf16.mxu0 0
  %2532 = vmatpush1.bf16.msra.mxu0 0
  %2533 = vmatprep.subr.bf16.mxu0 0
  %2534 = vmatpush1.bf16.msra.mxu0 0
  %2535 = vmatprep.subr.bf16.mxu0 0
  %2536 = vmatpush1.bf16.msra.mxu0 0
  %2537 = vmatprep.subr.bf16.mxu0 0
  %2538 = vmatpush1.bf16.msra.mxu0 0
  %2539 = vmatprep.subr.bf16.mxu0 0
  %2540 = vmatpush1.bf16.msra.mxu0 0
  %2541 = vmatprep.subr.bf16.mxu0 0
  %2542 = vmatpush1.bf16.msra.mxu0 0
  %2543 = vmatprep.subr.bf16.mxu0 0
  %2544 = vmatpush1.bf16.msra.mxu0 0
  %2545 = vmatprep.subr.bf16.mxu0 0
  %2546 = vmatpush1.bf16.msra.mxu0 0
  %2547 = vmatprep.mubr.bf16.mxu0 0
  %2548 = vmatmul.mubr.bf16.gmra.mrb[0].mxu0 %v2510
  %v2549 = vpop.f32.mrb[0].mxu0
  %v2550 = vadd.f32 0.0, %v2549
  %v2551 = vpop.f32.mrb[0].mxu0
  %v2552 = vpop.f32.mrb[0].mxu0
  %v2553 = vadd.f32 0.0, %v2552
  %v2554 = vpop.f32.mrb[0].mxu0
  %2555 = vdwg.mxu0
  %v2556 = vpack.c.bf16 %v2553, %v2550
  %s2557 = scalar_lea.vmem %s49, 36
  %v2558 = vld [vmem:[%s2557] sm:$0xf]
  %v2559 = vld [vmem:[%s2557 + $0x4] sm:$0xf]
  %v2560 = vld [vmem:[%s2557 + $0x8] sm:$0xf]
  %v2564 = vunpack.c.l.b16 %v2558
  %v2565 = vunpack.c.l.b16 %v2559
  %v2566 = vunpack.c.l.b16 %v2560
  %v2567 = vpack.c.b16 %v2565, %v2564
  %v2568 = vpack.c.b16 %v2566, %v2566
  %v2571 = vsel %vm924, %v2556, 0
  %v2574 = vsel %vm1407, %v2568, 0
  %2576 = vmatprep.subr.bf16.mxu0 0
  %2577 = vmatpush1.bf16.msra.mxu0 %v2567
  %2578 = vmatprep.subr.bf16.mxu0 0
  %2579 = vmatpush1.bf16.msra.mxu0 %v2574
  %2580 = vmatprep.subr.bf16.mxu0 0
  %2581 = vmatpush1.bf16.msra.mxu0 0
  %2582 = vmatprep.subr.bf16.mxu0 0
  %2583 = vmatpush1.bf16.msra.mxu0 0
  %2584 = vmatprep.subr.bf16.mxu0 0
  %2585 = vmatpush1.bf16.msra.mxu0 0
  %2586 = vmatprep.subr.bf16.mxu0 0
  %2587 = vmatpush1.bf16.msra.mxu0 0
  %2588 = vmatprep.subr.bf16.mxu0 0
  %2589 = vmatpush1.bf16.msra.mxu0 0
  %2590 = vmatprep.subr.bf16.mxu0 0
  %2591 = vmatpush1.bf16.msra.mxu0 0
  %2592 = vmatprep.subr.bf16.mxu0 0
  %2593 = vmatpush1.bf16.msra.mxu0 0
  %2594 = vmatprep.subr.bf16.mxu0 0
  %2595 = vmatpush1.bf16.msra.mxu0 0
  %2596 = vmatprep.subr.bf16.mxu0 0
  %2597 = vmatpush1.bf16.msra.mxu0 0
  %2598 = vmatprep.subr.bf16.mxu0 0
  %2599 = vmatpush1.bf16.msra.mxu0 0
  %2600 = vmatprep.subr.bf16.mxu0 0
  %2601 = vmatpush1.bf16.msra.mxu0 0
  %2602 = vmatprep.subr.bf16.mxu0 0
  %2603 = vmatpush1.bf16.msra.mxu0 0
  %2604 = vmatprep.subr.bf16.mxu0 0
  %2605 = vmatpush1.bf16.msra.mxu0 0
  %2606 = vmatprep.subr.bf16.mxu0 0
  %2607 = vmatpush1.bf16.msra.mxu0 0
  %2608 = vmatprep.mubr.bf16.mxu0 0
  %2609 = vmatmul.mubr.bf16.gmra.mrb[0].mxu0 %v2571
  %v2610 = vpop.f32.mrb[0].mxu0
  %v2611 = vadd.f32 0.0, %v2610
  %v2612 = vpop.f32.mrb[0].mxu0
  %v2613 = vpop.f32.mrb[0].mxu0
  %v2614 = vadd.f32 0.0, %v2613
  %v2615 = vpop.f32.mrb[0].mxu0
  %2616 = vdwg.mxu0
  %v2620 = vunpack.c.l.b16 %v2217
  %v2621 = vunpack.c.l.b16 %v2218
  %v2622 = vunpack.c.l.b16 %v2219
  %v2623 = vpack.c.b16 %v2621, %v2620
  %v2624 = vpack.c.b16 %v2622, %v2622
  %v2627 = vsel %vm924, %v2215, 0
  %v2630 = vsel %vm1407, %v2624, 0
  %2632 = vmatprep.subr.bf16.mxu0 0
  %2633 = vmatpush1.bf16.msra.mxu0 %v2623
  %2634 = vmatprep.subr.bf16.mxu0 0
  %2635 = vmatpush1.bf16.msra.mxu0 %v2630
  %2636 = vmatprep.subr.bf16.mxu0 0
  %2637 = vmatpush1.bf16.msra.mxu0 0
  %2638 = vmatprep.subr.bf16.mxu0 0
  %2639 = vmatpush1.bf16.msra.mxu0 0
  %2640 = vmatprep.subr.bf16.mxu0 0
  %2641 = vmatpush1.bf16.msra.mxu0 0
  %2642 = vmatprep.subr.bf16.mxu0 0
  %2643 = vmatpush1.bf16.msra.mxu0 0
  %2644 = vmatprep.subr.bf16.mxu0 0
  %2645 = vmatpush1.bf16.msra.mxu0 0
  %2646 = vmatprep.subr.bf16.mxu0 0
  %2647 = vmatpush1.bf16.msra.mxu0 0
  %2648 = vmatprep.subr.bf16.mxu0 0
  %2649 = vmatpush1.bf16.msra.mxu0 0
  %2650 = vmatprep.subr.bf16.mxu0 0
  %2651 = vmatpush1.bf16.msra.mxu0 0
  %2652 = vmatprep.subr.bf16.mxu0 0
  %2653 = vmatpush1.bf16.msra.mxu0 0
  %2654 = vmatprep.subr.bf16.mxu0 0
  %2655 = vmatpush1.bf16.msra.mxu0 0
  %2656 = vmatprep.subr.bf16.mxu0 0
  %2657 = vmatpush1.bf16.msra.mxu0 0
  %2658 = vmatprep.subr.bf16.mxu0 0
  %2659 = vmatpush1.bf16.msra.mxu0 0
  %2660 = vmatprep.subr.bf16.mxu0 0
  %2661 = vmatpush1.bf16.msra.mxu0 0
  %2662 = vmatprep.subr.bf16.mxu0 0
  %2663 = vmatpush1.bf16.msra.mxu0 0
  %2664 = vmatprep.mubr.bf16.mxu0 0
  %2665 = vmatmul.mubr.bf16.gmra.mrb[0].mxu0 %v2627
  %v2666 = vpop.f32.mrb[0].mxu0
  %v2667 = vadd.f32 %v2611, %v2666
  %v2668 = vpop.f32.mrb[0].mxu0
  %v2669 = vpop.f32.mrb[0].mxu0
  %v2670 = vadd.f32 %v2614, %v2669
  %v2671 = vpop.f32.mrb[0].mxu0
  %2672 = vdwg.mxu0
  %v2673 = vadd.f32 %v1831, %v2667
  %v2674 = vadd.f32 %v1832, %v2670
  %v2675 = vlaneseq
  %v2676 = vshrl.u32 %v2675, 7
  %v2677 = vsub.s32 0, %v2676
  %v2678 = vrot.slane %v1836, %v2677
  %v2679 = vadd.f32 %v2673, %v2678
  %v2680 = vadd.f32 %v2674, %v2678
  %v2681 = vsel %vm277, %v2679, 0.0
  %2682 = vadd.xlane.f32.xlu0 %v2681
  %v2683 = vpop.xlane.xlu0 %2682
  %v2684 = vsel %vm281, %v2680, 0.0
  %2685 = vadd.xlane.f32.xlu0 %v2684
  %v2686 = vpop.xlane.xlu0 %2685
  %v2687 = vmul.f32 %v2683, %v285
  %v2688 = vmul.f32 %v2686, %v285
  %v2689 = vsub.f32 %v2679, %v2687
  %v2690 = vsub.f32 %v2680, %v2688
  %v2691 = vmul.f32 %v2689, %v2689
  %v2692 = vmul.f32 %v2690, %v2690
  %v2693 = vsel %vm277, %v2691, 0.0
  %2694 = vadd.xlane.f32.xlu0 %v2693
  %v2695 = vpop.xlane.xlu0 %2694
  %v2696 = vsel %vm281, %v2692, 0.0
  %2697 = vadd.xlane.f32.xlu0 %v2696
  %v2698 = vpop.xlane.xlu0 %2697
  %v2699 = vmul.f32 %v2695, %v285
  %v2700 = vmul.f32 %v2698, %v285
  %v2701 = vadd.f32 %v2699, 1e-05
  %v2702 = vadd.f32 %v2700, 1e-05
  %v2703 = vrsqrt.pop %v2701
  %v2704 = vrsqrt.pop %v2702
  %v2705 = vmul.f32 %v2689, %v2703
  %v2706 = vmul.f32 %v2690, %v2704
  %v2707 = vlaneseq
  %v2708 = vshrl.u32 %v2707, 7
  %v2709 = vsub.s32 2, %v2708
  %v2710 = vrot.slane %v1834, %v2709
  %v2711 = vmul.f32 %v2705, %v2710
  %v2712 = vmul.f32 %v2706, %v2710
  %v2713 = vlaneseq
  %v2714 = vshrl.u32 %v2713, 7
  %v2715 = vsub.s32 3, %v2714
  %v2716 = vrot.slane %v1834, %v2715
  %v2717 = vadd.f32 %v2711, %v2716
  %v2718 = vadd.f32 %v2712, %v2716
  %v2719 = vpack.c.bf16 %v2718, %v2717
  %s2720 = scalar_lea.vmem %s45, 48
  %v2721 = vld [vmem:[%s2720] sm:$0xff]
  %v2722 = vld [vmem:[%s2720 + $0x8] sm:$0xff]
  %v2723 = vld [vmem:[%s2720 + $0x10] sm:$0xff]
  %v2724 = vld [vmem:[%s2720 + $0x18] sm:$0xff]
  %v2725 = vld [vmem:[%s2720 + $0x20] sm:$0xff]
  %v2726 = vld [vmem:[%s2720 + $0x28] sm:$0xff]
  %s2727 = scalar_lea.vmem %s43, 2
  %v2728 = vld [vmem:[%s2727] sm:$0x3]
  %v2730 = vlaneseq
  %v2731 = vshrl.u32 %v2730, 7
  %v2732 = vsub.s32 0, %v2731
  %v2733 = vrot.slane %v2728, %v2732
  %v2734 = vlaneseq
  %v2735 = vshrl.u32 %v2734, 7
  %v2736 = vsub.s32 1, %v2735
  %v2737 = vrot.slane %v2728, %v2736
  %v2746 = vunpack.c.l.b16 %v2721
  %v2747 = vunpack.c.h.b16 %v2721
  %v2748 = vunpack.c.l.b16 %v2722
  %v2749 = vunpack.c.h.b16 %v2722
  %v2750 = vunpack.c.l.b16 %v2723
  %v2751 = vunpack.c.h.b16 %v2723
  %v2752 = vunpack.c.l.b16 %v2724
  %v2753 = vunpack.c.h.b16 %v2724
  %v2754 = vunpack.c.l.b16 %v2725
  %v2755 = vunpack.c.h.b16 %v2725
  %v2756 = vunpack.c.l.b16 %v2726
  %v2757 = vunpack.c.h.b16 %v2726
  %v2758 = vpack.c.b16 %v2748, %v2746
  %v2759 = vpack.c.b16 %v2749, %v2747
  %v2760 = vpack.c.b16 %v2752, %v2750
  %v2761 = vpack.c.b16 %v2753, %v2751
  %v2762 = vpack.c.b16 %v2756, %v2754
  %v2763 = vpack.c.b16 %v2757, %v2755
  %v2771 = vsel %vm277, %v2719, 0
  %2773 = vmatprep.subr.bf16.mxu0 %v2759
  %2774 = vmatpush1.bf16.msra.mxu0 %v2758
  %2775 = vmatprep.subr.bf16.mxu0 %v2761
  %2776 = vmatpush1.bf16.msra.mxu0 %v2760
  %2777 = vmatprep.subr.bf16.mxu0 %v2763
  %2778 = vmatpush1.bf16.msra.mxu0 %v2762
  %2779 = vmatprep.subr.bf16.mxu0 0
  %2780 = vmatpush1.bf16.msra.mxu0 0
  %2781 = vmatprep.subr.bf16.mxu0 0
  %2782 = vmatpush1.bf16.msra.mxu0 0
  %2783 = vmatprep.subr.bf16.mxu0 0
  %2784 = vmatpush1.bf16.msra.mxu0 0
  %2785 = vmatprep.subr.bf16.mxu0 0
  %2786 = vmatpush1.bf16.msra.mxu0 0
  %2787 = vmatprep.subr.bf16.mxu0 0
  %2788 = vmatpush1.bf16.msra.mxu0 0
  %2789 = vmatprep.subr.bf16.mxu0 0
  %2790 = vmatpush1.bf16.msra.mxu0 0
  %2791 = vmatprep.subr.bf16.mxu0 0
  %2792 = vmatpush1.bf16.msra.mxu0 0
  %2793 = vmatprep.subr.bf16.mxu0 0
  %2794 = vmatpush1.bf16.msra.mxu0 0
  %2795 = vmatprep.subr.bf16.mxu0 0
  %2796 = vmatpush1.bf16.msra.mxu0 0
  %2797 = vmatprep.subr.bf16.mxu0 0
  %2798 = vmatpush1.bf16.msra.mxu0 0
  %2799 = vmatprep.subr.bf16.mxu0 0
  %2800 = vmatpush1.bf16.msra.mxu0 0
  %2801 = vmatprep.subr.bf16.mxu0 0
  %2802 = vmatpush1.bf16.msra.mxu0 0
  %2803 = vmatprep.subr.bf16.mxu0 0
  %2804 = vmatpush1.bf16.msra.mxu0 0
  %2805 = vmatprep.mubr.bf16.mxu0 0
  %2806 = vmatmul.mubr.bf16.gmra.mrb[0].mxu0 %v2771
  %v2807 = vpop.f32.mrb[0].mxu0
  %v2808 = vadd.f32 %v2733, %v2807
  %v2809 = vpop.f32.mrb[0].mxu0
  %v2810 = vadd.f32 %v2737, %v2809
  %v2811 = vpop.f32.mrb[0].mxu0
  %v2812 = vadd.f32 %v2733, %v2811
  %v2813 = vpop.f32.mrb[0].mxu0
  %v2814 = vadd.f32 %v2737, %v2813
  %2815 = vdwg.mxu0
  %v2816 = vmul.f32 %v2808, %v2808
  %v2817 = vmul.f32 %v2810, %v2810
  %v2818 = vmul.f32 %v2812, %v2812
  %v2819 = vmul.f32 %v2814, %v2814
  %v2820 = vmul.f32 %v2808, %v2816
  %v2821 = vmul.f32 %v2810, %v2817
  %v2822 = vmul.f32 %v2812, %v2818
  %v2823 = vmul.f32 %v2814, %v2819
  %v2824 = vmul.f32 %v2820, 0.044715
  %v2825 = vmul.f32 %v2821, 0.044715
  %v2826 = vmul.f32 %v2822, 0.044715
  %v2827 = vmul.f32 %v2823, 0.044715
  %v2828 = vadd.f32 %v2808, %v2824
  %v2829 = vadd.f32 %v2810, %v2825
  %v2830 = vadd.f32 %v2812, %v2826
  %v2831 = vadd.f32 %v2814, %v2827
  %v2832 = vmul.f32 %v2828, 0.7978846
  %v2833 = vmul.f32 %v2829, 0.7978846
  %v2834 = vmul.f32 %v2830, 0.7978846
  %v2835 = vmul.f32 %v2831, 0.7978846
  %v2836 = vtanh.pop %v2832
  %v2837 = vtanh.pop %v2833
  %v2838 = vtanh.pop %v2834
  %v2839 = vtanh.pop %v2835
  %v2840 = vadd.f32 %v2836, 1.0
  %v2841 = vadd.f32 %v2837, 1.0
  %v2842 = vadd.f32 %v2838, 1.0
  %v2843 = vadd.f32 %v2839, 1.0
  %v2844 = vmul.f32 %v2840, 0.5
  %v2845 = vmul.f32 %v2841, 0.5
  %v2846 = vmul.f32 %v2842, 0.5
  %v2847 = vmul.f32 %v2843, 0.5
  %v2848 = vmul.f32 %v2808, %v2844
  %v2849 = vmul.f32 %v2810, %v2845
  %v2850 = vmul.f32 %v2812, %v2846
  %v2851 = vmul.f32 %v2814, %v2847
  %v2852 = vpack.c.bf16 %v2850, %v2848
  %v2853 = vpack.c.bf16 %v2851, %v2849
  %s2854 = scalar_lea.vmem %s47, 96
  %v2855 = vld [vmem:[%s2854] sm:$0xf]
  %v2856 = vld [vmem:[%s2854 + $0x4] sm:$0xf]
  %v2857 = vld [vmem:[%s2854 + $0x8] sm:$0xf]
  %v2858 = vld [vmem:[%s2854 + $0xc] sm:$0xf]
  %v2859 = vld [vmem:[%s2854 + $0x10] sm:$0xf]
  %v2860 = vld [vmem:[%s2854 + $0x14] sm:$0xf]
  %v2861 = vld [vmem:[%s2854 + $0x18] sm:$0xf]
  %v2862 = vld [vmem:[%s2854 + $0x1c] sm:$0xf]
  %v2863 = vld [vmem:[%s2854 + $0x20] sm:$0xf]
  %v2864 = vld [vmem:[%s2854 + $0x24] sm:$0xf]
  %v2865 = vld [vmem:[%s2854 + $0x28] sm:$0xf]
  %v2866 = vld [vmem:[%s2854 + $0x2c] sm:$0xf]
  %v2867 = vld [vmem:[%s2854 + $0x30] sm:$0xf]
  %v2868 = vld [vmem:[%s2854 + $0x34] sm:$0xf]
  %v2869 = vld [vmem:[%s2854 + $0x38] sm:$0xf]
  %v2870 = vld [vmem:[%s2854 + $0x3c] sm:$0xf]
  %v2871 = vld [vmem:[%s2854 + $0x40] sm:$0xf]
  %v2872 = vld [vmem:[%s2854 + $0x44] sm:$0xf]
  %v2873 = vld [vmem:[%s2854 + $0x48] sm:$0xf]
  %v2874 = vld [vmem:[%s2854 + $0x4c] sm:$0xf]
  %v2875 = vld [vmem:[%s2854 + $0x50] sm:$0xf]
  %v2876 = vld [vmem:[%s2854 + $0x54] sm:$0xf]
  %v2877 = vld [vmem:[%s2854 + $0x58] sm:$0xf]
  %v2878 = vld [vmem:[%s2854 + $0x5c] sm:$0xf]
  %v2879 = vlaneseq
  %v2880 = vshrl.u32 %v2879, 7
  %v2881 = vsub.s32 1, %v2880
  %v2882 = vrot.slane %v1836, %v2881
  %v2907 = vunpack.c.l.b16 %v2855
  %v2908 = vunpack.c.l.b16 %v2856
  %v2909 = vunpack.c.l.b16 %v2857
  %v2910 = vunpack.c.l.b16 %v2858
  %v2911 = vunpack.c.l.b16 %v2859
  %v2912 = vunpack.c.l.b16 %v2860
  %v2913 = vunpack.c.l.b16 %v2861
  %v2914 = vunpack.c.l.b16 %v2862
  %v2915 = vunpack.c.l.b16 %v2863
  %v2916 = vunpack.c.l.b16 %v2864
  %v2917 = vunpack.c.l.b16 %v2865
  %v2918 = vunpack.c.l.b16 %v2866
  %v2919 = vunpack.c.l.b16 %v2867
  %v2920 = vunpack.c.l.b16 %v2868
  %v2921 = vunpack.c.l.b16 %v2869
  %v2922 = vunpack.c.l.b16 %v2870
  %v2923 = vunpack.c.l.b16 %v2871
  %v2924 = vunpack.c.l.b16 %v2872
  %v2925 = vunpack.c.l.b16 %v2873
  %v2926 = vunpack.c.l.b16 %v2874
  %v2927 = vunpack.c.l.b16 %v2875
  %v2928 = vunpack.c.l.b16 %v2876
  %v2929 = vunpack.c.l.b16 %v2877
  %v2930 = vunpack.c.l.b16 %v2878
  %v2931 = vpack.c.b16 %v2908, %v2907
  %v2932 = vpack.c.b16 %v2910, %v2909
  %v2933 = vpack.c.b16 %v2912, %v2911
  %v2934 = vpack.c.b16 %v2914, %v2913
  %v2935 = vpack.c.b16 %v2916, %v2915
  %v2936 = vpack.c.b16 %v2918, %v2917
  %v2937 = vpack.c.b16 %v2920, %v2919
  %v2938 = vpack.c.b16 %v2922, %v2921
  %v2939 = vpack.c.b16 %v2924, %v2923
  %v2940 = vpack.c.b16 %v2926, %v2925
  %v2941 = vpack.c.b16 %v2928, %v2927
  %v2942 = vpack.c.b16 %v2930, %v2929
  %v2956 = vsel %vm232, %v2853, 0
  %2958 = vmatprep.subr.bf16.mxu0 0
  %2959 = vmatpush1.bf16.msra.mxu0 %v2931
  %2960 = vmatprep.subr.bf16.mxu0 0
  %2961 = vmatpush1.bf16.msra.mxu0 %v2932
  %2962 = vmatprep.subr.bf16.mxu0 0
  %2963 = vmatpush1.bf16.msra.mxu0 %v2933
  %2964 = vmatprep.subr.bf16.mxu0 0
  %2965 = vmatpush1.bf16.msra.mxu0 %v2934
  %2966 = vmatprep.subr.bf16.mxu0 0
  %2967 = vmatpush1.bf16.msra.mxu0 %v2935
  %2968 = vmatprep.subr.bf16.mxu0 0
  %2969 = vmatpush1.bf16.msra.mxu0 %v2936
  %2970 = vmatprep.subr.bf16.mxu0 0
  %2971 = vmatpush1.bf16.msra.mxu0 %v2937
  %2972 = vmatprep.subr.bf16.mxu0 0
  %2973 = vmatpush1.bf16.msra.mxu0 %v2938
  %2974 = vmatprep.subr.bf16.mxu0 0
  %2975 = vmatpush1.bf16.msra.mxu0 %v2939
  %2976 = vmatprep.subr.bf16.mxu0 0
  %2977 = vmatpush1.bf16.msra.mxu0 %v2940
  %2978 = vmatprep.subr.bf16.mxu0 0
  %2979 = vmatpush1.bf16.msra.mxu0 %v2941
  %2980 = vmatprep.subr.bf16.mxu0 0
  %2981 = vmatpush1.bf16.msra.mxu0 %v2942
  %2982 = vmatprep.subr.bf16.mxu0 0
  %2983 = vmatpush1.bf16.msra.mxu0 0
  %2984 = vmatprep.subr.bf16.mxu0 0
  %2985 = vmatpush1.bf16.msra.mxu0 0
  %2986 = vmatprep.subr.bf16.mxu0 0
  %2987 = vmatpush1.bf16.msra.mxu0 0
  %2988 = vmatprep.subr.bf16.mxu0 0
  %2989 = vmatpush1.bf16.msra.mxu0 0
  %2990 = vmatprep.mubr.bf16.mxu0 %v2956
  %2991 = vmatmul.mubr.bf16.gmra.mrb[0].mxu0 %v2852
  %v2992 = vpop.f32.mrb[0].mxu0
  %v2993 = vadd.f32 %v2882, %v2992
  %v2994 = vpop.f32.mrb[0].mxu0
  %v2995 = vpop.f32.mrb[0].mxu0
  %v2996 = vadd.f32 %v2882, %v2995
  %v2997 = vpop.f32.mrb[0].mxu0
  %2998 = vdwg.mxu0
  %v2999 = vadd.f32 %v2679, %v2993
  %v3000 = vadd.f32 %v2680, %v2996
  %v3001 = vsel %vm277, %v2999, 0.0
  %3002 = vadd.xlane.f32.xlu0 %v3001
  %v3003 = vpop.xlane.xlu0 %3002
  %v3004 = vsel %vm281, %v3000, 0.0
  %3005 = vadd.xlane.f32.xlu0 %v3004
  %v3006 = vpop.xlane.xlu0 %3005
  %v3007 = vmul.f32 %v3003, %v285
  %v3008 = vmul.f32 %v3006, %v285
  %v3009 = vsub.f32 %v2999, %v3007
  %v3010 = vsub.f32 %v3000, %v3008
  %v3011 = vmul.f32 %v3009, %v3009
  %v3012 = vmul.f32 %v3010, %v3010
  %v3013 = vsel %vm277, %v3011, 0.0
  %3014 = vadd.xlane.f32.xlu0 %v3013
  %v3015 = vpop.xlane.xlu0 %3014
  %v3016 = vsel %vm281, %v3012, 0.0
  %3017 = vadd.xlane.f32.xlu0 %v3016
  %v3018 = vpop.xlane.xlu0 %3017
  %v3019 = vmul.f32 %v3015, %v285
  %v3020 = vmul.f32 %v3018, %v285
  %v3021 = vadd.f32 %v3019, 1e-05
  %v3022 = vadd.f32 %v3020, 1e-05
  %v3023 = vrsqrt.pop %v3021
  %v3024 = vrsqrt.pop %v3022
  %v3025 = vmul.f32 %v3009, %v3023
  %v3026 = vmul.f32 %v3010, %v3024
  %v3027 = vlaneseq
  %v3028 = vshrl.u32 %v3027, 7
  %v3029 = vsub.s32 4, %v3028
  %v3030 = vrot.slane %v195, %v3029
  %v3031 = vmul.f32 %v3025, %v3030
  %v3032 = vmul.f32 %v3026, %v3030
  %v3033 = vlaneseq
  %v3034 = vshrl.u32 %v3033, 7
  %v3035 = vsub.s32 5, %v3034
  %v3036 = vrot.slane %v195, %v3035
  %v3037 = vadd.f32 %v3031, %v3036
  %v3038 = vadd.f32 %v3032, %v3036
  %v3039 = vpack.c.bf16 %v3038, %v3037
  %v3040 = vld [vmem:[%s15] sm:$0xf]
  %v3041 = vld [vmem:[%s15 + $0x4] sm:$0xf]
  %v3042 = vld [vmem:[%s15 + $0x8] sm:$0xf]
  %v3043 = vld [vmem:[%s15 + $0xc] sm:$0xf]
  %v3044 = vld [vmem:[%s15 + $0x10] sm:$0xf]
  %v3045 = vld [vmem:[%s15 + $0x14] sm:$0xf]
  %v3046 = vld [vmem:[%s13] sm:$0xf]
  %v3047 = vld [vmem:[%s13 + $0x4] sm:$0xf]
  %v3048 = vld [vmem:[%s13 + $0x8] sm:$0xf]
  %v3049 = vld [vmem:[%s13 + $0xc] sm:$0xf]
  %v3050 = vld [vmem:[%s13 + $0x10] sm:$0xf]
  %v3051 = vld [vmem:[%s13 + $0x14] sm:$0xf]
  %v3052 = vld [vmem:[%s13 + $0x18] sm:$0xf]
  %v3053 = vld [vmem:[%s13 + $0x1c] sm:$0xf]
  %v3062 = vunpack.c.l.b16 %v3046
  %v3063 = vunpack.c.l.b16 %v3047
  %v3064 = vunpack.c.l.b16 %v3048
  %v3065 = vunpack.c.l.b16 %v3049
  %v3066 = vunpack.c.l.b16 %v3050
  %v3067 = vunpack.c.l.b16 %v3051
  %v3068 = vunpack.c.l.b16 %v3052
  %v3069 = vunpack.c.l.b16 %v3053
  %v3070 = vpack.c.b16 %v3063, %v3062
  %v3071 = vpack.c.b16 %v3065, %v3064
  %v3072 = vpack.c.b16 %v3067, %v3066
  %v3073 = vpack.c.b16 %v3069, %v3068
  %3078 = vmatprep.subr.bf16.mxu0 0
  %3079 = vmatpush1.bf16.msra.mxu0 %v3070
  %3080 = vmatprep.subr.bf16.mxu0 0
  %3081 = vmatpush1.bf16.msra.mxu0 %v3071
  %3082 = vmatprep.subr.bf16.mxu0 0
  %3083 = vmatpush1.bf16.msra.mxu0 %v3072
  %3084 = vmatprep.subr.bf16.mxu0 0
  %3085 = vmatpush1.bf16.msra.mxu0 %v3073
  %3086 = vmatprep.subr.bf16.mxu0 0
  %3087 = vmatpush1.bf16.msra.mxu0 0
  %3088 = vmatprep.subr.bf16.mxu0 0
  %3089 = vmatpush1.bf16.msra.mxu0 0
  %3090 = vmatprep.subr.bf16.mxu0 0
  %3091 = vmatpush1.bf16.msra.mxu0 0
  %3092 = vmatprep.subr.bf16.mxu0 0
  %3093 = vmatpush1.bf16.msra.mxu0 0
  %3094 = vmatprep.subr.bf16.mxu0 0
  %3095 = vmatpush1.bf16.msra.mxu0 0
  %3096 = vmatprep.subr.bf16.mxu0 0
  %3097 = vmatpush1.bf16.msra.mxu0 0
  %3098 = vmatprep.subr.bf16.mxu0 0
  %3099 = vmatpush1.bf16.msra.mxu0 0
  %3100 = vmatprep.subr.bf16.mxu0 0
  %3101 = vmatpush1.bf16.msra.mxu0 0
  %3102 = vmatprep.subr.bf16.mxu0 0
  %3103 = vmatpush1.bf16.msra.mxu0 0
  %3104 = vmatprep.subr.bf16.mxu0 0
  %3105 = vmatpush1.bf16.msra.mxu0 0
  %3106 = vmatprep.subr.bf16.mxu0 0
  %3107 = vmatpush1.bf16.msra.mxu0 0
  %3108 = vmatprep.subr.bf16.mxu0 0
  %3109 = vmatpush1.bf16.msra.mxu0 0
  %3110 = vmatprep.mubr.bf16.mxu0 0
  %3111 = vmatmul.mubr.bf16.gmra.mrb[0].mxu0 %v234
  %v3112 = vpop.f32.mrb[0].mxu0
  %v3113 = vadd.f32 0.0, %v3112
  %v3114 = vpop.f32.mrb[0].mxu0
  %v3115 = vpop.f32.mrb[0].mxu0
  %v3116 = vadd.f32 0.0, %v3115
  %v3117 = vpop.f32.mrb[0].mxu0
  %3118 = vdwg.mxu0
  %v3125 = vunpack.c.l.b16 %v3040
  %v3126 = vunpack.c.l.b16 %v3041
  %v3127 = vunpack.c.l.b16 %v3042
  %v3128 = vunpack.c.l.b16 %v3043
  %v3129 = vunpack.c.l.b16 %v3044
  %v3130 = vunpack.c.l.b16 %v3045
  %v3131 = vpack.c.b16 %v3126, %v3125
  %v3132 = vpack.c.b16 %v3128, %v3127
  %v3133 = vpack.c.b16 %v3130, %v3129
  %v3138 = vsel %vm277, %v3039, 0
  %3140 = vmatprep.subr.bf16.mxu0 0
  %3141 = vmatpush1.bf16.msra.mxu0 %v3131
  %3142 = vmatprep.subr.bf16.mxu0 0
  %3143 = vmatpush1.bf16.msra.mxu0 %v3132
  %3144 = vmatprep.subr.bf16.mxu0 0
  %3145 = vmatpush1.bf16.msra.mxu0 %v3133
  %3146 = vmatprep.subr.bf16.mxu0 0
  %3147 = vmatpush1.bf16.msra.mxu0 0
  %3148 = vmatprep.subr.bf16.mxu0 0
  %3149 = vmatpush1.bf16.msra.mxu0 0
  %3150 = vmatprep.subr.bf16.mxu0 0
  %3151 = vmatpush1.bf16.msra.mxu0 0
  %3152 = vmatprep.subr.bf16.mxu0 0
  %3153 = vmatpush1.bf16.msra.mxu0 0
  %3154 = vmatprep.subr.bf16.mxu0 0
  %3155 = vmatpush1.bf16.msra.mxu0 0
  %3156 = vmatprep.subr.bf16.mxu0 0
  %3157 = vmatpush1.bf16.msra.mxu0 0
  %3158 = vmatprep.subr.bf16.mxu0 0
  %3159 = vmatpush1.bf16.msra.mxu0 0
  %3160 = vmatprep.subr.bf16.mxu0 0
  %3161 = vmatpush1.bf16.msra.mxu0 0
  %3162 = vmatprep.subr.bf16.mxu0 0
  %3163 = vmatpush1.bf16.msra.mxu0 0
  %3164 = vmatprep.subr.bf16.mxu0 0
  %3165 = vmatpush1.bf16.msra.mxu0 0
  %3166 = vmatprep.subr.bf16.mxu0 0
  %3167 = vmatpush1.bf16.msra.mxu0 0
  %3168 = vmatprep.subr.bf16.mxu0 0
  %3169 = vmatpush1.bf16.msra.mxu0 0
  %3170 = vmatprep.subr.bf16.mxu0 0
  %3171 = vmatpush1.bf16.msra.mxu0 0
  %3172 = vmatprep.mubr.bf16.mxu0 0
  %3173 = vmatmul.mubr.bf16.gmra.mrb[0].mxu0 %v3138
  %v3174 = vpop.f32.mrb[0].mxu0
  %v3175 = vadd.f32 %v3113, %v3174
  %v3176 = vpop.f32.mrb[0].mxu0
  %v3177 = vpop.f32.mrb[0].mxu0
  %v3178 = vadd.f32 %v3116, %v3177
  %v3179 = vpop.f32.mrb[0].mxu0
  %3180 = vdwg.mxu0
  %v3181 = vld [vmem:[%s11] sm:$0x1]
  %v3183 = vlaneseq
  %v3184 = vshrl.u32 %v3183, 7
  %v3185 = vsub.s32 0, %v3184
  %v3186 = vrot.slane %v3181, %v3185
  %v3188 = vadd.f32 %v3175, %v3186
  %v3189 = vadd.f32 %v3178, %v3186
  %v3190 = vld [vmem:[%s7] sm:$0xff]
  %v3192 = vrot.slane %v3190, 4
  %v3194 = vsel %vm1407, %v3189, %v3192
  %v3195 = vld [vmem:[%s9] sm:$0xff]
  %v3196 = vld [vmem:[%s9 + $0x8] sm:$0xff]
  %v3197 = vld [vmem:[%s9 + $0x10] sm:$0xf]
  %v3198 = vpack.c.bf16 %v3196, %v3195
  %v3199 = vpack.c.bf16 %v3197, %v3197
  %v3200 = vld [vmem:[%s19] sm:$0xf]
  %v3201 = vld [vmem:[%s17] sm:$0x3]
  %v3202 = vsel %vm232, %v3188, 0.0
  %3203 = vadd.xlane.f32.xlu0 %v3202
  %v3204 = vpop.xlane.xlu0 %3203
  %v3205 = vsel %vm232, %v3194, 0.0
  %3206 = vadd.xlane.f32.xlu0 %v3205
  %v3207 = vpop.xlane.xlu0 %3206
  %vm3208 = vcmask 519168
  %v3209 = vsel %vm3208, %v3192, 0.0
  %3210 = vadd.xlane.f32.xlu0 %v3209
  %v3211 = vpop.xlane.xlu0 %3210
  %v3212 = vrcp.pop 64.0
  %v3213 = vmul.f32 %v3204, %v3212
  %v3214 = vmul.f32 %v3207, %v3212
  %v3215 = vmul.f32 %v3211, %v3212
  %v3216 = vsub.f32 %v3188, %v3213
  %v3217 = vsub.f32 %v3194, %v3214
  %v3218 = vsub.f32 %v3192, %v3215
  %v3219 = vmul.f32 %v3216, %v3216
  %v3220 = vmul.f32 %v3217, %v3217
  %v3221 = vmul.f32 %v3218, %v3218
  %v3222 = vsel %vm232, %v3219, 0.0
  %3223 = vadd.xlane.f32.xlu0 %v3222
  %v3224 = vpop.xlane.xlu0 %3223
  %v3225 = vsel %vm232, %v3220, 0.0
  %3226 = vadd.xlane.f32.xlu0 %v3225
  %v3227 = vpop.xlane.xlu0 %3226
  %v3228 = vsel %vm3208, %v3221, 0.0
  %3229 = vadd.xlane.f32.xlu0 %v3228
  %v3230 = vpop.xlane.xlu0 %3229
  %v3231 = vmul.f32 %v3224, %v3212
  %v3232 = vmul.f32 %v3227, %v3212
  %v3233 = vmul.f32 %v3230, %v3212
  %v3234 = vadd.f32 %v3231, 1e-05
  %v3235 = vadd.f32 %v3232, 1e-05
  %v3236 = vadd.f32 %v3233, 1e-05
  %v3237 = vrsqrt.pop %v3234
  %v3238 = vrsqrt.pop %v3235
  %v3239 = vrsqrt.pop %v3236
  %v3240 = vmul.f32 %v3216, %v3237
  %v3241 = vmul.f32 %v3217, %v3238
  %v3242 = vmul.f32 %v3218, %v3239
  %v3243 = vlaneseq
  %v3244 = vshrl.u32 %v3243, 7
  %v3245 = vsub.s32 0, %v3244
  %v3246 = vrot.slane %v3200, %v3245
  %v3247 = vmul.f32 %v3240, %v3246
  %v3248 = vmul.f32 %v3241, %v3246
  %v3249 = vmul.f32 %v3242, %v3246
  %v3250 = vlaneseq
  %v3251 = vshrl.u32 %v3250, 7
  %v3252 = vsub.s32 1, %v3251
  %v3253 = vrot.slane %v3200, %v3252
  %v3254 = vadd.f32 %v3247, %v3253
  %v3255 = vadd.f32 %v3248, %v3253
  %v3256 = vadd.f32 %v3249, %v3253
  %v3257 = vpack.c.bf16 %v3255, %v3254
  %v3258 = vpack.c.bf16 %v3256, %v3256
  %v3259 = vld [vmem:[%s31] sm:$0x7]
  %v3260 = vld [vmem:[%s35] sm:$0xf]
  %v3261 = vld [vmem:[%s35 + $0x4] sm:$0xf]
  %v3262 = vld [vmem:[%s35 + $0x8] sm:$0xf]
  %v3263 = vld [vmem:[%s35 + $0xc] sm:$0xf]
  %v3264 = vld [vmem:[%s35 + $0x10] sm:$0xf]
  %v3265 = vld [vmem:[%s35 + $0x14] sm:$0xf]
  %v3266 = vld [vmem:[%s35 + $0x18] sm:$0xf]
  %v3267 = vld [vmem:[%s35 + $0x1c] sm:$0xf]
  %v3268 = vlaneseq
  %v3269 = vshrl.u32 %v3268, 7
  %v3270 = vsub.s32 0, %v3269
  %v3271 = vrot.slane %v3259, %v3270
  %v3280 = vunpack.c.l.b16 %v3260
  %v3281 = vunpack.c.l.b16 %v3261
  %v3282 = vunpack.c.l.b16 %v3262
  %v3283 = vunpack.c.l.b16 %v3263
  %v3284 = vunpack.c.l.b16 %v3264
  %v3285 = vunpack.c.l.b16 %v3265
  %v3286 = vunpack.c.l.b16 %v3266
  %v3287 = vunpack.c.l.b16 %v3267
  %v3288 = vpack.c.b16 %v3281, %v3280
  %v3289 = vpack.c.b16 %v3283, %v3282
  %v3290 = vpack.c.b16 %v3285, %v3284
  %v3291 = vpack.c.b16 %v3287, %v3286
  %v3297 = vsel %vm232, %v3257, 0
  %v3300 = vsel %vm232, %v3258, 0
  %3302 = vmatprep.subr.bf16.mxu0 0
  %3303 = vmatpush1.bf16.msra.mxu0 %v3288
  %3304 = vmatprep.subr.bf16.mxu0 0
  %3305 = vmatpush1.bf16.msra.mxu0 %v3289
  %3306 = vmatprep.subr.bf16.mxu0 0
  %3307 = vmatpush1.bf16.msra.mxu0 %v3290
  %3308 = vmatprep.subr.bf16.mxu0 0
  %3309 = vmatpush1.bf16.msra.mxu0 %v3291
  %3310 = vmatprep.subr.bf16.mxu0 0
  %3311 = vmatpush1.bf16.msra.mxu0 0
  %3312 = vmatprep.subr.bf16.mxu0 0
  %3313 = vmatpush1.bf16.msra.mxu0 0
  %3314 = vmatprep.subr.bf16.mxu0 0
  %3315 = vmatpush1.bf16.msra.mxu0 0
  %3316 = vmatprep.subr.bf16.mxu0 0
  %3317 = vmatpush1.bf16.msra.mxu0 0
  %3318 = vmatprep.subr.bf16.mxu0 0
  %3319 = vmatpush1.bf16.msra.mxu0 0
  %3320 = vmatprep.subr.bf16.mxu0 0
  %3321 = vmatpush1.bf16.msra.mxu0 0
  %3322 = vmatprep.subr.bf16.mxu0 0
  %3323 = vmatpush1.bf16.msra.mxu0 0
  %3324 = vmatprep.subr.bf16.mxu0 0
  %3325 = vmatpush1.bf16.msra.mxu0 0
  %3326 = vmatprep.subr.bf16.mxu0 0
  %3327 = vmatpush1.bf16.msra.mxu0 0
  %3328 = vmatprep.subr.bf16.mxu0 0
  %3329 = vmatpush1.bf16.msra.mxu0 0
  %3330 = vmatprep.subr.bf16.mxu0 0
  %3331 = vmatpush1.bf16.msra.mxu0 0
  %3332 = vmatprep.subr.bf16.mxu0 0
  %3333 = vmatpush1.bf16.msra.mxu0 0
  %3334 = vmatprep.mubr.bf16.mxu0 0
  %3335 = vmatmul.mubr.bf16.gmra.mrb[0].mxu0 %v3297
  %v3336 = vpop.f32.mrb[0].mxu0
  %v3337 = vadd.f32 %v3271, %v3336
  %v3338 = vpop.f32.mrb[0].mxu0
  %v3339 = vpop.f32.mrb[0].mxu0
  %v3340 = vadd.f32 %v3271, %v3339
  %v3341 = vpop.f32.mrb[0].mxu0
  %3342 = vmatprep.mubr.bf16.mxu0 0
  %3343 = vmatmul.mubr.bf16.gmra.mrb[0].mxu0 %v3300
  %v3344 = vpop.f32.mrb[0].mxu0
  %v3345 = vadd.f32 %v3271, %v3344
  %v3346 = vpop.f32.mrb[0].mxu0
  %v3347 = vpop.f32.mrb[0].mxu0
  %v3348 = vpop.f32.mrb[0].mxu0
  %3349 = vdwg.mxu0
  %v3350 = vld [vmem:[%s33] sm:$0xf]
  %v3351 = vld [vmem:[%s33 + $0x4] sm:$0xf]
  %v3352 = vld [vmem:[%s33 + $0x8] sm:$0xf]
  %v3353 = vld [vmem:[%s33 + $0xc] sm:$0xf]
  %v3354 = vld [vmem:[%s33 + $0x10] sm:$0xf]
  %v3355 = vld [vmem:[%s33 + $0x14] sm:$0xf]
  %v3356 = vld [vmem:[%s33 + $0x18] sm:$0xf]
  %v3357 = vld [vmem:[%s33 + $0x1c] sm:$0xf]
  %v3358 = vlaneseq
  %v3359 = vshrl.u32 %v3358, 7
  %v3360 = vsub.s32 1, %v3359
  %v3361 = vrot.slane %v3259, %v3360
  %v3370 = vunpack.c.l.b16 %v3350
  %v3371 = vunpack.c.l.b16 %v3351
  %v3372 = vunpack.c.l.b16 %v3352
  %v3373 = vunpack.c.l.b16 %v3353
  %v3374 = vunpack.c.l.b16 %v3354
  %v3375 = vunpack.c.l.b16 %v3355
  %v3376 = vunpack.c.l.b16 %v3356
  %v3377 = vunpack.c.l.b16 %v3357
  %v3378 = vpack.c.b16 %v3371, %v3370
  %v3379 = vpack.c.b16 %v3373, %v3372
  %v3380 = vpack.c.b16 %v3375, %v3374
  %v3381 = vpack.c.b16 %v3377, %v3376
  %3386 = vmatprep.subr.bf16.mxu0 0
  %3387 = vmatpush1.bf16.msra.mxu0 %v3378
  %3388 = vmatprep.subr.bf16.mxu0 0
  %3389 = vmatpush1.bf16.msra.mxu0 %v3379
  %3390 = vmatprep.subr.bf16.mxu0 0
  %3391 = vmatpush1.bf16.msra.mxu0 %v3380
  %3392 = vmatprep.subr.bf16.mxu0 0
  %3393 = vmatpush1.bf16.msra.mxu0 %v3381
  %3394 = vmatprep.subr.bf16.mxu0 0
  %3395 = vmatpush1.bf16.msra.mxu0 0
  %3396 = vmatprep.subr.bf16.mxu0 0
  %3397 = vmatpush1.bf16.msra.mxu0 0
  %3398 = vmatprep.subr.bf16.mxu0 0
  %3399 = vmatpush1.bf16.msra.mxu0 0
  %3400 = vmatprep.subr.bf16.mxu0 0
  %3401 = vmatpush1.bf16.msra.mxu0 0
  %3402 = vmatprep.subr.bf16.mxu0 0
  %3403 = vmatpush1.bf16.msra.mxu0 0
  %3404 = vmatprep.subr.bf16.mxu0 0
  %3405 = vmatpush1.bf16.msra.mxu0 0
  %3406 = vmatprep.subr.bf16.mxu0 0
  %3407 = vmatpush1.bf16.msra.mxu0 0
  %3408 = vmatprep.subr.bf16.mxu0 0
  %3409 = vmatpush1.bf16.msra.mxu0 0
  %3410 = vmatprep.subr.bf16.mxu0 0
  %3411 = vmatpush1.bf16.msra.mxu0 0
  %3412 = vmatprep.subr.bf16.mxu0 0
  %3413 = vmatpush1.bf16.msra.mxu0 0
  %3414 = vmatprep.subr.bf16.mxu0 0
  %3415 = vmatpush1.bf16.msra.mxu0 0
  %3416 = vmatprep.subr.bf16.mxu0 0
  %3417 = vmatpush1.bf16.msra.mxu0 0
  %3418 = vmatprep.mubr.bf16.mxu0 0
  %3419 = vmatmul.mubr.bf16.gmra.mrb[0].mxu0 %v3297
  %v3420 = vpop.f32.mrb[0].mxu0
  %v3421 = vadd.f32 %v3361, %v3420
  %v3422 = vpop.f32.mrb[0].mxu0
  %v3423 = vpop.f32.mrb[0].mxu0
  %v3424 = vadd.f32 %v3361, %v3423
  %v3425 = vpop.f32.mrb[0].mxu0
  %3426 = vmatprep.mubr.bf16.mxu0 0
  %3427 = vmatmul.mubr.bf16.gmra.mrb[0].mxu0 %v3300
  %v3428 = vpop.f32.mrb[0].mxu0
  %v3429 = vadd.f32 %v3361, %v3428
  %v3430 = vpop.f32.mrb[0].mxu0
  %v3431 = vpop.f32.mrb[0].mxu0
  %v3432 = vpop.f32.mrb[0].mxu0
  %3433 = vdwg.mxu0
  %v3434 = vld [vmem:[%s37] sm:$0xf]
  %v3435 = vld [vmem:[%s37 + $0x4] sm:$0xf]
  %v3436 = vld [vmem:[%s37 + $0x8] sm:$0xf]
  %v3437 = vld [vmem:[%s37 + $0xc] sm:$0xf]
  %v3438 = vld [vmem:[%s37 + $0x10] sm:$0xf]
  %v3439 = vld [vmem:[%s37 + $0x14] sm:$0xf]
  %v3440 = vld [vmem:[%s37 + $0x18] sm:$0xf]
  %v3441 = vld [vmem:[%s37 + $0x1c] sm:$0xf]
  %v3442 = vlaneseq
  %v3443 = vshrl.u32 %v3442, 7
  %v3444 = vsub.s32 2, %v3443
  %v3445 = vrot.slane %v3259, %v3444
  %v3454 = vunpack.c.l.b16 %v3434
  %v3455 = vunpack.c.l.b16 %v3435
  %v3456 = vunpack.c.l.b16 %v3436
  %v3457 = vunpack.c.l.b16 %v3437
  %v3458 = vunpack.c.l.b16 %v3438
  %v3459 = vunpack.c.l.b16 %v3439
  %v3460 = vunpack.c.l.b16 %v3440
  %v3461 = vunpack.c.l.b16 %v3441
  %v3462 = vpack.c.b16 %v3455, %v3454
  %v3463 = vpack.c.b16 %v3457, %v3456
  %v3464 = vpack.c.b16 %v3459, %v3458
  %v3465 = vpack.c.b16 %v3461, %v3460
  %3470 = vmatprep.subr.bf16.mxu0 0
  %3471 = vmatpush1.bf16.msra.mxu0 %v3462
  %3472 = vmatprep.subr.bf16.mxu0 0
  %3473 = vmatpush1.bf16.msra.mxu0 %v3463
  %3474 = vmatprep.subr.bf16.mxu0 0
  %3475 = vmatpush1.bf16.msra.mxu0 %v3464
  %3476 = vmatprep.subr.bf16.mxu0 0
  %3477 = vmatpush1.bf16.msra.mxu0 %v3465
  %3478 = vmatprep.subr.bf16.mxu0 0
  %3479 = vmatpush1.bf16.msra.mxu0 0
  %3480 = vmatprep.subr.bf16.mxu0 0
  %3481 = vmatpush1.bf16.msra.mxu0 0
  %3482 = vmatprep.subr.bf16.mxu0 0
  %3483 = vmatpush1.bf16.msra.mxu0 0
  %3484 = vmatprep.subr.bf16.mxu0 0
  %3485 = vmatpush1.bf16.msra.mxu0 0
  %3486 = vmatprep.subr.bf16.mxu0 0
  %3487 = vmatpush1.bf16.msra.mxu0 0
  %3488 = vmatprep.subr.bf16.mxu0 0
  %3489 = vmatpush1.bf16.msra.mxu0 0
  %3490 = vmatprep.subr.bf16.mxu0 0
  %3491 = vmatpush1.bf16.msra.mxu0 0
  %3492 = vmatprep.subr.bf16.mxu0 0
  %3493 = vmatpush1.bf16.msra.mxu0 0
  %3494 = vmatprep.subr.bf16.mxu0 0
  %3495 = vmatpush1.bf16.msra.mxu0 0
  %3496 = vmatprep.subr.bf16.mxu0 0
  %3497 = vmatpush1.bf16.msra.mxu0 0
  %3498 = vmatprep.subr.bf16.mxu0 0
  %3499 = vmatpush1.bf16.msra.mxu0 0
  %3500 = vmatprep.subr.bf16.mxu0 0
  %3501 = vmatpush1.bf16.msra.mxu0 0
  %3502 = vmatprep.mubr.bf16.mxu0 0
  %3503 = vmatmul.mubr.bf16.gmra.mrb[0].mxu0 %v3297
  %v3504 = vpop.f32.mrb[0].mxu0
  %v3505 = vadd.f32 %v3445, %v3504
  %v3506 = vpop.f32.mrb[0].mxu0
  %v3507 = vpop.f32.mrb[0].mxu0
  %v3508 = vadd.f32 %v3445, %v3507
  %v3509 = vpop.f32.mrb[0].mxu0
  %3510 = vmatprep.mubr.bf16.mxu0 0
  %3511 = vmatmul.mubr.bf16.gmra.mrb[0].mxu0 %v3300
  %v3512 = vpop.f32.mrb[0].mxu0
  %v3513 = vadd.f32 %v3445, %v3512
  %v3514 = vpop.f32.mrb[0].mxu0
  %v3515 = vpop.f32.mrb[0].mxu0
  %v3516 = vpop.f32.mrb[0].mxu0
  %3517 = vdwg.mxu0
  %v3518 = vpack.c.bf16 %v3340, %v3337
  %v3519 = vpack.c.bf16 %v3345, %v3345
  %v3520 = vpack.c.bf16 %v3424, %v3421
  %v3521 = vpack.c.bf16 %v3429, %v3429
  %vm3522 = vcmask 261120
  %v3524 = vsel %vm3522, %v3518, 0
  %v3527 = vsel %vm3522, %v3519, 0
  %v3530 = vsel %vm3522, %v3520, 0
  %v3533 = vsel %vm3522, %v3521, 0
  %3535 = vmatprep.subr.bf16.mxu0 0
  %3536 = vmatpush1.bf16.xpose.msra.mxu0 %v3530
  %3537 = vmatprep.subr.bf16.mxu0 0
  %3538 = vmatpush1.bf16.xpose.msra.mxu0 %v3533
  %3539 = vmatprep.subr.bf16.mxu0 0
  %3540 = vmatpush1.bf16.xpose.msra.mxu0 0
  %3541 = vmatprep.subr.bf16.mxu0 0
  %3542 = vmatpush1.bf16.xpose.msra.mxu0 0
  %3543 = vmatprep.subr.bf16.mxu0 0
  %3544 = vmatpush1.bf16.xpose.msra.mxu0 0
  %3545 = vmatprep.subr.bf16.mxu0 0
  %3546 = vmatpush1.bf16.xpose.msra.mxu0 0
  %3547 = vmatprep.subr.bf16.mxu0 0
  %3548 = vmatpush1.bf16.xpose.msra.mxu0 0
  %3549 = vmatprep.subr.bf16.mxu0 0
  %3550 = vmatpush1.bf16.xpose.msra.mxu0 0
  %3551 = vmatprep.subr.bf16.mxu0 0
  %3552 = vmatpush1.bf16.xpose.msra.mxu0 0
  %3553 = vmatprep.subr.bf16.mxu0 0
  %3554 = vmatpush1.bf16.xpose.msra.mxu0 0
  %3555 = vmatprep.subr.bf16.mxu0 0
  %3556 = vmatpush1.bf16.xpose.msra.mxu0 0
  %3557 = vmatprep.subr.bf16.mxu0 0
  %3558 = vmatpush1.bf16.xpose.msra.mxu0 0
  %3559 = vmatprep.subr.bf16.mxu0 0
  %3560 = vmatpush1.bf16.xpose.msra.mxu0 0
  %3561 = vmatprep.subr.bf16.mxu0 0
  %3562 = vmatpush1.bf16.xpose.msra.mxu0 0
  %3563 = vmatprep.subr.bf16.mxu0 0
  %3564 = vmatpush1.bf16.xpose.msra.mxu0 0
  %3565 = vmatprep.subr.bf16.mxu0 0
  %3566 = vmatpush1.bf16.xpose.msra.mxu0 0
  %3567 = vmatprep.mubr.bf16.mxu0 0
  %3568 = vmatmul.mubr.bf16.gmra.mrb[0].mxu0 %v3524
  %v3569 = vpop.f32.mrb[0].mxu0
  %v3570 = vadd.f32 0.0, %v3569
  %v3571 = vpop.f32.mrb[0].mxu0
  %v3572 = vpop.f32.mrb[0].mxu0
  %v3573 = vadd.f32 0.0, %v3572
  %v3574 = vpop.f32.mrb[0].mxu0
  %3575 = vmatprep.mubr.bf16.mxu0 0
  %3576 = vmatmul.mubr.bf16.gmra.mrb[0].mxu0 %v3527
  %v3577 = vpop.f32.mrb[0].mxu0
  %v3578 = vadd.f32 0.0, %v3577
  %v3579 = vpop.f32.mrb[0].mxu0
  %v3580 = vpop.f32.mrb[0].mxu0
  %v3581 = vpop.f32.mrb[0].mxu0
  %3582 = vdwg.mxu0
  %v3583 = vmul.f32 %v3570, 0.17677669
  %v3584 = vmul.f32 %v3573, 0.17677669
  %v3585 = vmul.f32 %v3578, 0.17677669
  %v3586 = vsel %vm182, %v3583, -1e+30
  %v3587 = vsel %vm183, %v3584, -1e+30
  %v3588 = vsel %vm191, %v3585, -1e+30
  %vm3589 = vcmask 162816
  %v3590 = vsel %vm3589, %v3586, -inf
  %3591 = vmax.xlane.f32.xlu0 %v3590
  %v3592 = vpop.xlane.xlu0 %3591
  %v3593 = vsel %vm3589, %v3587, -inf
  %3594 = vmax.xlane.f32.xlu0 %v3593
  %v3595 = vpop.xlane.xlu0 %3594
  %vm3596 = vcmask 158720
  %v3597 = vsel %vm3596, %v3588, -inf
  %3598 = vmax.xlane.f32.xlu0 %v3597
  %v3599 = vpop.xlane.xlu0 %3598
  %v3600 = vsub.f32 %v3586, %v3592
  %v3601 = vsub.f32 %v3587, %v3595
  %v3602 = vsub.f32 %v3588, %v3599
  %v3603 = vmul.f32 %v3600, 1.442695
  %v3604 = vpow.pop %v3603
  %v3605 = vmul.f32 %v3601, 1.442695
  %v3606 = vpow.pop %v3605
  %v3607 = vmul.f32 %v3602, 1.442695
  %v3608 = vpow.pop %v3607
  %v3609 = vsel %vm3589, %v3604, 0.0
  %3610 = vadd.xlane.f32.xlu0 %v3609
  %v3611 = vpop.xlane.xlu0 %3610
  %v3612 = vsel %vm3589, %v3606, 0.0
  %3613 = vadd.xlane.f32.xlu0 %v3612
  %v3614 = vpop.xlane.xlu0 %3613
  %v3615 = vsel %vm3596, %v3608, 0.0
  %3616 = vadd.xlane.f32.xlu0 %v3615
  %v3617 = vpop.xlane.xlu0 %3616
  %v3618 = vrcp.pop %v3611
  %v3619 = vmul.f32 %v3604, %v3618
  %v3620 = vrcp.pop %v3614
  %v3621 = vmul.f32 %v3606, %v3620
  %v3622 = vrcp.pop %v3617
  %v3623 = vmul.f32 %v3608, %v3622
  %v3624 = vpack.c.bf16 %v3621, %v3619
  %v3625 = vpack.c.bf16 %v3623, %v3623
  %v3626 = vpack.c.bf16 %v3508, %v3505
  %v3627 = vpack.c.bf16 %v3513, %v3513
  %v3629 = vsel %vm3589, %v3624, 0
  %v3632 = vsel %vm3589, %v3625, 0
  %v3635 = vsel %vm342, %v3627, 0
  %3637 = vmatprep.subr.bf16.mxu0 0
  %3638 = vmatpush1.bf16.msra.mxu0 %v3626
  %3639 = vmatprep.subr.bf16.mxu0 0
  %3640 = vmatpush1.bf16.msra.mxu0 %v3635
  %3641 = vmatprep.subr.bf16.mxu0 0
  %3642 = vmatpush1.bf16.msra.mxu0 0
  %3643 = vmatprep.subr.bf16.mxu0 0
  %3644 = vmatpush1.bf16.msra.mxu0 0
  %3645 = vmatprep.subr.bf16.mxu0 0
  %3646 = vmatpush1.bf16.msra.mxu0 0
  %3647 = vmatprep.subr.bf16.mxu0 0
  %3648 = vmatpush1.bf16.msra.mxu0 0
  %3649 = vmatprep.subr.bf16.mxu0 0
  %3650 = vmatpush1.bf16.msra.mxu0 0
  %3651 = vmatprep.subr.bf16.mxu0 0
  %3652 = vmatpush1.bf16.msra.mxu0 0
  %3653 = vmatprep.subr.bf16.mxu0 0
  %3654 = vmatpush1.bf16.msra.mxu0 0
  %3655 = vmatprep.subr.bf16.mxu0 0
  %3656 = vmatpush1.bf16.msra.mxu0 0
  %3657 = vmatprep.subr.bf16.mxu0 0
  %3658 = vmatpush1.bf16.msra.mxu0 0
  %3659 = vmatprep.subr.bf16.mxu0 0
  %3660 = vmatpush1.bf16.msra.mxu0 0
  %3661 = vmatprep.subr.bf16.mxu0 0
  %3662 = vmatpush1.bf16.msra.mxu0 0
  %3663 = vmatprep.subr.bf16.mxu0 0
  %3664 = vmatpush1.bf16.msra.mxu0 0
  %3665 = vmatprep.subr.bf16.mxu0 0
  %3666 = vmatpush1.bf16.msra.mxu0 0
  %3667 = vmatprep.subr.bf16.mxu0 0
  %3668 = vmatpush1.bf16.msra.mxu0 0
  %3669 = vmatprep.mubr.bf16.mxu0 0
  %3670 = vmatmul.mubr.bf16.gmra.mrb[0].mxu0 %v3629
  %v3671 = vpop.f32.mrb[0].mxu0
  %v3672 = vadd.f32 0.0, %v3671
  %v3673 = vpop.f32.mrb[0].mxu0
  %v3674 = vpop.f32.mrb[0].mxu0
  %v3675 = vadd.f32 0.0, %v3674
  %v3676 = vpop.f32.mrb[0].mxu0
  %3677 = vmatprep.mubr.bf16.mxu0 0
  %3678 = vmatmul.mubr.bf16.gmra.mrb[0].mxu0 %v3632
  %v3679 = vpop.f32.mrb[0].mxu0
  %v3680 = vadd.f32 0.0, %v3679
  %v3681 = vpop.f32.mrb[0].mxu0
  %v3682 = vpop.f32.mrb[0].mxu0
  %v3683 = vpop.f32.mrb[0].mxu0
  %3684 = vdwg.mxu0
  %v3685 = vpack.c.bf16 %v3675, %v3672
  %v3686 = vpack.c.bf16 %v3680, %v3680
  %v3687 = vld [vmem:[%s29] sm:$0xf]
  %v3688 = vld [vmem:[%s29 + $0x4] sm:$0xf]
  %v3689 = vld [vmem:[%s29 + $0x8] sm:$0xf]
  %v3690 = vld [vmem:[%s29 + $0xc] sm:$0xf]
  %s3691 = scalar_lea.vmem %s31, 4
  %v3692 = vld [vmem:[%s3691] sm:$0x7]
  %s3693 = scalar_lea.vmem %s35, 32
  %v3694 = vld [vmem:[%s3693] sm:$0xf]
  %v3695 = vld [vmem:[%s3693 + $0x4] sm:$0xf]
  %v3696 = vld [vmem:[%s3693 + $0x8] sm:$0xf]
  %v3697 = vld [vmem:[%s3693 + $0xc] sm:$0xf]
  %v3698 = vld [vmem:[%s3693 + $0x10] sm:$0xf]
  %v3699 = vld [vmem:[%s3693 + $0x14] sm:$0xf]
  %v3700 = vld [vmem:[%s3693 + $0x18] sm:$0xf]
  %v3701 = vld [vmem:[%s3693 + $0x1c] sm:$0xf]
  %v3702 = vlaneseq
  %v3703 = vshrl.u32 %v3702, 7
  %v3704 = vsub.s32 0, %v3703
  %v3705 = vrot.slane %v3692, %v3704
  %v3714 = vunpack.c.l.b16 %v3694
  %v3715 = vunpack.c.l.b16 %v3695
  %v3716 = vunpack.c.l.b16 %v3696
  %v3717 = vunpack.c.l.b16 %v3697
  %v3718 = vunpack.c.l.b16 %v3698
  %v3719 = vunpack.c.l.b16 %v3699
  %v3720 = vunpack.c.l.b16 %v3700
  %v3721 = vunpack.c.l.b16 %v3701
  %v3722 = vpack.c.b16 %v3715, %v3714
  %v3723 = vpack.c.b16 %v3717, %v3716
  %v3724 = vpack.c.b16 %v3719, %v3718
  %v3725 = vpack.c.b16 %v3721, %v3720
  %3730 = vmatprep.subr.bf16.mxu0 0
  %3731 = vmatpush1.bf16.msra.mxu0 %v3722
  %3732 = vmatprep.subr.bf16.mxu0 0
  %3733 = vmatpush1.bf16.msra.mxu0 %v3723
  %3734 = vmatprep.subr.bf16.mxu0 0
  %3735 = vmatpush1.bf16.msra.mxu0 %v3724
  %3736 = vmatprep.subr.bf16.mxu0 0
  %3737 = vmatpush1.bf16.msra.mxu0 %v3725
  %3738 = vmatprep.subr.bf16.mxu0 0
  %3739 = vmatpush1.bf16.msra.mxu0 0
  %3740 = vmatprep.subr.bf16.mxu0 0
  %3741 = vmatpush1.bf16.msra.mxu0 0
  %3742 = vmatprep.subr.bf16.mxu0 0
  %3743 = vmatpush1.bf16.msra.mxu0 0
  %3744 = vmatprep.subr.bf16.mxu0 0
  %3745 = vmatpush1.bf16.msra.mxu0 0
  %3746 = vmatprep.subr.bf16.mxu0 0
  %3747 = vmatpush1.bf16.msra.mxu0 0
  %3748 = vmatprep.subr.bf16.mxu0 0
  %3749 = vmatpush1.bf16.msra.mxu0 0
  %3750 = vmatprep.subr.bf16.mxu0 0
  %3751 = vmatpush1.bf16.msra.mxu0 0
  %3752 = vmatprep.subr.bf16.mxu0 0
  %3753 = vmatpush1.bf16.msra.mxu0 0
  %3754 = vmatprep.subr.bf16.mxu0 0
  %3755 = vmatpush1.bf16.msra.mxu0 0
  %3756 = vmatprep.subr.bf16.mxu0 0
  %3757 = vmatpush1.bf16.msra.mxu0 0
  %3758 = vmatprep.subr.bf16.mxu0 0
  %3759 = vmatpush1.bf16.msra.mxu0 0
  %3760 = vmatprep.subr.bf16.mxu0 0
  %3761 = vmatpush1.bf16.msra.mxu0 0
  %3762 = vmatprep.mubr.bf16.mxu0 0
  %3763 = vmatmul.mubr.bf16.gmra.mrb[0].mxu0 %v3297
  %v3764 = vpop.f32.mrb[0].mxu0
  %v3765 = vadd.f32 %v3705, %v3764
  %v3766 = vpop.f32.mrb[0].mxu0
  %v3767 = vpop.f32.mrb[0].mxu0
  %v3768 = vadd.f32 %v3705, %v3767
  %v3769 = vpop.f32.mrb[0].mxu0
  %3770 = vmatprep.mubr.bf16.mxu0 0
  %3771 = vmatmul.mubr.bf16.gmra.mrb[0].mxu0 %v3300
  %v3772 = vpop.f32.mrb[0].mxu0
  %v3773 = vadd.f32 %v3705, %v3772
  %v3774 = vpop.f32.mrb[0].mxu0
  %v3775 = vpop.f32.mrb[0].mxu0
  %v3776 = vpop.f32.mrb[0].mxu0
  %3777 = vdwg.mxu0
  %s3778 = scalar_lea.vmem %s33, 32
  %v3779 = vld [vmem:[%s3778] sm:$0xf]
  %v3780 = vld [vmem:[%s3778 + $0x4] sm:$0xf]
  %v3781 = vld [vmem:[%s3778 + $0x8] sm:$0xf]
  %v3782 = vld [vmem:[%s3778 + $0xc] sm:$0xf]
  %v3783 = vld [vmem:[%s3778 + $0x10] sm:$0xf]
  %v3784 = vld [vmem:[%s3778 + $0x14] sm:$0xf]
  %v3785 = vld [vmem:[%s3778 + $0x18] sm:$0xf]
  %v3786 = vld [vmem:[%s3778 + $0x1c] sm:$0xf]
  %v3787 = vlaneseq
  %v3788 = vshrl.u32 %v3787, 7
  %v3789 = vsub.s32 1, %v3788
  %v3790 = vrot.slane %v3692, %v3789
  %v3799 = vunpack.c.l.b16 %v3779
  %v3800 = vunpack.c.l.b16 %v3780
  %v3801 = vunpack.c.l.b16 %v3781
  %v3802 = vunpack.c.l.b16 %v3782
  %v3803 = vunpack.c.l.b16 %v3783
  %v3804 = vunpack.c.l.b16 %v3784
  %v3805 = vunpack.c.l.b16 %v3785
  %v3806 = vunpack.c.l.b16 %v3786
  %v3807 = vpack.c.b16 %v3800, %v3799
  %v3808 = vpack.c.b16 %v3802, %v3801
  %v3809 = vpack.c.b16 %v3804, %v3803
  %v3810 = vpack.c.b16 %v3806, %v3805
  %3815 = vmatprep.subr.bf16.mxu0 0
  %3816 = vmatpush1.bf16.msra.mxu0 %v3807
  %3817 = vmatprep.subr.bf16.mxu0 0
  %3818 = vmatpush1.bf16.msra.mxu0 %v3808
  %3819 = vmatprep.subr.bf16.mxu0 0
  %3820 = vmatpush1.bf16.msra.mxu0 %v3809
  %3821 = vmatprep.subr.bf16.mxu0 0
  %3822 = vmatpush1.bf16.msra.mxu0 %v3810
  %3823 = vmatprep.subr.bf16.mxu0 0
  %3824 = vmatpush1.bf16.msra.mxu0 0
  %3825 = vmatprep.subr.bf16.mxu0 0
  %3826 = vmatpush1.bf16.msra.mxu0 0
  %3827 = vmatprep.subr.bf16.mxu0 0
  %3828 = vmatpush1.bf16.msra.mxu0 0
  %3829 = vmatprep.subr.bf16.mxu0 0
  %3830 = vmatpush1.bf16.msra.mxu0 0
  %3831 = vmatprep.subr.bf16.mxu0 0
  %3832 = vmatpush1.bf16.msra.mxu0 0
  %3833 = vmatprep.subr.bf16.mxu0 0
  %3834 = vmatpush1.bf16.msra.mxu0 0
  %3835 = vmatprep.subr.bf16.mxu0 0
  %3836 = vmatpush1.bf16.msra.mxu0 0
  %3837 = vmatprep.subr.bf16.mxu0 0
  %3838 = vmatpush1.bf16.msra.mxu0 0
  %3839 = vmatprep.subr.bf16.mxu0 0
  %3840 = vmatpush1.bf16.msra.mxu0 0
  %3841 = vmatprep.subr.bf16.mxu0 0
  %3842 = vmatpush1.bf16.msra.mxu0 0
  %3843 = vmatprep.subr.bf16.mxu0 0
  %3844 = vmatpush1.bf16.msra.mxu0 0
  %3845 = vmatprep.subr.bf16.mxu0 0
  %3846 = vmatpush1.bf16.msra.mxu0 0
  %3847 = vmatprep.mubr.bf16.mxu0 0
  %3848 = vmatmul.mubr.bf16.gmra.mrb[0].mxu0 %v3297
  %v3849 = vpop.f32.mrb[0].mxu0
  %v3850 = vadd.f32 %v3790, %v3849
  %v3851 = vpop.f32.mrb[0].mxu0
  %v3852 = vpop.f32.mrb[0].mxu0
  %v3853 = vadd.f32 %v3790, %v3852
  %v3854 = vpop.f32.mrb[0].mxu0
  %3855 = vmatprep.mubr.bf16.mxu0 0
  %3856 = vmatmul.mubr.bf16.gmra.mrb[0].mxu0 %v3300
  %v3857 = vpop.f32.mrb[0].mxu0
  %v3858 = vadd.f32 %v3790, %v3857
  %v3859 = vpop.f32.mrb[0].mxu0
  %v3860 = vpop.f32.mrb[0].mxu0
  %v3861 = vpop.f32.mrb[0].mxu0
  %3862 = vdwg.mxu0
  %s3863 = scalar_lea.vmem %s37, 32
  %v3864 = vld [vmem:[%s3863] sm:$0xf]
  %v3865 = vld [vmem:[%s3863 + $0x4] sm:$0xf]
  %v3866 = vld [vmem:[%s3863 + $0x8] sm:$0xf]
  %v3867 = vld [vmem:[%s3863 + $0xc] sm:$0xf]
  %v3868 = vld [vmem:[%s3863 + $0x10] sm:$0xf]
  %v3869 = vld [vmem:[%s3863 + $0x14] sm:$0xf]
  %v3870 = vld [vmem:[%s3863 + $0x18] sm:$0xf]
  %v3871 = vld [vmem:[%s3863 + $0x1c] sm:$0xf]
  %v3872 = vlaneseq
  %v3873 = vshrl.u32 %v3872, 7
  %v3874 = vsub.s32 2, %v3873
  %v3875 = vrot.slane %v3692, %v3874
  %v3884 = vunpack.c.l.b16 %v3864
  %v3885 = vunpack.c.l.b16 %v3865
  %v3886 = vunpack.c.l.b16 %v3866
  %v3887 = vunpack.c.l.b16 %v3867
  %v3888 = vunpack.c.l.b16 %v3868
  %v3889 = vunpack.c.l.b16 %v3869
  %v3890 = vunpack.c.l.b16 %v3870
  %v3891 = vunpack.c.l.b16 %v3871
  %v3892 = vpack.c.b16 %v3885, %v3884
  %v3893 = vpack.c.b16 %v3887, %v3886
  %v3894 = vpack.c.b16 %v3889, %v3888
  %v3895 = vpack.c.b16 %v3891, %v3890
  %3900 = vmatprep.subr.bf16.mxu0 0
  %3901 = vmatpush1.bf16.msra.mxu0 %v3892
  %3902 = vmatprep.subr.bf16.mxu0 0
  %3903 = vmatpush1.bf16.msra.mxu0 %v3893
  %3904 = vmatprep.subr.bf16.mxu0 0
  %3905 = vmatpush1.bf16.msra.mxu0 %v3894
  %3906 = vmatprep.subr.bf16.mxu0 0
  %3907 = vmatpush1.bf16.msra.mxu0 %v3895
  %3908 = vmatprep.subr.bf16.mxu0 0
  %3909 = vmatpush1.bf16.msra.mxu0 0
  %3910 = vmatprep.subr.bf16.mxu0 0
  %3911 = vmatpush1.bf16.msra.mxu0 0
  %3912 = vmatprep.subr.bf16.mxu0 0
  %3913 = vmatpush1.bf16.msra.mxu0 0
  %3914 = vmatprep.subr.bf16.mxu0 0
  %3915 = vmatpush1.bf16.msra.mxu0 0
  %3916 = vmatprep.subr.bf16.mxu0 0
  %3917 = vmatpush1.bf16.msra.mxu0 0
  %3918 = vmatprep.subr.bf16.mxu0 0
  %3919 = vmatpush1.bf16.msra.mxu0 0
  %3920 = vmatprep.subr.bf16.mxu0 0
  %3921 = vmatpush1.bf16.msra.mxu0 0
  %3922 = vmatprep.subr.bf16.mxu0 0
  %3923 = vmatpush1.bf16.msra.mxu0 0
  %3924 = vmatprep.subr.bf16.mxu0 0
  %3925 = vmatpush1.bf16.msra.mxu0 0
  %3926 = vmatprep.subr.bf16.mxu0 0
  %3927 = vmatpush1.bf16.msra.mxu0 0
  %3928 = vmatprep.subr.bf16.mxu0 0
  %3929 = vmatpush1.bf16.msra.mxu0 0
  %3930 = vmatprep.subr.bf16.mxu0 0
  %3931 = vmatpush1.bf16.msra.mxu0 0
  %3932 = vmatprep.mubr.bf16.mxu0 0
  %3933 = vmatmul.mubr.bf16.gmra.mrb[0].mxu0 %v3297
  %v3934 = vpop.f32.mrb[0].mxu0
  %v3935 = vadd.f32 %v3875, %v3934
  %v3936 = vpop.f32.mrb[0].mxu0
  %v3937 = vpop.f32.mrb[0].mxu0
  %v3938 = vadd.f32 %v3875, %v3937
  %v3939 = vpop.f32.mrb[0].mxu0
  %3940 = vmatprep.mubr.bf16.mxu0 0
  %3941 = vmatmul.mubr.bf16.gmra.mrb[0].mxu0 %v3300
  %v3942 = vpop.f32.mrb[0].mxu0
  %v3943 = vadd.f32 %v3875, %v3942
  %v3944 = vpop.f32.mrb[0].mxu0
  %v3945 = vpop.f32.mrb[0].mxu0
  %v3946 = vpop.f32.mrb[0].mxu0
  %3947 = vdwg.mxu0
  %v3948 = vpack.c.bf16 %v3768, %v3765
  %v3949 = vpack.c.bf16 %v3773, %v3773
  %v3950 = vpack.c.bf16 %v3853, %v3850
  %v3951 = vpack.c.bf16 %v3858, %v3858
  %v3953 = vsel %vm3522, %v3948, 0
  %v3956 = vsel %vm3522, %v3949, 0
  %v3959 = vsel %vm3522, %v3950, 0
  %v3962 = vsel %vm3522, %v3951, 0
  %3964 = vmatprep.subr.bf16.mxu0 0
  %3965 = vmatpush1.bf16.xpose.msra.mxu0 %v3959
  %3966 = vmatprep.subr.bf16.mxu0 0
  %3967 = vmatpush1.bf16.xpose.msra.mxu0 %v3962
  %3968 = vmatprep.subr.bf16.mxu0 0
  %3969 = vmatpush1.bf16.xpose.msra.mxu0 0
  %3970 = vmatprep.subr.bf16.mxu0 0
  %3971 = vmatpush1.bf16.xpose.msra.mxu0 0
  %3972 = vmatprep.subr.bf16.mxu0 0
  %3973 = vmatpush1.bf16.xpose.msra.mxu0 0
  %3974 = vmatprep.subr.bf16.mxu0 0
  %3975 = vmatpush1.bf16.xpose.msra.mxu0 0
  %3976 = vmatprep.subr.bf16.mxu0 0
  %3977 = vmatpush1.bf16.xpose.msra.mxu0 0
  %3978 = vmatprep.subr.bf16.mxu0 0
  %3979 = vmatpush1.bf16.xpose.msra.mxu0 0
  %3980 = vmatprep.subr.bf16.mxu0 0
  %3981 = vmatpush1.bf16.xpose.msra.mxu0 0
  %3982 = vmatprep.subr.bf16.mxu0 0
  %3983 = vmatpush1.bf16.xpose.msra.mxu0 0
  %3984 = vmatprep.subr.bf16.mxu0 0
  %3985 = vmatpush1.bf16.xpose.msra.mxu0 0
  %3986 = vmatprep.subr.bf16.mxu0 0
  %3987 = vmatpush1.bf16.xpose.msra.mxu0 0
  %3988 = vmatprep.subr.bf16.mxu0 0
  %3989 = vmatpush1.bf16.xpose.msra.mxu0 0
  %3990 = vmatprep.subr.bf16.mxu0 0
  %3991 = vmatpush1.bf16.xpose.msra.mxu0 0
  %3992 = vmatprep.subr.bf16.mxu0 0
  %3993 = vmatpush1.bf16.xpose.msra.mxu0 0
  %3994 = vmatprep.subr.bf16.mxu0 0
  %3995 = vmatpush1.bf16.xpose.msra.mxu0 0
  %3996 = vmatprep.mubr.bf16.mxu0 0
  %3997 = vmatmul.mubr.bf16.gmra.mrb[0].mxu0 %v3953
  %v3998 = vpop.f32.mrb[0].mxu0
  %v3999 = vadd.f32 0.0, %v3998
  %v4000 = vpop.f32.mrb[0].mxu0
  %v4001 = vpop.f32.mrb[0].mxu0
  %v4002 = vadd.f32 0.0, %v4001
  %v4003 = vpop.f32.mrb[0].mxu0
  %4004 = vmatprep.mubr.bf16.mxu0 0
  %4005 = vmatmul.mubr.bf16.gmra.mrb[0].mxu0 %v3956
  %v4006 = vpop.f32.mrb[0].mxu0
  %v4007 = vadd.f32 0.0, %v4006
  %v4008 = vpop.f32.mrb[0].mxu0
  %v4009 = vpop.f32.mrb[0].mxu0
  %v4010 = vpop.f32.mrb[0].mxu0
  %4011 = vdwg.mxu0
  %v4012 = vmul.f32 %v3999, 0.17677669
  %v4013 = vmul.f32 %v4002, 0.17677669
  %v4014 = vmul.f32 %v4007, 0.17677669
  %v4015 = vsel %vm182, %v4012, -1e+30
  %v4016 = vsel %vm183, %v4013, -1e+30
  %v4017 = vsel %vm191, %v4014, -1e+30
  %v4018 = vsel %vm3589, %v4015, -inf
  %4019 = vmax.xlane.f32.xlu0 %v4018
  %v4020 = vpop.xlane.xlu0 %4019
  %v4021 = vsel %vm3589, %v4016, -inf
  %4022 = vmax.xlane.f32.xlu0 %v4021
  %v4023 = vpop.xlane.xlu0 %4022
  %v4024 = vsel %vm3596, %v4017, -inf
  %4025 = vmax.xlane.f32.xlu0 %v4024
  %v4026 = vpop.xlane.xlu0 %4025
  %v4027 = vsub.f32 %v4015, %v4020
  %v4028 = vsub.f32 %v4016, %v4023
  %v4029 = vsub.f32 %v4017, %v4026
  %v4030 = vmul.f32 %v4027, 1.442695
  %v4031 = vpow.pop %v4030
  %v4032 = vmul.f32 %v4028, 1.442695
  %v4033 = vpow.pop %v4032
  %v4034 = vmul.f32 %v4029, 1.442695
  %v4035 = vpow.pop %v4034
  %v4036 = vsel %vm3589, %v4031, 0.0
  %4037 = vadd.xlane.f32.xlu0 %v4036
  %v4038 = vpop.xlane.xlu0 %4037
  %v4039 = vsel %vm3589, %v4033, 0.0
  %4040 = vadd.xlane.f32.xlu0 %v4039
  %v4041 = vpop.xlane.xlu0 %4040
  %v4042 = vsel %vm3596, %v4035, 0.0
  %4043 = vadd.xlane.f32.xlu0 %v4042
  %v4044 = vpop.xlane.xlu0 %4043
  %v4045 = vrcp.pop %v4038
  %v4046 = vmul.f32 %v4031, %v4045
  %v4047 = vrcp.pop %v4041
  %v4048 = vmul.f32 %v4033, %v4047
  %v4049 = vrcp.pop %v4044
  %v4050 = vmul.f32 %v4035, %v4049
  %v4051 = vpack.c.bf16 %v4048, %v4046
  %v4052 = vpack.c.bf16 %v4050, %v4050
  %v4053 = vpack.c.bf16 %v3938, %v3935
  %v4054 = vpack.c.bf16 %v3943, %v3943
  %v4056 = vsel %vm3589, %v4051, 0
  %v4059 = vsel %vm3589, %v4052, 0
  %v4062 = vsel %vm342, %v4054, 0
  %4064 = vmatprep.subr.bf16.mxu0 0
  %4065 = vmatpush1.bf16.msra.mxu0 %v4053
  %4066 = vmatprep.subr.bf16.mxu0 0
  %4067 = vmatpush1.bf16.msra.mxu0 %v4062
  %4068 = vmatprep.subr.bf16.mxu0 0
  %4069 = vmatpush1.bf16.msra.mxu0 0
  %4070 = vmatprep.subr.bf16.mxu0 0
  %4071 = vmatpush1.bf16.msra.mxu0 0
  %4072 = vmatprep.subr.bf16.mxu0 0
  %4073 = vmatpush1.bf16.msra.mxu0 0
  %4074 = vmatprep.subr.bf16.mxu0 0
  %4075 = vmatpush1.bf16.msra.mxu0 0
  %4076 = vmatprep.subr.bf16.mxu0 0
  %4077 = vmatpush1.bf16.msra.mxu0 0
  %4078 = vmatprep.subr.bf16.mxu0 0
  %4079 = vmatpush1.bf16.msra.mxu0 0
  %4080 = vmatprep.subr.bf16.mxu0 0
  %4081 = vmatpush1.bf16.msra.mxu0 0
  %4082 = vmatprep.subr.bf16.mxu0 0
  %4083 = vmatpush1.bf16.msra.mxu0 0
  %4084 = vmatprep.subr.bf16.mxu0 0
  %4085 = vmatpush1.bf16.msra.mxu0 0
  %4086 = vmatprep.subr.bf16.mxu0 0
  %4087 = vmatpush1.bf16.msra.mxu0 0
  %4088 = vmatprep.subr.bf16.mxu0 0
  %4089 = vmatpush1.bf16.msra.mxu0 0
  %4090 = vmatprep.subr.bf16.mxu0 0
  %4091 = vmatpush1.bf16.msra.mxu0 0
  %4092 = vmatprep.subr.bf16.mxu0 0
  %4093 = vmatpush1.bf16.msra.mxu0 0
  %4094 = vmatprep.subr.bf16.mxu0 0
  %4095 = vmatpush1.bf16.msra.mxu0 0
  %4096 = vmatprep.mubr.bf16.mxu0 0
  %4097 = vmatmul.mubr.bf16.gmra.mrb[0].mxu0 %v4056
  %v4098 = vpop.f32.mrb[0].mxu0
  %v4099 = vadd.f32 0.0, %v4098
  %v4100 = vpop.f32.mrb[0].mxu0
  %v4101 = vpop.f32.mrb[0].mxu0
  %v4102 = vadd.f32 0.0, %v4101
  %v4103 = vpop.f32.mrb[0].mxu0
  %4104 = vmatprep.mubr.bf16.mxu0 0
  %4105 = vmatmul.mubr.bf16.gmra.mrb[0].mxu0 %v4059
  %v4106 = vpop.f32.mrb[0].mxu0
  %v4107 = vadd.f32 0.0, %v4106
  %v4108 = vpop.f32.mrb[0].mxu0
  %v4109 = vpop.f32.mrb[0].mxu0
  %v4110 = vpop.f32.mrb[0].mxu0
  %4111 = vdwg.mxu0
  %v4112 = vpack.c.bf16 %v4102, %v4099
  %v4113 = vpack.c.bf16 %v4107, %v4107
  %s4114 = scalar_lea.vmem %s29, 16
  %v4115 = vld [vmem:[%s4114] sm:$0xf]
  %v4116 = vld [vmem:[%s4114 + $0x4] sm:$0xf]
  %v4117 = vld [vmem:[%s4114 + $0x8] sm:$0xf]
  %v4118 = vld [vmem:[%s4114 + $0xc] sm:$0xf]
  %v4123 = vunpack.c.l.b16 %v4115
  %v4124 = vunpack.c.l.b16 %v4116
  %v4125 = vunpack.c.l.b16 %v4117
  %v4126 = vunpack.c.l.b16 %v4118
  %v4127 = vpack.c.b16 %v4124, %v4123
  %v4128 = vpack.c.b16 %v4126, %v4125
  %v4132 = vsel %vm3522, %v4112, 0
  %v4135 = vsel %vm3522, %v4113, 0
  %4137 = vmatprep.subr.bf16.mxu0 0
  %4138 = vmatpush1.bf16.msra.mxu0 %v4127
  %4139 = vmatprep.subr.bf16.mxu0 0
  %4140 = vmatpush1.bf16.msra.mxu0 %v4128
  %4141 = vmatprep.subr.bf16.mxu0 0
  %4142 = vmatpush1.bf16.msra.mxu0 0
  %4143 = vmatprep.subr.bf16.mxu0 0
  %4144 = vmatpush1.bf16.msra.mxu0 0
  %4145 = vmatprep.subr.bf16.mxu0 0
  %4146 = vmatpush1.bf16.msra.mxu0 0
  %4147 = vmatprep.subr.bf16.mxu0 0
  %4148 = vmatpush1.bf16.msra.mxu0 0
  %4149 = vmatprep.subr.bf16.mxu0 0
  %4150 = vmatpush1.bf16.msra.mxu0 0
  %4151 = vmatprep.subr.bf16.mxu0 0
  %4152 = vmatpush1.bf16.msra.mxu0 0
  %4153 = vmatprep.subr.bf16.mxu0 0
  %4154 = vmatpush1.bf16.msra.mxu0 0
  %4155 = vmatprep.subr.bf16.mxu0 0
  %4156 = vmatpush1.bf16.msra.mxu0 0
  %4157 = vmatprep.subr.bf16.mxu0 0
  %4158 = vmatpush1.bf16.msra.mxu0 0
  %4159 = vmatprep.subr.bf16.mxu0 0
  %4160 = vmatpush1.bf16.msra.mxu0 0
  %4161 = vmatprep.subr.bf16.mxu0 0
  %4162 = vmatpush1.bf16.msra.mxu0 0
  %4163 = vmatprep.subr.bf16.mxu0 0
  %4164 = vmatpush1.bf16.msra.mxu0 0
  %4165 = vmatprep.subr.bf16.mxu0 0
  %4166 = vmatpush1.bf16.msra.mxu0 0
  %4167 = vmatprep.subr.bf16.mxu0 0
  %4168 = vmatpush1.bf16.msra.mxu0 0
  %4169 = vmatprep.mubr.bf16.mxu0 0
  %4170 = vmatmul.mubr.bf16.gmra.mrb[0].mxu0 %v4132
  %v4171 = vpop.f32.mrb[0].mxu0
  %v4172 = vadd.f32 0.0, %v4171
  %v4173 = vpop.f32.mrb[0].mxu0
  %v4174 = vpop.f32.mrb[0].mxu0
  %v4175 = vadd.f32 0.0, %v4174
  %v4176 = vpop.f32.mrb[0].mxu0
  %4177 = vmatprep.mubr.bf16.mxu0 0
  %4178 = vmatmul.mubr.bf16.gmra.mrb[0].mxu0 %v4135
  %v4179 = vpop.f32.mrb[0].mxu0
  %v4180 = vadd.f32 0.0, %v4179
  %v4181 = vpop.f32.mrb[0].mxu0
  %v4182 = vpop.f32.mrb[0].mxu0
  %v4183 = vpop.f32.mrb[0].mxu0
  %4184 = vdwg.mxu0
  %v4189 = vunpack.c.l.b16 %v3687
  %v4190 = vunpack.c.l.b16 %v3688
  %v4191 = vunpack.c.l.b16 %v3689
  %v4192 = vunpack.c.l.b16 %v3690
  %v4193 = vpack.c.b16 %v4190, %v4189
  %v4194 = vpack.c.b16 %v4192, %v4191
  %v4198 = vsel %vm3522, %v3685, 0
  %v4201 = vsel %vm3522, %v3686, 0
  %4203 = vmatprep.subr.bf16.mxu0 0
  %4204 = vmatpush1.bf16.msra.mxu0 %v4193
  %4205 = vmatprep.subr.bf16.mxu0 0
  %4206 = vmatpush1.bf16.msra.mxu0 %v4194
  %4207 = vmatprep.subr.bf16.mxu0 0
  %4208 = vmatpush1.bf16.msra.mxu0 0
  %4209 = vmatprep.subr.bf16.mxu0 0
  %4210 = vmatpush1.bf16.msra.mxu0 0
  %4211 = vmatprep.subr.bf16.mxu0 0
  %4212 = vmatpush1.bf16.msra.mxu0 0
  %4213 = vmatprep.subr.bf16.mxu0 0
  %4214 = vmatpush1.bf16.msra.mxu0 0
  %4215 = vmatprep.subr.bf16.mxu0 0
  %4216 = vmatpush1.bf16.msra.mxu0 0
  %4217 = vmatprep.subr.bf16.mxu0 0
  %4218 = vmatpush1.bf16.msra.mxu0 0
  %4219 = vmatprep.subr.bf16.mxu0 0
  %4220 = vmatpush1.bf16.msra.mxu0 0
  %4221 = vmatprep.subr.bf16.mxu0 0
  %4222 = vmatpush1.bf16.msra.mxu0 0
  %4223 = vmatprep.subr.bf16.mxu0 0
  %4224 = vmatpush1.bf16.msra.mxu0 0
  %4225 = vmatprep.subr.bf16.mxu0 0
  %4226 = vmatpush1.bf16.msra.mxu0 0
  %4227 = vmatprep.subr.bf16.mxu0 0
  %4228 = vmatpush1.bf16.msra.mxu0 0
  %4229 = vmatprep.subr.bf16.mxu0 0
  %4230 = vmatpush1.bf16.msra.mxu0 0
  %4231 = vmatprep.subr.bf16.mxu0 0
  %4232 = vmatpush1.bf16.msra.mxu0 0
  %4233 = vmatprep.subr.bf16.mxu0 0
  %4234 = vmatpush1.bf16.msra.mxu0 0
  %4235 = vmatprep.mubr.bf16.mxu0 0
  %4236 = vmatmul.mubr.bf16.gmra.mrb[0].mxu0 %v4198
  %v4237 = vpop.f32.mrb[0].mxu0
  %v4238 = vadd.f32 %v4172, %v4237
  %v4239 = vpop.f32.mrb[0].mxu0
  %v4240 = vpop.f32.mrb[0].mxu0
  %v4241 = vadd.f32 %v4175, %v4240
  %v4242 = vpop.f32.mrb[0].mxu0
  %4243 = vmatprep.mubr.bf16.mxu0 0
  %4244 = vmatmul.mubr.bf16.gmra.mrb[0].mxu0 %v4201
  %v4245 = vpop.f32.mrb[0].mxu0
  %v4246 = vadd.f32 %v4180, %v4245
  %v4247 = vpop.f32.mrb[0].mxu0
  %v4248 = vpop.f32.mrb[0].mxu0
  %v4249 = vpop.f32.mrb[0].mxu0
  %4250 = vdwg.mxu0
  %v4251 = vadd.f32 %v3188, %v4238
  %v4252 = vadd.f32 %v3194, %v4241
  %v4253 = vadd.f32 %v3192, %v4246
  %v4254 = vlaneseq
  %v4255 = vshrl.u32 %v4254, 7
  %v4256 = vsub.s32 0, %v4255
  %v4257 = vrot.slane %v3201, %v4256
  %v4258 = vadd.f32 %v4251, %v4257
  %v4259 = vadd.f32 %v4252, %v4257
  %v4260 = vadd.f32 %v4253, %v4257
  %v4261 = vsel %vm232, %v4258, 0.0
  %4262 = vadd.xlane.f32.xlu0 %v4261
  %v4263 = vpop.xlane.xlu0 %4262
  %v4264 = vsel %vm232, %v4259, 0.0
  %4265 = vadd.xlane.f32.xlu0 %v4264
  %v4266 = vpop.xlane.xlu0 %4265
  %v4267 = vsel %vm3208, %v4260, 0.0
  %4268 = vadd.xlane.f32.xlu0 %v4267
  %v4269 = vpop.xlane.xlu0 %4268
  %v4270 = vmul.f32 %v4263, %v3212
  %v4271 = vmul.f32 %v4266, %v3212
  %v4272 = vmul.f32 %v4269, %v3212
  %v4273 = vsub.f32 %v4258, %v4270
  %v4274 = vsub.f32 %v4259, %v4271
  %v4275 = vsub.f32 %v4260, %v4272
  %v4276 = vmul.f32 %v4273, %v4273
  %v4277 = vmul.f32 %v4274, %v4274
  %v4278 = vmul.f32 %v4275, %v4275
  %v4279 = vsel %vm232, %v4276, 0.0
  %4280 = vadd.xlane.f32.xlu0 %v4279
  %v4281 = vpop.xlane.xlu0 %4280
  %v4282 = vsel %vm232, %v4277, 0.0
  %4283 = vadd.xlane.f32.xlu0 %v4282
  %v4284 = vpop.xlane.xlu0 %4283
  %v4285 = vsel %vm3208, %v4278, 0.0
  %4286 = vadd.xlane.f32.xlu0 %v4285
  %v4287 = vpop.xlane.xlu0 %4286
  %v4288 = vmul.f32 %v4281, %v3212
  %v4289 = vmul.f32 %v4284, %v3212
  %v4290 = vmul.f32 %v4287, %v3212
  %v4291 = vadd.f32 %v4288, 1e-05
  %v4292 = vadd.f32 %v4289, 1e-05
  %v4293 = vadd.f32 %v4290, 1e-05
  %v4294 = vrsqrt.pop %v4291
  %v4295 = vrsqrt.pop %v4292
  %v4296 = vrsqrt.pop %v4293
  %v4297 = vmul.f32 %v4273, %v4294
  %v4298 = vmul.f32 %v4274, %v4295
  %v4299 = vmul.f32 %v4275, %v4296
  %v4300 = vlaneseq
  %v4301 = vshrl.u32 %v4300, 7
  %v4302 = vsub.s32 2, %v4301
  %v4303 = vrot.slane %v3200, %v4302
  %v4304 = vmul.f32 %v4297, %v4303
  %v4305 = vmul.f32 %v4298, %v4303
  %v4306 = vmul.f32 %v4299, %v4303
  %v4307 = vlaneseq
  %v4308 = vshrl.u32 %v4307, 7
  %v4309 = vsub.s32 3, %v4308
  %v4310 = vrot.slane %v3200, %v4309
  %v4311 = vadd.f32 %v4304, %v4310
  %v4312 = vadd.f32 %v4305, %v4310
  %v4313 = vadd.f32 %v4306, %v4310
  %v4314 = vpack.c.bf16 %v4312, %v4311
  %v4315 = vpack.c.bf16 %v4313, %v4313
  %v4316 = vld [vmem:[%s25] sm:$0xff]
  %v4317 = vld [vmem:[%s25 + $0x8] sm:$0xff]
  %v4318 = vld [vmem:[%s25 + $0x10] sm:$0xff]
  %v4319 = vld [vmem:[%s25 + $0x18] sm:$0xff]
  %v4320 = vld [vmem:[%s25 + $0x20] sm:$0xff]
  %v4321 = vld [vmem:[%s25 + $0x28] sm:$0xff]
  %v4322 = vld [vmem:[%s25 + $0x30] sm:$0xff]
  %v4323 = vld [vmem:[%s25 + $0x38] sm:$0xff]
  %v4324 = vld [vmem:[%s23] sm:$0xff]
  %v4325 = vld [vmem:[%s23 + $0x8] sm:$0xff]
  %v4326 = vld [vmem:[%s23 + $0x10] sm:$0xff]
  %v4327 = vld [vmem:[%s23 + $0x18] sm:$0xff]
  %v4328 = vld [vmem:[%s23 + $0x20] sm:$0xff]
  %v4329 = vld [vmem:[%s23 + $0x28] sm:$0xff]
  %v4330 = vld [vmem:[%s23 + $0x30] sm:$0xff]
  %v4331 = vld [vmem:[%s23 + $0x38] sm:$0xff]
  %v4340 = vunpack.c.l.b16 %v4324
  %v4341 = vunpack.c.h.b16 %v4324
  %v4342 = vunpack.c.l.b16 %v4325
  %v4343 = vunpack.c.h.b16 %v4325
  %v4344 = vunpack.c.l.b16 %v4326
  %v4345 = vunpack.c.h.b16 %v4326
  %v4346 = vunpack.c.l.b16 %v4327
  %v4347 = vunpack.c.h.b16 %v4327
  %v4348 = vunpack.c.l.b16 %v4328
  %v4349 = vunpack.c.h.b16 %v4328
  %v4350 = vunpack.c.l.b16 %v4329
  %v4351 = vunpack.c.h.b16 %v4329
  %v4352 = vunpack.c.l.b16 %v4330
  %v4353 = vunpack.c.h.b16 %v4330
  %v4354 = vunpack.c.l.b16 %v4331
  %v4355 = vunpack.c.h.b16 %v4331
  %v4356 = vpack.c.b16 %v4342, %v4340
  %v4357 = vpack.c.b16 %v4343, %v4341
  %v4358 = vpack.c.b16 %v4346, %v4344
  %v4359 = vpack.c.b16 %v4347, %v4345
  %v4360 = vpack.c.b16 %v4350, %v4348
  %v4361 = vpack.c.b16 %v4351, %v4349
  %v4362 = vpack.c.b16 %v4354, %v4352
  %v4363 = vpack.c.b16 %v4355, %v4353
  %v4373 = vsel %vm232, %v3198, 0
  %v4376 = vsel %vm232, %v3199, 0
  %4378 = vmatprep.subr.bf16.mxu0 %v4357
  %4379 = vmatpush1.bf16.msra.mxu0 %v4356
  %4380 = vmatprep.subr.bf16.mxu0 %v4359
  %4381 = vmatpush1.bf16.msra.mxu0 %v4358
  %4382 = vmatprep.subr.bf16.mxu0 %v4361
  %4383 = vmatpush1.bf16.msra.mxu0 %v4360
  %4384 = vmatprep.subr.bf16.mxu0 %v4363
  %4385 = vmatpush1.bf16.msra.mxu0 %v4362
  %4386 = vmatprep.subr.bf16.mxu0 0
  %4387 = vmatpush1.bf16.msra.mxu0 0
  %4388 = vmatprep.subr.bf16.mxu0 0
  %4389 = vmatpush1.bf16.msra.mxu0 0
  %4390 = vmatprep.subr.bf16.mxu0 0
  %4391 = vmatpush1.bf16.msra.mxu0 0
  %4392 = vmatprep.subr.bf16.mxu0 0
  %4393 = vmatpush1.bf16.msra.mxu0 0
  %4394 = vmatprep.subr.bf16.mxu0 0
  %4395 = vmatpush1.bf16.msra.mxu0 0
  %4396 = vmatprep.subr.bf16.mxu0 0
  %4397 = vmatpush1.bf16.msra.mxu0 0
  %4398 = vmatprep.subr.bf16.mxu0 0
  %4399 = vmatpush1.bf16.msra.mxu0 0
  %4400 = vmatprep.subr.bf16.mxu0 0
  %4401 = vmatpush1.bf16.msra.mxu0 0
  %4402 = vmatprep.subr.bf16.mxu0 0
  %4403 = vmatpush1.bf16.msra.mxu0 0
  %4404 = vmatprep.subr.bf16.mxu0 0
  %4405 = vmatpush1.bf16.msra.mxu0 0
  %4406 = vmatprep.subr.bf16.mxu0 0
  %4407 = vmatpush1.bf16.msra.mxu0 0
  %4408 = vmatprep.subr.bf16.mxu0 0
  %4409 = vmatpush1.bf16.msra.mxu0 0
  %4410 = vmatprep.mubr.bf16.mxu0 0
  %4411 = vmatmul.mubr.bf16.gmra.mrb[0].mxu0 %v4373
  %v4412 = vpop.f32.mrb[0].mxu0
  %v4413 = vadd.f32 0.0, %v4412
  %v4414 = vpop.f32.mrb[0].mxu0
  %v4415 = vadd.f32 0.0, %v4414
  %v4416 = vpop.f32.mrb[0].mxu0
  %v4417 = vadd.f32 0.0, %v4416
  %v4418 = vpop.f32.mrb[0].mxu0
  %v4419 = vadd.f32 0.0, %v4418
  %4420 = vmatprep.mubr.bf16.mxu0 0
  %4421 = vmatmul.mubr.bf16.gmra.mrb[0].mxu0 %v4376
  %v4422 = vpop.f32.mrb[0].mxu0
  %v4423 = vadd.f32 0.0, %v4422
  %v4424 = vpop.f32.mrb[0].mxu0
  %v4425 = vadd.f32 0.0, %v4424
  %v4426 = vpop.f32.mrb[0].mxu0
  %v4427 = vpop.f32.mrb[0].mxu0
  %4428 = vdwg.mxu0
  %v4437 = vunpack.c.l.b16 %v4316
  %v4438 = vunpack.c.h.b16 %v4316
  %v4439 = vunpack.c.l.b16 %v4317
  %v4440 = vunpack.c.h.b16 %v4317
  %v4441 = vunpack.c.l.b16 %v4318
  %v4442 = vunpack.c.h.b16 %v4318
  %v4443 = vunpack.c.l.b16 %v4319
  %v4444 = vunpack.c.h.b16 %v4319
  %v4445 = vunpack.c.l.b16 %v4320
  %v4446 = vunpack.c.h.b16 %v4320
  %v4447 = vunpack.c.l.b16 %v4321
  %v4448 = vunpack.c.h.b16 %v4321
  %v4449 = vunpack.c.l.b16 %v4322
  %v4450 = vunpack.c.h.b16 %v4322
  %v4451 = vunpack.c.l.b16 %v4323
  %v4452 = vunpack.c.h.b16 %v4323
  %v4453 = vpack.c.b16 %v4439, %v4437
  %v4454 = vpack.c.b16 %v4440, %v4438
  %v4455 = vpack.c.b16 %v4443, %v4441
  %v4456 = vpack.c.b16 %v4444, %v4442
  %v4457 = vpack.c.b16 %v4447, %v4445
  %v4458 = vpack.c.b16 %v4448, %v4446
  %v4459 = vpack.c.b16 %v4451, %v4449
  %v4460 = vpack.c.b16 %v4452, %v4450
  %v4470 = vsel %vm232, %v4314, 0
  %v4473 = vsel %vm232, %v4315, 0
  %4475 = vmatprep.subr.bf16.mxu0 %v4454
  %4476 = vmatpush1.bf16.msra.mxu0 %v4453
  %4477 = vmatprep.subr.bf16.mxu0 %v4456
  %4478 = vmatpush1.bf16.msra.mxu0 %v4455
  %4479 = vmatprep.subr.bf16.mxu0 %v4458
  %4480 = vmatpush1.bf16.msra.mxu0 %v4457
  %4481 = vmatprep.subr.bf16.mxu0 %v4460
  %4482 = vmatpush1.bf16.msra.mxu0 %v4459
  %4483 = vmatprep.subr.bf16.mxu0 0
  %4484 = vmatpush1.bf16.msra.mxu0 0
  %4485 = vmatprep.subr.bf16.mxu0 0
  %4486 = vmatpush1.bf16.msra.mxu0 0
  %4487 = vmatprep.subr.bf16.mxu0 0
  %4488 = vmatpush1.bf16.msra.mxu0 0
  %4489 = vmatprep.subr.bf16.mxu0 0
  %4490 = vmatpush1.bf16.msra.mxu0 0
  %4491 = vmatprep.subr.bf16.mxu0 0
  %4492 = vmatpush1.bf16.msra.mxu0 0
  %4493 = vmatprep.subr.bf16.mxu0 0
  %4494 = vmatpush1.bf16.msra.mxu0 0
  %4495 = vmatprep.subr.bf16.mxu0 0
  %4496 = vmatpush1.bf16.msra.mxu0 0
  %4497 = vmatprep.subr.bf16.mxu0 0
  %4498 = vmatpush1.bf16.msra.mxu0 0
  %4499 = vmatprep.subr.bf16.mxu0 0
  %4500 = vmatpush1.bf16.msra.mxu0 0
  %4501 = vmatprep.subr.bf16.mxu0 0
  %4502 = vmatpush1.bf16.msra.mxu0 0
  %4503 = vmatprep.subr.bf16.mxu0 0
  %4504 = vmatpush1.bf16.msra.mxu0 0
  %4505 = vmatprep.subr.bf16.mxu0 0
  %4506 = vmatpush1.bf16.msra.mxu0 0
  %4507 = vmatprep.mubr.bf16.mxu0 0
  %4508 = vmatmul.mubr.bf16.gmra.mrb[0].mxu0 %v4470
  %v4509 = vpop.f32.mrb[0].mxu0
  %v4510 = vadd.f32 %v4413, %v4509
  %v4511 = vpop.f32.mrb[0].mxu0
  %v4512 = vadd.f32 %v4415, %v4511
  %v4513 = vpop.f32.mrb[0].mxu0
  %v4514 = vadd.f32 %v4417, %v4513
  %v4515 = vpop.f32.mrb[0].mxu0
  %v4516 = vadd.f32 %v4419, %v4515
  %4517 = vmatprep.mubr.bf16.mxu0 0
  %4518 = vmatmul.mubr.bf16.gmra.mrb[0].mxu0 %v4473
  %v4519 = vpop.f32.mrb[0].mxu0
  %v4520 = vadd.f32 %v4423, %v4519
  %v4521 = vpop.f32.mrb[0].mxu0
  %v4522 = vadd.f32 %v4425, %v4521
  %v4523 = vpop.f32.mrb[0].mxu0
  %v4524 = vpop.f32.mrb[0].mxu0
  %4525 = vdwg.mxu0
  %v4526 = vld [vmem:[%s21] sm:$0x3]
  %v4528 = vlaneseq
  %v4529 = vshrl.u32 %v4528, 7
  %v4530 = vsub.s32 0, %v4529
  %v4531 = vrot.slane %v4526, %v4530
  %v4532 = vlaneseq
  %v4533 = vshrl.u32 %v4532, 7
  %v4534 = vsub.s32 1, %v4533
  %v4535 = vrot.slane %v4526, %v4534
  %v4538 = vadd.f32 %v4510, %v4531
  %v4539 = vadd.f32 %v4512, %v4535
  %v4540 = vadd.f32 %v4514, %v4531
  %v4541 = vadd.f32 %v4516, %v4535
  %v4542 = vadd.f32 %v4520, %v4531
  %v4543 = vadd.f32 %v4522, %v4535
  %v4544 = vmul.f32 %v4538, %v4538
  %v4545 = vmul.f32 %v4539, %v4539
  %v4546 = vmul.f32 %v4540, %v4540
  %v4547 = vmul.f32 %v4541, %v4541
  %v4548 = vmul.f32 %v4542, %v4542
  %v4549 = vmul.f32 %v4543, %v4543
  %v4550 = vmul.f32 %v4538, %v4544
  %v4551 = vmul.f32 %v4539, %v4545
  %v4552 = vmul.f32 %v4540, %v4546
  %v4553 = vmul.f32 %v4541, %v4547
  %v4554 = vmul.f32 %v4542, %v4548
  %v4555 = vmul.f32 %v4543, %v4549
  %v4556 = vmul.f32 %v4550, 0.044715
  %v4557 = vmul.f32 %v4551, 0.044715
  %v4558 = vmul.f32 %v4552, 0.044715
  %v4559 = vmul.f32 %v4553, 0.044715
  %v4560 = vmul.f32 %v4554, 0.044715
  %v4561 = vmul.f32 %v4555, 0.044715
  %v4562 = vadd.f32 %v4538, %v4556
  %v4563 = vadd.f32 %v4539, %v4557
  %v4564 = vadd.f32 %v4540, %v4558
  %v4565 = vadd.f32 %v4541, %v4559
  %v4566 = vadd.f32 %v4542, %v4560
  %v4567 = vadd.f32 %v4543, %v4561
  %v4568 = vmul.f32 %v4562, 0.7978846
  %v4569 = vmul.f32 %v4563, 0.7978846
  %v4570 = vmul.f32 %v4564, 0.7978846
  %v4571 = vmul.f32 %v4565, 0.7978846
  %v4572 = vmul.f32 %v4566, 0.7978846
  %v4573 = vmul.f32 %v4567, 0.7978846
  %v4574 = vtanh.pop %v4568
  %v4575 = vtanh.pop %v4569
  %v4576 = vtanh.pop %v4570
  %v4577 = vtanh.pop %v4571
  %v4578 = vtanh.pop %v4572
  %v4579 = vtanh.pop %v4573
  %v4580 = vadd.f32 %v4574, 1.0
  %v4581 = vadd.f32 %v4575, 1.0
  %v4582 = vadd.f32 %v4576, 1.0
  %v4583 = vadd.f32 %v4577, 1.0
  %v4584 = vadd.f32 %v4578, 1.0
  %v4585 = vadd.f32 %v4579, 1.0
  %v4586 = vmul.f32 %v4580, 0.5
  %v4587 = vmul.f32 %v4581, 0.5
  %v4588 = vmul.f32 %v4582, 0.5
  %v4589 = vmul.f32 %v4583, 0.5
  %v4590 = vmul.f32 %v4584, 0.5
  %v4591 = vmul.f32 %v4585, 0.5
  %v4592 = vmul.f32 %v4538, %v4586
  %v4593 = vmul.f32 %v4539, %v4587
  %v4594 = vmul.f32 %v4540, %v4588
  %v4595 = vmul.f32 %v4541, %v4589
  %v4596 = vmul.f32 %v4542, %v4590
  %v4597 = vmul.f32 %v4543, %v4591
  %v4598 = vpack.c.bf16 %v4594, %v4592
  %v4599 = vpack.c.bf16 %v4595, %v4593
  %v4600 = vpack.c.bf16 %v4596, %v4596
  %v4601 = vpack.c.bf16 %v4597, %v4597
  %v4602 = vld [vmem:[%s27] sm:$0xf]
  %v4603 = vld [vmem:[%s27 + $0x4] sm:$0xf]
  %v4604 = vld [vmem:[%s27 + $0x8] sm:$0xf]
  %v4605 = vld [vmem:[%s27 + $0xc] sm:$0xf]
  %v4606 = vld [vmem:[%s27 + $0x10] sm:$0xf]
  %v4607 = vld [vmem:[%s27 + $0x14] sm:$0xf]
  %v4608 = vld [vmem:[%s27 + $0x18] sm:$0xf]
  %v4609 = vld [vmem:[%s27 + $0x1c] sm:$0xf]
  %v4610 = vld [vmem:[%s27 + $0x20] sm:$0xf]
  %v4611 = vld [vmem:[%s27 + $0x24] sm:$0xf]
  %v4612 = vld [vmem:[%s27 + $0x28] sm:$0xf]
  %v4613 = vld [vmem:[%s27 + $0x2c] sm:$0xf]
  %v4614 = vld [vmem:[%s27 + $0x30] sm:$0xf]
  %v4615 = vld [vmem:[%s27 + $0x34] sm:$0xf]
  %v4616 = vld [vmem:[%s27 + $0x38] sm:$0xf]
  %v4617 = vld [vmem:[%s27 + $0x3c] sm:$0xf]
  %v4618 = vld [vmem:[%s27 + $0x40] sm:$0xf]
  %v4619 = vld [vmem:[%s27 + $0x44] sm:$0xf]
  %v4620 = vld [vmem:[%s27 + $0x48] sm:$0xf]
  %v4621 = vld [vmem:[%s27 + $0x4c] sm:$0xf]
  %v4622 = vld [vmem:[%s27 + $0x50] sm:$0xf]
  %v4623 = vld [vmem:[%s27 + $0x54] sm:$0xf]
  %v4624 = vld [vmem:[%s27 + $0x58] sm:$0xf]
  %v4625 = vld [vmem:[%s27 + $0x5c] sm:$0xf]
  %v4626 = vld [vmem:[%s27 + $0x60] sm:$0xf]
  %v4627 = vld [vmem:[%s27 + $0x64] sm:$0xf]
  %v4628 = vld [vmem:[%s27 + $0x68] sm:$0xf]
  %v4629 = vld [vmem:[%s27 + $0x6c] sm:$0xf]
  %v4630 = vld [vmem:[%s27 + $0x70] sm:$0xf]
  %v4631 = vld [vmem:[%s27 + $0x74] sm:$0xf]
  %v4632 = vld [vmem:[%s27 + $0x78] sm:$0xf]
  %v4633 = vld [vmem:[%s27 + $0x7c] sm:$0xf]
  %v4634 = vlaneseq
  %v4635 = vshrl.u32 %v4634, 7
  %v4636 = vsub.s32 1, %v4635
  %v4637 = vrot.slane %v3201, %v4636
  %v4670 = vunpack.c.l.b16 %v4602
  %v4671 = vunpack.c.l.b16 %v4603
  %v4672 = vunpack.c.l.b16 %v4604
  %v4673 = vunpack.c.l.b16 %v4605
  %v4674 = vunpack.c.l.b16 %v4606
  %v4675 = vunpack.c.l.b16 %v4607
  %v4676 = vunpack.c.l.b16 %v4608
  %v4677 = vunpack.c.l.b16 %v4609
  %v4678 = vunpack.c.l.b16 %v4610
  %v4679 = vunpack.c.l.b16 %v4611
  %v4680 = vunpack.c.l.b16 %v4612
  %v4681 = vunpack.c.l.b16 %v4613
  %v4682 = vunpack.c.l.b16 %v4614
  %v4683 = vunpack.c.l.b16 %v4615
  %v4684 = vunpack.c.l.b16 %v4616
  %v4685 = vunpack.c.l.b16 %v4617
  %v4686 = vunpack.c.l.b16 %v4618
  %v4687 = vunpack.c.l.b16 %v4619
  %v4688 = vunpack.c.l.b16 %v4620
  %v4689 = vunpack.c.l.b16 %v4621
  %v4690 = vunpack.c.l.b16 %v4622
  %v4691 = vunpack.c.l.b16 %v4623
  %v4692 = vunpack.c.l.b16 %v4624
  %v4693 = vunpack.c.l.b16 %v4625
  %v4694 = vunpack.c.l.b16 %v4626
  %v4695 = vunpack.c.l.b16 %v4627
  %v4696 = vunpack.c.l.b16 %v4628
  %v4697 = vunpack.c.l.b16 %v4629
  %v4698 = vunpack.c.l.b16 %v4630
  %v4699 = vunpack.c.l.b16 %v4631
  %v4700 = vunpack.c.l.b16 %v4632
  %v4701 = vunpack.c.l.b16 %v4633
  %v4702 = vpack.c.b16 %v4671, %v4670
  %v4703 = vpack.c.b16 %v4673, %v4672
  %v4704 = vpack.c.b16 %v4675, %v4674
  %v4705 = vpack.c.b16 %v4677, %v4676
  %v4706 = vpack.c.b16 %v4679, %v4678
  %v4707 = vpack.c.b16 %v4681, %v4680
  %v4708 = vpack.c.b16 %v4683, %v4682
  %v4709 = vpack.c.b16 %v4685, %v4684
  %v4710 = vpack.c.b16 %v4687, %v4686
  %v4711 = vpack.c.b16 %v4689, %v4688
  %v4712 = vpack.c.b16 %v4691, %v4690
  %v4713 = vpack.c.b16 %v4693, %v4692
  %v4714 = vpack.c.b16 %v4695, %v4694
  %v4715 = vpack.c.b16 %v4697, %v4696
  %v4716 = vpack.c.b16 %v4699, %v4698
  %v4717 = vpack.c.b16 %v4701, %v4700
  %4734 = vmatprep.subr.bf16.mxu0 0
  %4735 = vmatpush1.bf16.msra.mxu0 %v4702
  %4736 = vmatprep.subr.bf16.mxu0 0
  %4737 = vmatpush1.bf16.msra.mxu0 %v4703
  %4738 = vmatprep.subr.bf16.mxu0 0
  %4739 = vmatpush1.bf16.msra.mxu0 %v4704
  %4740 = vmatprep.subr.bf16.mxu0 0
  %4741 = vmatpush1.bf16.msra.mxu0 %v4705
  %4742 = vmatprep.subr.bf16.mxu0 0
  %4743 = vmatpush1.bf16.msra.mxu0 %v4706
  %4744 = vmatprep.subr.bf16.mxu0 0
  %4745 = vmatpush1.bf16.msra.mxu0 %v4707
  %4746 = vmatprep.subr.bf16.mxu0 0
  %4747 = vmatpush1.bf16.msra.mxu0 %v4708
  %4748 = vmatprep.subr.bf16.mxu0 0
  %4749 = vmatpush1.bf16.msra.mxu0 %v4709
  %4750 = vmatprep.subr.bf16.mxu0 0
  %4751 = vmatpush1.bf16.msra.mxu0 %v4710
  %4752 = vmatprep.subr.bf16.mxu0 0
  %4753 = vmatpush1.bf16.msra.mxu0 %v4711
  %4754 = vmatprep.subr.bf16.mxu0 0
  %4755 = vmatpush1.bf16.msra.mxu0 %v4712
  %4756 = vmatprep.subr.bf16.mxu0 0
  %4757 = vmatpush1.bf16.msra.mxu0 %v4713
  %4758 = vmatprep.subr.bf16.mxu0 0
  %4759 = vmatpush1.bf16.msra.mxu0 %v4714
  %4760 = vmatprep.subr.bf16.mxu0 0
  %4761 = vmatpush1.bf16.msra.mxu0 %v4715
  %4762 = vmatprep.subr.bf16.mxu0 0
  %4763 = vmatpush1.bf16.msra.mxu0 %v4716
  %4764 = vmatprep.subr.bf16.mxu0 0
  %4765 = vmatpush1.bf16.msra.mxu0 %v4717
  %4766 = vmatprep.mubr.bf16.mxu0 %v4599
  %4767 = vmatmul.mubr.bf16.gmra.mrb[0].mxu0 %v4598
  %v4768 = vpop.f32.mrb[0].mxu0
  %v4769 = vadd.f32 %v4637, %v4768
  %v4770 = vpop.f32.mrb[0].mxu0
  %v4771 = vpop.f32.mrb[0].mxu0
  %v4772 = vadd.f32 %v4637, %v4771
  %v4773 = vpop.f32.mrb[0].mxu0
  %4774 = vmatprep.mubr.bf16.mxu0 %v4601
  %4775 = vmatmul.mubr.bf16.gmra.mrb[0].mxu0 %v4600
  %v4776 = vpop.f32.mrb[0].mxu0
  %v4777 = vadd.f32 %v4637, %v4776
  %v4778 = vpop.f32.mrb[0].mxu0
  %v4779 = vpop.f32.mrb[0].mxu0
  %v4780 = vpop.f32.mrb[0].mxu0
  %4781 = vdwg.mxu0
  %v4782 = vadd.f32 %v4258, %v4769
  %v4783 = vadd.f32 %v4259, %v4772
  %v4784 = vadd.f32 %v4260, %v4777
  %s4785 = scalar_lea.vmem %s19, 4
  %v4786 = vld [vmem:[%s4785] sm:$0xf]
  %s4787 = scalar_lea.vmem %s17, 2
  %v4788 = vld [vmem:[%s4787] sm:$0x3]
  %v4789 = vsel %vm232, %v4782, 0.0
  %4790 = vadd.xlane.f32.xlu0 %v4789
  %v4791 = vpop.xlane.xlu0 %4790
  %v4792 = vsel %vm232, %v4783, 0.0
  %4793 = vadd.xlane.f32.xlu0 %v4792
  %v4794 = vpop.xlane.xlu0 %4793
  %v4795 = vsel %vm3208, %v4784, 0.0
  %4796 = vadd.xlane.f32.xlu0 %v4795
  %v4797 = vpop.xlane.xlu0 %4796
  %v4798 = vmul.f32 %v4791, %v3212
  %v4799 = vmul.f32 %v4794, %v3212
  %v4800 = vmul.f32 %v4797, %v3212
  %v4801 = vsub.f32 %v4782, %v4798
  %v4802 = vsub.f32 %v4783, %v4799
  %v4803 = vsub.f32 %v4784, %v4800
  %v4804 = vmul.f32 %v4801, %v4801
  %v4805 = vmul.f32 %v4802, %v4802
  %v4806 = vmul.f32 %v4803, %v4803
  %v4807 = vsel %vm232, %v4804, 0.0
  %4808 = vadd.xlane.f32.xlu0 %v4807
  %v4809 = vpop.xlane.xlu0 %4808
  %v4810 = vsel %vm232, %v4805, 0.0
  %4811 = vadd.xlane.f32.xlu0 %v4810
  %v4812 = vpop.xlane.xlu0 %4811
  %v4813 = vsel %vm3208, %v4806, 0.0
  %4814 = vadd.xlane.f32.xlu0 %v4813
  %v4815 = vpop.xlane.xlu0 %4814
  %v4816 = vmul.f32 %v4809, %v3212
  %v4817 = vmul.f32 %v4812, %v3212
  %v4818 = vmul.f32 %v4815, %v3212
  %v4819 = vadd.f32 %v4816, 1e-05
  %v4820 = vadd.f32 %v4817, 1e-05
  %v4821 = vadd.f32 %v4818, 1e-05
  %v4822 = vrsqrt.pop %v4819
  %v4823 = vrsqrt.pop %v4820
  %v4824 = vrsqrt.pop %v4821
  %v4825 = vmul.f32 %v4801, %v4822
  %v4826 = vmul.f32 %v4802, %v4823
  %v4827 = vmul.f32 %v4803, %v4824
  %v4828 = vlaneseq
  %v4829 = vshrl.u32 %v4828, 7
  %v4830 = vsub.s32 0, %v4829
  %v4831 = vrot.slane %v4786, %v4830
  %v4832 = vmul.f32 %v4825, %v4831
  %v4833 = vmul.f32 %v4826, %v4831
  %v4834 = vmul.f32 %v4827, %v4831
  %v4835 = vlaneseq
  %v4836 = vshrl.u32 %v4835, 7
  %v4837 = vsub.s32 1, %v4836
  %v4838 = vrot.slane %v4786, %v4837
  %v4839 = vadd.f32 %v4832, %v4838
  %v4840 = vadd.f32 %v4833, %v4838
  %v4841 = vadd.f32 %v4834, %v4838
  %v4842 = vpack.c.bf16 %v4840, %v4839
  %v4843 = vpack.c.bf16 %v4841, %v4841
  %s4844 = scalar_lea.vmem %s31, 8
  %v4845 = vld [vmem:[%s4844] sm:$0x7]
  %s4846 = scalar_lea.vmem %s35, 64
  %v4847 = vld [vmem:[%s4846] sm:$0xf]
  %v4848 = vld [vmem:[%s4846 + $0x4] sm:$0xf]
  %v4849 = vld [vmem:[%s4846 + $0x8] sm:$0xf]
  %v4850 = vld [vmem:[%s4846 + $0xc] sm:$0xf]
  %v4851 = vld [vmem:[%s4846 + $0x10] sm:$0xf]
  %v4852 = vld [vmem:[%s4846 + $0x14] sm:$0xf]
  %v4853 = vld [vmem:[%s4846 + $0x18] sm:$0xf]
  %v4854 = vld [vmem:[%s4846 + $0x1c] sm:$0xf]
  %v4855 = vlaneseq
  %v4856 = vshrl.u32 %v4855, 7
  %v4857 = vsub.s32 0, %v4856
  %v4858 = vrot.slane %v4845, %v4857
  %v4867 = vunpack.c.l.b16 %v4847
  %v4868 = vunpack.c.l.b16 %v4848
  %v4869 = vunpack.c.l.b16 %v4849
  %v4870 = vunpack.c.l.b16 %v4850
  %v4871 = vunpack.c.l.b16 %v4851
  %v4872 = vunpack.c.l.b16 %v4852
  %v4873 = vunpack.c.l.b16 %v4853
  %v4874 = vunpack.c.l.b16 %v4854
  %v4875 = vpack.c.b16 %v4868, %v4867
  %v4876 = vpack.c.b16 %v4870, %v4869
  %v4877 = vpack.c.b16 %v4872, %v4871
  %v4878 = vpack.c.b16 %v4874, %v4873
  %v4884 = vsel %vm232, %v4842, 0
  %v4887 = vsel %vm232, %v4843, 0
  %4889 = vmatprep.subr.bf16.mxu0 0
  %4890 = vmatpush1.bf16.msra.mxu0 %v4875
  %4891 = vmatprep.subr.bf16.mxu0 0
  %4892 = vmatpush1.bf16.msra.mxu0 %v4876
  %4893 = vmatprep.subr.bf16.mxu0 0
  %4894 = vmatpush1.bf16.msra.mxu0 %v4877
  %4895 = vmatprep.subr.bf16.mxu0 0
  %4896 = vmatpush1.bf16.msra.mxu0 %v4878
  %4897 = vmatprep.subr.bf16.mxu0 0
  %4898 = vmatpush1.bf16.msra.mxu0 0
  %4899 = vmatprep.subr.bf16.mxu0 0
  %4900 = vmatpush1.bf16.msra.mxu0 0
  %4901 = vmatprep.subr.bf16.mxu0 0
  %4902 = vmatpush1.bf16.msra.mxu0 0
  %4903 = vmatprep.subr.bf16.mxu0 0
  %4904 = vmatpush1.bf16.msra.mxu0 0
  %4905 = vmatprep.subr.bf16.mxu0 0
  %4906 = vmatpush1.bf16.msra.mxu0 0
  %4907 = vmatprep.subr.bf16.mxu0 0
  %4908 = vmatpush1.bf16.msra.mxu0 0
  %4909 = vmatprep.subr.bf16.mxu0 0
  %4910 = vmatpush1.bf16.msra.mxu0 0
  %4911 = vmatprep.subr.bf16.mxu0 0
  %4912 = vmatpush1.bf16.msra.mxu0 0
  %4913 = vmatprep.subr.bf16.mxu0 0
  %4914 = vmatpush1.bf16.msra.mxu0 0
  %4915 = vmatprep.subr.bf16.mxu0 0
  %4916 = vmatpush1.bf16.msra.mxu0 0
  %4917 = vmatprep.subr.bf16.mxu0 0
  %4918 = vmatpush1.bf16.msra.mxu0 0
  %4919 = vmatprep.subr.bf16.mxu0 0
  %4920 = vmatpush1.bf16.msra.mxu0 0
  %4921 = vmatprep.mubr.bf16.mxu0 0
  %4922 = vmatmul.mubr.bf16.gmra.mrb[0].mxu0 %v4884
  %v4923 = vpop.f32.mrb[0].mxu0
  %v4924 = vadd.f32 %v4858, %v4923
  %v4925 = vpop.f32.mrb[0].mxu0
  %v4926 = vpop.f32.mrb[0].mxu0
  %v4927 = vadd.f32 %v4858, %v4926
  %v4928 = vpop.f32.mrb[0].mxu0
  %4929 = vmatprep.mubr.bf16.mxu0 0
  %4930 = vmatmul.mubr.bf16.gmra.mrb[0].mxu0 %v4887
  %v4931 = vpop.f32.mrb[0].mxu0
  %v4932 = vadd.f32 %v4858, %v4931
  %v4933 = vpop.f32.mrb[0].mxu0
  %v4934 = vpop.f32.mrb[0].mxu0
  %v4935 = vpop.f32.mrb[0].mxu0
  %4936 = vdwg.mxu0
  %s4937 = scalar_lea.vmem %s33, 64
  %v4938 = vld [vmem:[%s4937] sm:$0xf]
  %v4939 = vld [vmem:[%s4937 + $0x4] sm:$0xf]
  %v4940 = vld [vmem:[%s4937 + $0x8] sm:$0xf]
  %v4941 = vld [vmem:[%s4937 + $0xc] sm:$0xf]
  %v4942 = vld [vmem:[%s4937 + $0x10] sm:$0xf]
  %v4943 = vld [vmem:[%s4937 + $0x14] sm:$0xf]
  %v4944 = vld [vmem:[%s4937 + $0x18] sm:$0xf]
  %v4945 = vld [vmem:[%s4937 + $0x1c] sm:$0xf]
  %v4946 = vlaneseq
  %v4947 = vshrl.u32 %v4946, 7
  %v4948 = vsub.s32 1, %v4947
  %v4949 = vrot.slane %v4845, %v4948
  %v4958 = vunpack.c.l.b16 %v4938
  %v4959 = vunpack.c.l.b16 %v4939
  %v4960 = vunpack.c.l.b16 %v4940
  %v4961 = vunpack.c.l.b16 %v4941
  %v4962 = vunpack.c.l.b16 %v4942
  %v4963 = vunpack.c.l.b16 %v4943
  %v4964 = vunpack.c.l.b16 %v4944
  %v4965 = vunpack.c.l.b16 %v4945
  %v4966 = vpack.c.b16 %v4959, %v4958
  %v4967 = vpack.c.b16 %v4961, %v4960
  %v4968 = vpack.c.b16 %v4963, %v4962
  %v4969 = vpack.c.b16 %v4965, %v4964
  %4974 = vmatprep.subr.bf16.mxu0 0
  %4975 = vmatpush1.bf16.msra.mxu0 %v4966
  %4976 = vmatprep.subr.bf16.mxu0 0
  %4977 = vmatpush1.bf16.msra.mxu0 %v4967
  %4978 = vmatprep.subr.bf16.mxu0 0
  %4979 = vmatpush1.bf16.msra.mxu0 %v4968
  %4980 = vmatprep.subr.bf16.mxu0 0
  %4981 = vmatpush1.bf16.msra.mxu0 %v4969
  %4982 = vmatprep.subr.bf16.mxu0 0
  %4983 = vmatpush1.bf16.msra.mxu0 0
  %4984 = vmatprep.subr.bf16.mxu0 0
  %4985 = vmatpush1.bf16.msra.mxu0 0
  %4986 = vmatprep.subr.bf16.mxu0 0
  %4987 = vmatpush1.bf16.msra.mxu0 0
  %4988 = vmatprep.subr.bf16.mxu0 0
  %4989 = vmatpush1.bf16.msra.mxu0 0
  %4990 = vmatprep.subr.bf16.mxu0 0
  %4991 = vmatpush1.bf16.msra.mxu0 0
  %4992 = vmatprep.subr.bf16.mxu0 0
  %4993 = vmatpush1.bf16.msra.mxu0 0
  %4994 = vmatprep.subr.bf16.mxu0 0
  %4995 = vmatpush1.bf16.msra.mxu0 0
  %4996 = vmatprep.subr.bf16.mxu0 0
  %4997 = vmatpush1.bf16.msra.mxu0 0
  %4998 = vmatprep.subr.bf16.mxu0 0
  %4999 = vmatpush1.bf16.msra.mxu0 0
  %5000 = vmatprep.subr.bf16.mxu0 0
  %5001 = vmatpush1.bf16.msra.mxu0 0
  %5002 = vmatprep.subr.bf16.mxu0 0
  %5003 = vmatpush1.bf16.msra.mxu0 0
  %5004 = vmatprep.subr.bf16.mxu0 0
  %5005 = vmatpush1.bf16.msra.mxu0 0
  %5006 = vmatprep.mubr.bf16.mxu0 0
  %5007 = vmatmul.mubr.bf16.gmra.mrb[0].mxu0 %v4884
  %v5008 = vpop.f32.mrb[0].mxu0
  %v5009 = vadd.f32 %v4949, %v5008
  %v5010 = vpop.f32.mrb[0].mxu0
  %v5011 = vpop.f32.mrb[0].mxu0
  %v5012 = vadd.f32 %v4949, %v5011
  %v5013 = vpop.f32.mrb[0].mxu0
  %5014 = vmatprep.mubr.bf16.mxu0 0
  %5015 = vmatmul.mubr.bf16.gmra.mrb[0].mxu0 %v4887
  %v5016 = vpop.f32.mrb[0].mxu0
  %v5017 = vadd.f32 %v4949, %v5016
  %v5018 = vpop.f32.mrb[0].mxu0
  %v5019 = vpop.f32.mrb[0].mxu0
  %v5020 = vpop.f32.mrb[0].mxu0
  %5021 = vdwg.mxu0
  %s5022 = scalar_lea.vmem %s37, 64
  %v5023 = vld [vmem:[%s5022] sm:$0xf]
  %v5024 = vld [vmem:[%s5022 + $0x4] sm:$0xf]
  %v5025 = vld [vmem:[%s5022 + $0x8] sm:$0xf]
  %v5026 = vld [vmem:[%s5022 + $0xc] sm:$0xf]
  %v5027 = vld [vmem:[%s5022 + $0x10] sm:$0xf]
  %v5028 = vld [vmem:[%s5022 + $0x14] sm:$0xf]
  %v5029 = vld [vmem:[%s5022 + $0x18] sm:$0xf]
  %v5030 = vld [vmem:[%s5022 + $0x1c] sm:$0xf]
  %v5031 = vlaneseq
  %v5032 = vshrl.u32 %v5031, 7
  %v5033 = vsub.s32 2, %v5032
  %v5034 = vrot.slane %v4845, %v5033
  %v5043 = vunpack.c.l.b16 %v5023
  %v5044 = vunpack.c.l.b16 %v5024
  %v5045 = vunpack.c.l.b16 %v5025
  %v5046 = vunpack.c.l.b16 %v5026
  %v5047 = vunpack.c.l.b16 %v5027
  %v5048 = vunpack.c.l.b16 %v5028
  %v5049 = vunpack.c.l.b16 %v5029
  %v5050 = vunpack.c.l.b16 %v5030
  %v5051 = vpack.c.b16 %v5044, %v5043
  %v5052 = vpack.c.b16 %v5046, %v5045
  %v5053 = vpack.c.b16 %v5048, %v5047
  %v5054 = vpack.c.b16 %v5050, %v5049
  %5059 = vmatprep.subr.bf16.mxu0 0
  %5060 = vmatpush1.bf16.msra.mxu0 %v5051
  %5061 = vmatprep.subr.bf16.mxu0 0
  %5062 = vmatpush1.bf16.msra.mxu0 %v5052
  %5063 = vmatprep.subr.bf16.mxu0 0
  %5064 = vmatpush1.bf16.msra.mxu0 %v5053
  %5065 = vmatprep.subr.bf16.mxu0 0
  %5066 = vmatpush1.bf16.msra.mxu0 %v5054
  %5067 = vmatprep.subr.bf16.mxu0 0
  %5068 = vmatpush1.bf16.msra.mxu0 0
  %5069 = vmatprep.subr.bf16.mxu0 0
  %5070 = vmatpush1.bf16.msra.mxu0 0
  %5071 = vmatprep.subr.bf16.mxu0 0
  %5072 = vmatpush1.bf16.msra.mxu0 0
  %5073 = vmatprep.subr.bf16.mxu0 0
  %5074 = vmatpush1.bf16.msra.mxu0 0
  %5075 = vmatprep.subr.bf16.mxu0 0
  %5076 = vmatpush1.bf16.msra.mxu0 0
  %5077 = vmatprep.subr.bf16.mxu0 0
  %5078 = vmatpush1.bf16.msra.mxu0 0
  %5079 = vmatprep.subr.bf16.mxu0 0
  %5080 = vmatpush1.bf16.msra.mxu0 0
  %5081 = vmatprep.subr.bf16.mxu0 0
  %5082 = vmatpush1.bf16.msra.mxu0 0
  %5083 = vmatprep.subr.bf16.mxu0 0
  %5084 = vmatpush1.bf16.msra.mxu0 0
  %5085 = vmatprep.subr.bf16.mxu0 0
  %5086 = vmatpush1.bf16.msra.mxu0 0
  %5087 = vmatprep.subr.bf16.mxu0 0
  %5088 = vmatpush1.bf16.msra.mxu0 0
  %5089 = vmatprep.subr.bf16.mxu0 0
  %5090 = vmatpush1.bf16.msra.mxu0 0
  %5091 = vmatprep.mubr.bf16.mxu0 0
  %5092 = vmatmul.mubr.bf16.gmra.mrb[0].mxu0 %v4884
  %v5093 = vpop.f32.mrb[0].mxu0
  %v5094 = vadd.f32 %v5034, %v5093
  %v5095 = vpop.f32.mrb[0].mxu0
  %v5096 = vpop.f32.mrb[0].mxu0
  %v5097 = vadd.f32 %v5034, %v5096
  %v5098 = vpop.f32.mrb[0].mxu0
  %5099 = vmatprep.mubr.bf16.mxu0 0
  %5100 = vmatmul.mubr.bf16.gmra.mrb[0].mxu0 %v4887
  %v5101 = vpop.f32.mrb[0].mxu0
  %v5102 = vadd.f32 %v5034, %v5101
  %v5103 = vpop.f32.mrb[0].mxu0
  %v5104 = vpop.f32.mrb[0].mxu0
  %v5105 = vpop.f32.mrb[0].mxu0
  %5106 = vdwg.mxu0
  %v5107 = vpack.c.bf16 %v4927, %v4924
  %v5108 = vpack.c.bf16 %v4932, %v4932
  %v5109 = vpack.c.bf16 %v5012, %v5009
  %v5110 = vpack.c.bf16 %v5017, %v5017
  %v5112 = vsel %vm3522, %v5107, 0
  %v5115 = vsel %vm3522, %v5108, 0
  %v5118 = vsel %vm3522, %v5109, 0
  %v5121 = vsel %vm3522, %v5110, 0
  %5123 = vmatprep.subr.bf16.mxu0 0
  %5124 = vmatpush1.bf16.xpose.msra.mxu0 %v5118
  %5125 = vmatprep.subr.bf16.mxu0 0
  %5126 = vmatpush1.bf16.xpose.msra.mxu0 %v5121
  %5127 = vmatprep.subr.bf16.mxu0 0
  %5128 = vmatpush1.bf16.xpose.msra.mxu0 0
  %5129 = vmatprep.subr.bf16.mxu0 0
  %5130 = vmatpush1.bf16.xpose.msra.mxu0 0
  %5131 = vmatprep.subr.bf16.mxu0 0
  %5132 = vmatpush1.bf16.xpose.msra.mxu0 0
  %5133 = vmatprep.subr.bf16.mxu0 0
  %5134 = vmatpush1.bf16.xpose.msra.mxu0 0
  %5135 = vmatprep.subr.bf16.mxu0 0
  %5136 = vmatpush1.bf16.xpose.msra.mxu0 0
  %5137 = vmatprep.subr.bf16.mxu0 0
  %5138 = vmatpush1.bf16.xpose.msra.mxu0 0
  %5139 = vmatprep.subr.bf16.mxu0 0
  %5140 = vmatpush1.bf16.xpose.msra.mxu0 0
  %5141 = vmatprep.subr.bf16.mxu0 0
  %5142 = vmatpush1.bf16.xpose.msra.mxu0 0
  %5143 = vmatprep.subr.bf16.mxu0 0
  %5144 = vmatpush1.bf16.xpose.msra.mxu0 0
  %5145 = vmatprep.subr.bf16.mxu0 0
  %5146 = vmatpush1.bf16.xpose.msra.mxu0 0
  %5147 = vmatprep.subr.bf16.mxu0 0
  %5148 = vmatpush1.bf16.xpose.msra.mxu0 0
  %5149 = vmatprep.subr.bf16.mxu0 0
  %5150 = vmatpush1.bf16.xpose.msra.mxu0 0
  %5151 = vmatprep.subr.bf16.mxu0 0
  %5152 = vmatpush1.bf16.xpose.msra.mxu0 0
  %5153 = vmatprep.subr.bf16.mxu0 0
  %5154 = vmatpush1.bf16.xpose.msra.mxu0 0
  %5155 = vmatprep.mubr.bf16.mxu0 0
  %5156 = vmatmul.mubr.bf16.gmra.mrb[0].mxu0 %v5112
  %v5157 = vpop.f32.mrb[0].mxu0
  %v5158 = vadd.f32 0.0, %v5157
  %v5159 = vpop.f32.mrb[0].mxu0
  %v5160 = vpop.f32.mrb[0].mxu0
  %v5161 = vadd.f32 0.0, %v5160
  %v5162 = vpop.f32.mrb[0].mxu0
  %5163 = vmatprep.mubr.bf16.mxu0 0
  %5164 = vmatmul.mubr.bf16.gmra.mrb[0].mxu0 %v5115
  %v5165 = vpop.f32.mrb[0].mxu0
  %v5166 = vadd.f32 0.0, %v5165
  %v5167 = vpop.f32.mrb[0].mxu0
  %v5168 = vpop.f32.mrb[0].mxu0
  %v5169 = vpop.f32.mrb[0].mxu0
  %5170 = vdwg.mxu0
  %v5171 = vmul.f32 %v5158, 0.17677669
  %v5172 = vmul.f32 %v5161, 0.17677669
  %v5173 = vmul.f32 %v5166, 0.17677669
  %v5174 = vsel %vm182, %v5171, -1e+30
  %v5175 = vsel %vm183, %v5172, -1e+30
  %v5176 = vsel %vm191, %v5173, -1e+30
  %v5177 = vsel %vm3589, %v5174, -inf
  %5178 = vmax.xlane.f32.xlu0 %v5177
  %v5179 = vpop.xlane.xlu0 %5178
  %v5180 = vsel %vm3589, %v5175, -inf
  %5181 = vmax.xlane.f32.xlu0 %v5180
  %v5182 = vpop.xlane.xlu0 %5181
  %v5183 = vsel %vm3596, %v5176, -inf
  %5184 = vmax.xlane.f32.xlu0 %v5183
  %v5185 = vpop.xlane.xlu0 %5184
  %v5186 = vsub.f32 %v5174, %v5179
  %v5187 = vsub.f32 %v5175, %v5182
  %v5188 = vsub.f32 %v5176, %v5185
  %v5189 = vmul.f32 %v5186, 1.442695
  %v5190 = vpow.pop %v5189
  %v5191 = vmul.f32 %v5187, 1.442695
  %v5192 = vpow.pop %v5191
  %v5193 = vmul.f32 %v5188, 1.442695
  %v5194 = vpow.pop %v5193
  %v5195 = vsel %vm3589, %v5190, 0.0
  %5196 = vadd.xlane.f32.xlu0 %v5195
  %v5197 = vpop.xlane.xlu0 %5196
  %v5198 = vsel %vm3589, %v5192, 0.0
  %5199 = vadd.xlane.f32.xlu0 %v5198
  %v5200 = vpop.xlane.xlu0 %5199
  %v5201 = vsel %vm3596, %v5194, 0.0
  %5202 = vadd.xlane.f32.xlu0 %v5201
  %v5203 = vpop.xlane.xlu0 %5202
  %v5204 = vrcp.pop %v5197
  %v5205 = vmul.f32 %v5190, %v5204
  %v5206 = vrcp.pop %v5200
  %v5207 = vmul.f32 %v5192, %v5206
  %v5208 = vrcp.pop %v5203
  %v5209 = vmul.f32 %v5194, %v5208
  %v5210 = vpack.c.bf16 %v5207, %v5205
  %v5211 = vpack.c.bf16 %v5209, %v5209
  %v5212 = vpack.c.bf16 %v5097, %v5094
  %v5213 = vpack.c.bf16 %v5102, %v5102
  %v5215 = vsel %vm3589, %v5210, 0
  %v5218 = vsel %vm3589, %v5211, 0
  %v5221 = vsel %vm342, %v5213, 0
  %5223 = vmatprep.subr.bf16.mxu0 0
  %5224 = vmatpush1.bf16.msra.mxu0 %v5212
  %5225 = vmatprep.subr.bf16.mxu0 0
  %5226 = vmatpush1.bf16.msra.mxu0 %v5221
  %5227 = vmatprep.subr.bf16.mxu0 0
  %5228 = vmatpush1.bf16.msra.mxu0 0
  %5229 = vmatprep.subr.bf16.mxu0 0
  %5230 = vmatpush1.bf16.msra.mxu0 0
  %5231 = vmatprep.subr.bf16.mxu0 0
  %5232 = vmatpush1.bf16.msra.mxu0 0
  %5233 = vmatprep.subr.bf16.mxu0 0
  %5234 = vmatpush1.bf16.msra.mxu0 0
  %5235 = vmatprep.subr.bf16.mxu0 0
  %5236 = vmatpush1.bf16.msra.mxu0 0
  %5237 = vmatprep.subr.bf16.mxu0 0
  %5238 = vmatpush1.bf16.msra.mxu0 0
  %5239 = vmatprep.subr.bf16.mxu0 0
  %5240 = vmatpush1.bf16.msra.mxu0 0
  %5241 = vmatprep.subr.bf16.mxu0 0
  %5242 = vmatpush1.bf16.msra.mxu0 0
  %5243 = vmatprep.subr.bf16.mxu0 0
  %5244 = vmatpush1.bf16.msra.mxu0 0
  %5245 = vmatprep.subr.bf16.mxu0 0
  %5246 = vmatpush1.bf16.msra.mxu0 0
  %5247 = vmatprep.subr.bf16.mxu0 0
  %5248 = vmatpush1.bf16.msra.mxu0 0
  %5249 = vmatprep.subr.bf16.mxu0 0
  %5250 = vmatpush1.bf16.msra.mxu0 0
  %5251 = vmatprep.subr.bf16.mxu0 0
  %5252 = vmatpush1.bf16.msra.mxu0 0
  %5253 = vmatprep.subr.bf16.mxu0 0
  %5254 = vmatpush1.bf16.msra.mxu0 0
  %5255 = vmatprep.mubr.bf16.mxu0 0
  %5256 = vmatmul.mubr.bf16.gmra.mrb[0].mxu0 %v5215
  %v5257 = vpop.f32.mrb[0].mxu0
  %v5258 = vadd.f32 0.0, %v5257
  %v5259 = vpop.f32.mrb[0].mxu0
  %v5260 = vpop.f32.mrb[0].mxu0
  %v5261 = vadd.f32 0.0, %v5260
  %v5262 = vpop.f32.mrb[0].mxu0
  %5263 = vmatprep.mubr.bf16.mxu0 0
  %5264 = vmatmul.mubr.bf16.gmra.mrb[0].mxu0 %v5218
  %v5265 = vpop.f32.mrb[0].mxu0
  %v5266 = vadd.f32 0.0, %v5265
  %v5267 = vpop.f32.mrb[0].mxu0
  %v5268 = vpop.f32.mrb[0].mxu0
  %v5269 = vpop.f32.mrb[0].mxu0
  %5270 = vdwg.mxu0
  %v5271 = vpack.c.bf16 %v5261, %v5258
  %v5272 = vpack.c.bf16 %v5266, %v5266
  %s5273 = scalar_lea.vmem %s29, 32
  %v5274 = vld [vmem:[%s5273] sm:$0xf]
  %v5275 = vld [vmem:[%s5273 + $0x4] sm:$0xf]
  %v5276 = vld [vmem:[%s5273 + $0x8] sm:$0xf]
  %v5277 = vld [vmem:[%s5273 + $0xc] sm:$0xf]
  %s5278 = scalar_lea.vmem %s31, 12
  %v5279 = vld [vmem:[%s5278] sm:$0x7]
  %s5280 = scalar_lea.vmem %s35, 96
  %v5281 = vld [vmem:[%s5280] sm:$0xf]
  %v5282 = vld [vmem:[%s5280 + $0x4] sm:$0xf]
  %v5283 = vld [vmem:[%s5280 + $0x8] sm:$0xf]
  %v5284 = vld [vmem:[%s5280 + $0xc] sm:$0xf]
  %v5285 = vld [vmem:[%s5280 + $0x10] sm:$0xf]
  %v5286 = vld [vmem:[%s5280 + $0x14] sm:$0xf]
  %v5287 = vld [vmem:[%s5280 + $0x18] sm:$0xf]
  %v5288 = vld [vmem:[%s5280 + $0x1c] sm:$0xf]
  %v5289 = vlaneseq
  %v5290 = vshrl.u32 %v5289, 7
  %v5291 = vsub.s32 0, %v5290
  %v5292 = vrot.slane %v5279, %v5291
  %v5301 = vunpack.c.l.b16 %v5281
  %v5302 = vunpack.c.l.b16 %v5282
  %v5303 = vunpack.c.l.b16 %v5283
  %v5304 = vunpack.c.l.b16 %v5284
  %v5305 = vunpack.c.l.b16 %v5285
  %v5306 = vunpack.c.l.b16 %v5286
  %v5307 = vunpack.c.l.b16 %v5287
  %v5308 = vunpack.c.l.b16 %v5288
  %v5309 = vpack.c.b16 %v5302, %v5301
  %v5310 = vpack.c.b16 %v5304, %v5303
  %v5311 = vpack.c.b16 %v5306, %v5305
  %v5312 = vpack.c.b16 %v5308, %v5307
  %5317 = vmatprep.subr.bf16.mxu0 0
  %5318 = vmatpush1.bf16.msra.mxu0 %v5309
  %5319 = vmatprep.subr.bf16.mxu0 0
  %5320 = vmatpush1.bf16.msra.mxu0 %v5310
  %5321 = vmatprep.subr.bf16.mxu0 0
  %5322 = vmatpush1.bf16.msra.mxu0 %v5311
  %5323 = vmatprep.subr.bf16.mxu0 0
  %5324 = vmatpush1.bf16.msra.mxu0 %v5312
  %5325 = vmatprep.subr.bf16.mxu0 0
  %5326 = vmatpush1.bf16.msra.mxu0 0
  %5327 = vmatprep.subr.bf16.mxu0 0
  %5328 = vmatpush1.bf16.msra.mxu0 0
  %5329 = vmatprep.subr.bf16.mxu0 0
  %5330 = vmatpush1.bf16.msra.mxu0 0
  %5331 = vmatprep.subr.bf16.mxu0 0
  %5332 = vmatpush1.bf16.msra.mxu0 0
  %5333 = vmatprep.subr.bf16.mxu0 0
  %5334 = vmatpush1.bf16.msra.mxu0 0
  %5335 = vmatprep.subr.bf16.mxu0 0
  %5336 = vmatpush1.bf16.msra.mxu0 0
  %5337 = vmatprep.subr.bf16.mxu0 0
  %5338 = vmatpush1.bf16.msra.mxu0 0
  %5339 = vmatprep.subr.bf16.mxu0 0
  %5340 = vmatpush1.bf16.msra.mxu0 0
  %5341 = vmatprep.subr.bf16.mxu0 0
  %5342 = vmatpush1.bf16.msra.mxu0 0
  %5343 = vmatprep.subr.bf16.mxu0 0
  %5344 = vmatpush1.bf16.msra.mxu0 0
  %5345 = vmatprep.subr.bf16.mxu0 0
  %5346 = vmatpush1.bf16.msra.mxu0 0
  %5347 = vmatprep.subr.bf16.mxu0 0
  %5348 = vmatpush1.bf16.msra.mxu0 0
  %5349 = vmatprep.mubr.bf16.mxu0 0
  %5350 = vmatmul.mubr.bf16.gmra.mrb[0].mxu0 %v4884
  %v5351 = vpop.f32.mrb[0].mxu0
  %v5352 = vadd.f32 %v5292, %v5351
  %v5353 = vpop.f32.mrb[0].mxu0
  %v5354 = vpop.f32.mrb[0].mxu0
  %v5355 = vadd.f32 %v5292, %v5354
  %v5356 = vpop.f32.mrb[0].mxu0
  %5357 = vmatprep.mubr.bf16.mxu0 0
  %5358 = vmatmul.mubr.bf16.gmra.mrb[0].mxu0 %v4887
  %v5359 = vpop.f32.mrb[0].mxu0
  %v5360 = vadd.f32 %v5292, %v5359
  %v5361 = vpop.f32.mrb[0].mxu0
  %v5362 = vpop.f32.mrb[0].mxu0
  %v5363 = vpop.f32.mrb[0].mxu0
  %5364 = vdwg.mxu0
  %s5365 = scalar_lea.vmem %s33, 96
  %v5366 = vld [vmem:[%s5365] sm:$0xf]
  %v5367 = vld [vmem:[%s5365 + $0x4] sm:$0xf]
  %v5368 = vld [vmem:[%s5365 + $0x8] sm:$0xf]
  %v5369 = vld [vmem:[%s5365 + $0xc] sm:$0xf]
  %v5370 = vld [vmem:[%s5365 + $0x10] sm:$0xf]
  %v5371 = vld [vmem:[%s5365 + $0x14] sm:$0xf]
  %v5372 = vld [vmem:[%s5365 + $0x18] sm:$0xf]
  %v5373 = vld [vmem:[%s5365 + $0x1c] sm:$0xf]
  %v5374 = vlaneseq
  %v5375 = vshrl.u32 %v5374, 7
  %v5376 = vsub.s32 1, %v5375
  %v5377 = vrot.slane %v5279, %v5376
  %v5386 = vunpack.c.l.b16 %v5366
  %v5387 = vunpack.c.l.b16 %v5367
  %v5388 = vunpack.c.l.b16 %v5368
  %v5389 = vunpack.c.l.b16 %v5369
  %v5390 = vunpack.c.l.b16 %v5370
  %v5391 = vunpack.c.l.b16 %v5371
  %v5392 = vunpack.c.l.b16 %v5372
  %v5393 = vunpack.c.l.b16 %v5373
  %v5394 = vpack.c.b16 %v5387, %v5386
  %v5395 = vpack.c.b16 %v5389, %v5388
  %v5396 = vpack.c.b16 %v5391, %v5390
  %v5397 = vpack.c.b16 %v5393, %v5392
  %5402 = vmatprep.subr.bf16.mxu0 0
  %5403 = vmatpush1.bf16.msra.mxu0 %v5394
  %5404 = vmatprep.subr.bf16.mxu0 0
  %5405 = vmatpush1.bf16.msra.mxu0 %v5395
  %5406 = vmatprep.subr.bf16.mxu0 0
  %5407 = vmatpush1.bf16.msra.mxu0 %v5396
  %5408 = vmatprep.subr.bf16.mxu0 0
  %5409 = vmatpush1.bf16.msra.mxu0 %v5397
  %5410 = vmatprep.subr.bf16.mxu0 0
  %5411 = vmatpush1.bf16.msra.mxu0 0
  %5412 = vmatprep.subr.bf16.mxu0 0
  %5413 = vmatpush1.bf16.msra.mxu0 0
  %5414 = vmatprep.subr.bf16.mxu0 0
  %5415 = vmatpush1.bf16.msra.mxu0 0
  %5416 = vmatprep.subr.bf16.mxu0 0
  %5417 = vmatpush1.bf16.msra.mxu0 0
  %5418 = vmatprep.subr.bf16.mxu0 0
  %5419 = vmatpush1.bf16.msra.mxu0 0
  %5420 = vmatprep.subr.bf16.mxu0 0
  %5421 = vmatpush1.bf16.msra.mxu0 0
  %5422 = vmatprep.subr.bf16.mxu0 0
  %5423 = vmatpush1.bf16.msra.mxu0 0
  %5424 = vmatprep.subr.bf16.mxu0 0
  %5425 = vmatpush1.bf16.msra.mxu0 0
  %5426 = vmatprep.subr.bf16.mxu0 0
  %5427 = vmatpush1.bf16.msra.mxu0 0
  %5428 = vmatprep.subr.bf16.mxu0 0
  %5429 = vmatpush1.bf16.msra.mxu0 0
  %5430 = vmatprep.subr.bf16.mxu0 0
  %5431 = vmatpush1.bf16.msra.mxu0 0
  %5432 = vmatprep.subr.bf16.mxu0 0
  %5433 = vmatpush1.bf16.msra.mxu0 0
  %5434 = vmatprep.mubr.bf16.mxu0 0
  %5435 = vmatmul.mubr.bf16.gmra.mrb[0].mxu0 %v4884
  %v5436 = vpop.f32.mrb[0].mxu0
  %v5437 = vadd.f32 %v5377, %v5436
  %v5438 = vpop.f32.mrb[0].mxu0
  %v5439 = vpop.f32.mrb[0].mxu0
  %v5440 = vadd.f32 %v5377, %v5439
  %v5441 = vpop.f32.mrb[0].mxu0
  %5442 = vmatprep.mubr.bf16.mxu0 0
  %5443 = vmatmul.mubr.bf16.gmra.mrb[0].mxu0 %v4887
  %v5444 = vpop.f32.mrb[0].mxu0
  %v5445 = vadd.f32 %v5377, %v5444
  %v5446 = vpop.f32.mrb[0].mxu0
  %v5447 = vpop.f32.mrb[0].mxu0
  %v5448 = vpop.f32.mrb[0].mxu0
  %5449 = vdwg.mxu0
  %s5450 = scalar_lea.vmem %s37, 96
  %v5451 = vld [vmem:[%s5450] sm:$0xf]
  %v5452 = vld [vmem:[%s5450 + $0x4] sm:$0xf]
  %v5453 = vld [vmem:[%s5450 + $0x8] sm:$0xf]
  %v5454 = vld [vmem:[%s5450 + $0xc] sm:$0xf]
  %v5455 = vld [vmem:[%s5450 + $0x10] sm:$0xf]
  %v5456 = vld [vmem:[%s5450 + $0x14] sm:$0xf]
  %v5457 = vld [vmem:[%s5450 + $0x18] sm:$0xf]
  %v5458 = vld [vmem:[%s5450 + $0x1c] sm:$0xf]
  %v5459 = vlaneseq
  %v5460 = vshrl.u32 %v5459, 7
  %v5461 = vsub.s32 2, %v5460
  %v5462 = vrot.slane %v5279, %v5461
  %v5471 = vunpack.c.l.b16 %v5451
  %v5472 = vunpack.c.l.b16 %v5452
  %v5473 = vunpack.c.l.b16 %v5453
  %v5474 = vunpack.c.l.b16 %v5454
  %v5475 = vunpack.c.l.b16 %v5455
  %v5476 = vunpack.c.l.b16 %v5456
  %v5477 = vunpack.c.l.b16 %v5457
  %v5478 = vunpack.c.l.b16 %v5458
  %v5479 = vpack.c.b16 %v5472, %v5471
  %v5480 = vpack.c.b16 %v5474, %v5473
  %v5481 = vpack.c.b16 %v5476, %v5475
  %v5482 = vpack.c.b16 %v5478, %v5477
  %5487 = vmatprep.subr.bf16.mxu0 0
  %5488 = vmatpush1.bf16.msra.mxu0 %v5479
  %5489 = vmatprep.subr.bf16.mxu0 0
  %5490 = vmatpush1.bf16.msra.mxu0 %v5480
  %5491 = vmatprep.subr.bf16.mxu0 0
  %5492 = vmatpush1.bf16.msra.mxu0 %v5481
  %5493 = vmatprep.subr.bf16.mxu0 0
  %5494 = vmatpush1.bf16.msra.mxu0 %v5482
  %5495 = vmatprep.subr.bf16.mxu0 0
  %5496 = vmatpush1.bf16.msra.mxu0 0
  %5497 = vmatprep.subr.bf16.mxu0 0
  %5498 = vmatpush1.bf16.msra.mxu0 0
  %5499 = vmatprep.subr.bf16.mxu0 0
  %5500 = vmatpush1.bf16.msra.mxu0 0
  %5501 = vmatprep.subr.bf16.mxu0 0
  %5502 = vmatpush1.bf16.msra.mxu0 0
  %5503 = vmatprep.subr.bf16.mxu0 0
  %5504 = vmatpush1.bf16.msra.mxu0 0
  %5505 = vmatprep.subr.bf16.mxu0 0
  %5506 = vmatpush1.bf16.msra.mxu0 0
  %5507 = vmatprep.subr.bf16.mxu0 0
  %5508 = vmatpush1.bf16.msra.mxu0 0
  %5509 = vmatprep.subr.bf16.mxu0 0
  %5510 = vmatpush1.bf16.msra.mxu0 0
  %5511 = vmatprep.subr.bf16.mxu0 0
  %5512 = vmatpush1.bf16.msra.mxu0 0
  %5513 = vmatprep.subr.bf16.mxu0 0
  %5514 = vmatpush1.bf16.msra.mxu0 0
  %5515 = vmatprep.subr.bf16.mxu0 0
  %5516 = vmatpush1.bf16.msra.mxu0 0
  %5517 = vmatprep.subr.bf16.mxu0 0
  %5518 = vmatpush1.bf16.msra.mxu0 0
  %5519 = vmatprep.mubr.bf16.mxu0 0
  %5520 = vmatmul.mubr.bf16.gmra.mrb[0].mxu0 %v4884
  %v5521 = vpop.f32.mrb[0].mxu0
  %v5522 = vadd.f32 %v5462, %v5521
  %v5523 = vpop.f32.mrb[0].mxu0
  %v5524 = vpop.f32.mrb[0].mxu0
  %v5525 = vadd.f32 %v5462, %v5524
  %v5526 = vpop.f32.mrb[0].mxu0
  %5527 = vmatprep.mubr.bf16.mxu0 0
  %5528 = vmatmul.mubr.bf16.gmra.mrb[0].mxu0 %v4887
  %v5529 = vpop.f32.mrb[0].mxu0
  %v5530 = vadd.f32 %v5462, %v5529
  %v5531 = vpop.f32.mrb[0].mxu0
  %v5532 = vpop.f32.mrb[0].mxu0
  %v5533 = vpop.f32.mrb[0].mxu0
  %5534 = vdwg.mxu0
  %v5535 = vpack.c.bf16 %v5355, %v5352
  %v5536 = vpack.c.bf16 %v5360, %v5360
  %v5537 = vpack.c.bf16 %v5440, %v5437
  %v5538 = vpack.c.bf16 %v5445, %v5445
  %v5540 = vsel %vm3522, %v5535, 0
  %v5543 = vsel %vm3522, %v5536, 0
  %v5546 = vsel %vm3522, %v5537, 0
  %v5549 = vsel %vm3522, %v5538, 0
  %5551 = vmatprep.subr.bf16.mxu0 0
  %5552 = vmatpush1.bf16.xpose.msra.mxu0 %v5546
  %5553 = vmatprep.subr.bf16.mxu0 0
  %5554 = vmatpush1.bf16.xpose.msra.mxu0 %v5549
  %5555 = vmatprep.subr.bf16.mxu0 0
  %5556 = vmatpush1.bf16.xpose.msra.mxu0 0
  %5557 = vmatprep.subr.bf16.mxu0 0
  %5558 = vmatpush1.bf16.xpose.msra.mxu0 0
  %5559 = vmatprep.subr.bf16.mxu0 0
  %5560 = vmatpush1.bf16.xpose.msra.mxu0 0
  %5561 = vmatprep.subr.bf16.mxu0 0
  %5562 = vmatpush1.bf16.xpose.msra.mxu0 0
  %5563 = vmatprep.subr.bf16.mxu0 0
  %5564 = vmatpush1.bf16.xpose.msra.mxu0 0
  %5565 = vmatprep.subr.bf16.mxu0 0
  %5566 = vmatpush1.bf16.xpose.msra.mxu0 0
  %5567 = vmatprep.subr.bf16.mxu0 0
  %5568 = vmatpush1.bf16.xpose.msra.mxu0 0
  %5569 = vmatprep.subr.bf16.mxu0 0
  %5570 = vmatpush1.bf16.xpose.msra.mxu0 0
  %5571 = vmatprep.subr.bf16.mxu0 0
  %5572 = vmatpush1.bf16.xpose.msra.mxu0 0
  %5573 = vmatprep.subr.bf16.mxu0 0
  %5574 = vmatpush1.bf16.xpose.msra.mxu0 0
  %5575 = vmatprep.subr.bf16.mxu0 0
  %5576 = vmatpush1.bf16.xpose.msra.mxu0 0
  %5577 = vmatprep.subr.bf16.mxu0 0
  %5578 = vmatpush1.bf16.xpose.msra.mxu0 0
  %5579 = vmatprep.subr.bf16.mxu0 0
  %5580 = vmatpush1.bf16.xpose.msra.mxu0 0
  %5581 = vmatprep.subr.bf16.mxu0 0
  %5582 = vmatpush1.bf16.xpose.msra.mxu0 0
  %5583 = vmatprep.mubr.bf16.mxu0 0
  %5584 = vmatmul.mubr.bf16.gmra.mrb[0].mxu0 %v5540
  %v5585 = vpop.f32.mrb[0].mxu0
  %v5586 = vadd.f32 0.0, %v5585
  %v5587 = vpop.f32.mrb[0].mxu0
  %v5588 = vpop.f32.mrb[0].mxu0
  %v5589 = vadd.f32 0.0, %v5588
  %v5590 = vpop.f32.mrb[0].mxu0
  %5591 = vmatprep.mubr.bf16.mxu0 0
  %5592 = vmatmul.mubr.bf16.gmra.mrb[0].mxu0 %v5543
  %v5593 = vpop.f32.mrb[0].mxu0
  %v5594 = vadd.f32 0.0, %v5593
  %v5595 = vpop.f32.mrb[0].mxu0
  %v5596 = vpop.f32.mrb[0].mxu0
  %v5597 = vpop.f32.mrb[0].mxu0
  %5598 = vdwg.mxu0
  %v5599 = vmul.f32 %v5586, 0.17677669
  %v5600 = vmul.f32 %v5589, 0.17677669
  %v5601 = vmul.f32 %v5594, 0.17677669
  %v5602 = vsel %vm182, %v5599, -1e+30
  %v5603 = vsel %vm183, %v5600, -1e+30
  %v5604 = vsel %vm191, %v5601, -1e+30
  %v5605 = vsel %vm3589, %v5602, -inf
  %5606 = vmax.xlane.f32.xlu0 %v5605
  %v5607 = vpop.xlane.xlu0 %5606
  %v5608 = vsel %vm3589, %v5603, -inf
  %5609 = vmax.xlane.f32.xlu0 %v5608
  %v5610 = vpop.xlane.xlu0 %5609
  %v5611 = vsel %vm3596, %v5604, -inf
  %5612 = vmax.xlane.f32.xlu0 %v5611
  %v5613 = vpop.xlane.xlu0 %5612
  %v5614 = vsub.f32 %v5602, %v5607
  %v5615 = vsub.f32 %v5603, %v5610
  %v5616 = vsub.f32 %v5604, %v5613
  %v5617 = vmul.f32 %v5614, 1.442695
  %v5618 = vpow.pop %v5617
  %v5619 = vmul.f32 %v5615, 1.442695
  %v5620 = vpow.pop %v5619
  %v5621 = vmul.f32 %v5616, 1.442695
  %v5622 = vpow.pop %v5621
  %v5623 = vsel %vm3589, %v5618, 0.0
  %5624 = vadd.xlane.f32.xlu0 %v5623
  %v5625 = vpop.xlane.xlu0 %5624
  %v5626 = vsel %vm3589, %v5620, 0.0
  %5627 = vadd.xlane.f32.xlu0 %v5626
  %v5628 = vpop.xlane.xlu0 %5627
  %v5629 = vsel %vm3596, %v5622, 0.0
  %5630 = vadd.xlane.f32.xlu0 %v5629
  %v5631 = vpop.xlane.xlu0 %5630
  %v5632 = vrcp.pop %v5625
  %v5633 = vmul.f32 %v5618, %v5632
  %v5634 = vrcp.pop %v5628
  %v5635 = vmul.f32 %v5620, %v5634
  %v5636 = vrcp.pop %v5631
  %v5637 = vmul.f32 %v5622, %v5636
  %v5638 = vpack.c.bf16 %v5635, %v5633
  %v5639 = vpack.c.bf16 %v5637, %v5637
  %v5640 = vpack.c.bf16 %v5525, %v5522
  %v5641 = vpack.c.bf16 %v5530, %v5530
  %v5643 = vsel %vm3589, %v5638, 0
  %v5646 = vsel %vm3589, %v5639, 0
  %v5649 = vsel %vm342, %v5641, 0
  %5651 = vmatprep.subr.bf16.mxu0 0
  %5652 = vmatpush1.bf16.msra.mxu0 %v5640
  %5653 = vmatprep.subr.bf16.mxu0 0
  %5654 = vmatpush1.bf16.msra.mxu0 %v5649
  %5655 = vmatprep.subr.bf16.mxu0 0
  %5656 = vmatpush1.bf16.msra.mxu0 0
  %5657 = vmatprep.subr.bf16.mxu0 0
  %5658 = vmatpush1.bf16.msra.mxu0 0
  %5659 = vmatprep.subr.bf16.mxu0 0
  %5660 = vmatpush1.bf16.msra.mxu0 0
  %5661 = vmatprep.subr.bf16.mxu0 0
  %5662 = vmatpush1.bf16.msra.mxu0 0
  %5663 = vmatprep.subr.bf16.mxu0 0
  %5664 = vmatpush1.bf16.msra.mxu0 0
  %5665 = vmatprep.subr.bf16.mxu0 0
  %5666 = vmatpush1.bf16.msra.mxu0 0
  %5667 = vmatprep.subr.bf16.mxu0 0
  %5668 = vmatpush1.bf16.msra.mxu0 0
  %5669 = vmatprep.subr.bf16.mxu0 0
  %5670 = vmatpush1.bf16.msra.mxu0 0
  %5671 = vmatprep.subr.bf16.mxu0 0
  %5672 = vmatpush1.bf16.msra.mxu0 0
  %5673 = vmatprep.subr.bf16.mxu0 0
  %5674 = vmatpush1.bf16.msra.mxu0 0
  %5675 = vmatprep.subr.bf16.mxu0 0
  %5676 = vmatpush1.bf16.msra.mxu0 0
  %5677 = vmatprep.subr.bf16.mxu0 0
  %5678 = vmatpush1.bf16.msra.mxu0 0
  %5679 = vmatprep.subr.bf16.mxu0 0
  %5680 = vmatpush1.bf16.msra.mxu0 0
  %5681 = vmatprep.subr.bf16.mxu0 0
  %5682 = vmatpush1.bf16.msra.mxu0 0
  %5683 = vmatprep.mubr.bf16.mxu0 0
  %5684 = vmatmul.mubr.bf16.gmra.mrb[0].mxu0 %v5643
  %v5685 = vpop.f32.mrb[0].mxu0
  %v5686 = vadd.f32 0.0, %v5685
  %v5687 = vpop.f32.mrb[0].mxu0
  %v5688 = vpop.f32.mrb[0].mxu0
  %v5689 = vadd.f32 0.0, %v5688
  %v5690 = vpop.f32.mrb[0].mxu0
  %5691 = vmatprep.mubr.bf16.mxu0 0
  %5692 = vmatmul.mubr.bf16.gmra.mrb[0].mxu0 %v5646
  %v5693 = vpop.f32.mrb[0].mxu0
  %v5694 = vadd.f32 0.0, %v5693
  %v5695 = vpop.f32.mrb[0].mxu0
  %v5696 = vpop.f32.mrb[0].mxu0
  %v5697 = vpop.f32.mrb[0].mxu0
  %5698 = vdwg.mxu0
  %v5699 = vpack.c.bf16 %v5689, %v5686
  %v5700 = vpack.c.bf16 %v5694, %v5694
  %s5701 = scalar_lea.vmem %s29, 48
  %v5702 = vld [vmem:[%s5701] sm:$0xf]
  %v5703 = vld [vmem:[%s5701 + $0x4] sm:$0xf]
  %v5704 = vld [vmem:[%s5701 + $0x8] sm:$0xf]
  %v5705 = vld [vmem:[%s5701 + $0xc] sm:$0xf]
  %v5710 = vunpack.c.l.b16 %v5702
  %v5711 = vunpack.c.l.b16 %v5703
  %v5712 = vunpack.c.l.b16 %v5704
  %v5713 = vunpack.c.l.b16 %v5705
  %v5714 = vpack.c.b16 %v5711, %v5710
  %v5715 = vpack.c.b16 %v5713, %v5712
  %v5719 = vsel %vm3522, %v5699, 0
  %v5722 = vsel %vm3522, %v5700, 0
  %5724 = vmatprep.subr.bf16.mxu0 0
  %5725 = vmatpush1.bf16.msra.mxu0 %v5714
  %5726 = vmatprep.subr.bf16.mxu0 0
  %5727 = vmatpush1.bf16.msra.mxu0 %v5715
  %5728 = vmatprep.subr.bf16.mxu0 0
  %5729 = vmatpush1.bf16.msra.mxu0 0
  %5730 = vmatprep.subr.bf16.mxu0 0
  %5731 = vmatpush1.bf16.msra.mxu0 0
  %5732 = vmatprep.subr.bf16.mxu0 0
  %5733 = vmatpush1.bf16.msra.mxu0 0
  %5734 = vmatprep.subr.bf16.mxu0 0
  %5735 = vmatpush1.bf16.msra.mxu0 0
  %5736 = vmatprep.subr.bf16.mxu0 0
  %5737 = vmatpush1.bf16.msra.mxu0 0
  %5738 = vmatprep.subr.bf16.mxu0 0
  %5739 = vmatpush1.bf16.msra.mxu0 0
  %5740 = vmatprep.subr.bf16.mxu0 0
  %5741 = vmatpush1.bf16.msra.mxu0 0
  %5742 = vmatprep.subr.bf16.mxu0 0
  %5743 = vmatpush1.bf16.msra.mxu0 0
  %5744 = vmatprep.subr.bf16.mxu0 0
  %5745 = vmatpush1.bf16.msra.mxu0 0
  %5746 = vmatprep.subr.bf16.mxu0 0
  %5747 = vmatpush1.bf16.msra.mxu0 0
  %5748 = vmatprep.subr.bf16.mxu0 0
  %5749 = vmatpush1.bf16.msra.mxu0 0
  %5750 = vmatprep.subr.bf16.mxu0 0
  %5751 = vmatpush1.bf16.msra.mxu0 0
  %5752 = vmatprep.subr.bf16.mxu0 0
  %5753 = vmatpush1.bf16.msra.mxu0 0
  %5754 = vmatprep.subr.bf16.mxu0 0
  %5755 = vmatpush1.bf16.msra.mxu0 0
  %5756 = vmatprep.mubr.bf16.mxu0 0
  %5757 = vmatmul.mubr.bf16.gmra.mrb[0].mxu0 %v5719
  %v5758 = vpop.f32.mrb[0].mxu0
  %v5759 = vadd.f32 0.0, %v5758
  %v5760 = vpop.f32.mrb[0].mxu0
  %v5761 = vpop.f32.mrb[0].mxu0
  %v5762 = vadd.f32 0.0, %v5761
  %v5763 = vpop.f32.mrb[0].mxu0
  %5764 = vmatprep.mubr.bf16.mxu0 0
  %5765 = vmatmul.mubr.bf16.gmra.mrb[0].mxu0 %v5722
  %v5766 = vpop.f32.mrb[0].mxu0
  %v5767 = vadd.f32 0.0, %v5766
  %v5768 = vpop.f32.mrb[0].mxu0
  %v5769 = vpop.f32.mrb[0].mxu0
  %v5770 = vpop.f32.mrb[0].mxu0
  %5771 = vdwg.mxu0
  %v5776 = vunpack.c.l.b16 %v5274
  %v5777 = vunpack.c.l.b16 %v5275
  %v5778 = vunpack.c.l.b16 %v5276
  %v5779 = vunpack.c.l.b16 %v5277
  %v5780 = vpack.c.b16 %v5777, %v5776
  %v5781 = vpack.c.b16 %v5779, %v5778
  %v5785 = vsel %vm3522, %v5271, 0
  %v5788 = vsel %vm3522, %v5272, 0
  %5790 = vmatprep.subr.bf16.mxu0 0
  %5791 = vmatpush1.bf16.msra.mxu0 %v5780
  %5792 = vmatprep.subr.bf16.mxu0 0
  %5793 = vmatpush1.bf16.msra.mxu0 %v5781
  %5794 = vmatprep.subr.bf16.mxu0 0
  %5795 = vmatpush1.bf16.msra.mxu0 0
  %5796 = vmatprep.subr.bf16.mxu0 0
  %5797 = vmatpush1.bf16.msra.mxu0 0
  %5798 = vmatprep.subr.bf16.mxu0 0
  %5799 = vmatpush1.bf16.msra.mxu0 0
  %5800 = vmatprep.subr.bf16.mxu0 0
  %5801 = vmatpush1.bf16.msra.mxu0 0
  %5802 = vmatprep.subr.bf16.mxu0 0
  %5803 = vmatpush1.bf16.msra.mxu0 0
  %5804 = vmatprep.subr.bf16.mxu0 0
  %5805 = vmatpush1.bf16.msra.mxu0 0
  %5806 = vmatprep.subr.bf16.mxu0 0
  %5807 = vmatpush1.bf16.msra.mxu0 0
  %5808 = vmatprep.subr.bf16.mxu0 0
  %5809 = vmatpush1.bf16.msra.mxu0 0
  %5810 = vmatprep.subr.bf16.mxu0 0
  %5811 = vmatpush1.bf16.msra.mxu0 0
  %5812 = vmatprep.subr.bf16.mxu0 0
  %5813 = vmatpush1.bf16.msra.mxu0 0
  %5814 = vmatprep.subr.bf16.mxu0 0
  %5815 = vmatpush1.bf16.msra.mxu0 0
  %5816 = vmatprep.subr.bf16.mxu0 0
  %5817 = vmatpush1.bf16.msra.mxu0 0
  %5818 = vmatprep.subr.bf16.mxu0 0
  %5819 = vmatpush1.bf16.msra.mxu0 0
  %5820 = vmatprep.subr.bf16.mxu0 0
  %5821 = vmatpush1.bf16.msra.mxu0 0
  %5822 = vmatprep.mubr.bf16.mxu0 0
  %5823 = vmatmul.mubr.bf16.gmra.mrb[0].mxu0 %v5785
  %v5824 = vpop.f32.mrb[0].mxu0
  %v5825 = vadd.f32 %v5759, %v5824
  %v5826 = vpop.f32.mrb[0].mxu0
  %v5827 = vpop.f32.mrb[0].mxu0
  %v5828 = vadd.f32 %v5762, %v5827
  %v5829 = vpop.f32.mrb[0].mxu0
  %5830 = vmatprep.mubr.bf16.mxu0 0
  %5831 = vmatmul.mubr.bf16.gmra.mrb[0].mxu0 %v5788
  %v5832 = vpop.f32.mrb[0].mxu0
  %v5833 = vadd.f32 %v5767, %v5832
  %v5834 = vpop.f32.mrb[0].mxu0
  %v5835 = vpop.f32.mrb[0].mxu0
  %v5836 = vpop.f32.mrb[0].mxu0
  %5837 = vdwg.mxu0
  %v5838 = vadd.f32 %v4782, %v5825
  %v5839 = vadd.f32 %v4783, %v5828
  %v5840 = vadd.f32 %v4784, %v5833
  %v5841 = vlaneseq
  %v5842 = vshrl.u32 %v5841, 7
  %v5843 = vsub.s32 0, %v5842
  %v5844 = vrot.slane %v4788, %v5843
  %v5845 = vadd.f32 %v5838, %v5844
  %v5846 = vadd.f32 %v5839, %v5844
  %v5847 = vadd.f32 %v5840, %v5844
  %v5848 = vsel %vm232, %v5845, 0.0
  %5849 = vadd.xlane.f32.xlu0 %v5848
  %v5850 = vpop.xlane.xlu0 %5849
  %v5851 = vsel %vm232, %v5846, 0.0
  %5852 = vadd.xlane.f32.xlu0 %v5851
  %v5853 = vpop.xlane.xlu0 %5852
  %v5854 = vsel %vm3208, %v5847, 0.0
  %5855 = vadd.xlane.f32.xlu0 %v5854
  %v5856 = vpop.xlane.xlu0 %5855
  %v5857 = vmul.f32 %v5850, %v3212
  %v5858 = vmul.f32 %v5853, %v3212
  %v5859 = vmul.f32 %v5856, %v3212
  %v5860 = vsub.f32 %v5845, %v5857
  %v5861 = vsub.f32 %v5846, %v5858
  %v5862 = vsub.f32 %v5847, %v5859
  %v5863 = vmul.f32 %v5860, %v5860
  %v5864 = vmul.f32 %v5861, %v5861
  %v5865 = vmul.f32 %v5862, %v5862
  %v5866 = vsel %vm232, %v5863, 0.0
  %5867 = vadd.xlane.f32.xlu0 %v5866
  %v5868 = vpop.xlane.xlu0 %5867
  %v5869 = vsel %vm232, %v5864, 0.0
  %5870 = vadd.xlane.f32.xlu0 %v5869
  %v5871 = vpop.xlane.xlu0 %5870
  %v5872 = vsel %vm3208, %v5865, 0.0
  %5873 = vadd.xlane.f32.xlu0 %v5872
  %v5874 = vpop.xlane.xlu0 %5873
  %v5875 = vmul.f32 %v5868, %v3212
  %v5876 = vmul.f32 %v5871, %v3212
  %v5877 = vmul.f32 %v5874, %v3212
  %v5878 = vadd.f32 %v5875, 1e-05
  %v5879 = vadd.f32 %v5876, 1e-05
  %v5880 = vadd.f32 %v5877, 1e-05
  %v5881 = vrsqrt.pop %v5878
  %v5882 = vrsqrt.pop %v5879
  %v5883 = vrsqrt.pop %v5880
  %v5884 = vmul.f32 %v5860, %v5881
  %v5885 = vmul.f32 %v5861, %v5882
  %v5886 = vmul.f32 %v5862, %v5883
  %v5887 = vlaneseq
  %v5888 = vshrl.u32 %v5887, 7
  %v5889 = vsub.s32 2, %v5888
  %v5890 = vrot.slane %v4786, %v5889
  %v5891 = vmul.f32 %v5884, %v5890
  %v5892 = vmul.f32 %v5885, %v5890
  %v5893 = vmul.f32 %v5886, %v5890
  %v5894 = vlaneseq
  %v5895 = vshrl.u32 %v5894, 7
  %v5896 = vsub.s32 3, %v5895
  %v5897 = vrot.slane %v4786, %v5896
  %v5898 = vadd.f32 %v5891, %v5897
  %v5899 = vadd.f32 %v5892, %v5897
  %v5900 = vadd.f32 %v5893, %v5897
  %v5901 = vpack.c.bf16 %v5899, %v5898
  %v5902 = vpack.c.bf16 %v5900, %v5900
  %s5903 = scalar_lea.vmem %s25, 64
  %v5904 = vld [vmem:[%s5903] sm:$0xff]
  %v5905 = vld [vmem:[%s5903 + $0x8] sm:$0xff]
  %v5906 = vld [vmem:[%s5903 + $0x10] sm:$0xff]
  %v5907 = vld [vmem:[%s5903 + $0x18] sm:$0xff]
  %v5908 = vld [vmem:[%s5903 + $0x20] sm:$0xff]
  %v5909 = vld [vmem:[%s5903 + $0x28] sm:$0xff]
  %v5910 = vld [vmem:[%s5903 + $0x30] sm:$0xff]
  %v5911 = vld [vmem:[%s5903 + $0x38] sm:$0xff]
  %s5912 = scalar_lea.vmem %s23, 64
  %v5913 = vld [vmem:[%s5912] sm:$0xff]
  %v5914 = vld [vmem:[%s5912 + $0x8] sm:$0xff]
  %v5915 = vld [vmem:[%s5912 + $0x10] sm:$0xff]
  %v5916 = vld [vmem:[%s5912 + $0x18] sm:$0xff]
  %v5917 = vld [vmem:[%s5912 + $0x20] sm:$0xff]
  %v5918 = vld [vmem:[%s5912 + $0x28] sm:$0xff]
  %v5919 = vld [vmem:[%s5912 + $0x30] sm:$0xff]
  %v5920 = vld [vmem:[%s5912 + $0x38] sm:$0xff]
  %v5929 = vunpack.c.l.b16 %v5913
  %v5930 = vunpack.c.h.b16 %v5913
  %v5931 = vunpack.c.l.b16 %v5914
  %v5932 = vunpack.c.h.b16 %v5914
  %v5933 = vunpack.c.l.b16 %v5915
  %v5934 = vunpack.c.h.b16 %v5915
  %v5935 = vunpack.c.l.b16 %v5916
  %v5936 = vunpack.c.h.b16 %v5916
  %v5937 = vunpack.c.l.b16 %v5917
  %v5938 = vunpack.c.h.b16 %v5917
  %v5939 = vunpack.c.l.b16 %v5918
  %v5940 = vunpack.c.h.b16 %v5918
  %v5941 = vunpack.c.l.b16 %v5919
  %v5942 = vunpack.c.h.b16 %v5919
  %v5943 = vunpack.c.l.b16 %v5920
  %v5944 = vunpack.c.h.b16 %v5920
  %v5945 = vpack.c.b16 %v5931, %v5929
  %v5946 = vpack.c.b16 %v5932, %v5930
  %v5947 = vpack.c.b16 %v5935, %v5933
  %v5948 = vpack.c.b16 %v5936, %v5934
  %v5949 = vpack.c.b16 %v5939, %v5937
  %v5950 = vpack.c.b16 %v5940, %v5938
  %v5951 = vpack.c.b16 %v5943, %v5941
  %v5952 = vpack.c.b16 %v5944, %v5942
  %5961 = vmatprep.subr.bf16.mxu0 %v5946
  %5962 = vmatpush1.bf16.msra.mxu0 %v5945
  %5963 = vmatprep.subr.bf16.mxu0 %v5948
  %5964 = vmatpush1.bf16.msra.mxu0 %v5947
  %5965 = vmatprep.subr.bf16.mxu0 %v5950
  %5966 = vmatpush1.bf16.msra.mxu0 %v5949
  %5967 = vmatprep.subr.bf16.mxu0 %v5952
  %5968 = vmatpush1.bf16.msra.mxu0 %v5951
  %5969 = vmatprep.subr.bf16.mxu0 0
  %5970 = vmatpush1.bf16.msra.mxu0 0
  %5971 = vmatprep.subr.bf16.mxu0 0
  %5972 = vmatpush1.bf16.msra.mxu0 0
  %5973 = vmatprep.subr.bf16.mxu0 0
  %5974 = vmatpush1.bf16.msra.mxu0 0
  %5975 = vmatprep.subr.bf16.mxu0 0
  %5976 = vmatpush1.bf16.msra.mxu0 0
  %5977 = vmatprep.subr.bf16.mxu0 0
  %5978 = vmatpush1.bf16.msra.mxu0 0
  %5979 = vmatprep.subr.bf16.mxu0 0
  %5980 = vmatpush1.bf16.msra.mxu0 0
  %5981 = vmatprep.subr.bf16.mxu0 0
  %5982 = vmatpush1.bf16.msra.mxu0 0
  %5983 = vmatprep.subr.bf16.mxu0 0
  %5984 = vmatpush1.bf16.msra.mxu0 0
  %5985 = vmatprep.subr.bf16.mxu0 0
  %5986 = vmatpush1.bf16.msra.mxu0 0
  %5987 = vmatprep.subr.bf16.mxu0 0
  %5988 = vmatpush1.bf16.msra.mxu0 0
  %5989 = vmatprep.subr.bf16.mxu0 0
  %5990 = vmatpush1.bf16.msra.mxu0 0
  %5991 = vmatprep.subr.bf16.mxu0 0
  %5992 = vmatpush1.bf16.msra.mxu0 0
  %5993 = vmatprep.mubr.bf16.mxu0 0
  %5994 = vmatmul.mubr.bf16.gmra.mrb[0].mxu0 %v4373
  %v5995 = vpop.f32.mrb[0].mxu0
  %v5996 = vadd.f32 0.0, %v5995
  %v5997 = vpop.f32.mrb[0].mxu0
  %v5998 = vadd.f32 0.0, %v5997
  %v5999 = vpop.f32.mrb[0].mxu0
  %v6000 = vadd.f32 0.0, %v5999
  %v6001 = vpop.f32.mrb[0].mxu0
  %v6002 = vadd.f32 0.0, %v6001
  %6003 = vmatprep.mubr.bf16.mxu0 0
  %6004 = vmatmul.mubr.bf16.gmra.mrb[0].mxu0 %v4376
  %v6005 = vpop.f32.mrb[0].mxu0
  %v6006 = vadd.f32 0.0, %v6005
  %v6007 = vpop.f32.mrb[0].mxu0
  %v6008 = vadd.f32 0.0, %v6007
  %v6009 = vpop.f32.mrb[0].mxu0
  %v6010 = vpop.f32.mrb[0].mxu0
  %6011 = vdwg.mxu0
  %v6020 = vunpack.c.l.b16 %v5904
  %v6021 = vunpack.c.h.b16 %v5904
  %v6022 = vunpack.c.l.b16 %v5905
  %v6023 = vunpack.c.h.b16 %v5905
  %v6024 = vunpack.c.l.b16 %v5906
  %v6025 = vunpack.c.h.b16 %v5906
  %v6026 = vunpack.c.l.b16 %v5907
  %v6027 = vunpack.c.h.b16 %v5907
  %v6028 = vunpack.c.l.b16 %v5908
  %v6029 = vunpack.c.h.b16 %v5908
  %v6030 = vunpack.c.l.b16 %v5909
  %v6031 = vunpack.c.h.b16 %v5909
  %v6032 = vunpack.c.l.b16 %v5910
  %v6033 = vunpack.c.h.b16 %v5910
  %v6034 = vunpack.c.l.b16 %v5911
  %v6035 = vunpack.c.h.b16 %v5911
  %v6036 = vpack.c.b16 %v6022, %v6020
  %v6037 = vpack.c.b16 %v6023, %v6021
  %v6038 = vpack.c.b16 %v6026, %v6024
  %v6039 = vpack.c.b16 %v6027, %v6025
  %v6040 = vpack.c.b16 %v6030, %v6028
  %v6041 = vpack.c.b16 %v6031, %v6029
  %v6042 = vpack.c.b16 %v6034, %v6032
  %v6043 = vpack.c.b16 %v6035, %v6033
  %v6053 = vsel %vm232, %v5901, 0
  %v6056 = vsel %vm232, %v5902, 0
  %6058 = vmatprep.subr.bf16.mxu0 %v6037
  %6059 = vmatpush1.bf16.msra.mxu0 %v6036
  %6060 = vmatprep.subr.bf16.mxu0 %v6039
  %6061 = vmatpush1.bf16.msra.mxu0 %v6038
  %6062 = vmatprep.subr.bf16.mxu0 %v6041
  %6063 = vmatpush1.bf16.msra.mxu0 %v6040
  %6064 = vmatprep.subr.bf16.mxu0 %v6043
  %6065 = vmatpush1.bf16.msra.mxu0 %v6042
  %6066 = vmatprep.subr.bf16.mxu0 0
  %6067 = vmatpush1.bf16.msra.mxu0 0
  %6068 = vmatprep.subr.bf16.mxu0 0
  %6069 = vmatpush1.bf16.msra.mxu0 0
  %6070 = vmatprep.subr.bf16.mxu0 0
  %6071 = vmatpush1.bf16.msra.mxu0 0
  %6072 = vmatprep.subr.bf16.mxu0 0
  %6073 = vmatpush1.bf16.msra.mxu0 0
  %6074 = vmatprep.subr.bf16.mxu0 0
  %6075 = vmatpush1.bf16.msra.mxu0 0
  %6076 = vmatprep.subr.bf16.mxu0 0
  %6077 = vmatpush1.bf16.msra.mxu0 0
  %6078 = vmatprep.subr.bf16.mxu0 0
  %6079 = vmatpush1.bf16.msra.mxu0 0
  %6080 = vmatprep.subr.bf16.mxu0 0
  %6081 = vmatpush1.bf16.msra.mxu0 0
  %6082 = vmatprep.subr.bf16.mxu0 0
  %6083 = vmatpush1.bf16.msra.mxu0 0
  %6084 = vmatprep.subr.bf16.mxu0 0
  %6085 = vmatpush1.bf16.msra.mxu0 0
  %6086 = vmatprep.subr.bf16.mxu0 0
  %6087 = vmatpush1.bf16.msra.mxu0 0
  %6088 = vmatprep.subr.bf16.mxu0 0
  %6089 = vmatpush1.bf16.msra.mxu0 0
  %6090 = vmatprep.mubr.bf16.mxu0 0
  %6091 = vmatmul.mubr.bf16.gmra.mrb[0].mxu0 %v6053
  %v6092 = vpop.f32.mrb[0].mxu0
  %v6093 = vadd.f32 %v5996, %v6092
  %v6094 = vpop.f32.mrb[0].mxu0
  %v6095 = vadd.f32 %v5998, %v6094
  %v6096 = vpop.f32.mrb[0].mxu0
  %v6097 = vadd.f32 %v6000, %v6096
  %v6098 = vpop.f32.mrb[0].mxu0
  %v6099 = vadd.f32 %v6002, %v6098
  %6100 = vmatprep.mubr.bf16.mxu0 0
  %6101 = vmatmul.mubr.bf16.gmra.mrb[0].mxu0 %v6056
  %v6102 = vpop.f32.mrb[0].mxu0
  %v6103 = vadd.f32 %v6006, %v6102
  %v6104 = vpop.f32.mrb[0].mxu0
  %v6105 = vadd.f32 %v6008, %v6104
  %v6106 = vpop.f32.mrb[0].mxu0
  %v6107 = vpop.f32.mrb[0].mxu0
  %6108 = vdwg.mxu0
  %s6109 = scalar_lea.vmem %s21, 2
  %v6110 = vld [vmem:[%s6109] sm:$0x3]
  %v6112 = vlaneseq
  %v6113 = vshrl.u32 %v6112, 7
  %v6114 = vsub.s32 0, %v6113
  %v6115 = vrot.slane %v6110, %v6114
  %v6116 = vlaneseq
  %v6117 = vshrl.u32 %v6116, 7
  %v6118 = vsub.s32 1, %v6117
  %v6119 = vrot.slane %v6110, %v6118
  %v6122 = vadd.f32 %v6093, %v6115
  %v6123 = vadd.f32 %v6095, %v6119
  %v6124 = vadd.f32 %v6097, %v6115
  %v6125 = vadd.f32 %v6099, %v6119
  %v6126 = vadd.f32 %v6103, %v6115
  %v6127 = vadd.f32 %v6105, %v6119
  %v6128 = vmul.f32 %v6122, %v6122
  %v6129 = vmul.f32 %v6123, %v6123
  %v6130 = vmul.f32 %v6124, %v6124
  %v6131 = vmul.f32 %v6125, %v6125
  %v6132 = vmul.f32 %v6126, %v6126
  %v6133 = vmul.f32 %v6127, %v6127
  %v6134 = vmul.f32 %v6122, %v6128
  %v6135 = vmul.f32 %v6123, %v6129
  %v6136 = vmul.f32 %v6124, %v6130
  %v6137 = vmul.f32 %v6125, %v6131
  %v6138 = vmul.f32 %v6126, %v6132
  %v6139 = vmul.f32 %v6127, %v6133
  %v6140 = vmul.f32 %v6134, 0.044715
  %v6141 = vmul.f32 %v6135, 0.044715
  %v6142 = vmul.f32 %v6136, 0.044715
  %v6143 = vmul.f32 %v6137, 0.044715
  %v6144 = vmul.f32 %v6138, 0.044715
  %v6145 = vmul.f32 %v6139, 0.044715
  %v6146 = vadd.f32 %v6122, %v6140
  %v6147 = vadd.f32 %v6123, %v6141
  %v6148 = vadd.f32 %v6124, %v6142
  %v6149 = vadd.f32 %v6125, %v6143
  %v6150 = vadd.f32 %v6126, %v6144
  %v6151 = vadd.f32 %v6127, %v6145
  %v6152 = vmul.f32 %v6146, 0.7978846
  %v6153 = vmul.f32 %v6147, 0.7978846
  %v6154 = vmul.f32 %v6148, 0.7978846
  %v6155 = vmul.f32 %v6149, 0.7978846
  %v6156 = vmul.f32 %v6150, 0.7978846
  %v6157 = vmul.f32 %v6151, 0.7978846
  %v6158 = vtanh.pop %v6152
  %v6159 = vtanh.pop %v6153
  %v6160 = vtanh.pop %v6154
  %v6161 = vtanh.pop %v6155
  %v6162 = vtanh.pop %v6156
  %v6163 = vtanh.pop %v6157
  %v6164 = vadd.f32 %v6158, 1.0
  %v6165 = vadd.f32 %v6159, 1.0
  %v6166 = vadd.f32 %v6160, 1.0
  %v6167 = vadd.f32 %v6161, 1.0
  %v6168 = vadd.f32 %v6162, 1.0
  %v6169 = vadd.f32 %v6163, 1.0
  %v6170 = vmul.f32 %v6164, 0.5
  %v6171 = vmul.f32 %v6165, 0.5
  %v6172 = vmul.f32 %v6166, 0.5
  %v6173 = vmul.f32 %v6167, 0.5
  %v6174 = vmul.f32 %v6168, 0.5
  %v6175 = vmul.f32 %v6169, 0.5
  %v6176 = vmul.f32 %v6122, %v6170
  %v6177 = vmul.f32 %v6123, %v6171
  %v6178 = vmul.f32 %v6124, %v6172
  %v6179 = vmul.f32 %v6125, %v6173
  %v6180 = vmul.f32 %v6126, %v6174
  %v6181 = vmul.f32 %v6127, %v6175
  %v6182 = vpack.c.bf16 %v6178, %v6176
  %v6183 = vpack.c.bf16 %v6179, %v6177
  %v6184 = vpack.c.bf16 %v6180, %v6180
  %v6185 = vpack.c.bf16 %v6181, %v6181
  %s6186 = scalar_lea.vmem %s27, 128
  %v6187 = vld [vmem:[%s6186] sm:$0xf]
  %v6188 = vld [vmem:[%s6186 + $0x4] sm:$0xf]
  %v6189 = vld [vmem:[%s6186 + $0x8] sm:$0xf]
  %v6190 = vld [vmem:[%s6186 + $0xc] sm:$0xf]
  %v6191 = vld [vmem:[%s6186 + $0x10] sm:$0xf]
  %v6192 = vld [vmem:[%s6186 + $0x14] sm:$0xf]
  %v6193 = vld [vmem:[%s6186 + $0x18] sm:$0xf]
  %v6194 = vld [vmem:[%s6186 + $0x1c] sm:$0xf]
  %v6195 = vld [vmem:[%s6186 + $0x20] sm:$0xf]
  %v6196 = vld [vmem:[%s6186 + $0x24] sm:$0xf]
  %v6197 = vld [vmem:[%s6186 + $0x28] sm:$0xf]
  %v6198 = vld [vmem:[%s6186 + $0x2c] sm:$0xf]
  %v6199 = vld [vmem:[%s6186 + $0x30] sm:$0xf]
  %v6200 = vld [vmem:[%s6186 + $0x34] sm:$0xf]
  %v6201 = vld [vmem:[%s6186 + $0x38] sm:$0xf]
  %v6202 = vld [vmem:[%s6186 + $0x3c] sm:$0xf]
  %v6203 = vld [vmem:[%s6186 + $0x40] sm:$0xf]
  %v6204 = vld [vmem:[%s6186 + $0x44] sm:$0xf]
  %v6205 = vld [vmem:[%s6186 + $0x48] sm:$0xf]
  %v6206 = vld [vmem:[%s6186 + $0x4c] sm:$0xf]
  %v6207 = vld [vmem:[%s6186 + $0x50] sm:$0xf]
  %v6208 = vld [vmem:[%s6186 + $0x54] sm:$0xf]
  %v6209 = vld [vmem:[%s6186 + $0x58] sm:$0xf]
  %v6210 = vld [vmem:[%s6186 + $0x5c] sm:$0xf]
  %v6211 = vld [vmem:[%s6186 + $0x60] sm:$0xf]
  %v6212 = vld [vmem:[%s6186 + $0x64] sm:$0xf]
  %v6213 = vld [vmem:[%s6186 + $0x68] sm:$0xf]
  %v6214 = vld [vmem:[%s6186 + $0x6c] sm:$0xf]
  %v6215 = vld [vmem:[%s6186 + $0x70] sm:$0xf]
  %v6216 = vld [vmem:[%s6186 + $0x74] sm:$0xf]
  %v6217 = vld [vmem:[%s6186 + $0x78] sm:$0xf]
  %v6218 = vld [vmem:[%s6186 + $0x7c] sm:$0xf]
  %v6219 = vlaneseq
  %v6220 = vshrl.u32 %v6219, 7
  %v6221 = vsub.s32 1, %v6220
  %v6222 = vrot.slane %v4788, %v6221
  %v6255 = vunpack.c.l.b16 %v6187
  %v6256 = vunpack.c.l.b16 %v6188
  %v6257 = vunpack.c.l.b16 %v6189
  %v6258 = vunpack.c.l.b16 %v6190
  %v6259 = vunpack.c.l.b16 %v6191
  %v6260 = vunpack.c.l.b16 %v6192
  %v6261 = vunpack.c.l.b16 %v6193
  %v6262 = vunpack.c.l.b16 %v6194
  %v6263 = vunpack.c.l.b16 %v6195
  %v6264 = vunpack.c.l.b16 %v6196
  %v6265 = vunpack.c.l.b16 %v6197
  %v6266 = vunpack.c.l.b16 %v6198
  %v6267 = vunpack.c.l.b16 %v6199
  %v6268 = vunpack.c.l.b16 %v6200
  %v6269 = vunpack.c.l.b16 %v6201
  %v6270 = vunpack.c.l.b16 %v6202
  %v6271 = vunpack.c.l.b16 %v6203
  %v6272 = vunpack.c.l.b16 %v6204
  %v6273 = vunpack.c.l.b16 %v6205
  %v6274 = vunpack.c.l.b16 %v6206
  %v6275 = vunpack.c.l.b16 %v6207
  %v6276 = vunpack.c.l.b16 %v6208
  %v6277 = vunpack.c.l.b16 %v6209
  %v6278 = vunpack.c.l.b16 %v6210
  %v6279 = vunpack.c.l.b16 %v6211
  %v6280 = vunpack.c.l.b16 %v6212
  %v6281 = vunpack.c.l.b16 %v6213
  %v6282 = vunpack.c.l.b16 %v6214
  %v6283 = vunpack.c.l.b16 %v6215
  %v6284 = vunpack.c.l.b16 %v6216
  %v6285 = vunpack.c.l.b16 %v6217
  %v6286 = vunpack.c.l.b16 %v6218
  %v6287 = vpack.c.b16 %v6256, %v6255
  %v6288 = vpack.c.b16 %v6258, %v6257
  %v6289 = vpack.c.b16 %v6260, %v6259
  %v6290 = vpack.c.b16 %v6262, %v6261
  %v6291 = vpack.c.b16 %v6264, %v6263
  %v6292 = vpack.c.b16 %v6266, %v6265
  %v6293 = vpack.c.b16 %v6268, %v6267
  %v6294 = vpack.c.b16 %v6270, %v6269
  %v6295 = vpack.c.b16 %v6272, %v6271
  %v6296 = vpack.c.b16 %v6274, %v6273
  %v6297 = vpack.c.b16 %v6276, %v6275
  %v6298 = vpack.c.b16 %v6278, %v6277
  %v6299 = vpack.c.b16 %v6280, %v6279
  %v6300 = vpack.c.b16 %v6282, %v6281
  %v6301 = vpack.c.b16 %v6284, %v6283
  %v6302 = vpack.c.b16 %v6286, %v6285
  %6319 = vmatprep.subr.bf16.mxu0 0
  %6320 = vmatpush1.bf16.msra.mxu0 %v6287
  %6321 = vmatprep.subr.bf16.mxu0 0
  %6322 = vmatpush1.bf16.msra.mxu0 %v6288
  %6323 = vmatprep.subr.bf16.mxu0 0
  %6324 = vmatpush1.bf16.msra.mxu0 %v6289
  %6325 = vmatprep.subr.bf16.mxu0 0
  %6326 = vmatpush1.bf16.msra.mxu0 %v6290
  %6327 = vmatprep.subr.bf16.mxu0 0
  %6328 = vmatpush1.bf16.msra.mxu0 %v6291
  %6329 = vmatprep.subr.bf16.mxu0 0
  %6330 = vmatpush1.bf16.msra.mxu0 %v6292
  %6331 = vmatprep.subr.bf16.mxu0 0
  %6332 = vmatpush1.bf16.msra.mxu0 %v6293
  %6333 = vmatprep.subr.bf16.mxu0 0
  %6334 = vmatpush1.bf16.msra.mxu0 %v6294
  %6335 = vmatprep.subr.bf16.mxu0 0
  %6336 = vmatpush1.bf16.msra.mxu0 %v6295
  %6337 = vmatprep.subr.bf16.mxu0 0
  %6338 = vmatpush1.bf16.msra.mxu0 %v6296
  %6339 = vmatprep.subr.bf16.mxu0 0
  %6340 = vmatpush1.bf16.msra.mxu0 %v6297
  %6341 = vmatprep.subr.bf16.mxu0 0
  %6342 = vmatpush1.bf16.msra.mxu0 %v6298
  %6343 = vmatprep.subr.bf16.mxu0 0
  %6344 = vmatpush1.bf16.msra.mxu0 %v6299
  %6345 = vmatprep.subr.bf16.mxu0 0
  %6346 = vmatpush1.bf16.msra.mxu0 %v6300
  %6347 = vmatprep.subr.bf16.mxu0 0
  %6348 = vmatpush1.bf16.msra.mxu0 %v6301
  %6349 = vmatprep.subr.bf16.mxu0 0
  %6350 = vmatpush1.bf16.msra.mxu0 %v6302
  %6351 = vmatprep.mubr.bf16.mxu0 %v6183
  %6352 = vmatmul.mubr.bf16.gmra.mrb[0].mxu0 %v6182
  %v6353 = vpop.f32.mrb[0].mxu0
  %v6354 = vadd.f32 %v6222, %v6353
  %v6355 = vpop.f32.mrb[0].mxu0
  %v6356 = vpop.f32.mrb[0].mxu0
  %v6357 = vadd.f32 %v6222, %v6356
  %v6358 = vpop.f32.mrb[0].mxu0
  %6359 = vmatprep.mubr.bf16.mxu0 %v6185
  %6360 = vmatmul.mubr.bf16.gmra.mrb[0].mxu0 %v6184
  %v6361 = vpop.f32.mrb[0].mxu0
  %v6362 = vadd.f32 %v6222, %v6361
  %v6363 = vpop.f32.mrb[0].mxu0
  %v6364 = vpop.f32.mrb[0].mxu0
  %v6365 = vpop.f32.mrb[0].mxu0
  %6366 = vdwg.mxu0
  %v6367 = vadd.f32 %v5845, %v6354
  %v6368 = vadd.f32 %v5846, %v6357
  %v6369 = vadd.f32 %v5847, %v6362
  %s6370 = scalar_lea.vmem %s19, 8
  %v6371 = vld [vmem:[%s6370] sm:$0xf]
  %s6372 = scalar_lea.vmem %s17, 4
  %v6373 = vld [vmem:[%s6372] sm:$0x3]
  %v6374 = vsel %vm232, %v6367, 0.0
  %6375 = vadd.xlane.f32.xlu0 %v6374
  %v6376 = vpop.xlane.xlu0 %6375
  %v6377 = vsel %vm232, %v6368, 0.0
  %6378 = vadd.xlane.f32.xlu0 %v6377
  %v6379 = vpop.xlane.xlu0 %6378
  %v6380 = vsel %vm3208, %v6369, 0.0
  %6381 = vadd.xlane.f32.xlu0 %v6380
  %v6382 = vpop.xlane.xlu0 %6381
  %v6383 = vmul.f32 %v6376, %v3212
  %v6384 = vmul.f32 %v6379, %v3212
  %v6385 = vmul.f32 %v6382, %v3212
  %v6386 = vsub.f32 %v6367, %v6383
  %v6387 = vsub.f32 %v6368, %v6384
  %v6388 = vsub.f32 %v6369, %v6385
  %v6389 = vmul.f32 %v6386, %v6386
  %v6390 = vmul.f32 %v6387, %v6387
  %v6391 = vmul.f32 %v6388, %v6388
  %v6392 = vsel %vm232, %v6389, 0.0
  %6393 = vadd.xlane.f32.xlu0 %v6392
  %v6394 = vpop.xlane.xlu0 %6393
  %v6395 = vsel %vm232, %v6390, 0.0
  %6396 = vadd.xlane.f32.xlu0 %v6395
  %v6397 = vpop.xlane.xlu0 %6396
  %v6398 = vsel %vm3208, %v6391, 0.0
  %6399 = vadd.xlane.f32.xlu0 %v6398
  %v6400 = vpop.xlane.xlu0 %6399
  %v6401 = vmul.f32 %v6394, %v3212
  %v6402 = vmul.f32 %v6397, %v3212
  %v6403 = vmul.f32 %v6400, %v3212
  %v6404 = vadd.f32 %v6401, 1e-05
  %v6405 = vadd.f32 %v6402, 1e-05
  %v6406 = vadd.f32 %v6403, 1e-05
  %v6407 = vrsqrt.pop %v6404
  %v6408 = vrsqrt.pop %v6405
  %v6409 = vrsqrt.pop %v6406
  %v6410 = vmul.f32 %v6386, %v6407
  %v6411 = vmul.f32 %v6387, %v6408
  %v6412 = vmul.f32 %v6388, %v6409
  %v6413 = vlaneseq
  %v6414 = vshrl.u32 %v6413, 7
  %v6415 = vsub.s32 0, %v6414
  %v6416 = vrot.slane %v6371, %v6415
  %v6417 = vmul.f32 %v6410, %v6416
  %v6418 = vmul.f32 %v6411, %v6416
  %v6419 = vmul.f32 %v6412, %v6416
  %v6420 = vlaneseq
  %v6421 = vshrl.u32 %v6420, 7
  %v6422 = vsub.s32 1, %v6421
  %v6423 = vrot.slane %v6371, %v6422
  %v6424 = vadd.f32 %v6417, %v6423
  %v6425 = vadd.f32 %v6418, %v6423
  %v6426 = vadd.f32 %v6419, %v6423
  %v6427 = vpack.c.bf16 %v6425, %v6424
  %v6428 = vpack.c.bf16 %v6426, %v6426
  %s6429 = scalar_lea.vmem %s31, 16
  %v6430 = vld [vmem:[%s6429] sm:$0x7]
  %s6431 = scalar_lea.vmem %s35, 128
  %v6432 = vld [vmem:[%s6431] sm:$0xf]
  %v6433 = vld [vmem:[%s6431 + $0x4] sm:$0xf]
  %v6434 = vld [vmem:[%s6431 + $0x8] sm:$0xf]
  %v6435 = vld [vmem:[%s6431 + $0xc] sm:$0xf]
  %v6436 = vld [vmem:[%s6431 + $0x10] sm:$0xf]
  %v6437 = vld [vmem:[%s6431 + $0x14] sm:$0xf]
  %v6438 = vld [vmem:[%s6431 + $0x18] sm:$0xf]
  %v6439 = vld [vmem:[%s6431 + $0x1c] sm:$0xf]
  %v6440 = vlaneseq
  %v6441 = vshrl.u32 %v6440, 7
  %v6442 = vsub.s32 0, %v6441
  %v6443 = vrot.slane %v6430, %v6442
  %v6452 = vunpack.c.l.b16 %v6432
  %v6453 = vunpack.c.l.b16 %v6433
  %v6454 = vunpack.c.l.b16 %v6434
  %v6455 = vunpack.c.l.b16 %v6435
  %v6456 = vunpack.c.l.b16 %v6436
  %v6457 = vunpack.c.l.b16 %v6437
  %v6458 = vunpack.c.l.b16 %v6438
  %v6459 = vunpack.c.l.b16 %v6439
  %v6460 = vpack.c.b16 %v6453, %v6452
  %v6461 = vpack.c.b16 %v6455, %v6454
  %v6462 = vpack.c.b16 %v6457, %v6456
  %v6463 = vpack.c.b16 %v6459, %v6458
  %v6469 = vsel %vm232, %v6427, 0
  %v6472 = vsel %vm232, %v6428, 0
  %6474 = vmatprep.subr.bf16.mxu0 0
  %6475 = vmatpush1.bf16.msra.mxu0 %v6460
  %6476 = vmatprep.subr.bf16.mxu0 0
  %6477 = vmatpush1.bf16.msra.mxu0 %v6461
  %6478 = vmatprep.subr.bf16.mxu0 0
  %6479 = vmatpush1.bf16.msra.mxu0 %v6462
  %6480 = vmatprep.subr.bf16.mxu0 0
  %6481 = vmatpush1.bf16.msra.mxu0 %v6463
  %6482 = vmatprep.subr.bf16.mxu0 0
  %6483 = vmatpush1.bf16.msra.mxu0 0
  %6484 = vmatprep.subr.bf16.mxu0 0
  %6485 = vmatpush1.bf16.msra.mxu0 0
  %6486 = vmatprep.subr.bf16.mxu0 0
  %6487 = vmatpush1.bf16.msra.mxu0 0
  %6488 = vmatprep.subr.bf16.mxu0 0
  %6489 = vmatpush1.bf16.msra.mxu0 0
  %6490 = vmatprep.subr.bf16.mxu0 0
  %6491 = vmatpush1.bf16.msra.mxu0 0
  %6492 = vmatprep.subr.bf16.mxu0 0
  %6493 = vmatpush1.bf16.msra.mxu0 0
  %6494 = vmatprep.subr.bf16.mxu0 0
  %6495 = vmatpush1.bf16.msra.mxu0 0
  %6496 = vmatprep.subr.bf16.mxu0 0
  %6497 = vmatpush1.bf16.msra.mxu0 0
  %6498 = vmatprep.subr.bf16.mxu0 0
  %6499 = vmatpush1.bf16.msra.mxu0 0
  %6500 = vmatprep.subr.bf16.mxu0 0
  %6501 = vmatpush1.bf16.msra.mxu0 0
  %6502 = vmatprep.subr.bf16.mxu0 0
  %6503 = vmatpush1.bf16.msra.mxu0 0
  %6504 = vmatprep.subr.bf16.mxu0 0
  %6505 = vmatpush1.bf16.msra.mxu0 0
  %6506 = vmatprep.mubr.bf16.mxu0 0
  %6507 = vmatmul.mubr.bf16.gmra.mrb[0].mxu0 %v6469
  %v6508 = vpop.f32.mrb[0].mxu0
  %v6509 = vadd.f32 %v6443, %v6508
  %v6510 = vpop.f32.mrb[0].mxu0
  %v6511 = vpop.f32.mrb[0].mxu0
  %v6512 = vadd.f32 %v6443, %v6511
  %v6513 = vpop.f32.mrb[0].mxu0
  %6514 = vmatprep.mubr.bf16.mxu0 0
  %6515 = vmatmul.mubr.bf16.gmra.mrb[0].mxu0 %v6472
  %v6516 = vpop.f32.mrb[0].mxu0
  %v6517 = vadd.f32 %v6443, %v6516
  %v6518 = vpop.f32.mrb[0].mxu0
  %v6519 = vpop.f32.mrb[0].mxu0
  %v6520 = vpop.f32.mrb[0].mxu0
  %6521 = vdwg.mxu0
  %s6522 = scalar_lea.vmem %s33, 128
  %v6523 = vld [vmem:[%s6522] sm:$0xf]
  %v6524 = vld [vmem:[%s6522 + $0x4] sm:$0xf]
  %v6525 = vld [vmem:[%s6522 + $0x8] sm:$0xf]
  %v6526 = vld [vmem:[%s6522 + $0xc] sm:$0xf]
  %v6527 = vld [vmem:[%s6522 + $0x10] sm:$0xf]
  %v6528 = vld [vmem:[%s6522 + $0x14] sm:$0xf]
  %v6529 = vld [vmem:[%s6522 + $0x18] sm:$0xf]
  %v6530 = vld [vmem:[%s6522 + $0x1c] sm:$0xf]
  %v6531 = vlaneseq
  %v6532 = vshrl.u32 %v6531, 7
  %v6533 = vsub.s32 1, %v6532
  %v6534 = vrot.slane %v6430, %v6533
  %v6543 = vunpack.c.l.b16 %v6523
  %v6544 = vunpack.c.l.b16 %v6524
  %v6545 = vunpack.c.l.b16 %v6525
  %v6546 = vunpack.c.l.b16 %v6526
  %v6547 = vunpack.c.l.b16 %v6527
  %v6548 = vunpack.c.l.b16 %v6528
  %v6549 = vunpack.c.l.b16 %v6529
  %v6550 = vunpack.c.l.b16 %v6530
  %v6551 = vpack.c.b16 %v6544, %v6543
  %v6552 = vpack.c.b16 %v6546, %v6545
  %v6553 = vpack.c.b16 %v6548, %v6547
  %v6554 = vpack.c.b16 %v6550, %v6549
  %6559 = vmatprep.subr.bf16.mxu0 0
  %6560 = vmatpush1.bf16.msra.mxu0 %v6551
  %6561 = vmatprep.subr.bf16.mxu0 0
  %6562 = vmatpush1.bf16.msra.mxu0 %v6552
  %6563 = vmatprep.subr.bf16.mxu0 0
  %6564 = vmatpush1.bf16.msra.mxu0 %v6553
  %6565 = vmatprep.subr.bf16.mxu0 0
  %6566 = vmatpush1.bf16.msra.mxu0 %v6554
  %6567 = vmatprep.subr.bf16.mxu0 0
  %6568 = vmatpush1.bf16.msra.mxu0 0
  %6569 = vmatprep.subr.bf16.mxu0 0
  %6570 = vmatpush1.bf16.msra.mxu0 0
  %6571 = vmatprep.subr.bf16.mxu0 0
  %6572 = vmatpush1.bf16.msra.mxu0 0
  %6573 = vmatprep.subr.bf16.mxu0 0
  %6574 = vmatpush1.bf16.msra.mxu0 0
  %6575 = vmatprep.subr.bf16.mxu0 0
  %6576 = vmatpush1.bf16.msra.mxu0 0
  %6577 = vmatprep.subr.bf16.mxu0 0
  %6578 = vmatpush1.bf16.msra.mxu0 0
  %6579 = vmatprep.subr.bf16.mxu0 0
  %6580 = vmatpush1.bf16.msra.mxu0 0
  %6581 = vmatprep.subr.bf16.mxu0 0
  %6582 = vmatpush1.bf16.msra.mxu0 0
  %6583 = vmatprep.subr.bf16.mxu0 0
  %6584 = vmatpush1.bf16.msra.mxu0 0
  %6585 = vmatprep.subr.bf16.mxu0 0
  %6586 = vmatpush1.bf16.msra.mxu0 0
  %6587 = vmatprep.subr.bf16.mxu0 0
  %6588 = vmatpush1.bf16.msra.mxu0 0
  %6589 = vmatprep.subr.bf16.mxu0 0
  %6590 = vmatpush1.bf16.msra.mxu0 0
  %6591 = vmatprep.mubr.bf16.mxu0 0
  %6592 = vmatmul.mubr.bf16.gmra.mrb[0].mxu0 %v6469
  %v6593 = vpop.f32.mrb[0].mxu0
  %v6594 = vadd.f32 %v6534, %v6593
  %v6595 = vpop.f32.mrb[0].mxu0
  %v6596 = vpop.f32.mrb[0].mxu0
  %v6597 = vadd.f32 %v6534, %v6596
  %v6598 = vpop.f32.mrb[0].mxu0
  %6599 = vmatprep.mubr.bf16.mxu0 0
  %6600 = vmatmul.mubr.bf16.gmra.mrb[0].mxu0 %v6472
  %v6601 = vpop.f32.mrb[0].mxu0
  %v6602 = vadd.f32 %v6534, %v6601
  %v6603 = vpop.f32.mrb[0].mxu0
  %v6604 = vpop.f32.mrb[0].mxu0
  %v6605 = vpop.f32.mrb[0].mxu0
  %6606 = vdwg.mxu0
  %s6607 = scalar_lea.vmem %s37, 128
  %v6608 = vld [vmem:[%s6607] sm:$0xf]
  %v6609 = vld [vmem:[%s6607 + $0x4] sm:$0xf]
  %v6610 = vld [vmem:[%s6607 + $0x8] sm:$0xf]
  %v6611 = vld [vmem:[%s6607 + $0xc] sm:$0xf]
  %v6612 = vld [vmem:[%s6607 + $0x10] sm:$0xf]
  %v6613 = vld [vmem:[%s6607 + $0x14] sm:$0xf]
  %v6614 = vld [vmem:[%s6607 + $0x18] sm:$0xf]
  %v6615 = vld [vmem:[%s6607 + $0x1c] sm:$0xf]
  %v6616 = vlaneseq
  %v6617 = vshrl.u32 %v6616, 7
  %v6618 = vsub.s32 2, %v6617
  %v6619 = vrot.slane %v6430, %v6618
  %v6628 = vunpack.c.l.b16 %v6608
  %v6629 = vunpack.c.l.b16 %v6609
  %v6630 = vunpack.c.l.b16 %v6610
  %v6631 = vunpack.c.l.b16 %v6611
  %v6632 = vunpack.c.l.b16 %v6612
  %v6633 = vunpack.c.l.b16 %v6613
  %v6634 = vunpack.c.l.b16 %v6614
  %v6635 = vunpack.c.l.b16 %v6615
  %v6636 = vpack.c.b16 %v6629, %v6628
  %v6637 = vpack.c.b16 %v6631, %v6630
  %v6638 = vpack.c.b16 %v6633, %v6632
  %v6639 = vpack.c.b16 %v6635, %v6634
  %6644 = vmatprep.subr.bf16.mxu0 0
  %6645 = vmatpush1.bf16.msra.mxu0 %v6636
  %6646 = vmatprep.subr.bf16.mxu0 0
  %6647 = vmatpush1.bf16.msra.mxu0 %v6637
  %6648 = vmatprep.subr.bf16.mxu0 0
  %6649 = vmatpush1.bf16.msra.mxu0 %v6638
  %6650 = vmatprep.subr.bf16.mxu0 0
  %6651 = vmatpush1.bf16.msra.mxu0 %v6639
  %6652 = vmatprep.subr.bf16.mxu0 0
  %6653 = vmatpush1.bf16.msra.mxu0 0
  %6654 = vmatprep.subr.bf16.mxu0 0
  %6655 = vmatpush1.bf16.msra.mxu0 0
  %6656 = vmatprep.subr.bf16.mxu0 0
  %6657 = vmatpush1.bf16.msra.mxu0 0
  %6658 = vmatprep.subr.bf16.mxu0 0
  %6659 = vmatpush1.bf16.msra.mxu0 0
  %6660 = vmatprep.subr.bf16.mxu0 0
  %6661 = vmatpush1.bf16.msra.mxu0 0
  %6662 = vmatprep.subr.bf16.mxu0 0
  %6663 = vmatpush1.bf16.msra.mxu0 0
  %6664 = vmatprep.subr.bf16.mxu0 0
  %6665 = vmatpush1.bf16.msra.mxu0 0
  %6666 = vmatprep.subr.bf16.mxu0 0
  %6667 = vmatpush1.bf16.msra.mxu0 0
  %6668 = vmatprep.subr.bf16.mxu0 0
  %6669 = vmatpush1.bf16.msra.mxu0 0
  %6670 = vmatprep.subr.bf16.mxu0 0
  %6671 = vmatpush1.bf16.msra.mxu0 0
  %6672 = vmatprep.subr.bf16.mxu0 0
  %6673 = vmatpush1.bf16.msra.mxu0 0
  %6674 = vmatprep.subr.bf16.mxu0 0
  %6675 = vmatpush1.bf16.msra.mxu0 0
  %6676 = vmatprep.mubr.bf16.mxu0 0
  %6677 = vmatmul.mubr.bf16.gmra.mrb[0].mxu0 %v6469
  %v6678 = vpop.f32.mrb[0].mxu0
  %v6679 = vadd.f32 %v6619, %v6678
  %v6680 = vpop.f32.mrb[0].mxu0
  %v6681 = vpop.f32.mrb[0].mxu0
  %v6682 = vadd.f32 %v6619, %v6681
  %v6683 = vpop.f32.mrb[0].mxu0
  %6684 = vmatprep.mubr.bf16.mxu0 0
  %6685 = vmatmul.mubr.bf16.gmra.mrb[0].mxu0 %v6472
  %v6686 = vpop.f32.mrb[0].mxu0
  %v6687 = vadd.f32 %v6619, %v6686
  %v6688 = vpop.f32.mrb[0].mxu0
  %v6689 = vpop.f32.mrb[0].mxu0
  %v6690 = vpop.f32.mrb[0].mxu0
  %6691 = vdwg.mxu0
  %v6692 = vpack.c.bf16 %v6512, %v6509
  %v6693 = vpack.c.bf16 %v6517, %v6517
  %v6694 = vpack.c.bf16 %v6597, %v6594
  %v6695 = vpack.c.bf16 %v6602, %v6602
  %v6697 = vsel %vm3522, %v6692, 0
  %v6700 = vsel %vm3522, %v6693, 0
  %v6703 = vsel %vm3522, %v6694, 0
  %v6706 = vsel %vm3522, %v6695, 0
  %6708 = vmatprep.subr.bf16.mxu0 0
  %6709 = vmatpush1.bf16.xpose.msra.mxu0 %v6703
  %6710 = vmatprep.subr.bf16.mxu0 0
  %6711 = vmatpush1.bf16.xpose.msra.mxu0 %v6706
  %6712 = vmatprep.subr.bf16.mxu0 0
  %6713 = vmatpush1.bf16.xpose.msra.mxu0 0
  %6714 = vmatprep.subr.bf16.mxu0 0
  %6715 = vmatpush1.bf16.xpose.msra.mxu0 0
  %6716 = vmatprep.subr.bf16.mxu0 0
  %6717 = vmatpush1.bf16.xpose.msra.mxu0 0
  %6718 = vmatprep.subr.bf16.mxu0 0
  %6719 = vmatpush1.bf16.xpose.msra.mxu0 0
  %6720 = vmatprep.subr.bf16.mxu0 0
  %6721 = vmatpush1.bf16.xpose.msra.mxu0 0
  %6722 = vmatprep.subr.bf16.mxu0 0
  %6723 = vmatpush1.bf16.xpose.msra.mxu0 0
  %6724 = vmatprep.subr.bf16.mxu0 0
  %6725 = vmatpush1.bf16.xpose.msra.mxu0 0
  %6726 = vmatprep.subr.bf16.mxu0 0
  %6727 = vmatpush1.bf16.xpose.msra.mxu0 0
  %6728 = vmatprep.subr.bf16.mxu0 0
  %6729 = vmatpush1.bf16.xpose.msra.mxu0 0
  %6730 = vmatprep.subr.bf16.mxu0 0
  %6731 = vmatpush1.bf16.xpose.msra.mxu0 0
  %6732 = vmatprep.subr.bf16.mxu0 0
  %6733 = vmatpush1.bf16.xpose.msra.mxu0 0
  %6734 = vmatprep.subr.bf16.mxu0 0
  %6735 = vmatpush1.bf16.xpose.msra.mxu0 0
  %6736 = vmatprep.subr.bf16.mxu0 0
  %6737 = vmatpush1.bf16.xpose.msra.mxu0 0
  %6738 = vmatprep.subr.bf16.mxu0 0
  %6739 = vmatpush1.bf16.xpose.msra.mxu0 0
  %6740 = vmatprep.mubr.bf16.mxu0 0
  %6741 = vmatmul.mubr.bf16.gmra.mrb[0].mxu0 %v6697
  %v6742 = vpop.f32.mrb[0].mxu0
  %v6743 = vadd.f32 0.0, %v6742
  %v6744 = vpop.f32.mrb[0].mxu0
  %v6745 = vpop.f32.mrb[0].mxu0
  %v6746 = vadd.f32 0.0, %v6745
  %v6747 = vpop.f32.mrb[0].mxu0
  %6748 = vmatprep.mubr.bf16.mxu0 0
  %6749 = vmatmul.mubr.bf16.gmra.mrb[0].mxu0 %v6700
  %v6750 = vpop.f32.mrb[0].mxu0
  %v6751 = vadd.f32 0.0, %v6750
  %v6752 = vpop.f32.mrb[0].mxu0
  %v6753 = vpop.f32.mrb[0].mxu0
  %v6754 = vpop.f32.mrb[0].mxu0
  %6755 = vdwg.mxu0
  %v6756 = vmul.f32 %v6743, 0.17677669
  %v6757 = vmul.f32 %v6746, 0.17677669
  %v6758 = vmul.f32 %v6751, 0.17677669
  %v6759 = vsel %vm182, %v6756, -1e+30
  %v6760 = vsel %vm183, %v6757, -1e+30
  %v6761 = vsel %vm191, %v6758, -1e+30
  %v6762 = vsel %vm3589, %v6759, -inf
  %6763 = vmax.xlane.f32.xlu0 %v6762
  %v6764 = vpop.xlane.xlu0 %6763
  %v6765 = vsel %vm3589, %v6760, -inf
  %6766 = vmax.xlane.f32.xlu0 %v6765
  %v6767 = vpop.xlane.xlu0 %6766
  %v6768 = vsel %vm3596, %v6761, -inf
  %6769 = vmax.xlane.f32.xlu0 %v6768
  %v6770 = vpop.xlane.xlu0 %6769
  %v6771 = vsub.f32 %v6759, %v6764
  %v6772 = vsub.f32 %v6760, %v6767
  %v6773 = vsub.f32 %v6761, %v6770
  %v6774 = vmul.f32 %v6771, 1.442695
  %v6775 = vpow.pop %v6774
  %v6776 = vmul.f32 %v6772, 1.442695
  %v6777 = vpow.pop %v6776
  %v6778 = vmul.f32 %v6773, 1.442695
  %v6779 = vpow.pop %v6778
  %v6780 = vsel %vm3589, %v6775, 0.0
  %6781 = vadd.xlane.f32.xlu0 %v6780
  %v6782 = vpop.xlane.xlu0 %6781
  %v6783 = vsel %vm3589, %v6777, 0.0
  %6784 = vadd.xlane.f32.xlu0 %v6783
  %v6785 = vpop.xlane.xlu0 %6784
  %v6786 = vsel %vm3596, %v6779, 0.0
  %6787 = vadd.xlane.f32.xlu0 %v6786
  %v6788 = vpop.xlane.xlu0 %6787
  %v6789 = vrcp.pop %v6782
  %v6790 = vmul.f32 %v6775, %v6789
  %v6791 = vrcp.pop %v6785
  %v6792 = vmul.f32 %v6777, %v6791
  %v6793 = vrcp.pop %v6788
  %v6794 = vmul.f32 %v6779, %v6793
  %v6795 = vpack.c.bf16 %v6792, %v6790
  %v6796 = vpack.c.bf16 %v6794, %v6794
  %v6797 = vpack.c.bf16 %v6682, %v6679
  %v6798 = vpack.c.bf16 %v6687, %v6687
  %v6800 = vsel %vm3589, %v6795, 0
  %v6803 = vsel %vm3589, %v6796, 0
  %v6806 = vsel %vm342, %v6798, 0
  %6808 = vmatprep.subr.bf16.mxu0 0
  %6809 = vmatpush1.bf16.msra.mxu0 %v6797
  %6810 = vmatprep.subr.bf16.mxu0 0
  %6811 = vmatpush1.bf16.msra.mxu0 %v6806
  %6812 = vmatprep.subr.bf16.mxu0 0
  %6813 = vmatpush1.bf16.msra.mxu0 0
  %6814 = vmatprep.subr.bf16.mxu0 0
  %6815 = vmatpush1.bf16.msra.mxu0 0
  %6816 = vmatprep.subr.bf16.mxu0 0
  %6817 = vmatpush1.bf16.msra.mxu0 0
  %6818 = vmatprep.subr.bf16.mxu0 0
  %6819 = vmatpush1.bf16.msra.mxu0 0
  %6820 = vmatprep.subr.bf16.mxu0 0
  %6821 = vmatpush1.bf16.msra.mxu0 0
  %6822 = vmatprep.subr.bf16.mxu0 0
  %6823 = vmatpush1.bf16.msra.mxu0 0
  %6824 = vmatprep.subr.bf16.mxu0 0
  %6825 = vmatpush1.bf16.msra.mxu0 0
  %6826 = vmatprep.subr.bf16.mxu0 0
  %6827 = vmatpush1.bf16.msra.mxu0 0
  %6828 = vmatprep.subr.bf16.mxu0 0
  %6829 = vmatpush1.bf16.msra.mxu0 0
  %6830 = vmatprep.subr.bf16.mxu0 0
  %6831 = vmatpush1.bf16.msra.mxu0 0
  %6832 = vmatprep.subr.bf16.mxu0 0
  %6833 = vmatpush1.bf16.msra.mxu0 0
  %6834 = vmatprep.subr.bf16.mxu0 0
  %6835 = vmatpush1.bf16.msra.mxu0 0
  %6836 = vmatprep.subr.bf16.mxu0 0
  %6837 = vmatpush1.bf16.msra.mxu0 0
  %6838 = vmatprep.subr.bf16.mxu0 0
  %6839 = vmatpush1.bf16.msra.mxu0 0
  %6840 = vmatprep.mubr.bf16.mxu0 0
  %6841 = vmatmul.mubr.bf16.gmra.mrb[0].mxu0 %v6800
  %v6842 = vpop.f32.mrb[0].mxu0
  %v6843 = vadd.f32 0.0, %v6842
  %v6844 = vpop.f32.mrb[0].mxu0
  %v6845 = vpop.f32.mrb[0].mxu0
  %v6846 = vadd.f32 0.0, %v6845
  %v6847 = vpop.f32.mrb[0].mxu0
  %6848 = vmatprep.mubr.bf16.mxu0 0
  %6849 = vmatmul.mubr.bf16.gmra.mrb[0].mxu0 %v6803
  %v6850 = vpop.f32.mrb[0].mxu0
  %v6851 = vadd.f32 0.0, %v6850
  %v6852 = vpop.f32.mrb[0].mxu0
  %v6853 = vpop.f32.mrb[0].mxu0
  %v6854 = vpop.f32.mrb[0].mxu0
  %6855 = vdwg.mxu0
  %v6856 = vpack.c.bf16 %v6846, %v6843
  %v6857 = vpack.c.bf16 %v6851, %v6851
  %s6858 = scalar_lea.vmem %s29, 64
  %v6859 = vld [vmem:[%s6858] sm:$0xf]
  %v6860 = vld [vmem:[%s6858 + $0x4] sm:$0xf]
  %v6861 = vld [vmem:[%s6858 + $0x8] sm:$0xf]
  %v6862 = vld [vmem:[%s6858 + $0xc] sm:$0xf]
  %s6863 = scalar_lea.vmem %s31, 20
  %v6864 = vld [vmem:[%s6863] sm:$0x7]
  %s6865 = scalar_lea.vmem %s35, 160
  %v6866 = vld [vmem:[%s6865] sm:$0xf]
  %v6867 = vld [vmem:[%s6865 + $0x4] sm:$0xf]
  %v6868 = vld [vmem:[%s6865 + $0x8] sm:$0xf]
  %v6869 = vld [vmem:[%s6865 + $0xc] sm:$0xf]
  %v6870 = vld [vmem:[%s6865 + $0x10] sm:$0xf]
  %v6871 = vld [vmem:[%s6865 + $0x14] sm:$0xf]
  %v6872 = vld [vmem:[%s6865 + $0x18] sm:$0xf]
  %v6873 = vld [vmem:[%s6865 + $0x1c] sm:$0xf]
  %v6874 = vlaneseq
  %v6875 = vshrl.u32 %v6874, 7
  %v6876 = vsub.s32 0, %v6875
  %v6877 = vrot.slane %v6864, %v6876
  %v6886 = vunpack.c.l.b16 %v6866
  %v6887 = vunpack.c.l.b16 %v6867
  %v6888 = vunpack.c.l.b16 %v6868
  %v6889 = vunpack.c.l.b16 %v6869
  %v6890 = vunpack.c.l.b16 %v6870
  %v6891 = vunpack.c.l.b16 %v6871
  %v6892 = vunpack.c.l.b16 %v6872
  %v6893 = vunpack.c.l.b16 %v6873
  %v6894 = vpack.c.b16 %v6887, %v6886
  %v6895 = vpack.c.b16 %v6889, %v6888
  %v6896 = vpack.c.b16 %v6891, %v6890
  %v6897 = vpack.c.b16 %v6893, %v6892
  %6902 = vmatprep.subr.bf16.mxu0 0
  %6903 = vmatpush1.bf16.msra.mxu0 %v6894
  %6904 = vmatprep.subr.bf16.mxu0 0
  %6905 = vmatpush1.bf16.msra.mxu0 %v6895
  %6906 = vmatprep.subr.bf16.mxu0 0
  %6907 = vmatpush1.bf16.msra.mxu0 %v6896
  %6908 = vmatprep.subr.bf16.mxu0 0
  %6909 = vmatpush1.bf16.msra.mxu0 %v6897
  %6910 = vmatprep.subr.bf16.mxu0 0
  %6911 = vmatpush1.bf16.msra.mxu0 0
  %6912 = vmatprep.subr.bf16.mxu0 0
  %6913 = vmatpush1.bf16.msra.mxu0 0
  %6914 = vmatprep.subr.bf16.mxu0 0
  %6915 = vmatpush1.bf16.msra.mxu0 0
  %6916 = vmatprep.subr.bf16.mxu0 0
  %6917 = vmatpush1.bf16.msra.mxu0 0
  %6918 = vmatprep.subr.bf16.mxu0 0
  %6919 = vmatpush1.bf16.msra.mxu0 0
  %6920 = vmatprep.subr.bf16.mxu0 0
  %6921 = vmatpush1.bf16.msra.mxu0 0
  %6922 = vmatprep.subr.bf16.mxu0 0
  %6923 = vmatpush1.bf16.msra.mxu0 0
  %6924 = vmatprep.subr.bf16.mxu0 0
  %6925 = vmatpush1.bf16.msra.mxu0 0
  %6926 = vmatprep.subr.bf16.mxu0 0
  %6927 = vmatpush1.bf16.msra.mxu0 0
  %6928 = vmatprep.subr.bf16.mxu0 0
  %6929 = vmatpush1.bf16.msra.mxu0 0
  %6930 = vmatprep.subr.bf16.mxu0 0
  %6931 = vmatpush1.bf16.msra.mxu0 0
  %6932 = vmatprep.subr.bf16.mxu0 0
  %6933 = vmatpush1.bf16.msra.mxu0 0
  %6934 = vmatprep.mubr.bf16.mxu0 0
  %6935 = vmatmul.mubr.bf16.gmra.mrb[0].mxu0 %v6469
  %v6936 = vpop.f32.mrb[0].mxu0
  %v6937 = vadd.f32 %v6877, %v6936
  %v6938 = vpop.f32.mrb[0].mxu0
  %v6939 = vpop.f32.mrb[0].mxu0
  %v6940 = vadd.f32 %v6877, %v6939
  %v6941 = vpop.f32.mrb[0].mxu0
  %6942 = vmatprep.mubr.bf16.mxu0 0
  %6943 = vmatmul.mubr.bf16.gmra.mrb[0].mxu0 %v6472
  %v6944 = vpop.f32.mrb[0].mxu0
  %v6945 = vadd.f32 %v6877, %v6944
  %v6946 = vpop.f32.mrb[0].mxu0
  %v6947 = vpop.f32.mrb[0].mxu0
  %v6948 = vpop.f32.mrb[0].mxu0
  %6949 = vdwg.mxu0
  %s6950 = scalar_lea.vmem %s33, 160
  %v6951 = vld [vmem:[%s6950] sm:$0xf]
  %v6952 = vld [vmem:[%s6950 + $0x4] sm:$0xf]
  %v6953 = vld [vmem:[%s6950 + $0x8] sm:$0xf]
  %v6954 = vld [vmem:[%s6950 + $0xc] sm:$0xf]
  %v6955 = vld [vmem:[%s6950 + $0x10] sm:$0xf]
  %v6956 = vld [vmem:[%s6950 + $0x14] sm:$0xf]
  %v6957 = vld [vmem:[%s6950 + $0x18] sm:$0xf]
  %v6958 = vld [vmem:[%s6950 + $0x1c] sm:$0xf]
  %v6959 = vlaneseq
  %v6960 = vshrl.u32 %v6959, 7
  %v6961 = vsub.s32 1, %v6960
  %v6962 = vrot.slane %v6864, %v6961
  %v6971 = vunpack.c.l.b16 %v6951
  %v6972 = vunpack.c.l.b16 %v6952
  %v6973 = vunpack.c.l.b16 %v6953
  %v6974 = vunpack.c.l.b16 %v6954
  %v6975 = vunpack.c.l.b16 %v6955
  %v6976 = vunpack.c.l.b16 %v6956
  %v6977 = vunpack.c.l.b16 %v6957
  %v6978 = vunpack.c.l.b16 %v6958
  %v6979 = vpack.c.b16 %v6972, %v6971
  %v6980 = vpack.c.b16 %v6974, %v6973
  %v6981 = vpack.c.b16 %v6976, %v6975
  %v6982 = vpack.c.b16 %v6978, %v6977
  %6987 = vmatprep.subr.bf16.mxu0 0
  %6988 = vmatpush1.bf16.msra.mxu0 %v6979
  %6989 = vmatprep.subr.bf16.mxu0 0
  %6990 = vmatpush1.bf16.msra.mxu0 %v6980
  %6991 = vmatprep.subr.bf16.mxu0 0
  %6992 = vmatpush1.bf16.msra.mxu0 %v6981
  %6993 = vmatprep.subr.bf16.mxu0 0
  %6994 = vmatpush1.bf16.msra.mxu0 %v6982
  %6995 = vmatprep.subr.bf16.mxu0 0
  %6996 = vmatpush1.bf16.msra.mxu0 0
  %6997 = vmatprep.subr.bf16.mxu0 0
  %6998 = vmatpush1.bf16.msra.mxu0 0
  %6999 = vmatprep.subr.bf16.mxu0 0
  %7000 = vmatpush1.bf16.msra.mxu0 0
  %7001 = vmatprep.subr.bf16.mxu0 0
  %7002 = vmatpush1.bf16.msra.mxu0 0
  %7003 = vmatprep.subr.bf16.mxu0 0
  %7004 = vmatpush1.bf16.msra.mxu0 0
  %7005 = vmatprep.subr.bf16.mxu0 0
  %7006 = vmatpush1.bf16.msra.mxu0 0
  %7007 = vmatprep.subr.bf16.mxu0 0
  %7008 = vmatpush1.bf16.msra.mxu0 0
  %7009 = vmatprep.subr.bf16.mxu0 0
  %7010 = vmatpush1.bf16.msra.mxu0 0
  %7011 = vmatprep.subr.bf16.mxu0 0
  %7012 = vmatpush1.bf16.msra.mxu0 0
  %7013 = vmatprep.subr.bf16.mxu0 0
  %7014 = vmatpush1.bf16.msra.mxu0 0
  %7015 = vmatprep.subr.bf16.mxu0 0
  %7016 = vmatpush1.bf16.msra.mxu0 0
  %7017 = vmatprep.subr.bf16.mxu0 0
  %7018 = vmatpush1.bf16.msra.mxu0 0
  %7019 = vmatprep.mubr.bf16.mxu0 0
  %7020 = vmatmul.mubr.bf16.gmra.mrb[0].mxu0 %v6469
  %v7021 = vpop.f32.mrb[0].mxu0
  %v7022 = vadd.f32 %v6962, %v7021
  %v7023 = vpop.f32.mrb[0].mxu0
  %v7024 = vpop.f32.mrb[0].mxu0
  %v7025 = vadd.f32 %v6962, %v7024
  %v7026 = vpop.f32.mrb[0].mxu0
  %7027 = vmatprep.mubr.bf16.mxu0 0
  %7028 = vmatmul.mubr.bf16.gmra.mrb[0].mxu0 %v6472
  %v7029 = vpop.f32.mrb[0].mxu0
  %v7030 = vadd.f32 %v6962, %v7029
  %v7031 = vpop.f32.mrb[0].mxu0
  %v7032 = vpop.f32.mrb[0].mxu0
  %v7033 = vpop.f32.mrb[0].mxu0
  %7034 = vdwg.mxu0
  %s7035 = scalar_lea.vmem %s37, 160
  %v7036 = vld [vmem:[%s7035] sm:$0xf]
  %v7037 = vld [vmem:[%s7035 + $0x4] sm:$0xf]
  %v7038 = vld [vmem:[%s7035 + $0x8] sm:$0xf]
  %v7039 = vld [vmem:[%s7035 + $0xc] sm:$0xf]
  %v7040 = vld [vmem:[%s7035 + $0x10] sm:$0xf]
  %v7041 = vld [vmem:[%s7035 + $0x14] sm:$0xf]
  %v7042 = vld [vmem:[%s7035 + $0x18] sm:$0xf]
  %v7043 = vld [vmem:[%s7035 + $0x1c] sm:$0xf]
  %v7044 = vlaneseq
  %v7045 = vshrl.u32 %v7044, 7
  %v7046 = vsub.s32 2, %v7045
  %v7047 = vrot.slane %v6864, %v7046
  %v7056 = vunpack.c.l.b16 %v7036
  %v7057 = vunpack.c.l.b16 %v7037
  %v7058 = vunpack.c.l.b16 %v7038
  %v7059 = vunpack.c.l.b16 %v7039
  %v7060 = vunpack.c.l.b16 %v7040
  %v7061 = vunpack.c.l.b16 %v7041
  %v7062 = vunpack.c.l.b16 %v7042
  %v7063 = vunpack.c.l.b16 %v7043
  %v7064 = vpack.c.b16 %v7057, %v7056
  %v7065 = vpack.c.b16 %v7059, %v7058
  %v7066 = vpack.c.b16 %v7061, %v7060
  %v7067 = vpack.c.b16 %v7063, %v7062
  %7072 = vmatprep.subr.bf16.mxu0 0
  %7073 = vmatpush1.bf16.msra.mxu0 %v7064
  %7074 = vmatprep.subr.bf16.mxu0 0
  %7075 = vmatpush1.bf16.msra.mxu0 %v7065
  %7076 = vmatprep.subr.bf16.mxu0 0
  %7077 = vmatpush1.bf16.msra.mxu0 %v7066
  %7078 = vmatprep.subr.bf16.mxu0 0
  %7079 = vmatpush1.bf16.msra.mxu0 %v7067
  %7080 = vmatprep.subr.bf16.mxu0 0
  %7081 = vmatpush1.bf16.msra.mxu0 0
  %7082 = vmatprep.subr.bf16.mxu0 0
  %7083 = vmatpush1.bf16.msra.mxu0 0
  %7084 = vmatprep.subr.bf16.mxu0 0
  %7085 = vmatpush1.bf16.msra.mxu0 0
  %7086 = vmatprep.subr.bf16.mxu0 0
  %7087 = vmatpush1.bf16.msra.mxu0 0
  %7088 = vmatprep.subr.bf16.mxu0 0
  %7089 = vmatpush1.bf16.msra.mxu0 0
  %7090 = vmatprep.subr.bf16.mxu0 0
  %7091 = vmatpush1.bf16.msra.mxu0 0
  %7092 = vmatprep.subr.bf16.mxu0 0
  %7093 = vmatpush1.bf16.msra.mxu0 0
  %7094 = vmatprep.subr.bf16.mxu0 0
  %7095 = vmatpush1.bf16.msra.mxu0 0
  %7096 = vmatprep.subr.bf16.mxu0 0
  %7097 = vmatpush1.bf16.msra.mxu0 0
  %7098 = vmatprep.subr.bf16.mxu0 0
  %7099 = vmatpush1.bf16.msra.mxu0 0
  %7100 = vmatprep.subr.bf16.mxu0 0
  %7101 = vmatpush1.bf16.msra.mxu0 0
  %7102 = vmatprep.subr.bf16.mxu0 0
  %7103 = vmatpush1.bf16.msra.mxu0 0
  %7104 = vmatprep.mubr.bf16.mxu0 0
  %7105 = vmatmul.mubr.bf16.gmra.mrb[0].mxu0 %v6469
  %v7106 = vpop.f32.mrb[0].mxu0
  %v7107 = vadd.f32 %v7047, %v7106
  %v7108 = vpop.f32.mrb[0].mxu0
  %v7109 = vpop.f32.mrb[0].mxu0
  %v7110 = vadd.f32 %v7047, %v7109
  %v7111 = vpop.f32.mrb[0].mxu0
  %7112 = vmatprep.mubr.bf16.mxu0 0
  %7113 = vmatmul.mubr.bf16.gmra.mrb[0].mxu0 %v6472
  %v7114 = vpop.f32.mrb[0].mxu0
  %v7115 = vadd.f32 %v7047, %v7114
  %v7116 = vpop.f32.mrb[0].mxu0
  %v7117 = vpop.f32.mrb[0].mxu0
  %v7118 = vpop.f32.mrb[0].mxu0
  %7119 = vdwg.mxu0
  %v7120 = vpack.c.bf16 %v6940, %v6937
  %v7121 = vpack.c.bf16 %v6945, %v6945
  %v7122 = vpack.c.bf16 %v7025, %v7022
  %v7123 = vpack.c.bf16 %v7030, %v7030
  %v7125 = vsel %vm3522, %v7120, 0
  %v7128 = vsel %vm3522, %v7121, 0
  %v7131 = vsel %vm3522, %v7122, 0
  %v7134 = vsel %vm3522, %v7123, 0
  %7136 = vmatprep.subr.bf16.mxu0 0
  %7137 = vmatpush1.bf16.xpose.msra.mxu0 %v7131
  %7138 = vmatprep.subr.bf16.mxu0 0
  %7139 = vmatpush1.bf16.xpose.msra.mxu0 %v7134
  %7140 = vmatprep.subr.bf16.mxu0 0
  %7141 = vmatpush1.bf16.xpose.msra.mxu0 0
  %7142 = vmatprep.subr.bf16.mxu0 0
  %7143 = vmatpush1.bf16.xpose.msra.mxu0 0
  %7144 = vmatprep.subr.bf16.mxu0 0
  %7145 = vmatpush1.bf16.xpose.msra.mxu0 0
  %7146 = vmatprep.subr.bf16.mxu0 0
  %7147 = vmatpush1.bf16.xpose.msra.mxu0 0
  %7148 = vmatprep.subr.bf16.mxu0 0
  %7149 = vmatpush1.bf16.xpose.msra.mxu0 0
  %7150 = vmatprep.subr.bf16.mxu0 0
  %7151 = vmatpush1.bf16.xpose.msra.mxu0 0
  %7152 = vmatprep.subr.bf16.mxu0 0
  %7153 = vmatpush1.bf16.xpose.msra.mxu0 0
  %7154 = vmatprep.subr.bf16.mxu0 0
  %7155 = vmatpush1.bf16.xpose.msra.mxu0 0
  %7156 = vmatprep.subr.bf16.mxu0 0
  %7157 = vmatpush1.bf16.xpose.msra.mxu0 0
  %7158 = vmatprep.subr.bf16.mxu0 0
  %7159 = vmatpush1.bf16.xpose.msra.mxu0 0
  %7160 = vmatprep.subr.bf16.mxu0 0
  %7161 = vmatpush1.bf16.xpose.msra.mxu0 0
  %7162 = vmatprep.subr.bf16.mxu0 0
  %7163 = vmatpush1.bf16.xpose.msra.mxu0 0
  %7164 = vmatprep.subr.bf16.mxu0 0
  %7165 = vmatpush1.bf16.xpose.msra.mxu0 0
  %7166 = vmatprep.subr.bf16.mxu0 0
  %7167 = vmatpush1.bf16.xpose.msra.mxu0 0
  %7168 = vmatprep.mubr.bf16.mxu0 0
  %7169 = vmatmul.mubr.bf16.gmra.mrb[0].mxu0 %v7125
  %v7170 = vpop.f32.mrb[0].mxu0
  %v7171 = vadd.f32 0.0, %v7170
  %v7172 = vpop.f32.mrb[0].mxu0
  %v7173 = vpop.f32.mrb[0].mxu0
  %v7174 = vadd.f32 0.0, %v7173
  %v7175 = vpop.f32.mrb[0].mxu0
  %7176 = vmatprep.mubr.bf16.mxu0 0
  %7177 = vmatmul.mubr.bf16.gmra.mrb[0].mxu0 %v7128
  %v7178 = vpop.f32.mrb[0].mxu0
  %v7179 = vadd.f32 0.0, %v7178
  %v7180 = vpop.f32.mrb[0].mxu0
  %v7181 = vpop.f32.mrb[0].mxu0
  %v7182 = vpop.f32.mrb[0].mxu0
  %7183 = vdwg.mxu0
  %v7184 = vmul.f32 %v7171, 0.17677669
  %v7185 = vmul.f32 %v7174, 0.17677669
  %v7186 = vmul.f32 %v7179, 0.17677669
  %v7187 = vsel %vm182, %v7184, -1e+30
  %v7188 = vsel %vm183, %v7185, -1e+30
  %v7189 = vsel %vm191, %v7186, -1e+30
  %v7190 = vsel %vm3589, %v7187, -inf
  %7191 = vmax.xlane.f32.xlu0 %v7190
  %v7192 = vpop.xlane.xlu0 %7191
  %v7193 = vsel %vm3589, %v7188, -inf
  %7194 = vmax.xlane.f32.xlu0 %v7193
  %v7195 = vpop.xlane.xlu0 %7194
  %v7196 = vsel %vm3596, %v7189, -inf
  %7197 = vmax.xlane.f32.xlu0 %v7196
  %v7198 = vpop.xlane.xlu0 %7197
  %v7199 = vsub.f32 %v7187, %v7192
  %v7200 = vsub.f32 %v7188, %v7195
  %v7201 = vsub.f32 %v7189, %v7198
  %v7202 = vmul.f32 %v7199, 1.442695
  %v7203 = vpow.pop %v7202
  %v7204 = vmul.f32 %v7200, 1.442695
  %v7205 = vpow.pop %v7204
  %v7206 = vmul.f32 %v7201, 1.442695
  %v7207 = vpow.pop %v7206
  %v7208 = vsel %vm3589, %v7203, 0.0
  %7209 = vadd.xlane.f32.xlu0 %v7208
  %v7210 = vpop.xlane.xlu0 %7209
  %v7211 = vsel %vm3589, %v7205, 0.0
  %7212 = vadd.xlane.f32.xlu0 %v7211
  %v7213 = vpop.xlane.xlu0 %7212
  %v7214 = vsel %vm3596, %v7207, 0.0
  %7215 = vadd.xlane.f32.xlu0 %v7214
  %v7216 = vpop.xlane.xlu0 %7215
  %v7217 = vrcp.pop %v7210
  %v7218 = vmul.f32 %v7203, %v7217
  %v7219 = vrcp.pop %v7213
  %v7220 = vmul.f32 %v7205, %v7219
  %v7221 = vrcp.pop %v7216
  %v7222 = vmul.f32 %v7207, %v7221
  %v7223 = vpack.c.bf16 %v7220, %v7218
  %v7224 = vpack.c.bf16 %v7222, %v7222
  %v7225 = vpack.c.bf16 %v7110, %v7107
  %v7226 = vpack.c.bf16 %v7115, %v7115
  %v7228 = vsel %vm3589, %v7223, 0
  %v7231 = vsel %vm3589, %v7224, 0
  %v7234 = vsel %vm342, %v7226, 0
  %7236 = vmatprep.subr.bf16.mxu0 0
  %7237 = vmatpush1.bf16.msra.mxu0 %v7225
  %7238 = vmatprep.subr.bf16.mxu0 0
  %7239 = vmatpush1.bf16.msra.mxu0 %v7234
  %7240 = vmatprep.subr.bf16.mxu0 0
  %7241 = vmatpush1.bf16.msra.mxu0 0
  %7242 = vmatprep.subr.bf16.mxu0 0
  %7243 = vmatpush1.bf16.msra.mxu0 0
  %7244 = vmatprep.subr.bf16.mxu0 0
  %7245 = vmatpush1.bf16.msra.mxu0 0
  %7246 = vmatprep.subr.bf16.mxu0 0
  %7247 = vmatpush1.bf16.msra.mxu0 0
  %7248 = vmatprep.subr.bf16.mxu0 0
  %7249 = vmatpush1.bf16.msra.mxu0 0
  %7250 = vmatprep.subr.bf16.mxu0 0
  %7251 = vmatpush1.bf16.msra.mxu0 0
  %7252 = vmatprep.subr.bf16.mxu0 0
  %7253 = vmatpush1.bf16.msra.mxu0 0
  %7254 = vmatprep.subr.bf16.mxu0 0
  %7255 = vmatpush1.bf16.msra.mxu0 0
  %7256 = vmatprep.subr.bf16.mxu0 0
  %7257 = vmatpush1.bf16.msra.mxu0 0
  %7258 = vmatprep.subr.bf16.mxu0 0
  %7259 = vmatpush1.bf16.msra.mxu0 0
  %7260 = vmatprep.subr.bf16.mxu0 0
  %7261 = vmatpush1.bf16.msra.mxu0 0
  %7262 = vmatprep.subr.bf16.mxu0 0
  %7263 = vmatpush1.bf16.msra.mxu0 0
  %7264 = vmatprep.subr.bf16.mxu0 0
  %7265 = vmatpush1.bf16.msra.mxu0 0
  %7266 = vmatprep.subr.bf16.mxu0 0
  %7267 = vmatpush1.bf16.msra.mxu0 0
  %7268 = vmatprep.mubr.bf16.mxu0 0
  %7269 = vmatmul.mubr.bf16.gmra.mrb[0].mxu0 %v7228
  %v7270 = vpop.f32.mrb[0].mxu0
  %v7271 = vadd.f32 0.0, %v7270
  %v7272 = vpop.f32.mrb[0].mxu0
  %v7273 = vpop.f32.mrb[0].mxu0
  %v7274 = vadd.f32 0.0, %v7273
  %v7275 = vpop.f32.mrb[0].mxu0
  %7276 = vmatprep.mubr.bf16.mxu0 0
  %7277 = vmatmul.mubr.bf16.gmra.mrb[0].mxu0 %v7231
  %v7278 = vpop.f32.mrb[0].mxu0
  %v7279 = vadd.f32 0.0, %v7278
  %v7280 = vpop.f32.mrb[0].mxu0
  %v7281 = vpop.f32.mrb[0].mxu0
  %v7282 = vpop.f32.mrb[0].mxu0
  %7283 = vdwg.mxu0
  %v7284 = vpack.c.bf16 %v7274, %v7271
  %v7285 = vpack.c.bf16 %v7279, %v7279
  %s7286 = scalar_lea.vmem %s29, 80
  %v7287 = vld [vmem:[%s7286] sm:$0xf]
  %v7288 = vld [vmem:[%s7286 + $0x4] sm:$0xf]
  %v7289 = vld [vmem:[%s7286 + $0x8] sm:$0xf]
  %v7290 = vld [vmem:[%s7286 + $0xc] sm:$0xf]
  %v7295 = vunpack.c.l.b16 %v7287
  %v7296 = vunpack.c.l.b16 %v7288
  %v7297 = vunpack.c.l.b16 %v7289
  %v7298 = vunpack.c.l.b16 %v7290
  %v7299 = vpack.c.b16 %v7296, %v7295
  %v7300 = vpack.c.b16 %v7298, %v7297
  %v7304 = vsel %vm3522, %v7284, 0
  %v7307 = vsel %vm3522, %v7285, 0
  %7309 = vmatprep.subr.bf16.mxu0 0
  %7310 = vmatpush1.bf16.msra.mxu0 %v7299
  %7311 = vmatprep.subr.bf16.mxu0 0
  %7312 = vmatpush1.bf16.msra.mxu0 %v7300
  %7313 = vmatprep.subr.bf16.mxu0 0
  %7314 = vmatpush1.bf16.msra.mxu0 0
  %7315 = vmatprep.subr.bf16.mxu0 0
  %7316 = vmatpush1.bf16.msra.mxu0 0
  %7317 = vmatprep.subr.bf16.mxu0 0
  %7318 = vmatpush1.bf16.msra.mxu0 0
  %7319 = vmatprep.subr.bf16.mxu0 0
  %7320 = vmatpush1.bf16.msra.mxu0 0
  %7321 = vmatprep.subr.bf16.mxu0 0
  %7322 = vmatpush1.bf16.msra.mxu0 0
  %7323 = vmatprep.subr.bf16.mxu0 0
  %7324 = vmatpush1.bf16.msra.mxu0 0
  %7325 = vmatprep.subr.bf16.mxu0 0
  %7326 = vmatpush1.bf16.msra.mxu0 0
  %7327 = vmatprep.subr.bf16.mxu0 0
  %7328 = vmatpush1.bf16.msra.mxu0 0
  %7329 = vmatprep.subr.bf16.mxu0 0
  %7330 = vmatpush1.bf16.msra.mxu0 0
  %7331 = vmatprep.subr.bf16.mxu0 0
  %7332 = vmatpush1.bf16.msra.mxu0 0
  %7333 = vmatprep.subr.bf16.mxu0 0
  %7334 = vmatpush1.bf16.msra.mxu0 0
  %7335 = vmatprep.subr.bf16.mxu0 0
  %7336 = vmatpush1.bf16.msra.mxu0 0
  %7337 = vmatprep.subr.bf16.mxu0 0
  %7338 = vmatpush1.bf16.msra.mxu0 0
  %7339 = vmatprep.subr.bf16.mxu0 0
  %7340 = vmatpush1.bf16.msra.mxu0 0
  %7341 = vmatprep.mubr.bf16.mxu0 0
  %7342 = vmatmul.mubr.bf16.gmra.mrb[0].mxu0 %v7304
  %v7343 = vpop.f32.mrb[0].mxu0
  %v7344 = vadd.f32 0.0, %v7343
  %v7345 = vpop.f32.mrb[0].mxu0
  %v7346 = vpop.f32.mrb[0].mxu0
  %v7347 = vadd.f32 0.0, %v7346
  %v7348 = vpop.f32.mrb[0].mxu0
  %7349 = vmatprep.mubr.bf16.mxu0 0
  %7350 = vmatmul.mubr.bf16.gmra.mrb[0].mxu0 %v7307
  %v7351 = vpop.f32.mrb[0].mxu0
  %v7352 = vadd.f32 0.0, %v7351
  %v7353 = vpop.f32.mrb[0].mxu0
  %v7354 = vpop.f32.mrb[0].mxu0
  %v7355 = vpop.f32.mrb[0].mxu0
  %7356 = vdwg.mxu0
  %v7361 = vunpack.c.l.b16 %v6859
  %v7362 = vunpack.c.l.b16 %v6860
  %v7363 = vunpack.c.l.b16 %v6861
  %v7364 = vunpack.c.l.b16 %v6862
  %v7365 = vpack.c.b16 %v7362, %v7361
  %v7366 = vpack.c.b16 %v7364, %v7363
  %v7370 = vsel %vm3522, %v6856, 0
  %v7373 = vsel %vm3522, %v6857, 0
  %7375 = vmatprep.subr.bf16.mxu0 0
  %7376 = vmatpush1.bf16.msra.mxu0 %v7365
  %7377 = vmatprep.subr.bf16.mxu0 0
  %7378 = vmatpush1.bf16.msra.mxu0 %v7366
  %7379 = vmatprep.subr.bf16.mxu0 0
  %7380 = vmatpush1.bf16.msra.mxu0 0
  %7381 = vmatprep.subr.bf16.mxu0 0
  %7382 = vmatpush1.bf16.msra.mxu0 0
  %7383 = vmatprep.subr.bf16.mxu0 0
  %7384 = vmatpush1.bf16.msra.mxu0 0
  %7385 = vmatprep.subr.bf16.mxu0 0
  %7386 = vmatpush1.bf16.msra.mxu0 0
  %7387 = vmatprep.subr.bf16.mxu0 0
  %7388 = vmatpush1.bf16.msra.mxu0 0
  %7389 = vmatprep.subr.bf16.mxu0 0
  %7390 = vmatpush1.bf16.msra.mxu0 0
  %7391 = vmatprep.subr.bf16.mxu0 0
  %7392 = vmatpush1.bf16.msra.mxu0 0
  %7393 = vmatprep.subr.bf16.mxu0 0
  %7394 = vmatpush1.bf16.msra.mxu0 0
  %7395 = vmatprep.subr.bf16.mxu0 0
  %7396 = vmatpush1.bf16.msra.mxu0 0
  %7397 = vmatprep.subr.bf16.mxu0 0
  %7398 = vmatpush1.bf16.msra.mxu0 0
  %7399 = vmatprep.subr.bf16.mxu0 0
  %7400 = vmatpush1.bf16.msra.mxu0 0
  %7401 = vmatprep.subr.bf16.mxu0 0
  %7402 = vmatpush1.bf16.msra.mxu0 0
  %7403 = vmatprep.subr.bf16.mxu0 0
  %7404 = vmatpush1.bf16.msra.mxu0 0
  %7405 = vmatprep.subr.bf16.mxu0 0
  %7406 = vmatpush1.bf16.msra.mxu0 0
  %7407 = vmatprep.mubr.bf16.mxu0 0
  %7408 = vmatmul.mubr.bf16.gmra.mrb[0].mxu0 %v7370
  %v7409 = vpop.f32.mrb[0].mxu0
  %v7410 = vadd.f32 %v7344, %v7409
  %v7411 = vpop.f32.mrb[0].mxu0
  %v7412 = vpop.f32.mrb[0].mxu0
  %v7413 = vadd.f32 %v7347, %v7412
  %v7414 = vpop.f32.mrb[0].mxu0
  %7415 = vmatprep.mubr.bf16.mxu0 0
  %7416 = vmatmul.mubr.bf16.gmra.mrb[0].mxu0 %v7373
  %v7417 = vpop.f32.mrb[0].mxu0
  %v7418 = vadd.f32 %v7352, %v7417
  %v7419 = vpop.f32.mrb[0].mxu0
  %v7420 = vpop.f32.mrb[0].mxu0
  %v7421 = vpop.f32.mrb[0].mxu0
  %7422 = vdwg.mxu0
  %v7423 = vadd.f32 %v6367, %v7410
  %v7424 = vadd.f32 %v6368, %v7413
  %v7425 = vadd.f32 %v6369, %v7418
  %v7426 = vlaneseq
  %v7427 = vshrl.u32 %v7426, 7
  %v7428 = vsub.s32 0, %v7427
  %v7429 = vrot.slane %v6373, %v7428
  %v7430 = vadd.f32 %v7423, %v7429
  %v7431 = vadd.f32 %v7424, %v7429
  %v7432 = vadd.f32 %v7425, %v7429
  %v7433 = vsel %vm232, %v7430, 0.0
  %7434 = vadd.xlane.f32.xlu0 %v7433
  %v7435 = vpop.xlane.xlu0 %7434
  %v7436 = vsel %vm232, %v7431, 0.0
  %7437 = vadd.xlane.f32.xlu0 %v7436
  %v7438 = vpop.xlane.xlu0 %7437
  %v7439 = vsel %vm3208, %v7432, 0.0
  %7440 = vadd.xlane.f32.xlu0 %v7439
  %v7441 = vpop.xlane.xlu0 %7440
  %v7442 = vmul.f32 %v7435, %v3212
  %v7443 = vmul.f32 %v7438, %v3212
  %v7444 = vmul.f32 %v7441, %v3212
  %v7445 = vsub.f32 %v7430, %v7442
  %v7446 = vsub.f32 %v7431, %v7443
  %v7447 = vsub.f32 %v7432, %v7444
  %v7448 = vmul.f32 %v7445, %v7445
  %v7449 = vmul.f32 %v7446, %v7446
  %v7450 = vmul.f32 %v7447, %v7447
  %v7451 = vsel %vm232, %v7448, 0.0
  %7452 = vadd.xlane.f32.xlu0 %v7451
  %v7453 = vpop.xlane.xlu0 %7452
  %v7454 = vsel %vm232, %v7449, 0.0
  %7455 = vadd.xlane.f32.xlu0 %v7454
  %v7456 = vpop.xlane.xlu0 %7455
  %v7457 = vsel %vm3208, %v7450, 0.0
  %7458 = vadd.xlane.f32.xlu0 %v7457
  %v7459 = vpop.xlane.xlu0 %7458
  %v7460 = vmul.f32 %v7453, %v3212
  %v7461 = vmul.f32 %v7456, %v3212
  %v7462 = vmul.f32 %v7459, %v3212
  %v7463 = vadd.f32 %v7460, 1e-05
  %v7464 = vadd.f32 %v7461, 1e-05
  %v7465 = vadd.f32 %v7462, 1e-05
  %v7466 = vrsqrt.pop %v7463
  %v7467 = vrsqrt.pop %v7464
  %v7468 = vrsqrt.pop %v7465
  %v7469 = vmul.f32 %v7445, %v7466
  %v7470 = vmul.f32 %v7446, %v7467
  %v7471 = vmul.f32 %v7447, %v7468
  %v7472 = vlaneseq
  %v7473 = vshrl.u32 %v7472, 7
  %v7474 = vsub.s32 2, %v7473
  %v7475 = vrot.slane %v6371, %v7474
  %v7476 = vmul.f32 %v7469, %v7475
  %v7477 = vmul.f32 %v7470, %v7475
  %v7478 = vmul.f32 %v7471, %v7475
  %v7479 = vlaneseq
  %v7480 = vshrl.u32 %v7479, 7
  %v7481 = vsub.s32 3, %v7480
  %v7482 = vrot.slane %v6371, %v7481
  %v7483 = vadd.f32 %v7476, %v7482
  %v7484 = vadd.f32 %v7477, %v7482
  %v7485 = vadd.f32 %v7478, %v7482
  %v7486 = vpack.c.bf16 %v7484, %v7483
  %v7487 = vpack.c.bf16 %v7485, %v7485
  %s7488 = scalar_lea.vmem %s25, 128
  %v7489 = vld [vmem:[%s7488] sm:$0xff]
  %v7490 = vld [vmem:[%s7488 + $0x8] sm:$0xff]
  %v7491 = vld [vmem:[%s7488 + $0x10] sm:$0xff]
  %v7492 = vld [vmem:[%s7488 + $0x18] sm:$0xff]
  %v7493 = vld [vmem:[%s7488 + $0x20] sm:$0xff]
  %v7494 = vld [vmem:[%s7488 + $0x28] sm:$0xff]
  %v7495 = vld [vmem:[%s7488 + $0x30] sm:$0xff]
  %v7496 = vld [vmem:[%s7488 + $0x38] sm:$0xff]
  %s7497 = scalar_lea.vmem %s23, 128
  %v7498 = vld [vmem:[%s7497] sm:$0xff]
  %v7499 = vld [vmem:[%s7497 + $0x8] sm:$0xff]
  %v7500 = vld [vmem:[%s7497 + $0x10] sm:$0xff]
  %v7501 = vld [vmem:[%s7497 + $0x18] sm:$0xff]
  %v7502 = vld [vmem:[%s7497 + $0x20] sm:$0xff]
  %v7503 = vld [vmem:[%s7497 + $0x28] sm:$0xff]
  %v7504 = vld [vmem:[%s7497 + $0x30] sm:$0xff]
  %v7505 = vld [vmem:[%s7497 + $0x38] sm:$0xff]
  %v7514 = vunpack.c.l.b16 %v7498
  %v7515 = vunpack.c.h.b16 %v7498
  %v7516 = vunpack.c.l.b16 %v7499
  %v7517 = vunpack.c.h.b16 %v7499
  %v7518 = vunpack.c.l.b16 %v7500
  %v7519 = vunpack.c.h.b16 %v7500
  %v7520 = vunpack.c.l.b16 %v7501
  %v7521 = vunpack.c.h.b16 %v7501
  %v7522 = vunpack.c.l.b16 %v7502
  %v7523 = vunpack.c.h.b16 %v7502
  %v7524 = vunpack.c.l.b16 %v7503
  %v7525 = vunpack.c.h.b16 %v7503
  %v7526 = vunpack.c.l.b16 %v7504
  %v7527 = vunpack.c.h.b16 %v7504
  %v7528 = vunpack.c.l.b16 %v7505
  %v7529 = vunpack.c.h.b16 %v7505
  %v7530 = vpack.c.b16 %v7516, %v7514
  %v7531 = vpack.c.b16 %v7517, %v7515
  %v7532 = vpack.c.b16 %v7520, %v7518
  %v7533 = vpack.c.b16 %v7521, %v7519
  %v7534 = vpack.c.b16 %v7524, %v7522
  %v7535 = vpack.c.b16 %v7525, %v7523
  %v7536 = vpack.c.b16 %v7528, %v7526
  %v7537 = vpack.c.b16 %v7529, %v7527
  %7546 = vmatprep.subr.bf16.mxu0 %v7531
  %7547 = vmatpush1.bf16.msra.mxu0 %v7530
  %7548 = vmatprep.subr.bf16.mxu0 %v7533
  %7549 = vmatpush1.bf16.msra.mxu0 %v7532
  %7550 = vmatprep.subr.bf16.mxu0 %v7535
  %7551 = vmatpush1.bf16.msra.mxu0 %v7534
  %7552 = vmatprep.subr.bf16.mxu0 %v7537
  %7553 = vmatpush1.bf16.msra.mxu0 %v7536
  %7554 = vmatprep.subr.bf16.mxu0 0
  %7555 = vmatpush1.bf16.msra.mxu0 0
  %7556 = vmatprep.subr.bf16.mxu0 0
  %7557 = vmatpush1.bf16.msra.mxu0 0
  %7558 = vmatprep.subr.bf16.mxu0 0
  %7559 = vmatpush1.bf16.msra.mxu0 0
  %7560 = vmatprep.subr.bf16.mxu0 0
  %7561 = vmatpush1.bf16.msra.mxu0 0
  %7562 = vmatprep.subr.bf16.mxu0 0
  %7563 = vmatpush1.bf16.msra.mxu0 0
  %7564 = vmatprep.subr.bf16.mxu0 0
  %7565 = vmatpush1.bf16.msra.mxu0 0
  %7566 = vmatprep.subr.bf16.mxu0 0
  %7567 = vmatpush1.bf16.msra.mxu0 0
  %7568 = vmatprep.subr.bf16.mxu0 0
  %7569 = vmatpush1.bf16.msra.mxu0 0
  %7570 = vmatprep.subr.bf16.mxu0 0
  %7571 = vmatpush1.bf16.msra.mxu0 0
  %7572 = vmatprep.subr.bf16.mxu0 0
  %7573 = vmatpush1.bf16.msra.mxu0 0
  %7574 = vmatprep.subr.bf16.mxu0 0
  %7575 = vmatpush1.bf16.msra.mxu0 0
  %7576 = vmatprep.subr.bf16.mxu0 0
  %7577 = vmatpush1.bf16.msra.mxu0 0
  %7578 = vmatprep.mubr.bf16.mxu0 0
  %7579 = vmatmul.mubr.bf16.gmra.mrb[0].mxu0 %v4373
  %v7580 = vpop.f32.mrb[0].mxu0
  %v7581 = vadd.f32 0.0, %v7580
  %v7582 = vpop.f32.mrb[0].mxu0
  %v7583 = vadd.f32 0.0, %v7582
  %v7584 = vpop.f32.mrb[0].mxu0
  %v7585 = vadd.f32 0.0, %v7584
  %v7586 = vpop.f32.mrb[0].mxu0
  %v7587 = vadd.f32 0.0, %v7586
  %7588 = vmatprep.mubr.bf16.mxu0 0
  %7589 = vmatmul.mubr.bf16.gmra.mrb[0].mxu0 %v4376
  %v7590 = vpop.f32.mrb[0].mxu0
  %v7591 = vadd.f32 0.0, %v7590
  %v7592 = vpop.f32.mrb[0].mxu0
  %v7593 = vadd.f32 0.0, %v7592
  %v7594 = vpop.f32.mrb[0].mxu0
  %v7595 = vpop.f32.mrb[0].mxu0
  %7596 = vdwg.mxu0
  %v7605 = vunpack.c.l.b16 %v7489
  %v7606 = vunpack.c.h.b16 %v7489
  %v7607 = vunpack.c.l.b16 %v7490
  %v7608 = vunpack.c.h.b16 %v7490
  %v7609 = vunpack.c.l.b16 %v7491
  %v7610 = vunpack.c.h.b16 %v7491
  %v7611 = vunpack.c.l.b16 %v7492
  %v7612 = vunpack.c.h.b16 %v7492
  %v7613 = vunpack.c.l.b16 %v7493
  %v7614 = vunpack.c.h.b16 %v7493
  %v7615 = vunpack.c.l.b16 %v7494
  %v7616 = vunpack.c.h.b16 %v7494
  %v7617 = vunpack.c.l.b16 %v7495
  %v7618 = vunpack.c.h.b16 %v7495
  %v7619 = vunpack.c.l.b16 %v7496
  %v7620 = vunpack.c.h.b16 %v7496
  %v7621 = vpack.c.b16 %v7607, %v7605
  %v7622 = vpack.c.b16 %v7608, %v7606
  %v7623 = vpack.c.b16 %v7611, %v7609
  %v7624 = vpack.c.b16 %v7612, %v7610
  %v7625 = vpack.c.b16 %v7615, %v7613
  %v7626 = vpack.c.b16 %v7616, %v7614
  %v7627 = vpack.c.b16 %v7619, %v7617
  %v7628 = vpack.c.b16 %v7620, %v7618
  %v7638 = vsel %vm232, %v7486, 0
  %v7641 = vsel %vm232, %v7487, 0
  %7643 = vmatprep.subr.bf16.mxu0 %v7622
  %7644 = vmatpush1.bf16.msra.mxu0 %v7621
  %7645 = vmatprep.subr.bf16.mxu0 %v7624
  %7646 = vmatpush1.bf16.msra.mxu0 %v7623
  %7647 = vmatprep.subr.bf16.mxu0 %v7626
  %7648 = vmatpush1.bf16.msra.mxu0 %v7625
  %7649 = vmatprep.subr.bf16.mxu0 %v7628
  %7650 = vmatpush1.bf16.msra.mxu0 %v7627
  %7651 = vmatprep.subr.bf16.mxu0 0
  %7652 = vmatpush1.bf16.msra.mxu0 0
  %7653 = vmatprep.subr.bf16.mxu0 0
  %7654 = vmatpush1.bf16.msra.mxu0 0
  %7655 = vmatprep.subr.bf16.mxu0 0
  %7656 = vmatpush1.bf16.msra.mxu0 0
  %7657 = vmatprep.subr.bf16.mxu0 0
  %7658 = vmatpush1.bf16.msra.mxu0 0
  %7659 = vmatprep.subr.bf16.mxu0 0
  %7660 = vmatpush1.bf16.msra.mxu0 0
  %7661 = vmatprep.subr.bf16.mxu0 0
  %7662 = vmatpush1.bf16.msra.mxu0 0
  %7663 = vmatprep.subr.bf16.mxu0 0
  %7664 = vmatpush1.bf16.msra.mxu0 0
  %7665 = vmatprep.subr.bf16.mxu0 0
  %7666 = vmatpush1.bf16.msra.mxu0 0
  %7667 = vmatprep.subr.bf16.mxu0 0
  %7668 = vmatpush1.bf16.msra.mxu0 0
  %7669 = vmatprep.subr.bf16.mxu0 0
  %7670 = vmatpush1.bf16.msra.mxu0 0
  %7671 = vmatprep.subr.bf16.mxu0 0
  %7672 = vmatpush1.bf16.msra.mxu0 0
  %7673 = vmatprep.subr.bf16.mxu0 0
  %7674 = vmatpush1.bf16.msra.mxu0 0
  %7675 = vmatprep.mubr.bf16.mxu0 0
  %7676 = vmatmul.mubr.bf16.gmra.mrb[0].mxu0 %v7638
  %v7677 = vpop.f32.mrb[0].mxu0
  %v7678 = vadd.f32 %v7581, %v7677
  %v7679 = vpop.f32.mrb[0].mxu0
  %v7680 = vadd.f32 %v7583, %v7679
  %v7681 = vpop.f32.mrb[0].mxu0
  %v7682 = vadd.f32 %v7585, %v7681
  %v7683 = vpop.f32.mrb[0].mxu0
  %v7684 = vadd.f32 %v7587, %v7683
  %7685 = vmatprep.mubr.bf16.mxu0 0
  %7686 = vmatmul.mubr.bf16.gmra.mrb[0].mxu0 %v7641
  %v7687 = vpop.f32.mrb[0].mxu0
  %v7688 = vadd.f32 %v7591, %v7687
  %v7689 = vpop.f32.mrb[0].mxu0
  %v7690 = vadd.f32 %v7593, %v7689
  %v7691 = vpop.f32.mrb[0].mxu0
  %v7692 = vpop.f32.mrb[0].mxu0
  %7693 = vdwg.mxu0
  %s7694 = scalar_lea.vmem %s21, 4
  %v7695 = vld [vmem:[%s7694] sm:$0x3]
  %v7697 = vlaneseq
  %v7698 = vshrl.u32 %v7697, 7
  %v7699 = vsub.s32 0, %v7698
  %v7700 = vrot.slane %v7695, %v7699
  %v7701 = vlaneseq
  %v7702 = vshrl.u32 %v7701, 7
  %v7703 = vsub.s32 1, %v7702
  %v7704 = vrot.slane %v7695, %v7703
  %v7707 = vadd.f32 %v7678, %v7700
  %v7708 = vadd.f32 %v7680, %v7704
  %v7709 = vadd.f32 %v7682, %v7700
  %v7710 = vadd.f32 %v7684, %v7704
  %v7711 = vadd.f32 %v7688, %v7700
  %v7712 = vadd.f32 %v7690, %v7704
  %v7713 = vmul.f32 %v7707, %v7707
  %v7714 = vmul.f32 %v7708, %v7708
  %v7715 = vmul.f32 %v7709, %v7709
  %v7716 = vmul.f32 %v7710, %v7710
  %v7717 = vmul.f32 %v7711, %v7711
  %v7718 = vmul.f32 %v7712, %v7712
  %v7719 = vmul.f32 %v7707, %v7713
  %v7720 = vmul.f32 %v7708, %v7714
  %v7721 = vmul.f32 %v7709, %v7715
  %v7722 = vmul.f32 %v7710, %v7716
  %v7723 = vmul.f32 %v7711, %v7717
  %v7724 = vmul.f32 %v7712, %v7718
  %v7725 = vmul.f32 %v7719, 0.044715
  %v7726 = vmul.f32 %v7720, 0.044715
  %v7727 = vmul.f32 %v7721, 0.044715
  %v7728 = vmul.f32 %v7722, 0.044715
  %v7729 = vmul.f32 %v7723, 0.044715
  %v7730 = vmul.f32 %v7724, 0.044715
  %v7731 = vadd.f32 %v7707, %v7725
  %v7732 = vadd.f32 %v7708, %v7726
  %v7733 = vadd.f32 %v7709, %v7727
  %v7734 = vadd.f32 %v7710, %v7728
  %v7735 = vadd.f32 %v7711, %v7729
  %v7736 = vadd.f32 %v7712, %v7730
  %v7737 = vmul.f32 %v7731, 0.7978846
  %v7738 = vmul.f32 %v7732, 0.7978846
  %v7739 = vmul.f32 %v7733, 0.7978846
  %v7740 = vmul.f32 %v7734, 0.7978846
  %v7741 = vmul.f32 %v7735, 0.7978846
  %v7742 = vmul.f32 %v7736, 0.7978846
  %v7743 = vtanh.pop %v7737
  %v7744 = vtanh.pop %v7738
  %v7745 = vtanh.pop %v7739
  %v7746 = vtanh.pop %v7740
  %v7747 = vtanh.pop %v7741
  %v7748 = vtanh.pop %v7742
  %v7749 = vadd.f32 %v7743, 1.0
  %v7750 = vadd.f32 %v7744, 1.0
  %v7751 = vadd.f32 %v7745, 1.0
  %v7752 = vadd.f32 %v7746, 1.0
  %v7753 = vadd.f32 %v7747, 1.0
  %v7754 = vadd.f32 %v7748, 1.0
  %v7755 = vmul.f32 %v7749, 0.5
  %v7756 = vmul.f32 %v7750, 0.5
  %v7757 = vmul.f32 %v7751, 0.5
  %v7758 = vmul.f32 %v7752, 0.5
  %v7759 = vmul.f32 %v7753, 0.5
  %v7760 = vmul.f32 %v7754, 0.5
  %v7761 = vmul.f32 %v7707, %v7755
  %v7762 = vmul.f32 %v7708, %v7756
  %v7763 = vmul.f32 %v7709, %v7757
  %v7764 = vmul.f32 %v7710, %v7758
  %v7765 = vmul.f32 %v7711, %v7759
  %v7766 = vmul.f32 %v7712, %v7760
  %v7767 = vpack.c.bf16 %v7763, %v7761
  %v7768 = vpack.c.bf16 %v7764, %v7762
  %v7769 = vpack.c.bf16 %v7765, %v7765
  %v7770 = vpack.c.bf16 %v7766, %v7766
  %s7771 = scalar_lea.vmem %s27, 256
  %v7772 = vld [vmem:[%s7771] sm:$0xf]
  %v7773 = vld [vmem:[%s7771 + $0x4] sm:$0xf]
  %v7774 = vld [vmem:[%s7771 + $0x8] sm:$0xf]
  %v7775 = vld [vmem:[%s7771 + $0xc] sm:$0xf]
  %v7776 = vld [vmem:[%s7771 + $0x10] sm:$0xf]
  %v7777 = vld [vmem:[%s7771 + $0x14] sm:$0xf]
  %v7778 = vld [vmem:[%s7771 + $0x18] sm:$0xf]
  %v7779 = vld [vmem:[%s7771 + $0x1c] sm:$0xf]
  %v7780 = vld [vmem:[%s7771 + $0x20] sm:$0xf]
  %v7781 = vld [vmem:[%s7771 + $0x24] sm:$0xf]
  %v7782 = vld [vmem:[%s7771 + $0x28] sm:$0xf]
  %v7783 = vld [vmem:[%s7771 + $0x2c] sm:$0xf]
  %v7784 = vld [vmem:[%s7771 + $0x30] sm:$0xf]
  %v7785 = vld [vmem:[%s7771 + $0x34] sm:$0xf]
  %v7786 = vld [vmem:[%s7771 + $0x38] sm:$0xf]
  %v7787 = vld [vmem:[%s7771 + $0x3c] sm:$0xf]
  %v7788 = vld [vmem:[%s7771 + $0x40] sm:$0xf]
  %v7789 = vld [vmem:[%s7771 + $0x44] sm:$0xf]
  %v7790 = vld [vmem:[%s7771 + $0x48] sm:$0xf]
  %v7791 = vld [vmem:[%s7771 + $0x4c] sm:$0xf]
  %v7792 = vld [vmem:[%s7771 + $0x50] sm:$0xf]
  %v7793 = vld [vmem:[%s7771 + $0x54] sm:$0xf]
  %v7794 = vld [vmem:[%s7771 + $0x58] sm:$0xf]
  %v7795 = vld [vmem:[%s7771 + $0x5c] sm:$0xf]
  %v7796 = vld [vmem:[%s7771 + $0x60] sm:$0xf]
  %v7797 = vld [vmem:[%s7771 + $0x64] sm:$0xf]
  %v7798 = vld [vmem:[%s7771 + $0x68] sm:$0xf]
  %v7799 = vld [vmem:[%s7771 + $0x6c] sm:$0xf]
  %v7800 = vld [vmem:[%s7771 + $0x70] sm:$0xf]
  %v7801 = vld [vmem:[%s7771 + $0x74] sm:$0xf]
  %v7802 = vld [vmem:[%s7771 + $0x78] sm:$0xf]
  %v7803 = vld [vmem:[%s7771 + $0x7c] sm:$0xf]
  %v7804 = vlaneseq
  %v7805 = vshrl.u32 %v7804, 7
  %v7806 = vsub.s32 1, %v7805
  %v7807 = vrot.slane %v6373, %v7806
  %v7840 = vunpack.c.l.b16 %v7772
  %v7841 = vunpack.c.l.b16 %v7773
  %v7842 = vunpack.c.l.b16 %v7774
  %v7843 = vunpack.c.l.b16 %v7775
  %v7844 = vunpack.c.l.b16 %v7776
  %v7845 = vunpack.c.l.b16 %v7777
  %v7846 = vunpack.c.l.b16 %v7778
  %v7847 = vunpack.c.l.b16 %v7779
  %v7848 = vunpack.c.l.b16 %v7780
  %v7849 = vunpack.c.l.b16 %v7781
  %v7850 = vunpack.c.l.b16 %v7782
  %v7851 = vunpack.c.l.b16 %v7783
  %v7852 = vunpack.c.l.b16 %v7784
  %v7853 = vunpack.c.l.b16 %v7785
  %v7854 = vunpack.c.l.b16 %v7786
  %v7855 = vunpack.c.l.b16 %v7787
  %v7856 = vunpack.c.l.b16 %v7788
  %v7857 = vunpack.c.l.b16 %v7789
  %v7858 = vunpack.c.l.b16 %v7790
  %v7859 = vunpack.c.l.b16 %v7791
  %v7860 = vunpack.c.l.b16 %v7792
  %v7861 = vunpack.c.l.b16 %v7793
  %v7862 = vunpack.c.l.b16 %v7794
  %v7863 = vunpack.c.l.b16 %v7795
  %v7864 = vunpack.c.l.b16 %v7796
  %v7865 = vunpack.c.l.b16 %v7797
  %v7866 = vunpack.c.l.b16 %v7798
  %v7867 = vunpack.c.l.b16 %v7799
  %v7868 = vunpack.c.l.b16 %v7800
  %v7869 = vunpack.c.l.b16 %v7801
  %v7870 = vunpack.c.l.b16 %v7802
  %v7871 = vunpack.c.l.b16 %v7803
  %v7872 = vpack.c.b16 %v7841, %v7840
  %v7873 = vpack.c.b16 %v7843, %v7842
  %v7874 = vpack.c.b16 %v7845, %v7844
  %v7875 = vpack.c.b16 %v7847, %v7846
  %v7876 = vpack.c.b16 %v7849, %v7848
  %v7877 = vpack.c.b16 %v7851, %v7850
  %v7878 = vpack.c.b16 %v7853, %v7852
  %v7879 = vpack.c.b16 %v7855, %v7854
  %v7880 = vpack.c.b16 %v7857, %v7856
  %v7881 = vpack.c.b16 %v7859, %v7858
  %v7882 = vpack.c.b16 %v7861, %v7860
  %v7883 = vpack.c.b16 %v7863, %v7862
  %v7884 = vpack.c.b16 %v7865, %v7864
  %v7885 = vpack.c.b16 %v7867, %v7866
  %v7886 = vpack.c.b16 %v7869, %v7868
  %v7887 = vpack.c.b16 %v7871, %v7870
  %7904 = vmatprep.subr.bf16.mxu0 0
  %7905 = vmatpush1.bf16.msra.mxu0 %v7872
  %7906 = vmatprep.subr.bf16.mxu0 0
  %7907 = vmatpush1.bf16.msra.mxu0 %v7873
  %7908 = vmatprep.subr.bf16.mxu0 0
  %7909 = vmatpush1.bf16.msra.mxu0 %v7874
  %7910 = vmatprep.subr.bf16.mxu0 0
  %7911 = vmatpush1.bf16.msra.mxu0 %v7875
  %7912 = vmatprep.subr.bf16.mxu0 0
  %7913 = vmatpush1.bf16.msra.mxu0 %v7876
  %7914 = vmatprep.subr.bf16.mxu0 0
  %7915 = vmatpush1.bf16.msra.mxu0 %v7877
  %7916 = vmatprep.subr.bf16.mxu0 0
  %7917 = vmatpush1.bf16.msra.mxu0 %v7878
  %7918 = vmatprep.subr.bf16.mxu0 0
  %7919 = vmatpush1.bf16.msra.mxu0 %v7879
  %7920 = vmatprep.subr.bf16.mxu0 0
  %7921 = vmatpush1.bf16.msra.mxu0 %v7880
  %7922 = vmatprep.subr.bf16.mxu0 0
  %7923 = vmatpush1.bf16.msra.mxu0 %v7881
  %7924 = vmatprep.subr.bf16.mxu0 0
  %7925 = vmatpush1.bf16.msra.mxu0 %v7882
  %7926 = vmatprep.subr.bf16.mxu0 0
  %7927 = vmatpush1.bf16.msra.mxu0 %v7883
  %7928 = vmatprep.subr.bf16.mxu0 0
  %7929 = vmatpush1.bf16.msra.mxu0 %v7884
  %7930 = vmatprep.subr.bf16.mxu0 0
  %7931 = vmatpush1.bf16.msra.mxu0 %v7885
  %7932 = vmatprep.subr.bf16.mxu0 0
  %7933 = vmatpush1.bf16.msra.mxu0 %v7886
  %7934 = vmatprep.subr.bf16.mxu0 0
  %7935 = vmatpush1.bf16.msra.mxu0 %v7887
  %7936 = vmatprep.mubr.bf16.mxu0 %v7768
  %7937 = vmatmul.mubr.bf16.gmra.mrb[0].mxu0 %v7767
  %v7938 = vpop.f32.mrb[0].mxu0
  %v7939 = vpop.f32.mrb[0].mxu0
  %v7940 = vpop.f32.mrb[0].mxu0
  %v7941 = vadd.f32 %v7807, %v7940
  %v7942 = vpop.f32.mrb[0].mxu0
  %7943 = vmatprep.mubr.bf16.mxu0 %v7770
  %7944 = vmatmul.mubr.bf16.gmra.mrb[0].mxu0 %v7769
  %v7945 = vpop.f32.mrb[0].mxu0
  %v7946 = vadd.f32 %v7807, %v7945
  %v7947 = vpop.f32.mrb[0].mxu0
  %v7948 = vpop.f32.mrb[0].mxu0
  %v7949 = vpop.f32.mrb[0].mxu0
  %7950 = vdwg.mxu0
  %v7951 = vadd.f32 %v7431, %v7941
  %v7952 = vadd.f32 %v7432, %v7946
  %v7953 = vsel %vm1407, %v6368, %v7951
  %v7954 = vpack.c.bf16 %v7953, %v6367
  %v7955 = vpack.c.bf16 %v7952, %v7952
  %v7956 = vld [vmem:[%s73] sm:$0xf]
  %v7957 = vld [vmem:[%s73 + $0x4] sm:$0xf]
  %v7958 = vld [vmem:[%s73 + $0x8] sm:$0xf]
  %v7959 = vld [vmem:[%s73 + $0xc] sm:$0xf]
  %v7960 = vld [vmem:[%s73 + $0x10] sm:$0xf]
  %v7961 = vld [vmem:[%s73 + $0x14] sm:$0xf]
  %v7962 = vld [vmem:[%s73 + $0x18] sm:$0xf]
  %v7963 = vld [vmem:[%s73 + $0x1c] sm:$0xf]
  %v7964 = vld [vmem:[%s71] sm:$0xf]
  %v7965 = vld [vmem:[%s71 + $0x4] sm:$0xf]
  %v7966 = vld [vmem:[%s71 + $0x8] sm:$0xf]
  %v7967 = vld [vmem:[%s71 + $0xc] sm:$0xf]
  %v7968 = vld [vmem:[%s71 + $0x10] sm:$0xf]
  %v7969 = vld [vmem:[%s71 + $0x14] sm:$0xf]
  %v7970 = vld [vmem:[%s71 + $0x18] sm:$0xf]
  %v7971 = vld [vmem:[%s71 + $0x1c] sm:$0xf]
  %v7980 = vunpack.c.l.b16 %v7964
  %v7981 = vunpack.c.l.b16 %v7965
  %v7982 = vunpack.c.l.b16 %v7966
  %v7983 = vunpack.c.l.b16 %v7967
  %v7984 = vunpack.c.l.b16 %v7968
  %v7985 = vunpack.c.l.b16 %v7969
  %v7986 = vunpack.c.l.b16 %v7970
  %v7987 = vunpack.c.l.b16 %v7971
  %v7988 = vpack.c.b16 %v7981, %v7980
  %v7989 = vpack.c.b16 %v7983, %v7982
  %v7990 = vpack.c.b16 %v7985, %v7984
  %v7991 = vpack.c.b16 %v7987, %v7986
  %7996 = vmatprep.subr.bf16.mxu0 0
  %7997 = vmatpush1.bf16.msra.mxu0 %v7988
  %7998 = vmatprep.subr.bf16.mxu0 0
  %7999 = vmatpush1.bf16.msra.mxu0 %v7989
  %8000 = vmatprep.subr.bf16.mxu0 0
  %8001 = vmatpush1.bf16.msra.mxu0 %v7990
  %8002 = vmatprep.subr.bf16.mxu0 0
  %8003 = vmatpush1.bf16.msra.mxu0 %v7991
  %8004 = vmatprep.subr.bf16.mxu0 0
  %8005 = vmatpush1.bf16.msra.mxu0 0
  %8006 = vmatprep.subr.bf16.mxu0 0
  %8007 = vmatpush1.bf16.msra.mxu0 0
  %8008 = vmatprep.subr.bf16.mxu0 0
  %8009 = vmatpush1.bf16.msra.mxu0 0
  %8010 = vmatprep.subr.bf16.mxu0 0
  %8011 = vmatpush1.bf16.msra.mxu0 0
  %8012 = vmatprep.subr.bf16.mxu0 0
  %8013 = vmatpush1.bf16.msra.mxu0 0
  %8014 = vmatprep.subr.bf16.mxu0 0
  %8015 = vmatpush1.bf16.msra.mxu0 0
  %8016 = vmatprep.subr.bf16.mxu0 0
  %8017 = vmatpush1.bf16.msra.mxu0 0
  %8018 = vmatprep.subr.bf16.mxu0 0
  %8019 = vmatpush1.bf16.msra.mxu0 0
  %8020 = vmatprep.subr.bf16.mxu0 0
  %8021 = vmatpush1.bf16.msra.mxu0 0
  %8022 = vmatprep.subr.bf16.mxu0 0
  %8023 = vmatpush1.bf16.msra.mxu0 0
  %8024 = vmatprep.subr.bf16.mxu0 0
  %8025 = vmatpush1.bf16.msra.mxu0 0
  %8026 = vmatprep.subr.bf16.mxu0 0
  %8027 = vmatpush1.bf16.msra.mxu0 0
  %8028 = vmatprep.mubr.bf16.mxu0 0
  %8029 = vmatmul.mubr.bf16.gmra.mrb[0].mxu0 %v4373
  %v8030 = vpop.f32.mrb[0].mxu0
  %v8031 = vadd.f32 0.0, %v8030
  %v8032 = vpop.f32.mrb[0].mxu0
  %v8033 = vpop.f32.mrb[0].mxu0
  %v8034 = vadd.f32 0.0, %v8033
  %v8035 = vpop.f32.mrb[0].mxu0
  %8036 = vmatprep.mubr.bf16.mxu0 0
  %8037 = vmatmul.mubr.bf16.gmra.mrb[0].mxu0 %v4376
  %v8038 = vpop.f32.mrb[0].mxu0
  %v8039 = vadd.f32 0.0, %v8038
  %v8040 = vpop.f32.mrb[0].mxu0
  %v8041 = vpop.f32.mrb[0].mxu0
  %v8042 = vpop.f32.mrb[0].mxu0
  %8043 = vdwg.mxu0
  %v8052 = vunpack.c.l.b16 %v7956
  %v8053 = vunpack.c.l.b16 %v7957
  %v8054 = vunpack.c.l.b16 %v7958
  %v8055 = vunpack.c.l.b16 %v7959
  %v8056 = vunpack.c.l.b16 %v7960
  %v8057 = vunpack.c.l.b16 %v7961
  %v8058 = vunpack.c.l.b16 %v7962
  %v8059 = vunpack.c.l.b16 %v7963
  %v8060 = vpack.c.b16 %v8053, %v8052
  %v8061 = vpack.c.b16 %v8055, %v8054
  %v8062 = vpack.c.b16 %v8057, %v8056
  %v8063 = vpack.c.b16 %v8059, %v8058
  %v8069 = vsel %vm232, %v7954, 0
  %v8072 = vsel %vm232, %v7955, 0
  %8074 = vmatprep.subr.bf16.mxu0 0
  %8075 = vmatpush1.bf16.msra.mxu0 %v8060
  %8076 = vmatprep.subr.bf16.mxu0 0
  %8077 = vmatpush1.bf16.msra.mxu0 %v8061
  %8078 = vmatprep.subr.bf16.mxu0 0
  %8079 = vmatpush1.bf16.msra.mxu0 %v8062
  %8080 = vmatprep.subr.bf16.mxu0 0
  %8081 = vmatpush1.bf16.msra.mxu0 %v8063
  %8082 = vmatprep.subr.bf16.mxu0 0
  %8083 = vmatpush1.bf16.msra.mxu0 0
  %8084 = vmatprep.subr.bf16.mxu0 0
  %8085 = vmatpush1.bf16.msra.mxu0 0
  %8086 = vmatprep.subr.bf16.mxu0 0
  %8087 = vmatpush1.bf16.msra.mxu0 0
  %8088 = vmatprep.subr.bf16.mxu0 0
  %8089 = vmatpush1.bf16.msra.mxu0 0
  %8090 = vmatprep.subr.bf16.mxu0 0
  %8091 = vmatpush1.bf16.msra.mxu0 0
  %8092 = vmatprep.subr.bf16.mxu0 0
  %8093 = vmatpush1.bf16.msra.mxu0 0
  %8094 = vmatprep.subr.bf16.mxu0 0
  %8095 = vmatpush1.bf16.msra.mxu0 0
  %8096 = vmatprep.subr.bf16.mxu0 0
  %8097 = vmatpush1.bf16.msra.mxu0 0
  %8098 = vmatprep.subr.bf16.mxu0 0
  %8099 = vmatpush1.bf16.msra.mxu0 0
  %8100 = vmatprep.subr.bf16.mxu0 0
  %8101 = vmatpush1.bf16.msra.mxu0 0
  %8102 = vmatprep.subr.bf16.mxu0 0
  %8103 = vmatpush1.bf16.msra.mxu0 0
  %8104 = vmatprep.subr.bf16.mxu0 0
  %8105 = vmatpush1.bf16.msra.mxu0 0
  %8106 = vmatprep.mubr.bf16.mxu0 0
  %8107 = vmatmul.mubr.bf16.gmra.mrb[0].mxu0 %v8069
  %v8108 = vpop.f32.mrb[0].mxu0
  %v8109 = vadd.f32 %v8031, %v8108
  %v8110 = vpop.f32.mrb[0].mxu0
  %v8111 = vpop.f32.mrb[0].mxu0
  %v8112 = vadd.f32 %v8034, %v8111
  %v8113 = vpop.f32.mrb[0].mxu0
  %8114 = vmatprep.mubr.bf16.mxu0 0
  %8115 = vmatmul.mubr.bf16.gmra.mrb[0].mxu0 %v8072
  %v8116 = vpop.f32.mrb[0].mxu0
  %v8117 = vadd.f32 %v8039, %v8116
  %v8118 = vpop.f32.mrb[0].mxu0
  %v8119 = vpop.f32.mrb[0].mxu0
  %v8120 = vpop.f32.mrb[0].mxu0
  %8121 = vdwg.mxu0
  %v8122 = vld [vmem:[%s69] sm:$0x1]
  %v8124 = vlaneseq
  %v8125 = vshrl.u32 %v8124, 7
  %v8126 = vsub.s32 0, %v8125
  %v8127 = vrot.slane %v8122, %v8126
  %v8129 = vadd.f32 %v8109, %v8127
  %v8130 = vadd.f32 %v8112, %v8127
  %v8131 = vadd.f32 %v8117, %v8127
  %8132 = vst.msk [vmem:[%s77] sm:$0xff] %vm232, %v8129
  %8133 = vst.msk [vmem:[%s77 + $0x8] sm:$0xff] %vm232, %v8130
  %8134 = vst.msk [vmem:[%s77 + $0x10] sm:$0xf] %vm3208, %v8131
  // Predicated region
  $region154: #{tpu_custom_call.1} parent=0 // pred_check
    _
  $region155: #{tpu_custom_call.1} parent=0 // pred_check_branch
    %8136 = sbr.rel (0) target = $region157
  $region156: #{tpu_custom_call.1} parent=0 // pred_region
    _
  $region157: #{tpu_custom_call.1} parent=0 // pred_fallthru
    _
  // Predicated region
  $region158: #{tpu_custom_call.1} parent=0 // pred_check
    _
  $region159: #{tpu_custom_call.1} parent=0 // pred_check_branch
    %8138 = sbr.rel (0) target = $region161
  $region160: #{tpu_custom_call.1} parent=0 // pred_region
    _
  $region161: #{tpu_custom_call.1} parent=0 // pred_fallthru
    _

</llo_original>
